<compile_context>
chip_gen: v5e
topology: v5e:2x2
jax: 0.10.0
libtpu: 0.0.40
codegen_flags: <defaults>
</compile_context>

<pallas_src>
import math
import functools

import jax
import jax.numpy as jnp
from jax import lax
from jax.experimental import pallas as pl
from jax.experimental.pallas import tpu as pltpu


def _flash_attn_kernel(q_ref, k_ref, v_ref, o_ref, m_sc, l_sc, acc_sc, qs_sc,
                       *, scale, block_k, kv_resident, kv_len, exp_dtype):
    """One (batch, q-tile, kv-tile) step of non-causal multi-head flash attention.

    Layouts (sequence axis on lanes, lane-dense):
      q_ref : [1, 1, H, d, tq]              bf16   (packed-qkv plane 0)
      k_ref : [1, 1, H, d, S or tk]         bf16   (plane 1; full-S when kv_resident)
      v_ref : [1, 1, H, d, S or tk]         bf16   (plane 2)
      o_ref : [1, H, d, tq]                 out dtype
      m_sc, l_sc : [H, 1, tq] f32   (running max / softmax denominator)
      acc_sc     : [H, d, tq] f32   (running numerator)
      qs_sc      : [H, d, tq] bf16  (softmax scale folded into q, once per q-tile)
    """
    ki = pl.program_id(2)

    @pl.when(ki == 0)
    def _():
        m_sc[...] = jnp.full_like(m_sc, -jnp.inf)
        l_sc[...] = jnp.zeros_like(l_sc)
        acc_sc[...] = jnp.zeros_like(acc_sc)
        # Fold the softmax scale into q once per q-tile (d << tk elements).
        qs_sc[...] = (q_ref[0, 0].astype(jnp.float32) * scale).astype(jnp.bfloat16)

    q = qs_sc[...]                                                  # [H, d, tq] bf16

    if kv_resident:
        start = pl.multiple_of(ki * block_k, block_k)
        k = k_ref[0, 0, :, :, pl.ds(start, block_k)]                # [H, d, tk] bf16
        v = v_ref[0, 0, :, :, pl.ds(start, block_k)]                # [H, d, tk] bf16
    else:
        k = k_ref[0, 0]
        v = v_ref[0, 0]

    # Scores with query positions on the lane axis: s[h, kpos, qpos].
    # bf16 MXU operands, f32 accumulation; scale already folded into q.
    s = lax.dot_general(k, q, (((1,), (1,)), ((0,), (0,))),
                        preferred_element_type=jnp.float32)         # [H, tk, tq] f32

    if kv_len is not None:
        # Mask key columns introduced by padding S up to a tile multiple.
        key_pos = ki * block_k + lax.broadcasted_iota(
            jnp.int32, (1,) + s.shape[1:], 1)
        s = jnp.where(key_pos < kv_len, s, -jnp.inf)

    m_prev = m_sc[...]                                              # [H, 1, tq]
    m_new = jnp.maximum(m_prev, jnp.max(s, axis=1, keepdims=True))  # [H, 1, tq]
    alpha = jnp.exp(m_prev - m_new)                                 # [H, 1, tq] f32 (tiny)

    # exp on the bf16 EUP path for v6e/v7x (f32 on v5e); p feeds the MXU directly.
    p = jnp.exp((s - m_new).astype(exp_dtype))                      # [H, tk, tq]
    p_mxu = p if p.dtype == jnp.bfloat16 else p.astype(jnp.bfloat16)

    l_sc[...] = alpha * l_sc[...] + jnp.sum(p.astype(jnp.float32), axis=1, keepdims=True)

    # acc[h, d, q] += sum_k v[h, d, k] * p[h, k, q]
    pv = lax.dot_general(v, p_mxu, (((2,), (1,)), ((0,), (0,))),
                         preferred_element_type=jnp.float32)        # [H, d, tq] f32
    acc_sc[...] = alpha * acc_sc[...] + pv
    m_sc[...] = m_new

    @pl.when(ki == pl.num_programs(2) - 1)
    def _():
        # approx reciprocal (EUP): ~1e-3 relative error on the softmax normalization.
        o_ref[0] = (acc_sc[...] *
                    pl.reciprocal(l_sc[...], approx=True)).astype(o_ref.dtype)


def _is_v5e():
    try:
        kind = jax.devices()[0].device_kind.lower()
    except Exception:
        return False
    return ("v5 lite" in kind) or ("v5e" in kind) or ("v5lite" in kind)


def _vmem_estimate(num_heads, d, tq, tk, s_pad, kv_resident, out_bytes):
    bf16, f32 = 2, 4
    q_blk = 2 * num_heads * d * tq * bf16                    # double-buffered q tile
    o_blk = 2 * num_heads * d * tq * out_bytes               # double-buffered out tile
    if kv_resident:
        kv_blk = 2 * 2 * num_heads * d * s_pad * bf16        # K + V, full-S, double-buffered
    else:
        kv_blk = 2 * 2 * num_heads * d * tk * bf16
    scratch = (2 * num_heads * tq * f32                       # m, l
               + num_heads * d * tq * f32                     # acc
               + num_heads * d * tq * bf16)                   # scale-folded q
    tmp = 6 * num_heads * tk * tq * f32                       # compiler temporaries (s, p, ...)
    return q_blk + o_blk + kv_blk + scratch + tmp


def qkv_flash_attention(qkv, num_heads):
    """qkv: [B, 3*embed_dim, S], channels packed as (three, heads, head_dim).

    Returns [B, embed_dim, S] = rearrange(flash_attn(qkv), 'b s h d -> b (h d) s'),
    matching QKVFlashAttention.forward (non-causal, dropout 0, scale 1/sqrt(head_dim)).
    """
    B, three_c, S = qkv.shape
    assert three_c % 3 == 0
    C = three_c // 3
    assert C % num_heads == 0
    d = C // num_heads
    assert d in (16, 32, 64), "Only head_dim in {16, 32, 64} (matches the torch module)."
    scale = 1.0 / math.sqrt(d)

    in_dtype = qkv.dtype
    if in_dtype in (jnp.float32, jnp.bfloat16, jnp.float16):
        out_dtype = in_dtype
    else:
        out_dtype = jnp.float32
    out_bytes = 4 if out_dtype == jnp.float32 else 2

    # Pad S to a multiple of 128; padded key columns are masked in-kernel, padded query
    # rows are sliced off afterwards.
    s_pad = ((S + 127) // 128) * 128

    # Single bf16 cast of the packed tensor; no strided q/k/v slice copies.
    qkv_r = qkv.reshape(B, 3, num_heads, d, S).astype(jnp.bfloat16)
    if s_pad != S:
        qkv_r = jnp.pad(qkv_r, ((0, 0), (0, 0), (0, 0), (0, 0), (0, s_pad - S)))

    v5e = _is_v5e()
    # kv tile: 128 fills v5e's 128-deep MXU; 256 for v6e/v7x (256-deep MXU).
    tk = 128 if v5e else 256
    tk = min(tk, s_pad)
    if s_pad % tk:
        tk = 128

    budget = 40 * (1 << 20)            # conservative under v7x's 64 MiB/TC physical VMEM
    kv_resident = (2 * 2 * num_heads * d * s_pad * 2) <= 24 * (1 << 20)

    tq = 128
    for cand in (512, 256, 128):
        if cand <= s_pad and s_pad % cand == 0 and \
           _vmem_estimate(num_heads, d, cand, tk, s_pad, kv_resident, out_bytes) <= budget:
            tq = cand
            break
    # Megacore: keep at least two (batch, q-tile) programs so both TensorCores get work.
    while B * (s_pad // tq) < 2 and tq > 128:
        tq //= 2

    grid = (B, s_pad // tq, s_pad // tk)

    est = _vmem_estimate(num_heads, d, tq, tk, s_pad, kv_resident, out_bytes)
    vmem_limit = int(min(max(est + 8 * (1 << 20), 32 * (1 << 20)), 48 * (1 << 20)))

    kernel = functools.partial(
        _flash_attn_kernel,
        scale=scale, block_k=tk, kv_resident=kv_resident,
        kv_len=(S if s_pad != S else None),
        exp_dtype=(jnp.float32 if v5e else jnp.bfloat16))

    q_spec = pl.BlockSpec((1, 1, num_heads, d, tq), lambda b, qi, ki: (b, 0, 0, 0, qi))
    if kv_resident:
        k_spec = pl.BlockSpec((1, 1, num_heads, d, s_pad), lambda b, qi, ki: (b, 1, 0, 0, 0))
        v_spec = pl.BlockSpec((1, 1, num_heads, d, s_pad), lambda b, qi, ki: (b, 2, 0, 0, 0))
    else:
        k_spec = pl.BlockSpec((1, 1, num_heads, d, tk), lambda b, qi, ki: (b, 1, 0, 0, ki))
        v_spec = pl.BlockSpec((1, 1, num_heads, d, tk), lambda b, qi, ki: (b, 2, 0, 0, ki))

    out = pl.pallas_call(
        kernel,
        out_shape=jax.ShapeDtypeStruct((B, num_heads, d, s_pad), out_dtype),
        grid_spec=pltpu.PrefetchScalarGridSpec(
            num_scalar_prefetch=0,
            grid=grid,
            in_specs=[q_spec, k_spec, v_spec],
            out_specs=pl.BlockSpec((1, num_heads, d, tq),
                                   lambda b, qi, ki: (b, 0, 0, qi)),
            scratch_shapes=[
                pltpu.VMEM((num_heads, 1, tq), jnp.float32),    # running max m
                pltpu.VMEM((num_heads, 1, tq), jnp.float32),    # running denominator l
                pltpu.VMEM((num_heads, d, tq), jnp.float32),    # running numerator acc
                pltpu.VMEM((num_heads, d, tq), jnp.bfloat16),   # scale-folded q tile
            ],
        ),
        compiler_params=pltpu.CompilerParams(
            dimension_semantics=("parallel", "parallel", "arbitrary"),
            vmem_limit_bytes=vmem_limit,
        ),
    )(qkv_r, qkv_r, qkv_r)

    out = out.reshape(B, C, s_pad)
    if s_pad != S:
        out = out[:, :, :S]
    return out.astype(in_dtype)


def reference_forward(qkv, num_heads):
    """Pure-JAX f32 reference matching QKVFlashAttention.forward."""
    B, three_c, S = qkv.shape
    C = three_c // 3
    d = C // num_heads
    qkv_r = qkv.reshape(B, 3, num_heads, d, S).astype(jnp.float32)
    q, k, v = qkv_r[:, 0], qkv_r[:, 1], qkv_r[:, 2]          # [B, H, d, S]
    s = jnp.einsum("bhdq,bhdk->bhqk", q, k) / math.sqrt(d)
    p = jax.nn.softmax(s, axis=-1)
    o = jnp.einsum("bhqk,bhdk->bhdq", p, v)                  # [B, H, d, S]
    return o.reshape(B, C, S)


if __name__ == "__main__":
    key = jax.random.PRNGKey(0)
    k1, k2 = jax.random.split(key)

    # Case 1: typical shape (head_dim must be in {16, 32, 64}); S multiple of 128.
    B, num_heads, head_dim, S = 2, 4, 32, 512
    embed_dim = num_heads * head_dim                 # 128 -> qkv has 3*128 = 384 channels
    qkv = jax.random.normal(k1, (B, 3 * embed_dim, S), jnp.float32)

    out = jax.block_until_ready(qkv_flash_attention(qkv, num_heads))
    ref = reference_forward(qkv, num_heads)
    assert out.shape == (B, embed_dim, S) and out.dtype == qkv.dtype
    err = float(jnp.max(jnp.abs(out.astype(jnp.float32) - ref)))
    if err > 5e-2:
        raise SystemExit(f"case 1 mismatch vs reference, max abs err = {err}")

    # Case 2: S not a multiple of 128 (exercises the pad + key-mask path).
    B2, H2, d2, S2 = 1, 2, 16, 200
    qkv2 = jax.random.normal(k2, (B2, 3 * H2 * d2, S2), jnp.float32)
    out2 = jax.block_until_ready(qkv_flash_attention(qkv2, H2))
    ref2 = reference_forward(qkv2, H2)
    assert out2.shape == (B2, H2 * d2, S2)
    err2 = float(jnp.max(jnp.abs(out2.astype(jnp.float32) - ref2)))
    if err2 > 5e-2:
        raise SystemExit(f"case 2 mismatch vs reference, max abs err = {err2}")

    print("KERNEL_OK")
</pallas_src>

<mosaic_0001>
module attributes {stable_mosaic.version = 11 : i64} {
  func.func @_flash_attn_kernel(%arg0: i32, %arg1: i32, %arg2: i32, %arg3: memref<1x1x4x32x512xbf16, #tpu.memory_space<vmem>>, %arg4: memref<1x1x4x32x512xbf16, #tpu.memory_space<vmem>>, %arg5: memref<1x1x4x32x512xbf16, #tpu.memory_space<vmem>>, %arg6: memref<1x4x32x512xf32, #tpu.memory_space<vmem>>, %arg7: memref<4x1x512xf32, #tpu.memory_space<vmem>>, %arg8: memref<4x1x512xf32, #tpu.memory_space<vmem>>, %arg9: memref<4x32x512xf32, #tpu.memory_space<vmem>>, %arg10: memref<4x32x512xbf16, #tpu.memory_space<vmem>>) attributes {dimension_semantics = [#tpu.dimension_semantics<parallel>, #tpu.dimension_semantics<parallel>, #tpu.dimension_semantics<arbitrary>], iteration_bounds = array<i64: 2, 1, 2>, scalar_prefetch = 0 : i64, scratch_operands = 4 : i64, tpu.core_type = #tpu.core_type<tc>, window_params = [{transform_indices = @transform_0, window_bounds = array<i64: 1, 1, 4, 32, 512>}, {transform_indices = @transform_1, window_bounds = array<i64: 1, 1, 4, 32, 512>}, {transform_indices = @transform_2, window_bounds = array<i64: 1, 1, 4, 32, 512>}, {transform_indices = @transform_3, window_bounds = array<i64: 1, 4, 32, 512>}]} {
    %c0_i32 = arith.constant 0 : i32
    %0 = arith.cmpi eq, %arg2, %c0_i32 : i32
    %1 = arith.extui %0 : i1 to i32
    %c0_i32_0 = arith.constant 0 : i32
    %2 = arith.cmpi ne, %1, %c0_i32_0 : i32
    scf.if %2 {
      %cst_33 = arith.constant 0xFF800000 : f32
      %40 = vector.broadcast %cst_33 : f32 to vector<4x1x512xf32>
      %c0_34 = arith.constant 0 : index
      %c0_35 = arith.constant 0 : index
      %c0_36 = arith.constant 0 : index
      %41 = vector.load %arg7[%c0_34, %c0_35, %c0_36] : memref<4x1x512xf32, #tpu.memory_space<vmem>>, vector<4x1x512xf32>
      tpu.vector_store %arg7[%c0_34, %c0_35, %c0_36], %40 {strides = array<i32>} : memref<4x1x512xf32, #tpu.memory_space<vmem>>, vector<4x1x512xf32>,
      %cst_37 = arith.constant 0.000000e+00 : f32
      %42 = vector.broadcast %cst_37 : f32 to vector<4x1x512xf32>
      %c0_38 = arith.constant 0 : index
      %c0_39 = arith.constant 0 : index
      %c0_40 = arith.constant 0 : index
      %43 = vector.load %arg8[%c0_38, %c0_39, %c0_40] : memref<4x1x512xf32, #tpu.memory_space<vmem>>, vector<4x1x512xf32>
      tpu.vector_store %arg8[%c0_38, %c0_39, %c0_40], %42 {strides = array<i32>} : memref<4x1x512xf32, #tpu.memory_space<vmem>>, vector<4x1x512xf32>,
      %cst_41 = arith.constant 0.000000e+00 : f32
      %44 = vector.broadcast %cst_41 : f32 to vector<4x32x512xf32>
      %c0_42 = arith.constant 0 : index
      %c0_43 = arith.constant 0 : index
      %c0_44 = arith.constant 0 : index
      %45 = vector.load %arg9[%c0_42, %c0_43, %c0_44] : memref<4x32x512xf32, #tpu.memory_space<vmem>>, vector<4x32x512xf32>
      tpu.vector_store %arg9[%c0_42, %c0_43, %c0_44], %44 {strides = array<i32>} : memref<4x32x512xf32, #tpu.memory_space<vmem>>, vector<4x32x512xf32>,
      %c0_45 = arith.constant 0 : index
      %c0_46 = arith.constant 0 : index
      %c0_47 = arith.constant 0 : index
      %c0_48 = arith.constant 0 : index
      %c0_49 = arith.constant 0 : index
      %46 = vector.load %arg3[%c0_45, %c0_46, %c0_47, %c0_48, %c0_49] : memref<1x1x4x32x512xbf16, #tpu.memory_space<vmem>>, vector<1x1x4x32x512xbf16>
      %47 = vector.shape_cast %46 : vector<1x1x4x32x512xbf16> to vector<4x32x512xbf16>
      %48 = arith.extf %47 : vector<4x32x512xbf16> to vector<4x32x512xf32>
      %cst_50 = arith.constant 0.176776692 : f32
      %49 = vector.broadcast %cst_50 : f32 to vector<4x32x512xf32>
      %50 = arith.mulf %48, %49 : vector<4x32x512xf32>
      %51 = arith.truncf %50 : vector<4x32x512xf32> to vector<4x32x512xbf16>
      %c0_51 = arith.constant 0 : index
      %c0_52 = arith.constant 0 : index
      %c0_53 = arith.constant 0 : index
      %52 = vector.load %arg10[%c0_51, %c0_52, %c0_53] : memref<4x32x512xbf16, #tpu.memory_space<vmem>>, vector<4x32x512xbf16>
      tpu.vector_store %arg10[%c0_51, %c0_52, %c0_53], %51 {strides = array<i32>} : memref<4x32x512xbf16, #tpu.memory_space<vmem>>, vector<4x32x512xbf16>,
    } else {
    }
    %c0 = arith.constant 0 : index
    %c0_1 = arith.constant 0 : index
    %c0_2 = arith.constant 0 : index
    %3 = vector.load %arg10[%c0, %c0_1, %c0_2] : memref<4x32x512xbf16, #tpu.memory_space<vmem>>, vector<4x32x512xbf16>
    %c256_i32 = arith.constant 256 : i32
    %4 = arith.muli %arg2, %c256_i32 : i32
    %5 = tpu.assume_multiple %4, 256 : i32
    %c0_3 = arith.constant 0 : index
    %c0_4 = arith.constant 0 : index
    %c0_5 = arith.constant 0 : index
    %c0_6 = arith.constant 0 : index
    %6 = arith.index_cast %5 : i32 to index
    %7 = vector.load %arg4[%c0_3, %c0_4, %c0_5, %c0_6, %6] : memref<1x1x4x32x512xbf16, #tpu.memory_space<vmem>>, vector<1x1x4x32x256xbf16>
    %8 = vector.shape_cast %7 : vector<1x1x4x32x256xbf16> to vector<4x32x256xbf16>
    %c0_7 = arith.constant 0 : index
    %c0_8 = arith.constant 0 : index
    %c0_9 = arith.constant 0 : index
    %c0_10 = arith.constant 0 : index
    %9 = arith.index_cast %5 : i32 to index
    %10 = vector.load %arg5[%c0_7, %c0_8, %c0_9, %c0_10, %9] : memref<1x1x4x32x512xbf16, #tpu.memory_space<vmem>>, vector<1x1x4x32x256xbf16>
    %11 = vector.shape_cast %10 : vector<1x1x4x32x256xbf16> to vector<4x32x256xbf16>
    %cst = arith.constant dense<0.000000e+00> : vector<4x256x512xf32>
    %12 = tpu.matmul %8, %3, %cst {dimension_numbers = #tpu.dot_dimension_numbers<[1], [1], [2], [2], [0, 0, 0, 2, 1, 2], [0], [0]>} : vector<4x32x256xbf16>, vector<4x32x512xbf16>, vector<4x256x512xf32> -> vector<4x256x512xf32>
    %c0_11 = arith.constant 0 : index
    %c0_12 = arith.constant 0 : index
    %c0_13 = arith.constant 0 : index
    %13 = vector.load %arg7[%c0_11, %c0_12, %c0_13] : memref<4x1x512xf32, #tpu.memory_space<vmem>>, vector<4x1x512xf32>
    %cst_14 = arith.constant dense<0xFF800000> : vector<4x512xf32>
    %14 = vector.multi_reduction <maximumf>, %12, %cst_14 [1] : vector<4x256x512xf32> to vector<4x512xf32>
    %15 = vector.shape_cast %14 : vector<4x512xf32> to vector<4x1x512xf32>
    %16 = arith.maximumf %13, %15 : vector<4x1x512xf32>
    %17 = arith.subf %13, %16 : vector<4x1x512xf32>
    %18 = math.exp %17 : vector<4x1x512xf32>
    %19 = vector.broadcast %16 : vector<4x1x512xf32> to vector<4x256x512xf32>
    %20 = arith.subf %12, %19 : vector<4x256x512xf32>
    %21 = arith.truncf %20 : vector<4x256x512xf32> to vector<4x256x512xbf16>
    %22 = math.exp %21 : vector<4x256x512xbf16>
    %c0_15 = arith.constant 0 : index
    %c0_16 = arith.constant 0 : index
    %c0_17 = arith.constant 0 : index
    %23 = vector.load %arg8[%c0_15, %c0_16, %c0_17] : memref<4x1x512xf32, #tpu.memory_space<vmem>>, vector<4x1x512xf32>
    %24 = arith.mulf %18, %23 : vector<4x1x512xf32>
    %25 = arith.extf %22 : vector<4x256x512xbf16> to vector<4x256x512xf32>
    %cst_18 = arith.constant dense<0.000000e+00> : vector<4x512xf32>
    %26 = vector.multi_reduction <add>, %25, %cst_18 [1] : vector<4x256x512xf32> to vector<4x512xf32>
    %27 = vector.shape_cast %26 : vector<4x512xf32> to vector<4x1x512xf32>
    %28 = arith.addf %24, %27 : vector<4x1x512xf32>
    %c0_19 = arith.constant 0 : index
    %c0_20 = arith.constant 0 : index
    %c0_21 = arith.constant 0 : index
    %29 = vector.load %arg8[%c0_19, %c0_20, %c0_21] : memref<4x1x512xf32, #tpu.memory_space<vmem>>, vector<4x1x512xf32>
    tpu.vector_store %arg8[%c0_19, %c0_20, %c0_21], %28 {strides = array<i32>} : memref<4x1x512xf32, #tpu.memory_space<vmem>>, vector<4x1x512xf32>,
    %cst_22 = arith.constant dense<0.000000e+00> : vector<4x32x512xf32>
    %30 = tpu.matmul %11, %22, %cst_22 {dimension_numbers = #tpu.dot_dimension_numbers<[2], [1], [1], [2], [0, 0, 0, 1, 1, 2], [0], [0]>} : vector<4x32x256xbf16>, vector<4x256x512xbf16>, vector<4x32x512xf32> -> vector<4x32x512xf32>
    %c0_23 = arith.constant 0 : index
    %c0_24 = arith.constant 0 : index
    %c0_25 = arith.constant 0 : index
    %31 = vector.load %arg9[%c0_23, %c0_24, %c0_25] : memref<4x32x512xf32, #tpu.memory_space<vmem>>, vector<4x32x512xf32>
    %32 = vector.broadcast %18 : vector<4x1x512xf32> to vector<4x32x512xf32>
    %33 = arith.mulf %32, %31 : vector<4x32x512xf32>
    %34 = arith.addf %33, %30 : vector<4x32x512xf32>
    %c0_26 = arith.constant 0 : index
    %c0_27 = arith.constant 0 : index
    %c0_28 = arith.constant 0 : index
    %35 = vector.load %arg9[%c0_26, %c0_27, %c0_28] : memref<4x32x512xf32, #tpu.memory_space<vmem>>, vector<4x32x512xf32>
    tpu.vector_store %arg9[%c0_26, %c0_27, %c0_28], %34 {strides = array<i32>} : memref<4x32x512xf32, #tpu.memory_space<vmem>>, vector<4x32x512xf32>,
    %c0_29 = arith.constant 0 : index
    %c0_30 = arith.constant 0 : index
    %c0_31 = arith.constant 0 : index
    %36 = vector.load %arg7[%c0_29, %c0_30, %c0_31] : memref<4x1x512xf32, #tpu.memory_space<vmem>>, vector<4x1x512xf32>
    tpu.vector_store %arg7[%c0_29, %c0_30, %c0_31], %16 {strides = array<i32>} : memref<4x1x512xf32, #tpu.memory_space<vmem>>, vector<4x1x512xf32>,
    %c1_i32 = arith.constant 1 : i32
    %37 = arith.cmpi eq, %arg2, %c1_i32 : i32
    %38 = arith.extui %37 : i1 to i32
    %c0_i32_32 = arith.constant 0 : i32
    %39 = arith.cmpi ne, %38, %c0_i32_32 : i32
    scf.if %39 {
      %c0_33 = arith.constant 0 : index
      %c0_34 = arith.constant 0 : index
      %c0_35 = arith.constant 0 : index
      %40 = vector.load %arg9[%c0_33, %c0_34, %c0_35] : memref<4x32x512xf32, #tpu.memory_space<vmem>>, vector<4x32x512xf32>
      %c0_36 = arith.constant 0 : index
      %c0_37 = arith.constant 0 : index
      %c0_38 = arith.constant 0 : index
      %41 = vector.load %arg8[%c0_36, %c0_37, %c0_38] : memref<4x1x512xf32, #tpu.memory_space<vmem>>, vector<4x1x512xf32>
      %42 = tpu.reciprocal %41 {approx = true} : vector<4x1x512xf32> -> vector<4x1x512xf32>
      %43 = vector.broadcast %42 : vector<4x1x512xf32> to vector<4x32x512xf32>
      %44 = arith.mulf %40, %43 : vector<4x32x512xf32>
      %c0_39 = arith.constant 0 : index
      %c0_40 = arith.constant 0 : index
      %c0_41 = arith.constant 0 : index
      %c0_42 = arith.constant 0 : index
      %45 = vector.load %arg6[%c0_39, %c0_40, %c0_41, %c0_42] : memref<1x4x32x512xf32, #tpu.memory_space<vmem>>, vector<1x4x32x512xf32>
      %46 = vector.shape_cast %45 : vector<1x4x32x512xf32> to vector<4x32x512xf32>
      %47 = vector.shape_cast %44 : vector<4x32x512xf32> to vector<1x4x32x512xf32>
      tpu.vector_store %arg6[%c0_39, %c0_40, %c0_41, %c0_42], %47 {strides = array<i32>} : memref<1x4x32x512xf32, #tpu.memory_space<vmem>>, vector<1x4x32x512xf32>,
    } else {
    }
    return
  }
  func.func @transform_0(%arg0: i32, %arg1: i32, %arg2: i32) -> (i32, i32, i32, i32, i32) {
    %c0_i32 = arith.constant 0 : i32
    %c0_i32_0 = arith.constant 0 : i32
    %c0_i32_1 = arith.constant 0 : i32
    %c0_i32_2 = arith.constant 0 : i32
    return %arg0, %c0_i32, %c0_i32_0, %c0_i32_1, %arg1 : i32, i32, i32, i32, i32
  }
  func.func @transform_1(%arg0: i32, %arg1: i32, %arg2: i32) -> (i32, i32, i32, i32, i32) {
    %c1_i32 = arith.constant 1 : i32
    %c0_i32 = arith.constant 0 : i32
    %c0_i32_0 = arith.constant 0 : i32
    %c0_i32_1 = arith.constant 0 : i32
    %c0_i32_2 = arith.constant 0 : i32
    return %arg0, %c1_i32, %c0_i32, %c0_i32_0, %c0_i32_1 : i32, i32, i32, i32, i32
  }
  func.func @transform_2(%arg0: i32, %arg1: i32, %arg2: i32) -> (i32, i32, i32, i32, i32) {
    %c2_i32 = arith.constant 2 : i32
    %c0_i32 = arith.constant 0 : i32
    %c0_i32_0 = arith.constant 0 : i32
    %c0_i32_1 = arith.constant 0 : i32
    %c0_i32_2 = arith.constant 0 : i32
    return %arg0, %c2_i32, %c0_i32, %c0_i32_0, %c0_i32_1 : i32, i32, i32, i32, i32
  }
  func.func @transform_3(%arg0: i32, %arg1: i32, %arg2: i32) -> (i32, i32, i32, i32) {
    %c0_i32 = arith.constant 0 : i32
    %c0_i32_0 = arith.constant 0 : i32
    %c0_i32_1 = arith.constant 0 : i32
    return %arg0, %c0_i32, %c0_i32_0, %arg1 : i32, i32, i32, i32
  }
}

</mosaic_0001>

<llo_original>
// kernel: tpu_custom_call.1
$region0: #{tpu_custom_call.1}
  #allocation0 [shape = 'u32[]', space=smem, size = 0x4, offset = 0x4, fixed_abs, tag = 'smem constant byte address 0x4 - core index']
  #allocation1 [shape = 'u32[72,128]{1,0:T(1,128)}', space=vmem, size = 0x9000, scoped, tag = 'internal scratch']
  #allocation2 [shape = 'f32[4,1,512]{2,1,0:T(1,128)}', space=vmem, size = 0x2000, scoped, tag = 'scratch operand']
  #allocation3 [shape = 'f32[4,1,512]{2,1,0:T(1,128)}', space=vmem, size = 0x2000, scoped, tag = 'scratch operand']
  #allocation4 [shape = 'f32[4,32,512]{2,1,0:T(8,128)}', space=vmem, size = 0x40000, scoped, tag = 'scratch operand']
  #allocation5 [shape = 'bf16[4,32,512]{2,1,0:T(8,128)(2,1)}', space=vmem, size = 0x20000, scoped, tag = 'scratch operand']
  %s0 = inlined_call_operand.hbm [shape: bf16[2,3,4,32,512], index: 0, kind: input, shape index: {}]
  %s1 = inlined_call_operand.hbm [shape: bf16[2,3,4,32,512], index: 1, kind: input, shape index: {}]
  %s2 = inlined_call_operand.hbm [shape: bf16[2,3,4,32,512], index: 2, kind: input, shape index: {}]
  %s3 = inlined_call_operand.hbm [shape: f32[2,4,32,512], index: 3, kind: output, shape index: {}]
  %s4 = sld [smem:[#allocation0]]
  $region65: #{tpu_custom_call.1} parent=0
    _
  %s6 = ssub.s32 1, %s4
  %s7 = scalar_select 0, %s6, %s4
  $region1: #{tpu_custom_call.1} parent=0
    #allocation6 [shape = 'u8[262144]{0}', space=vmem, size = 0x40000, scoped, tag = 'input window, operand 0']
    #allocation7 [shape = 's32[2]{0}', space=sflag, size = 0x8, scoped, tag = 'scoped memory for tpu_custom_call.1']
    #allocation8 [shape = 's32[2]{0}', space=sflag, size = 0x8, scoped, tag = 'scoped memory for tpu_custom_call.1']
    #allocation9 [shape = 'u8[262144]{0}', space=vmem, size = 0x40000, scoped, tag = 'input window, operand 1']
    #allocation10 [shape = 's32[2]{0}', space=sflag, size = 0x8, scoped, tag = 'scoped memory for tpu_custom_call.1']
    #allocation11 [shape = 'u8[262144]{0}', space=vmem, size = 0x40000, scoped, tag = 'input window, operand 2']
    #allocation12 [shape = 'u8[524288]{0}', space=vmem, size = 0x80000, scoped, tag = 'output window, operand 0']
    %8 = vsyncpa [#allocation7], 0
    %s9 = scalar_lea.sflag [#allocation7], 1
    %10 = vsyncpa %s9, 0
    %11 = vsyncpa [#allocation10], 0
    %s12 = scalar_lea.sflag [#allocation10], 1
    %13 = vsyncpa %s12, 0
    %14 = vsyncpa [#allocation8], 0
    %s15 = scalar_lea.sflag [#allocation8], 1
    %16 = vsyncpa %s15, 0
    loop: start=0, step=1, limit=6
    $region2: #{tpu_custom_call.1} parent=1 // loop_pre_header
      _
    $region3: #{tpu_custom_call.1} parent=1 // loop_header
      %s18 = sphi 0, %s22
      %p19 = scmp.ge.s32.totalorder %s18, 6
      %s25 = sphi 0, %s44
      %s26 = sphi 0, %s40
      %s27 = sphi 0, %s36
      %s28 = sphi 0, %s25
      %s29 = sphi 0, %s26
      %s30 = sphi 0, %s27
      %s31 = sphi 0, %s28
      %s32 = sphi 0, %s29
      %s33 = sphi 0, %s30
      %s49 = sphi 0, %s51
      %s52 = sphi 0, %s49
      %s53 = sphi 0, %s52
      %s69 = sphi 0, %s53
      %s75 = sphi 0, %s77
      %s78 = sphi 0, %s75
      %s79 = sphi 0, %s78
      %s95 = sphi 0, %s79
      %s101 = sphi 0, %s103
      %s104 = sphi 0, %s101
      %s105 = sphi 0, %s104
      %s121 = sphi 0, %s105
      %s129 = sphi 0, %s131
      %s132 = sphi 0, %s129
      %s133 = sphi 0, %s132
      %s149 = sphi 0, %s133
    $region4: #{tpu_custom_call.1} parent=1 // loop_header_branch
      %21 = sbr.rel (%p19) target = $region8
    $region5: #{tpu_custom_call.1} parent=1 // loop_body
      %s23 = ssub.s32 %s18, 1
      %s24 = ssub.s32 %s18, 2
      %s34 = sadd.s32 1, %s27
      %p35 = scmp.ge.s32.totalorder %s34, 2
      %s36 = scalar_select %p35, 0, %s34
      %s37 = sadd.s32 1, %s26
      %s38 = scalar_select %p35, %s37, %s26
      %p39 = scmp.ge.s32.totalorder %s38, 1
      %s40 = scalar_select %p39, 0, %s38
      %s41 = sadd.s32 1, %s25
      %s42 = scalar_select %p39, %s41, %s25
      %p43 = scmp.ge.s32.totalorder %s42, 2
      %s44 = scalar_select %p43, 0, %s42
      %s45 = ssub.s32 %s25, %s44
      %s46 = ssub.s32 %s26, %s40
      %s47 = sor.u32 %s45, %s46
      %p48 = scmp.eq.s32.totalorder %s47, 0
      %s50 = sadd.s32 %s49, 1
      %s51 = scalar_select %p48, %s49, %s50
      %p54 = pneg %p48
      %p55 = scmp.eq.s32.totalorder %s18, 3
      %p56 = por %p54, %p55
      %p57 = scmp.ne.s32.totalorder %s49, %s52
      %p58 = scmp.eq.s32.totalorder %s18, 0
      %p59 = por %p57, %p58
      %p60 = scmp.ne.s32.totalorder %s49, %s52
      %p61 = scmp.eq.s32.totalorder %s23, 3
      %p62 = por %p60, %p61
      %p63 = scmp.ne.s32.totalorder %s52, %s53
      %p64 = scmp.eq.s32.totalorder %s23, 0
      %p65 = por %p63, %p64
      %p66 = scmp.ne.s32.totalorder %s52, %s53
      %p67 = scmp.eq.s32.totalorder %s24, 3
      %p68 = por %p66, %p67
      %p70 = scmp.ne.s32.totalorder %s53, %s69
      %p71 = scmp.eq.s32.totalorder %s24, 0
      %p72 = por %p70, %p71
      %s73 = ssub.s32 %s25, %s44
      %p74 = scmp.eq.s32.totalorder %s73, 0
      %s76 = sadd.s32 %s75, 1
      %s77 = scalar_select %p74, %s75, %s76
      %p80 = pneg %p74
      %p81 = scmp.eq.s32.totalorder %s18, 3
      %p82 = por %p80, %p81
      %p83 = scmp.ne.s32.totalorder %s75, %s78
      %p84 = scmp.eq.s32.totalorder %s18, 0
      %p85 = por %p83, %p84
      %p86 = scmp.ne.s32.totalorder %s75, %s78
      %p87 = scmp.eq.s32.totalorder %s23, 3
      %p88 = por %p86, %p87
      %p89 = scmp.ne.s32.totalorder %s78, %s79
      %p90 = scmp.eq.s32.totalorder %s23, 0
      %p91 = por %p89, %p90
      %p92 = scmp.ne.s32.totalorder %s78, %s79
      %p93 = scmp.eq.s32.totalorder %s24, 3
      %p94 = por %p92, %p93
      %p96 = scmp.ne.s32.totalorder %s79, %s95
      %p97 = scmp.eq.s32.totalorder %s24, 0
      %p98 = por %p96, %p97
      %s99 = ssub.s32 %s25, %s44
      %p100 = scmp.eq.s32.totalorder %s99, 0
      %s102 = sadd.s32 %s101, 1
      %s103 = scalar_select %p100, %s101, %s102
      %p106 = pneg %p100
      %p107 = scmp.eq.s32.totalorder %s18, 3
      %p108 = por %p106, %p107
      %p109 = scmp.ne.s32.totalorder %s101, %s104
      %p110 = scmp.eq.s32.totalorder %s18, 0
      %p111 = por %p109, %p110
      %p112 = scmp.ne.s32.totalorder %s101, %s104
      %p113 = scmp.eq.s32.totalorder %s23, 3
      %p114 = por %p112, %p113
      %p115 = scmp.ne.s32.totalorder %s104, %s105
      %p116 = scmp.eq.s32.totalorder %s23, 0
      %p117 = por %p115, %p116
      %p118 = scmp.ne.s32.totalorder %s104, %s105
      %p119 = scmp.eq.s32.totalorder %s24, 3
      %p120 = por %p118, %p119
      %p122 = scmp.ne.s32.totalorder %s105, %s121
      %p123 = scmp.eq.s32.totalorder %s24, 0
      %p124 = por %p122, %p123
      %s125 = ssub.s32 %s25, %s44
      %s126 = ssub.s32 %s26, %s40
      %s127 = sor.u32 %s125, %s126
      %p128 = scmp.eq.s32.totalorder %s127, 0
      %s130 = sadd.s32 %s129, 1
      %s131 = scalar_select %p128, %s129, %s130
      %p134 = pneg %p128
      %p135 = scmp.eq.s32.totalorder %s18, 3
      %p136 = por %p134, %p135
      %p137 = scmp.ne.s32.totalorder %s129, %s132
      %p138 = scmp.eq.s32.totalorder %s18, 0
      %p139 = por %p137, %p138
      %p140 = scmp.ne.s32.totalorder %s129, %s132
      %p141 = scmp.eq.s32.totalorder %s23, 3
      %p142 = por %p140, %p141
      %p143 = scmp.ne.s32.totalorder %s132, %s133
      %p144 = scmp.eq.s32.totalorder %s23, 0
      %p145 = por %p143, %p144
      %p146 = scmp.ne.s32.totalorder %s132, %s133
      %p147 = scmp.eq.s32.totalorder %s24, 3
      %p148 = por %p146, %p147
      %p150 = scmp.ne.s32.totalorder %s133, %s149
      %p151 = scmp.eq.s32.totalorder %s24, 0
      %p152 = por %p150, %p151
      %p153 = scmp.le.s32.totalorder 1, %s18
      %p154 = scmp.lt.s32.totalorder %s18, 5
      %p155 = pnand %p153, %p154
      %p156 = pneg %p155
      // Predicated region
      $region9: #{tpu_custom_call.1} parent=5 // pred_check
        _
      $region10: #{tpu_custom_call.1} parent=5 // pred_check_branch
        %158 = sbr.rel (%p155) target = $region12
      $region11: #{tpu_custom_call.1} parent=5 // pred_region
        %s159 = ssub.s32 %s18, 1
      $region12: #{tpu_custom_call.1} parent=5 // pred_fallthru
        _
      %p160 = scmp.lt.s32.totalorder %s18, 4
      // Predicated region
      $region13: #{tpu_custom_call.1} parent=5 // pred_check
        %p161 = pneg %p160
      $region14: #{tpu_custom_call.1} parent=5 // pred_check_branch
        %163 = sbr.rel (%p161) target = $region16
      $region15: #{tpu_custom_call.1} parent=5 // pred_region
        // Predicated region
        $region17: #{tpu_custom_call.1} parent=15 // pred_check
          %p164 = pneg %p59
        $region18: #{tpu_custom_call.1} parent=15 // pred_check_branch
          %166 = sbr.rel (%p164) target = $region20
        $region19: #{tpu_custom_call.1} parent=15 // pred_region
          %s167 = sand.u32 %s49, 1
          %s168 = scalar_lea.sflag [#allocation7], %s167
          %s169 = sand.u32 %s49, 1
          %s170 = smul.addr %s169, 256
          %s171 = scalar_lea.vmem [#allocation6], %s170
          %s172 = smul.u32 4, %s26
          %174 = vsyncadd %s168, 0
          %s175 = smul.addr %s25, 192
          %s176 = sadd.s32 %s172, %s175
          %s177 = smul.addr %s176, 4
          %s178 = scalar_lea.hbm %s0, %s177
          %s179 = sshll.u32 %s178, 4
          %s180 = int_to_ptr.hbm [resolvable:$true] %s179
          %s181 = sshll.u32 %s171, 4
          %s182 = int_to_ptr.vmem [resolvable:$true] %s181
          %187 = dma.hbm_to_vmem [thread:$0]  %s180, 4096, %s182, %s168, 256, 256, 16
        $region20: #{tpu_custom_call.1} parent=15 // pred_fallthru
          _
        // Predicated region
        $region21: #{tpu_custom_call.1} parent=15 // pred_check
          %p188 = pneg %p85
        $region22: #{tpu_custom_call.1} parent=15 // pred_check_branch
          %190 = sbr.rel (%p188) target = $region24
        $region23: #{tpu_custom_call.1} parent=15 // pred_region
          %s191 = sand.u32 %s18, 1
          %s192 = scalar_lea.sflag [#allocation10], %s191
          %s193 = sand.u32 %s75, 1
          %s194 = smul.addr %s193, 256
          %s195 = scalar_lea.vmem [#allocation9], %s194
          %197 = vsyncadd %s192, 0
          %s198 = smul.addr %s25, 192
          %s199 = sadd.s32 64, %s198
          %s200 = smul.addr %s199, 4
          %s201 = scalar_lea.hbm %s1, %s200
          %s202 = sshll.u32 %s201, 4
          %s203 = int_to_ptr.hbm [resolvable:$true] %s202
          %s204 = sshll.u32 %s195, 4
          %s205 = int_to_ptr.vmem [resolvable:$true] %s204
          %210 = dma.hbm_to_vmem [thread:$0]  %s203, 4096, %s205, %s192, 256, 256, 16
        $region24: #{tpu_custom_call.1} parent=15 // pred_fallthru
          _
        // Predicated region
        $region25: #{tpu_custom_call.1} parent=15 // pred_check
          %p211 = pneg %p111
        $region26: #{tpu_custom_call.1} parent=15 // pred_check_branch
          %213 = sbr.rel (%p211) target = $region28
        $region27: #{tpu_custom_call.1} parent=15 // pred_region
          %s214 = sand.u32 %s18, 1
          %s215 = scalar_lea.sflag [#allocation10], %s214
          %s216 = sand.u32 %s101, 1
          %s217 = smul.addr %s216, 256
          %s218 = scalar_lea.vmem [#allocation11], %s217
          %220 = vsyncadd %s215, 0
          %s221 = smul.addr %s25, 192
          %s222 = sadd.s32 128, %s221
          %s223 = smul.addr %s222, 4
          %s224 = scalar_lea.hbm %s2, %s223
          %s225 = sshll.u32 %s224, 4
          %s226 = int_to_ptr.hbm [resolvable:$true] %s225
          %s227 = sshll.u32 %s218, 4
          %s228 = int_to_ptr.vmem [resolvable:$true] %s227
          %233 = dma.hbm_to_vmem [thread:$0]  %s226, 4096, %s228, %s215, 256, 256, 16
        $region28: #{tpu_custom_call.1} parent=15 // pred_fallthru
          _
      $region16: #{tpu_custom_call.1} parent=5 // pred_fallthru
        _
      %p234 = scmp.le.s32.totalorder 1, %s18
      %p235 = scmp.lt.s32.totalorder %s18, 5
      %p236 = pnand %p234, %p235
      %p237 = pneg %p236
      // Predicated region
      $region29: #{tpu_custom_call.1} parent=5 // pred_check
        _
      $region30: #{tpu_custom_call.1} parent=5 // pred_check_branch
        %239 = sbr.rel (%p236) target = $region32
      $region31: #{tpu_custom_call.1} parent=5 // pred_region
        %s240 = ssub.s32 %s18, 1
        %s241 = sand.u32 %s52, 1
        %s242 = scalar_lea.sflag [#allocation7], %s241
        %s243 = sand.u32 %s52, 1
        %s244 = smul.addr %s243, 256
        %s245 = scalar_lea.vmem [#allocation6], %s244
        // Predicated region
        $region33: #{tpu_custom_call.1} parent=31 // pred_check
          %p246 = pneg %p65
        $region34: #{tpu_custom_call.1} parent=31 // pred_check_branch
          %248 = sbr.rel (%p246) target = $region36
        $region35: #{tpu_custom_call.1} parent=31 // pred_region
          %250 = dma.done %s242, 4096
        $region36: #{tpu_custom_call.1} parent=31 // pred_fallthru
          _
        %s251 = sand.u32 %s23, 1
        %s252 = scalar_lea.sflag [#allocation10], %s251
        %s253 = sand.u32 %s78, 1
        %s254 = smul.addr %s253, 256
        %s255 = scalar_lea.vmem [#allocation9], %s254
        // Predicated region
        $region37: #{tpu_custom_call.1} parent=31 // pred_check
          %p256 = pneg %p91
        $region38: #{tpu_custom_call.1} parent=31 // pred_check_branch
          %258 = sbr.rel (%p256) target = $region40
        $region39: #{tpu_custom_call.1} parent=31 // pred_region
          %260 = dma.done %s252, 4096
        $region40: #{tpu_custom_call.1} parent=31 // pred_fallthru
          _
        %s261 = sand.u32 %s23, 1
        %s262 = scalar_lea.sflag [#allocation10], %s261
        %s263 = sand.u32 %s104, 1
        %s264 = smul.addr %s263, 256
        %s265 = scalar_lea.vmem [#allocation11], %s264
        // Predicated region
        $region41: #{tpu_custom_call.1} parent=31 // pred_check
          %p266 = pneg %p117
        $region42: #{tpu_custom_call.1} parent=31 // pred_check_branch
          %268 = sbr.rel (%p266) target = $region44
        $region43: #{tpu_custom_call.1} parent=31 // pred_region
          %270 = dma.done %s262, 4096
        $region44: #{tpu_custom_call.1} parent=31 // pred_fallthru
          _
        %s271 = sand.u32 %s52, 1
        %s272 = scalar_lea.sflag [#allocation7], %s271
        %s273 = sand.u32 %s52, 1
        %s274 = smul.addr %s273, 256
        %s275 = scalar_lea.vmem [#allocation6], %s274
        %p276 = pneg %p65
        %p277 = pneg %p62
        %s278 = sand.u32 %s23, 1
        %s279 = scalar_lea.sflag [#allocation10], %s278
        %s280 = sand.u32 %s78, 1
        %s281 = smul.addr %s280, 256
        %s282 = scalar_lea.vmem [#allocation9], %s281
        %p283 = pneg %p91
        %p284 = pneg %p88
        %s285 = sand.u32 %s23, 1
        %s286 = scalar_lea.sflag [#allocation10], %s285
        %s287 = sand.u32 %s104, 1
        %s288 = smul.addr %s287, 256
        %s289 = scalar_lea.vmem [#allocation11], %s288
        %p290 = pneg %p117
        %p291 = pneg %p114
        %p292 = pneg %p145
        %p293 = pneg %p142
        %s294 = sand.u32 %s132, 1
        %s295 = scalar_lea.sflag [#allocation8], %s294
        %s296 = sand.u32 %s132, 1
        %s297 = smul.addr %s296, 512
        %s298 = scalar_lea.vmem [#allocation12], %s297
        %s299 = smul.u32 4, %s29
        %s300 = smul.u32 4, %s29
        %p302 = scmp.eq.s32.totalorder %s30, 0
        // Predicated region
        $region45: #{tpu_custom_call.1} parent=31 // pred_check
          %p303 = pneg %p302
        $region46: #{tpu_custom_call.1} parent=31 // pred_check_branch
          %305 = sbr.rel (%p303) target = $region48
        $region47: #{tpu_custom_call.1} parent=31 // pred_region
          %v306 = vlaneseq
          %vm307 = vcmp.ge.s32.totalorder %v306, 0
          %vm308 = vcmp.lt.s32.totalorder %v306, 512
          %vm309 = vmand %vm307, %vm308
          %310 = vst.msk [vmem:[#allocation2] sm:$0xf] %vm309, -inf
          %311 = vst.msk [vmem:[#allocation2 + $0x4] sm:$0xf] %vm309, -inf
          %312 = vst.msk [vmem:[#allocation2 + $0x8] sm:$0xf] %vm309, -inf
          %313 = vst.msk [vmem:[#allocation2 + $0xc] sm:$0xf] %vm309, -inf
          %314 = vst.msk [vmem:[#allocation3] sm:$0xf] %vm309, 0.0
          %315 = vst.msk [vmem:[#allocation3 + $0x4] sm:$0xf] %vm309, 0.0
          %316 = vst.msk [vmem:[#allocation3 + $0x8] sm:$0xf] %vm309, 0.0
          %317 = vst.msk [vmem:[#allocation3 + $0xc] sm:$0xf] %vm309, 0.0
          %318 = vst [vmem:[#allocation4] sm:$0xff] 0.0
          %319 = vst [vmem:[#allocation4 + $0x8] sm:$0xff] 0.0
          %320 = vst [vmem:[#allocation4 + $0x10] sm:$0xff] 0.0
          %321 = vst [vmem:[#allocation4 + $0x18] sm:$0xff] 0.0
          %322 = vst [vmem:[#allocation4 + $0x20] sm:$0xff] 0.0
          %323 = vst [vmem:[#allocation4 + $0x28] sm:$0xff] 0.0
          %324 = vst [vmem:[#allocation4 + $0x30] sm:$0xff] 0.0
          %325 = vst [vmem:[#allocation4 + $0x38] sm:$0xff] 0.0
          %326 = vst [vmem:[#allocation4 + $0x40] sm:$0xff] 0.0
          %327 = vst [vmem:[#allocation4 + $0x48] sm:$0xff] 0.0
          %328 = vst [vmem:[#allocation4 + $0x50] sm:$0xff] 0.0
          %329 = vst [vmem:[#allocation4 + $0x58] sm:$0xff] 0.0
          %330 = vst [vmem:[#allocation4 + $0x60] sm:$0xff] 0.0
          %331 = vst [vmem:[#allocation4 + $0x68] sm:$0xff] 0.0
          %332 = vst [vmem:[#allocation4 + $0x70] sm:$0xff] 0.0
          %333 = vst [vmem:[#allocation4 + $0x78] sm:$0xff] 0.0
          %334 = vst [vmem:[#allocation4 + $0x80] sm:$0xff] 0.0
          %335 = vst [vmem:[#allocation4 + $0x88] sm:$0xff] 0.0
          %336 = vst [vmem:[#allocation4 + $0x90] sm:$0xff] 0.0
          %337 = vst [vmem:[#allocation4 + $0x98] sm:$0xff] 0.0
          %338 = vst [vmem:[#allocation4 + $0xa0] sm:$0xff] 0.0
          %339 = vst [vmem:[#allocation4 + $0xa8] sm:$0xff] 0.0
          %340 = vst [vmem:[#allocation4 + $0xb0] sm:$0xff] 0.0
          %341 = vst [vmem:[#allocation4 + $0xb8] sm:$0xff] 0.0
          %342 = vst [vmem:[#allocation4 + $0xc0] sm:$0xff] 0.0
          %343 = vst [vmem:[#allocation4 + $0xc8] sm:$0xff] 0.0
          %344 = vst [vmem:[#allocation4 + $0xd0] sm:$0xff] 0.0
          %345 = vst [vmem:[#allocation4 + $0xd8] sm:$0xff] 0.0
          %346 = vst [vmem:[#allocation4 + $0xe0] sm:$0xff] 0.0
          %347 = vst [vmem:[#allocation4 + $0xe8] sm:$0xff] 0.0
          %348 = vst [vmem:[#allocation4 + $0xf0] sm:$0xff] 0.0
          %349 = vst [vmem:[#allocation4 + $0xf8] sm:$0xff] 0.0
          %350 = vst [vmem:[#allocation4 + $0x100] sm:$0xff] 0.0
          %351 = vst [vmem:[#allocation4 + $0x108] sm:$0xff] 0.0
          %352 = vst [vmem:[#allocation4 + $0x110] sm:$0xff] 0.0
          %353 = vst [vmem:[#allocation4 + $0x118] sm:$0xff] 0.0
          %354 = vst [vmem:[#allocation4 + $0x120] sm:$0xff] 0.0
          %355 = vst [vmem:[#allocation4 + $0x128] sm:$0xff] 0.0
          %356 = vst [vmem:[#allocation4 + $0x130] sm:$0xff] 0.0
          %357 = vst [vmem:[#allocation4 + $0x138] sm:$0xff] 0.0
          %358 = vst [vmem:[#allocation4 + $0x140] sm:$0xff] 0.0
          %359 = vst [vmem:[#allocation4 + $0x148] sm:$0xff] 0.0
          %360 = vst [vmem:[#allocation4 + $0x150] sm:$0xff] 0.0
          %361 = vst [vmem:[#allocation4 + $0x158] sm:$0xff] 0.0
          %362 = vst [vmem:[#allocation4 + $0x160] sm:$0xff] 0.0
          %363 = vst [vmem:[#allocation4 + $0x168] sm:$0xff] 0.0
          %364 = vst [vmem:[#allocation4 + $0x170] sm:$0xff] 0.0
          %365 = vst [vmem:[#allocation4 + $0x178] sm:$0xff] 0.0
          %366 = vst [vmem:[#allocation4 + $0x180] sm:$0xff] 0.0
          %367 = vst [vmem:[#allocation4 + $0x188] sm:$0xff] 0.0
          %368 = vst [vmem:[#allocation4 + $0x190] sm:$0xff] 0.0
          %369 = vst [vmem:[#allocation4 + $0x198] sm:$0xff] 0.0
          %370 = vst [vmem:[#allocation4 + $0x1a0] sm:$0xff] 0.0
          %371 = vst [vmem:[#allocation4 + $0x1a8] sm:$0xff] 0.0
          %372 = vst [vmem:[#allocation4 + $0x1b0] sm:$0xff] 0.0
          %373 = vst [vmem:[#allocation4 + $0x1b8] sm:$0xff] 0.0
          %374 = vst [vmem:[#allocation4 + $0x1c0] sm:$0xff] 0.0
          %375 = vst [vmem:[#allocation4 + $0x1c8] sm:$0xff] 0.0
          %376 = vst [vmem:[#allocation4 + $0x1d0] sm:$0xff] 0.0
          %377 = vst [vmem:[#allocation4 + $0x1d8] sm:$0xff] 0.0
          %378 = vst [vmem:[#allocation4 + $0x1e0] sm:$0xff] 0.0
          %379 = vst [vmem:[#allocation4 + $0x1e8] sm:$0xff] 0.0
          %380 = vst [vmem:[#allocation4 + $0x1f0] sm:$0xff] 0.0
          %381 = vst [vmem:[#allocation4 + $0x1f8] sm:$0xff] 0.0
          %v382 = vld [vmem:[%s245] sm:$0xff]
          %v383 = vld [vmem:[%s245 + $0x8] sm:$0xff]
          %v384 = vld [vmem:[%s245 + $0x10] sm:$0xff]
          %v385 = vld [vmem:[%s245 + $0x18] sm:$0xff]
          %v386 = vld [vmem:[%s245 + $0x20] sm:$0xff]
          %v387 = vld [vmem:[%s245 + $0x28] sm:$0xff]
          %v388 = vld [vmem:[%s245 + $0x30] sm:$0xff]
          %v389 = vld [vmem:[%s245 + $0x38] sm:$0xff]
          %v390 = vld [vmem:[%s245 + $0x40] sm:$0xff]
          %v391 = vld [vmem:[%s245 + $0x48] sm:$0xff]
          %v392 = vld [vmem:[%s245 + $0x50] sm:$0xff]
          %v393 = vld [vmem:[%s245 + $0x58] sm:$0xff]
          %v394 = vld [vmem:[%s245 + $0x60] sm:$0xff]
          %v395 = vld [vmem:[%s245 + $0x68] sm:$0xff]
          %v396 = vld [vmem:[%s245 + $0x70] sm:$0xff]
          %v397 = vld [vmem:[%s245 + $0x78] sm:$0xff]
          %v398 = vld [vmem:[%s245 + $0x80] sm:$0xff]
          %v399 = vld [vmem:[%s245 + $0x88] sm:$0xff]
          %v400 = vld [vmem:[%s245 + $0x90] sm:$0xff]
          %v401 = vld [vmem:[%s245 + $0x98] sm:$0xff]
          %v402 = vld [vmem:[%s245 + $0xa0] sm:$0xff]
          %v403 = vld [vmem:[%s245 + $0xa8] sm:$0xff]
          %v404 = vld [vmem:[%s245 + $0xb0] sm:$0xff]
          %v405 = vld [vmem:[%s245 + $0xb8] sm:$0xff]
          %v406 = vld [vmem:[%s245 + $0xc0] sm:$0xff]
          %v407 = vld [vmem:[%s245 + $0xc8] sm:$0xff]
          %v408 = vld [vmem:[%s245 + $0xd0] sm:$0xff]
          %v409 = vld [vmem:[%s245 + $0xd8] sm:$0xff]
          %v410 = vld [vmem:[%s245 + $0xe0] sm:$0xff]
          %v411 = vld [vmem:[%s245 + $0xe8] sm:$0xff]
          %v412 = vld [vmem:[%s245 + $0xf0] sm:$0xff]
          %v413 = vld [vmem:[%s245 + $0xf8] sm:$0xff]
          %v414 = vunpack.c.l.bf16 %v382
          %v415 = vunpack.c.h.bf16 %v382
          %v416 = vunpack.c.l.bf16 %v383
          %v417 = vunpack.c.h.bf16 %v383
          %v418 = vunpack.c.l.bf16 %v384
          %v419 = vunpack.c.h.bf16 %v384
          %v420 = vunpack.c.l.bf16 %v385
          %v421 = vunpack.c.h.bf16 %v385
          %v422 = vunpack.c.l.bf16 %v386
          %v423 = vunpack.c.h.bf16 %v386
          %v424 = vunpack.c.l.bf16 %v387
          %v425 = vunpack.c.h.bf16 %v387
          %v426 = vunpack.c.l.bf16 %v388
          %v427 = vunpack.c.h.bf16 %v388
          %v428 = vunpack.c.l.bf16 %v389
          %v429 = vunpack.c.h.bf16 %v389
          %v430 = vunpack.c.l.bf16 %v390
          %v431 = vunpack.c.h.bf16 %v390
          %v432 = vunpack.c.l.bf16 %v391
          %v433 = vunpack.c.h.bf16 %v391
          %v434 = vunpack.c.l.bf16 %v392
          %v435 = vunpack.c.h.bf16 %v392
          %v436 = vunpack.c.l.bf16 %v393
          %v437 = vunpack.c.h.bf16 %v393
          %v438 = vunpack.c.l.bf16 %v394
          %v439 = vunpack.c.h.bf16 %v394
          %v440 = vunpack.c.l.bf16 %v395
          %v441 = vunpack.c.h.bf16 %v395
          %v442 = vunpack.c.l.bf16 %v396
          %v443 = vunpack.c.h.bf16 %v396
          %v444 = vunpack.c.l.bf16 %v397
          %v445 = vunpack.c.h.bf16 %v397
          %v446 = vunpack.c.l.bf16 %v398
          %v447 = vunpack.c.h.bf16 %v398
          %v448 = vunpack.c.l.bf16 %v399
          %v449 = vunpack.c.h.bf16 %v399
          %v450 = vunpack.c.l.bf16 %v400
          %v451 = vunpack.c.h.bf16 %v400
          %v452 = vunpack.c.l.bf16 %v401
          %v453 = vunpack.c.h.bf16 %v401
          %v454 = vunpack.c.l.bf16 %v402
          %v455 = vunpack.c.h.bf16 %v402
          %v456 = vunpack.c.l.bf16 %v403
          %v457 = vunpack.c.h.bf16 %v403
          %v458 = vunpack.c.l.bf16 %v404
          %v459 = vunpack.c.h.bf16 %v404
          %v460 = vunpack.c.l.bf16 %v405
          %v461 = vunpack.c.h.bf16 %v405
          %v462 = vunpack.c.l.bf16 %v406
          %v463 = vunpack.c.h.bf16 %v406
          %v464 = vunpack.c.l.bf16 %v407
          %v465 = vunpack.c.h.bf16 %v407
          %v466 = vunpack.c.l.bf16 %v408
          %v467 = vunpack.c.h.bf16 %v408
          %v468 = vunpack.c.l.bf16 %v409
          %v469 = vunpack.c.h.bf16 %v409
          %v470 = vunpack.c.l.bf16 %v410
          %v471 = vunpack.c.h.bf16 %v410
          %v472 = vunpack.c.l.bf16 %v411
          %v473 = vunpack.c.h.bf16 %v411
          %v474 = vunpack.c.l.bf16 %v412
          %v475 = vunpack.c.h.bf16 %v412
          %v476 = vunpack.c.l.bf16 %v413
          %v477 = vunpack.c.h.bf16 %v413
          %v478 = vmul.f32 %v414, 0.17677669
          %v479 = vmul.f32 %v415, 0.17677669
          %v480 = vmul.f32 %v416, 0.17677669
          %v481 = vmul.f32 %v417, 0.17677669
          %v482 = vmul.f32 %v418, 0.17677669
          %v483 = vmul.f32 %v419, 0.17677669
          %v484 = vmul.f32 %v420, 0.17677669
          %v485 = vmul.f32 %v421, 0.17677669
          %v486 = vmul.f32 %v422, 0.17677669
          %v487 = vmul.f32 %v423, 0.17677669
          %v488 = vmul.f32 %v424, 0.17677669
          %v489 = vmul.f32 %v425, 0.17677669
          %v490 = vmul.f32 %v426, 0.17677669
          %v491 = vmul.f32 %v427, 0.17677669
          %v492 = vmul.f32 %v428, 0.17677669
          %v493 = vmul.f32 %v429, 0.17677669
          %v494 = vmul.f32 %v430, 0.17677669
          %v495 = vmul.f32 %v431, 0.17677669
          %v496 = vmul.f32 %v432, 0.17677669
          %v497 = vmul.f32 %v433, 0.17677669
          %v498 = vmul.f32 %v434, 0.17677669
          %v499 = vmul.f32 %v435, 0.17677669
          %v500 = vmul.f32 %v436, 0.17677669
          %v501 = vmul.f32 %v437, 0.17677669
          %v502 = vmul.f32 %v438, 0.17677669
          %v503 = vmul.f32 %v439, 0.17677669
          %v504 = vmul.f32 %v440, 0.17677669
          %v505 = vmul.f32 %v441, 0.17677669
          %v506 = vmul.f32 %v442, 0.17677669
          %v507 = vmul.f32 %v443, 0.17677669
          %v508 = vmul.f32 %v444, 0.17677669
          %v509 = vmul.f32 %v445, 0.17677669
          %v510 = vmul.f32 %v446, 0.17677669
          %v511 = vmul.f32 %v447, 0.17677669
          %v512 = vmul.f32 %v448, 0.17677669
          %v513 = vmul.f32 %v449, 0.17677669
          %v514 = vmul.f32 %v450, 0.17677669
          %v515 = vmul.f32 %v451, 0.17677669
          %v516 = vmul.f32 %v452, 0.17677669
          %v517 = vmul.f32 %v453, 0.17677669
          %v518 = vmul.f32 %v454, 0.17677669
          %v519 = vmul.f32 %v455, 0.17677669
          %v520 = vmul.f32 %v456, 0.17677669
          %v521 = vmul.f32 %v457, 0.17677669
          %v522 = vmul.f32 %v458, 0.17677669
          %v523 = vmul.f32 %v459, 0.17677669
          %v524 = vmul.f32 %v460, 0.17677669
          %v525 = vmul.f32 %v461, 0.17677669
          %v526 = vmul.f32 %v462, 0.17677669
          %v527 = vmul.f32 %v463, 0.17677669
          %v528 = vmul.f32 %v464, 0.17677669
          %v529 = vmul.f32 %v465, 0.17677669
          %v530 = vmul.f32 %v466, 0.17677669
          %v531 = vmul.f32 %v467, 0.17677669
          %v532 = vmul.f32 %v468, 0.17677669
          %v533 = vmul.f32 %v469, 0.17677669
          %v534 = vmul.f32 %v470, 0.17677669
          %v535 = vmul.f32 %v471, 0.17677669
          %v536 = vmul.f32 %v472, 0.17677669
          %v537 = vmul.f32 %v473, 0.17677669
          %v538 = vmul.f32 %v474, 0.17677669
          %v539 = vmul.f32 %v475, 0.17677669
          %v540 = vmul.f32 %v476, 0.17677669
          %v541 = vmul.f32 %v477, 0.17677669
          %v542 = vpack.c.bf16 %v479, %v478
          %v543 = vpack.c.bf16 %v481, %v480
          %v544 = vpack.c.bf16 %v483, %v482
          %v545 = vpack.c.bf16 %v485, %v484
          %v546 = vpack.c.bf16 %v487, %v486
          %v547 = vpack.c.bf16 %v489, %v488
          %v548 = vpack.c.bf16 %v491, %v490
          %v549 = vpack.c.bf16 %v493, %v492
          %v550 = vpack.c.bf16 %v495, %v494
          %v551 = vpack.c.bf16 %v497, %v496
          %v552 = vpack.c.bf16 %v499, %v498
          %v553 = vpack.c.bf16 %v501, %v500
          %v554 = vpack.c.bf16 %v503, %v502
          %v555 = vpack.c.bf16 %v505, %v504
          %v556 = vpack.c.bf16 %v507, %v506
          %v557 = vpack.c.bf16 %v509, %v508
          %v558 = vpack.c.bf16 %v511, %v510
          %v559 = vpack.c.bf16 %v513, %v512
          %v560 = vpack.c.bf16 %v515, %v514
          %v561 = vpack.c.bf16 %v517, %v516
          %v562 = vpack.c.bf16 %v519, %v518
          %v563 = vpack.c.bf16 %v521, %v520
          %v564 = vpack.c.bf16 %v523, %v522
          %v565 = vpack.c.bf16 %v525, %v524
          %v566 = vpack.c.bf16 %v527, %v526
          %v567 = vpack.c.bf16 %v529, %v528
          %v568 = vpack.c.bf16 %v531, %v530
          %v569 = vpack.c.bf16 %v533, %v532
          %v570 = vpack.c.bf16 %v535, %v534
          %v571 = vpack.c.bf16 %v537, %v536
          %v572 = vpack.c.bf16 %v539, %v538
          %v573 = vpack.c.bf16 %v541, %v540
          %574 = vst [vmem:[#allocation5] sm:$0xff] %v542
          %575 = vst [vmem:[#allocation5 + $0x8] sm:$0xff] %v543
          %576 = vst [vmem:[#allocation5 + $0x10] sm:$0xff] %v544
          %577 = vst [vmem:[#allocation5 + $0x18] sm:$0xff] %v545
          %578 = vst [vmem:[#allocation5 + $0x20] sm:$0xff] %v546
          %579 = vst [vmem:[#allocation5 + $0x28] sm:$0xff] %v547
          %580 = vst [vmem:[#allocation5 + $0x30] sm:$0xff] %v548
          %581 = vst [vmem:[#allocation5 + $0x38] sm:$0xff] %v549
          %582 = vst [vmem:[#allocation5 + $0x40] sm:$0xff] %v550
          %583 = vst [vmem:[#allocation5 + $0x48] sm:$0xff] %v551
          %584 = vst [vmem:[#allocation5 + $0x50] sm:$0xff] %v552
          %585 = vst [vmem:[#allocation5 + $0x58] sm:$0xff] %v553
          %586 = vst [vmem:[#allocation5 + $0x60] sm:$0xff] %v554
          %587 = vst [vmem:[#allocation5 + $0x68] sm:$0xff] %v555
          %588 = vst [vmem:[#allocation5 + $0x70] sm:$0xff] %v556
          %589 = vst [vmem:[#allocation5 + $0x78] sm:$0xff] %v557
          %590 = vst [vmem:[#allocation5 + $0x80] sm:$0xff] %v558
          %591 = vst [vmem:[#allocation5 + $0x88] sm:$0xff] %v559
          %592 = vst [vmem:[#allocation5 + $0x90] sm:$0xff] %v560
          %593 = vst [vmem:[#allocation5 + $0x98] sm:$0xff] %v561
          %594 = vst [vmem:[#allocation5 + $0xa0] sm:$0xff] %v562
          %595 = vst [vmem:[#allocation5 + $0xa8] sm:$0xff] %v563
          %596 = vst [vmem:[#allocation5 + $0xb0] sm:$0xff] %v564
          %597 = vst [vmem:[#allocation5 + $0xb8] sm:$0xff] %v565
          %598 = vst [vmem:[#allocation5 + $0xc0] sm:$0xff] %v566
          %599 = vst [vmem:[#allocation5 + $0xc8] sm:$0xff] %v567
          %600 = vst [vmem:[#allocation5 + $0xd0] sm:$0xff] %v568
          %601 = vst [vmem:[#allocation5 + $0xd8] sm:$0xff] %v569
          %602 = vst [vmem:[#allocation5 + $0xe0] sm:$0xff] %v570
          %603 = vst [vmem:[#allocation5 + $0xe8] sm:$0xff] %v571
          %604 = vst [vmem:[#allocation5 + $0xf0] sm:$0xff] %v572
          %605 = vst [vmem:[#allocation5 + $0xf8] sm:$0xff] %v573
        $region48: #{tpu_custom_call.1} parent=31 // pred_fallthru
          _
        %v606 = vld [vmem:[#allocation5] sm:$0xff]
        %v607 = vld [vmem:[#allocation5 + $0x8] sm:$0xff]
        %v608 = vld [vmem:[#allocation5 + $0x10] sm:$0xff]
        %v609 = vld [vmem:[#allocation5 + $0x18] sm:$0xff]
        %v610 = vld [vmem:[#allocation5 + $0x20] sm:$0xff]
        %v611 = vld [vmem:[#allocation5 + $0x28] sm:$0xff]
        %v612 = vld [vmem:[#allocation5 + $0x30] sm:$0xff]
        %v613 = vld [vmem:[#allocation5 + $0x38] sm:$0xff]
        %v614 = vld [vmem:[#allocation5 + $0x40] sm:$0xff]
        %v615 = vld [vmem:[#allocation5 + $0x48] sm:$0xff]
        %v616 = vld [vmem:[#allocation5 + $0x50] sm:$0xff]
        %v617 = vld [vmem:[#allocation5 + $0x58] sm:$0xff]
        %v618 = vld [vmem:[#allocation5 + $0x60] sm:$0xff]
        %v619 = vld [vmem:[#allocation5 + $0x68] sm:$0xff]
        %v620 = vld [vmem:[#allocation5 + $0x70] sm:$0xff]
        %v621 = vld [vmem:[#allocation5 + $0x78] sm:$0xff]
        %v622 = vld [vmem:[#allocation5 + $0x80] sm:$0xff]
        %v623 = vld [vmem:[#allocation5 + $0x88] sm:$0xff]
        %v624 = vld [vmem:[#allocation5 + $0x90] sm:$0xff]
        %v625 = vld [vmem:[#allocation5 + $0x98] sm:$0xff]
        %v626 = vld [vmem:[#allocation5 + $0xa0] sm:$0xff]
        %v627 = vld [vmem:[#allocation5 + $0xa8] sm:$0xff]
        %v628 = vld [vmem:[#allocation5 + $0xb0] sm:$0xff]
        %v629 = vld [vmem:[#allocation5 + $0xb8] sm:$0xff]
        %v630 = vld [vmem:[#allocation5 + $0xc0] sm:$0xff]
        %v631 = vld [vmem:[#allocation5 + $0xc8] sm:$0xff]
        %v632 = vld [vmem:[#allocation5 + $0xd0] sm:$0xff]
        %v633 = vld [vmem:[#allocation5 + $0xd8] sm:$0xff]
        %v634 = vld [vmem:[#allocation5 + $0xe0] sm:$0xff]
        %v635 = vld [vmem:[#allocation5 + $0xe8] sm:$0xff]
        %v636 = vld [vmem:[#allocation5 + $0xf0] sm:$0xff]
        %v637 = vld [vmem:[#allocation5 + $0xf8] sm:$0xff]
        %s638 = smul.u32 %s30, 256
        %s639 = sshra.s32 %s638, 7
        %s640 = sand.u32 %s638, 127
        %s641 = smul.addr %s639, 4
        %s642 = scalar_lea.vmem %s255, %s641 [#allocation9]
        %v643 = vld [vmem:[%s642] sm:$0xff]
        %v644 = vld [vmem:[%s642 + $0x10] sm:$0xff]
        %v645 = vld [vmem:[%s642 + $0x20] sm:$0xff]
        %v646 = vld [vmem:[%s642 + $0x30] sm:$0xff]
        %v647 = vld [vmem:[%s642 + $0x40] sm:$0xff]
        %v648 = vld [vmem:[%s642 + $0x50] sm:$0xff]
        %v649 = vld [vmem:[%s642 + $0x60] sm:$0xff]
        %v650 = vld [vmem:[%s642 + $0x70] sm:$0xff]
        %v651 = vld [vmem:[%s642 + $0x80] sm:$0xff]
        %v652 = vld [vmem:[%s642 + $0x90] sm:$0xff]
        %v653 = vld [vmem:[%s642 + $0xa0] sm:$0xff]
        %v654 = vld [vmem:[%s642 + $0xb0] sm:$0xff]
        %v655 = vld [vmem:[%s642 + $0xc0] sm:$0xff]
        %v656 = vld [vmem:[%s642 + $0xd0] sm:$0xff]
        %v657 = vld [vmem:[%s642 + $0xe0] sm:$0xff]
        %v658 = vld [vmem:[%s642 + $0xf0] sm:$0xff]
        %s659 = smul.addr %s639, 4
        %s660 = scalar_lea.vmem %s265, %s659 [#allocation11]
        %v661 = vld [vmem:[%s660] sm:$0xff]
        %v662 = vld [vmem:[%s660 + $0x10] sm:$0xff]
        %v663 = vld [vmem:[%s660 + $0x20] sm:$0xff]
        %v664 = vld [vmem:[%s660 + $0x30] sm:$0xff]
        %v665 = vld [vmem:[%s660 + $0x40] sm:$0xff]
        %v666 = vld [vmem:[%s660 + $0x50] sm:$0xff]
        %v667 = vld [vmem:[%s660 + $0x60] sm:$0xff]
        %v668 = vld [vmem:[%s660 + $0x70] sm:$0xff]
        %v669 = vld [vmem:[%s660 + $0x80] sm:$0xff]
        %v670 = vld [vmem:[%s660 + $0x90] sm:$0xff]
        %v671 = vld [vmem:[%s660 + $0xa0] sm:$0xff]
        %v672 = vld [vmem:[%s660 + $0xb0] sm:$0xff]
        %v673 = vld [vmem:[%s660 + $0xc0] sm:$0xff]
        %v674 = vld [vmem:[%s660 + $0xd0] sm:$0xff]
        %v675 = vld [vmem:[%s660 + $0xe0] sm:$0xff]
        %v676 = vld [vmem:[%s660 + $0xf0] sm:$0xff]
        %v681 = vunpack.c.l.b16 %v643
        %v682 = vunpack.c.h.b16 %v643
        %v683 = vunpack.c.l.b16 %v644
        %v684 = vunpack.c.h.b16 %v644
        %v685 = vunpack.c.l.b16 %v645
        %v686 = vunpack.c.h.b16 %v645
        %v687 = vunpack.c.l.b16 %v646
        %v688 = vunpack.c.h.b16 %v646
        %v689 = vpack.c.b16 %v683, %v681
        %v690 = vpack.c.b16 %v684, %v682
        %v691 = vpack.c.b16 %v687, %v685
        %v692 = vpack.c.b16 %v688, %v686
        %697 = vxpose.binary.xlu0.c.b16.start [1/16] %v690, %v689, 128
        %698 = vxpose.binary.xlu0.c.b16.cont [2/16] %v692, %v691, 128
        %699 = vxpose.binary.xlu0.c.b16.cont [3/16] 0, 0, 128
        %700 = vxpose.binary.xlu0.c.b16.cont [4/16] 0, 0, 128
        %701 = vxpose.binary.xlu0.c.b16.cont [5/16] 0, 0, 128
        %702 = vxpose.binary.xlu0.c.b16.cont [6/16] 0, 0, 128
        %703 = vxpose.binary.xlu0.c.b16.cont [7/16] 0, 0, 128
        %704 = vxpose.binary.xlu0.c.b16.end [8/16] 0, 0, 128
        %v705 = vpop.trf.xlu0
        %v706 = vpop.trf.xlu0
        %v707 = vpop.trf.xlu0
        %v708 = vpop.trf.xlu0
        %v709 = vpop.trf.xlu0
        %v710 = vpop.trf.xlu0
        %v711 = vpop.trf.xlu0
        %v712 = vpop.trf.xlu0
        %v713 = vpop.trf.xlu0
        %v714 = vpop.trf.xlu0
        %v715 = vpop.trf.xlu0
        %v716 = vpop.trf.xlu0
        %v717 = vpop.trf.xlu0
        %v718 = vpop.trf.xlu0
        %v719 = vpop.trf.xlu0
        %v720 = vpop.trf.xlu0
        %v729 = vunpack.c.l.b16 %v606
        %v730 = vunpack.c.h.b16 %v606
        %v731 = vunpack.c.l.b16 %v607
        %v732 = vunpack.c.h.b16 %v607
        %v733 = vunpack.c.l.b16 %v608
        %v734 = vunpack.c.h.b16 %v608
        %v735 = vunpack.c.l.b16 %v609
        %v736 = vunpack.c.h.b16 %v609
        %v737 = vunpack.c.l.b16 %v610
        %v738 = vunpack.c.h.b16 %v610
        %v739 = vunpack.c.l.b16 %v611
        %v740 = vunpack.c.h.b16 %v611
        %v741 = vunpack.c.l.b16 %v612
        %v742 = vunpack.c.h.b16 %v612
        %v743 = vunpack.c.l.b16 %v613
        %v744 = vunpack.c.h.b16 %v613
        %v745 = vpack.c.b16 %v733, %v729
        %v746 = vpack.c.b16 %v734, %v730
        %v747 = vpack.c.b16 %v735, %v731
        %v748 = vpack.c.b16 %v736, %v732
        %v749 = vpack.c.b16 %v741, %v737
        %v750 = vpack.c.b16 %v742, %v738
        %v751 = vpack.c.b16 %v743, %v739
        %v752 = vpack.c.b16 %v744, %v740
        %vm761 = vcmask 261120
        %v763 = vsel %vm761, %v705, 0
        %v766 = vsel %vm761, %v707, 0
        %v769 = vsel %vm761, %v709, 0
        %v772 = vsel %vm761, %v711, 0
        %v775 = vsel %vm761, %v713, 0
        %v778 = vsel %vm761, %v715, 0
        %v781 = vsel %vm761, %v717, 0
        %v784 = vsel %vm761, %v719, 0
        %v787 = vsel %vm761, %v706, 0
        %v790 = vsel %vm761, %v708, 0
        %v793 = vsel %vm761, %v710, 0
        %v796 = vsel %vm761, %v712, 0
        %v799 = vsel %vm761, %v714, 0
        %v802 = vsel %vm761, %v716, 0
        %v805 = vsel %vm761, %v718, 0
        %v808 = vsel %vm761, %v720, 0
        %810 = vmatpush.bf16.msra.mxu0 0
        %811 = vmatpush.bf16.msra.mxu0 0
        %812 = vmatpush.bf16.msra.mxu0 0
        %813 = vmatpush.bf16.msra.mxu0 0
        %814 = vmatpush.bf16.msra.mxu0 0
        %815 = vmatpush.bf16.msra.mxu0 0
        %816 = vmatpush.bf16.msra.mxu0 %v749
        %817 = vmatpush.bf16.msra.mxu0 %v745
        %818 = vmatmul.bf16.gmra.mxu0 %v763
        %v819 = vpop.f32.mrf.mxu0
        %v820 = vadd.f32 0.0, %v819
        %v821 = vpop.f32.mrf.mxu0
        %v822 = vadd.f32 0.0, %v821
        %823 = vmatmul.bf16.gmra.mxu0 %v766
        %v824 = vpop.f32.mrf.mxu0
        %v825 = vadd.f32 0.0, %v824
        %v826 = vpop.f32.mrf.mxu0
        %v827 = vadd.f32 0.0, %v826
        %828 = vmatmul.bf16.gmra.mxu0 %v769
        %v829 = vpop.f32.mrf.mxu0
        %v830 = vadd.f32 0.0, %v829
        %v831 = vpop.f32.mrf.mxu0
        %v832 = vadd.f32 0.0, %v831
        %833 = vmatmul.bf16.gmra.mxu0 %v772
        %v834 = vpop.f32.mrf.mxu0
        %v835 = vadd.f32 0.0, %v834
        %v836 = vpop.f32.mrf.mxu0
        %v837 = vadd.f32 0.0, %v836
        %838 = vmatmul.bf16.gmra.mxu0 %v775
        %v839 = vpop.f32.mrf.mxu0
        %v840 = vadd.f32 0.0, %v839
        %v841 = vpop.f32.mrf.mxu0
        %v842 = vadd.f32 0.0, %v841
        %843 = vmatmul.bf16.gmra.mxu0 %v778
        %v844 = vpop.f32.mrf.mxu0
        %v845 = vadd.f32 0.0, %v844
        %v846 = vpop.f32.mrf.mxu0
        %v847 = vadd.f32 0.0, %v846
        %848 = vmatmul.bf16.gmra.mxu0 %v781
        %v849 = vpop.f32.mrf.mxu0
        %v850 = vadd.f32 0.0, %v849
        %v851 = vpop.f32.mrf.mxu0
        %v852 = vadd.f32 0.0, %v851
        %853 = vmatmul.bf16.gmra.mxu0 %v784
        %v854 = vpop.f32.mrf.mxu0
        %v855 = vadd.f32 0.0, %v854
        %v856 = vpop.f32.mrf.mxu0
        %v857 = vadd.f32 0.0, %v856
        %858 = vmatmul.bf16.gmra.mxu0 %v787
        %v859 = vpop.f32.mrf.mxu0
        %v860 = vadd.f32 0.0, %v859
        %v861 = vpop.f32.mrf.mxu0
        %v862 = vadd.f32 0.0, %v861
        %863 = vmatmul.bf16.gmra.mxu0 %v790
        %v864 = vpop.f32.mrf.mxu0
        %v865 = vadd.f32 0.0, %v864
        %v866 = vpop.f32.mrf.mxu0
        %v867 = vadd.f32 0.0, %v866
        %868 = vmatmul.bf16.gmra.mxu0 %v793
        %v869 = vpop.f32.mrf.mxu0
        %v870 = vadd.f32 0.0, %v869
        %v871 = vpop.f32.mrf.mxu0
        %v872 = vadd.f32 0.0, %v871
        %873 = vmatmul.bf16.gmra.mxu0 %v796
        %v874 = vpop.f32.mrf.mxu0
        %v875 = vadd.f32 0.0, %v874
        %v876 = vpop.f32.mrf.mxu0
        %v877 = vadd.f32 0.0, %v876
        %878 = vmatmul.bf16.gmra.mxu0 %v799
        %v879 = vpop.f32.mrf.mxu0
        %v880 = vadd.f32 0.0, %v879
        %v881 = vpop.f32.mrf.mxu0
        %v882 = vadd.f32 0.0, %v881
        %883 = vmatmul.bf16.gmra.mxu0 %v802
        %v884 = vpop.f32.mrf.mxu0
        %v885 = vadd.f32 0.0, %v884
        %v886 = vpop.f32.mrf.mxu0
        %v887 = vadd.f32 0.0, %v886
        %888 = vmatmul.bf16.gmra.mxu0 %v805
        %v889 = vpop.f32.mrf.mxu0
        %v890 = vadd.f32 0.0, %v889
        %v891 = vpop.f32.mrf.mxu0
        %v892 = vadd.f32 0.0, %v891
        %893 = vmatmul.bf16.gmra.mxu0 %v808
        %v894 = vpop.f32.mrf.mxu0
        %v895 = vadd.f32 0.0, %v894
        %v896 = vpop.f32.mrf.mxu0
        %v897 = vadd.f32 0.0, %v896
        %898 = vdwg.mxu0
        %899 = vmatpush.bf16.msra.mxu0 0
        %900 = vmatpush.bf16.msra.mxu0 0
        %901 = vmatpush.bf16.msra.mxu0 0
        %902 = vmatpush.bf16.msra.mxu0 0
        %903 = vmatpush.bf16.msra.mxu0 0
        %904 = vmatpush.bf16.msra.mxu0 0
        %905 = vmatpush.bf16.msra.mxu0 %v750
        %906 = vmatpush.bf16.msra.mxu0 %v746
        %907 = vmatmul.bf16.gmra.mxu0 %v763
        %v908 = vpop.f32.mrf.mxu0
        %v909 = vadd.f32 0.0, %v908
        %v910 = vpop.f32.mrf.mxu0
        %v911 = vadd.f32 0.0, %v910
        %912 = vmatmul.bf16.gmra.mxu0 %v766
        %v913 = vpop.f32.mrf.mxu0
        %v914 = vadd.f32 0.0, %v913
        %v915 = vpop.f32.mrf.mxu0
        %v916 = vadd.f32 0.0, %v915
        %917 = vmatmul.bf16.gmra.mxu0 %v769
        %v918 = vpop.f32.mrf.mxu0
        %v919 = vadd.f32 0.0, %v918
        %v920 = vpop.f32.mrf.mxu0
        %v921 = vadd.f32 0.0, %v920
        %922 = vmatmul.bf16.gmra.mxu0 %v772
        %v923 = vpop.f32.mrf.mxu0
        %v924 = vadd.f32 0.0, %v923
        %v925 = vpop.f32.mrf.mxu0
        %v926 = vadd.f32 0.0, %v925
        %927 = vmatmul.bf16.gmra.mxu0 %v775
        %v928 = vpop.f32.mrf.mxu0
        %v929 = vadd.f32 0.0, %v928
        %v930 = vpop.f32.mrf.mxu0
        %v931 = vadd.f32 0.0, %v930
        %932 = vmatmul.bf16.gmra.mxu0 %v778
        %v933 = vpop.f32.mrf.mxu0
        %v934 = vadd.f32 0.0, %v933
        %v935 = vpop.f32.mrf.mxu0
        %v936 = vadd.f32 0.0, %v935
        %937 = vmatmul.bf16.gmra.mxu0 %v781
        %v938 = vpop.f32.mrf.mxu0
        %v939 = vadd.f32 0.0, %v938
        %v940 = vpop.f32.mrf.mxu0
        %v941 = vadd.f32 0.0, %v940
        %942 = vmatmul.bf16.gmra.mxu0 %v784
        %v943 = vpop.f32.mrf.mxu0
        %v944 = vadd.f32 0.0, %v943
        %v945 = vpop.f32.mrf.mxu0
        %v946 = vadd.f32 0.0, %v945
        %947 = vmatmul.bf16.gmra.mxu0 %v787
        %v948 = vpop.f32.mrf.mxu0
        %v949 = vadd.f32 0.0, %v948
        %v950 = vpop.f32.mrf.mxu0
        %v951 = vadd.f32 0.0, %v950
        %952 = vmatmul.bf16.gmra.mxu0 %v790
        %v953 = vpop.f32.mrf.mxu0
        %v954 = vadd.f32 0.0, %v953
        %v955 = vpop.f32.mrf.mxu0
        %v956 = vadd.f32 0.0, %v955
        %957 = vmatmul.bf16.gmra.mxu0 %v793
        %v958 = vpop.f32.mrf.mxu0
        %v959 = vadd.f32 0.0, %v958
        %v960 = vpop.f32.mrf.mxu0
        %v961 = vadd.f32 0.0, %v960
        %962 = vmatmul.bf16.gmra.mxu0 %v796
        %v963 = vpop.f32.mrf.mxu0
        %v964 = vadd.f32 0.0, %v963
        %v965 = vpop.f32.mrf.mxu0
        %v966 = vadd.f32 0.0, %v965
        %967 = vmatmul.bf16.gmra.mxu0 %v799
        %v968 = vpop.f32.mrf.mxu0
        %v969 = vadd.f32 0.0, %v968
        %v970 = vpop.f32.mrf.mxu0
        %v971 = vadd.f32 0.0, %v970
        %972 = vmatmul.bf16.gmra.mxu0 %v802
        %v973 = vpop.f32.mrf.mxu0
        %v974 = vadd.f32 0.0, %v973
        %v975 = vpop.f32.mrf.mxu0
        %v976 = vadd.f32 0.0, %v975
        %977 = vmatmul.bf16.gmra.mxu0 %v805
        %v978 = vpop.f32.mrf.mxu0
        %v979 = vadd.f32 0.0, %v978
        %v980 = vpop.f32.mrf.mxu0
        %v981 = vadd.f32 0.0, %v980
        %982 = vmatmul.bf16.gmra.mxu0 %v808
        %v983 = vpop.f32.mrf.mxu0
        %v984 = vadd.f32 0.0, %v983
        %v985 = vpop.f32.mrf.mxu0
        %v986 = vadd.f32 0.0, %v985
        %987 = vdwg.mxu0
        %988 = vmatpush.bf16.msra.mxu0 0
        %989 = vmatpush.bf16.msra.mxu0 0
        %990 = vmatpush.bf16.msra.mxu0 0
        %991 = vmatpush.bf16.msra.mxu0 0
        %992 = vmatpush.bf16.msra.mxu0 0
        %993 = vmatpush.bf16.msra.mxu0 0
        %994 = vmatpush.bf16.msra.mxu0 %v751
        %995 = vmatpush.bf16.msra.mxu0 %v747
        %996 = vmatmul.bf16.gmra.mxu0 %v763
        %v997 = vpop.f32.mrf.mxu0
        %v998 = vadd.f32 0.0, %v997
        %v999 = vpop.f32.mrf.mxu0
        %v1000 = vadd.f32 0.0, %v999
        %1001 = vmatmul.bf16.gmra.mxu0 %v766
        %v1002 = vpop.f32.mrf.mxu0
        %v1003 = vadd.f32 0.0, %v1002
        %v1004 = vpop.f32.mrf.mxu0
        %v1005 = vadd.f32 0.0, %v1004
        %1006 = vmatmul.bf16.gmra.mxu0 %v769
        %v1007 = vpop.f32.mrf.mxu0
        %v1008 = vadd.f32 0.0, %v1007
        %v1009 = vpop.f32.mrf.mxu0
        %v1010 = vadd.f32 0.0, %v1009
        %1011 = vmatmul.bf16.gmra.mxu0 %v772
        %v1012 = vpop.f32.mrf.mxu0
        %v1013 = vadd.f32 0.0, %v1012
        %v1014 = vpop.f32.mrf.mxu0
        %v1015 = vadd.f32 0.0, %v1014
        %1016 = vmatmul.bf16.gmra.mxu0 %v775
        %v1017 = vpop.f32.mrf.mxu0
        %v1018 = vadd.f32 0.0, %v1017
        %v1019 = vpop.f32.mrf.mxu0
        %v1020 = vadd.f32 0.0, %v1019
        %1021 = vmatmul.bf16.gmra.mxu0 %v778
        %v1022 = vpop.f32.mrf.mxu0
        %v1023 = vadd.f32 0.0, %v1022
        %v1024 = vpop.f32.mrf.mxu0
        %v1025 = vadd.f32 0.0, %v1024
        %1026 = vmatmul.bf16.gmra.mxu0 %v781
        %v1027 = vpop.f32.mrf.mxu0
        %v1028 = vadd.f32 0.0, %v1027
        %v1029 = vpop.f32.mrf.mxu0
        %v1030 = vadd.f32 0.0, %v1029
        %1031 = vmatmul.bf16.gmra.mxu0 %v784
        %v1032 = vpop.f32.mrf.mxu0
        %v1033 = vadd.f32 0.0, %v1032
        %v1034 = vpop.f32.mrf.mxu0
        %v1035 = vadd.f32 0.0, %v1034
        %1036 = vmatmul.bf16.gmra.mxu0 %v787
        %v1037 = vpop.f32.mrf.mxu0
        %v1038 = vadd.f32 0.0, %v1037
        %v1039 = vpop.f32.mrf.mxu0
        %v1040 = vadd.f32 0.0, %v1039
        %1041 = vmatmul.bf16.gmra.mxu0 %v790
        %v1042 = vpop.f32.mrf.mxu0
        %v1043 = vadd.f32 0.0, %v1042
        %v1044 = vpop.f32.mrf.mxu0
        %v1045 = vadd.f32 0.0, %v1044
        %1046 = vmatmul.bf16.gmra.mxu0 %v793
        %v1047 = vpop.f32.mrf.mxu0
        %v1048 = vadd.f32 0.0, %v1047
        %v1049 = vpop.f32.mrf.mxu0
        %v1050 = vadd.f32 0.0, %v1049
        %1051 = vmatmul.bf16.gmra.mxu0 %v796
        %v1052 = vpop.f32.mrf.mxu0
        %v1053 = vadd.f32 0.0, %v1052
        %v1054 = vpop.f32.mrf.mxu0
        %v1055 = vadd.f32 0.0, %v1054
        %1056 = vmatmul.bf16.gmra.mxu0 %v799
        %v1057 = vpop.f32.mrf.mxu0
        %v1058 = vadd.f32 0.0, %v1057
        %v1059 = vpop.f32.mrf.mxu0
        %v1060 = vadd.f32 0.0, %v1059
        %1061 = vmatmul.bf16.gmra.mxu0 %v802
        %v1062 = vpop.f32.mrf.mxu0
        %v1063 = vadd.f32 0.0, %v1062
        %v1064 = vpop.f32.mrf.mxu0
        %v1065 = vadd.f32 0.0, %v1064
        %1066 = vmatmul.bf16.gmra.mxu0 %v805
        %v1067 = vpop.f32.mrf.mxu0
        %v1068 = vadd.f32 0.0, %v1067
        %v1069 = vpop.f32.mrf.mxu0
        %v1070 = vadd.f32 0.0, %v1069
        %1071 = vmatmul.bf16.gmra.mxu0 %v808
        %v1072 = vpop.f32.mrf.mxu0
        %v1073 = vadd.f32 0.0, %v1072
        %v1074 = vpop.f32.mrf.mxu0
        %v1075 = vadd.f32 0.0, %v1074
        %1076 = vdwg.mxu0
        %1077 = vmatpush.bf16.msra.mxu0 0
        %1078 = vmatpush.bf16.msra.mxu0 0
        %1079 = vmatpush.bf16.msra.mxu0 0
        %1080 = vmatpush.bf16.msra.mxu0 0
        %1081 = vmatpush.bf16.msra.mxu0 0
        %1082 = vmatpush.bf16.msra.mxu0 0
        %1083 = vmatpush.bf16.msra.mxu0 %v752
        %1084 = vmatpush.bf16.msra.mxu0 %v748
        %1085 = vmatmul.bf16.gmra.mxu0 %v763
        %v1086 = vpop.f32.mrf.mxu0
        %v1087 = vadd.f32 0.0, %v1086
        %v1088 = vpop.f32.mrf.mxu0
        %v1089 = vadd.f32 0.0, %v1088
        %1090 = vmatmul.bf16.gmra.mxu0 %v766
        %v1091 = vpop.f32.mrf.mxu0
        %v1092 = vadd.f32 0.0, %v1091
        %v1093 = vpop.f32.mrf.mxu0
        %v1094 = vadd.f32 0.0, %v1093
        %1095 = vmatmul.bf16.gmra.mxu0 %v769
        %v1096 = vpop.f32.mrf.mxu0
        %v1097 = vadd.f32 0.0, %v1096
        %v1098 = vpop.f32.mrf.mxu0
        %v1099 = vadd.f32 0.0, %v1098
        %1100 = vmatmul.bf16.gmra.mxu0 %v772
        %v1101 = vpop.f32.mrf.mxu0
        %v1102 = vadd.f32 0.0, %v1101
        %v1103 = vpop.f32.mrf.mxu0
        %v1104 = vadd.f32 0.0, %v1103
        %1105 = vmatmul.bf16.gmra.mxu0 %v775
        %v1106 = vpop.f32.mrf.mxu0
        %v1107 = vadd.f32 0.0, %v1106
        %v1108 = vpop.f32.mrf.mxu0
        %v1109 = vadd.f32 0.0, %v1108
        %1110 = vmatmul.bf16.gmra.mxu0 %v778
        %v1111 = vpop.f32.mrf.mxu0
        %v1112 = vadd.f32 0.0, %v1111
        %v1113 = vpop.f32.mrf.mxu0
        %v1114 = vadd.f32 0.0, %v1113
        %1115 = vmatmul.bf16.gmra.mxu0 %v781
        %v1116 = vpop.f32.mrf.mxu0
        %v1117 = vadd.f32 0.0, %v1116
        %v1118 = vpop.f32.mrf.mxu0
        %v1119 = vadd.f32 0.0, %v1118
        %1120 = vmatmul.bf16.gmra.mxu0 %v784
        %v1121 = vpop.f32.mrf.mxu0
        %v1122 = vadd.f32 0.0, %v1121
        %v1123 = vpop.f32.mrf.mxu0
        %v1124 = vadd.f32 0.0, %v1123
        %1125 = vmatmul.bf16.gmra.mxu0 %v787
        %v1126 = vpop.f32.mrf.mxu0
        %v1127 = vadd.f32 0.0, %v1126
        %v1128 = vpop.f32.mrf.mxu0
        %v1129 = vadd.f32 0.0, %v1128
        %1130 = vmatmul.bf16.gmra.mxu0 %v790
        %v1131 = vpop.f32.mrf.mxu0
        %v1132 = vadd.f32 0.0, %v1131
        %v1133 = vpop.f32.mrf.mxu0
        %v1134 = vadd.f32 0.0, %v1133
        %1135 = vmatmul.bf16.gmra.mxu0 %v793
        %v1136 = vpop.f32.mrf.mxu0
        %v1137 = vadd.f32 0.0, %v1136
        %v1138 = vpop.f32.mrf.mxu0
        %v1139 = vadd.f32 0.0, %v1138
        %1140 = vmatmul.bf16.gmra.mxu0 %v796
        %v1141 = vpop.f32.mrf.mxu0
        %v1142 = vadd.f32 0.0, %v1141
        %v1143 = vpop.f32.mrf.mxu0
        %v1144 = vadd.f32 0.0, %v1143
        %1145 = vmatmul.bf16.gmra.mxu0 %v799
        %v1146 = vpop.f32.mrf.mxu0
        %v1147 = vadd.f32 0.0, %v1146
        %v1148 = vpop.f32.mrf.mxu0
        %v1149 = vadd.f32 0.0, %v1148
        %1150 = vmatmul.bf16.gmra.mxu0 %v802
        %v1151 = vpop.f32.mrf.mxu0
        %v1152 = vadd.f32 0.0, %v1151
        %v1153 = vpop.f32.mrf.mxu0
        %v1154 = vadd.f32 0.0, %v1153
        %1155 = vmatmul.bf16.gmra.mxu0 %v805
        %v1156 = vpop.f32.mrf.mxu0
        %v1157 = vadd.f32 0.0, %v1156
        %v1158 = vpop.f32.mrf.mxu0
        %v1159 = vadd.f32 0.0, %v1158
        %1160 = vmatmul.bf16.gmra.mxu0 %v808
        %v1161 = vpop.f32.mrf.mxu0
        %v1162 = vadd.f32 0.0, %v1161
        %v1163 = vpop.f32.mrf.mxu0
        %v1164 = vadd.f32 0.0, %v1163
        %1165 = vdwg.mxu0
        %v1170 = vunpack.c.l.b16 %v647
        %v1171 = vunpack.c.h.b16 %v647
        %v1172 = vunpack.c.l.b16 %v648
        %v1173 = vunpack.c.h.b16 %v648
        %v1174 = vunpack.c.l.b16 %v649
        %v1175 = vunpack.c.h.b16 %v649
        %v1176 = vunpack.c.l.b16 %v650
        %v1177 = vunpack.c.h.b16 %v650
        %v1178 = vpack.c.b16 %v1172, %v1170
        %v1179 = vpack.c.b16 %v1173, %v1171
        %v1180 = vpack.c.b16 %v1176, %v1174
        %v1181 = vpack.c.b16 %v1177, %v1175
        %1186 = vxpose.binary.xlu0.c.b16.start [1/16] %v1179, %v1178, 128
        %1187 = vxpose.binary.xlu0.c.b16.cont [2/16] %v1181, %v1180, 128
        %1188 = vxpose.binary.xlu0.c.b16.cont [3/16] 0, 0, 128
        %1189 = vxpose.binary.xlu0.c.b16.cont [4/16] 0, 0, 128
        %1190 = vxpose.binary.xlu0.c.b16.cont [5/16] 0, 0, 128
        %1191 = vxpose.binary.xlu0.c.b16.cont [6/16] 0, 0, 128
        %1192 = vxpose.binary.xlu0.c.b16.cont [7/16] 0, 0, 128
        %1193 = vxpose.binary.xlu0.c.b16.end [8/16] 0, 0, 128
        %v1194 = vpop.trf.xlu0
        %v1195 = vpop.trf.xlu0
        %v1196 = vpop.trf.xlu0
        %v1197 = vpop.trf.xlu0
        %v1198 = vpop.trf.xlu0
        %v1199 = vpop.trf.xlu0
        %v1200 = vpop.trf.xlu0
        %v1201 = vpop.trf.xlu0
        %v1202 = vpop.trf.xlu0
        %v1203 = vpop.trf.xlu0
        %v1204 = vpop.trf.xlu0
        %v1205 = vpop.trf.xlu0
        %v1206 = vpop.trf.xlu0
        %v1207 = vpop.trf.xlu0
        %v1208 = vpop.trf.xlu0
        %v1209 = vpop.trf.xlu0
        %v1218 = vunpack.c.l.b16 %v614
        %v1219 = vunpack.c.h.b16 %v614
        %v1220 = vunpack.c.l.b16 %v615
        %v1221 = vunpack.c.h.b16 %v615
        %v1222 = vunpack.c.l.b16 %v616
        %v1223 = vunpack.c.h.b16 %v616
        %v1224 = vunpack.c.l.b16 %v617
        %v1225 = vunpack.c.h.b16 %v617
        %v1226 = vunpack.c.l.b16 %v618
        %v1227 = vunpack.c.h.b16 %v618
        %v1228 = vunpack.c.l.b16 %v619
        %v1229 = vunpack.c.h.b16 %v619
        %v1230 = vunpack.c.l.b16 %v620
        %v1231 = vunpack.c.h.b16 %v620
        %v1232 = vunpack.c.l.b16 %v621
        %v1233 = vunpack.c.h.b16 %v621
        %v1234 = vpack.c.b16 %v1222, %v1218
        %v1235 = vpack.c.b16 %v1223, %v1219
        %v1236 = vpack.c.b16 %v1224, %v1220
        %v1237 = vpack.c.b16 %v1225, %v1221
        %v1238 = vpack.c.b16 %v1230, %v1226
        %v1239 = vpack.c.b16 %v1231, %v1227
        %v1240 = vpack.c.b16 %v1232, %v1228
        %v1241 = vpack.c.b16 %v1233, %v1229
        %v1251 = vsel %vm761, %v1194, 0
        %v1254 = vsel %vm761, %v1196, 0
        %v1257 = vsel %vm761, %v1198, 0
        %v1260 = vsel %vm761, %v1200, 0
        %v1263 = vsel %vm761, %v1202, 0
        %v1266 = vsel %vm761, %v1204, 0
        %v1269 = vsel %vm761, %v1206, 0
        %v1272 = vsel %vm761, %v1208, 0
        %v1275 = vsel %vm761, %v1195, 0
        %v1278 = vsel %vm761, %v1197, 0
        %v1281 = vsel %vm761, %v1199, 0
        %v1284 = vsel %vm761, %v1201, 0
        %v1287 = vsel %vm761, %v1203, 0
        %v1290 = vsel %vm761, %v1205, 0
        %v1293 = vsel %vm761, %v1207, 0
        %v1296 = vsel %vm761, %v1209, 0
        %1298 = vmatpush.bf16.msra.mxu0 0
        %1299 = vmatpush.bf16.msra.mxu0 0
        %1300 = vmatpush.bf16.msra.mxu0 0
        %1301 = vmatpush.bf16.msra.mxu0 0
        %1302 = vmatpush.bf16.msra.mxu0 0
        %1303 = vmatpush.bf16.msra.mxu0 0
        %1304 = vmatpush.bf16.msra.mxu0 %v1238
        %1305 = vmatpush.bf16.msra.mxu0 %v1234
        %1306 = vmatmul.bf16.gmra.mxu0 %v1251
        %v1307 = vpop.f32.mrf.mxu0
        %v1308 = vadd.f32 0.0, %v1307
        %v1309 = vpop.f32.mrf.mxu0
        %v1310 = vadd.f32 0.0, %v1309
        %1311 = vmatmul.bf16.gmra.mxu0 %v1254
        %v1312 = vpop.f32.mrf.mxu0
        %v1313 = vadd.f32 0.0, %v1312
        %v1314 = vpop.f32.mrf.mxu0
        %v1315 = vadd.f32 0.0, %v1314
        %1316 = vmatmul.bf16.gmra.mxu0 %v1257
        %v1317 = vpop.f32.mrf.mxu0
        %v1318 = vadd.f32 0.0, %v1317
        %v1319 = vpop.f32.mrf.mxu0
        %v1320 = vadd.f32 0.0, %v1319
        %1321 = vmatmul.bf16.gmra.mxu0 %v1260
        %v1322 = vpop.f32.mrf.mxu0
        %v1323 = vadd.f32 0.0, %v1322
        %v1324 = vpop.f32.mrf.mxu0
        %v1325 = vadd.f32 0.0, %v1324
        %1326 = vmatmul.bf16.gmra.mxu0 %v1263
        %v1327 = vpop.f32.mrf.mxu0
        %v1328 = vadd.f32 0.0, %v1327
        %v1329 = vpop.f32.mrf.mxu0
        %v1330 = vadd.f32 0.0, %v1329
        %1331 = vmatmul.bf16.gmra.mxu0 %v1266
        %v1332 = vpop.f32.mrf.mxu0
        %v1333 = vadd.f32 0.0, %v1332
        %v1334 = vpop.f32.mrf.mxu0
        %v1335 = vadd.f32 0.0, %v1334
        %1336 = vmatmul.bf16.gmra.mxu0 %v1269
        %v1337 = vpop.f32.mrf.mxu0
        %v1338 = vadd.f32 0.0, %v1337
        %v1339 = vpop.f32.mrf.mxu0
        %v1340 = vadd.f32 0.0, %v1339
        %1341 = vmatmul.bf16.gmra.mxu0 %v1272
        %v1342 = vpop.f32.mrf.mxu0
        %v1343 = vadd.f32 0.0, %v1342
        %v1344 = vpop.f32.mrf.mxu0
        %v1345 = vadd.f32 0.0, %v1344
        %1346 = vmatmul.bf16.gmra.mxu0 %v1275
        %v1347 = vpop.f32.mrf.mxu0
        %v1348 = vadd.f32 0.0, %v1347
        %v1349 = vpop.f32.mrf.mxu0
        %v1350 = vadd.f32 0.0, %v1349
        %1351 = vmatmul.bf16.gmra.mxu0 %v1278
        %v1352 = vpop.f32.mrf.mxu0
        %v1353 = vadd.f32 0.0, %v1352
        %v1354 = vpop.f32.mrf.mxu0
        %v1355 = vadd.f32 0.0, %v1354
        %1356 = vmatmul.bf16.gmra.mxu0 %v1281
        %v1357 = vpop.f32.mrf.mxu0
        %v1358 = vadd.f32 0.0, %v1357
        %v1359 = vpop.f32.mrf.mxu0
        %v1360 = vadd.f32 0.0, %v1359
        %1361 = vmatmul.bf16.gmra.mxu0 %v1284
        %v1362 = vpop.f32.mrf.mxu0
        %v1363 = vadd.f32 0.0, %v1362
        %v1364 = vpop.f32.mrf.mxu0
        %v1365 = vadd.f32 0.0, %v1364
        %1366 = vmatmul.bf16.gmra.mxu0 %v1287
        %v1367 = vpop.f32.mrf.mxu0
        %v1368 = vadd.f32 0.0, %v1367
        %v1369 = vpop.f32.mrf.mxu0
        %v1370 = vadd.f32 0.0, %v1369
        %1371 = vmatmul.bf16.gmra.mxu0 %v1290
        %v1372 = vpop.f32.mrf.mxu0
        %v1373 = vadd.f32 0.0, %v1372
        %v1374 = vpop.f32.mrf.mxu0
        %v1375 = vadd.f32 0.0, %v1374
        %1376 = vmatmul.bf16.gmra.mxu0 %v1293
        %v1377 = vpop.f32.mrf.mxu0
        %v1378 = vadd.f32 0.0, %v1377
        %v1379 = vpop.f32.mrf.mxu0
        %v1380 = vadd.f32 0.0, %v1379
        %1381 = vmatmul.bf16.gmra.mxu0 %v1296
        %v1382 = vpop.f32.mrf.mxu0
        %v1383 = vadd.f32 0.0, %v1382
        %v1384 = vpop.f32.mrf.mxu0
        %v1385 = vadd.f32 0.0, %v1384
        %1386 = vdwg.mxu0
        %1387 = vmatpush.bf16.msra.mxu0 0
        %1388 = vmatpush.bf16.msra.mxu0 0
        %1389 = vmatpush.bf16.msra.mxu0 0
        %1390 = vmatpush.bf16.msra.mxu0 0
        %1391 = vmatpush.bf16.msra.mxu0 0
        %1392 = vmatpush.bf16.msra.mxu0 0
        %1393 = vmatpush.bf16.msra.mxu0 %v1239
        %1394 = vmatpush.bf16.msra.mxu0 %v1235
        %1395 = vmatmul.bf16.gmra.mxu0 %v1251
        %v1396 = vpop.f32.mrf.mxu0
        %v1397 = vadd.f32 0.0, %v1396
        %v1398 = vpop.f32.mrf.mxu0
        %v1399 = vadd.f32 0.0, %v1398
        %1400 = vmatmul.bf16.gmra.mxu0 %v1254
        %v1401 = vpop.f32.mrf.mxu0
        %v1402 = vadd.f32 0.0, %v1401
        %v1403 = vpop.f32.mrf.mxu0
        %v1404 = vadd.f32 0.0, %v1403
        %1405 = vmatmul.bf16.gmra.mxu0 %v1257
        %v1406 = vpop.f32.mrf.mxu0
        %v1407 = vadd.f32 0.0, %v1406
        %v1408 = vpop.f32.mrf.mxu0
        %v1409 = vadd.f32 0.0, %v1408
        %1410 = vmatmul.bf16.gmra.mxu0 %v1260
        %v1411 = vpop.f32.mrf.mxu0
        %v1412 = vadd.f32 0.0, %v1411
        %v1413 = vpop.f32.mrf.mxu0
        %v1414 = vadd.f32 0.0, %v1413
        %1415 = vmatmul.bf16.gmra.mxu0 %v1263
        %v1416 = vpop.f32.mrf.mxu0
        %v1417 = vadd.f32 0.0, %v1416
        %v1418 = vpop.f32.mrf.mxu0
        %v1419 = vadd.f32 0.0, %v1418
        %1420 = vmatmul.bf16.gmra.mxu0 %v1266
        %v1421 = vpop.f32.mrf.mxu0
        %v1422 = vadd.f32 0.0, %v1421
        %v1423 = vpop.f32.mrf.mxu0
        %v1424 = vadd.f32 0.0, %v1423
        %1425 = vmatmul.bf16.gmra.mxu0 %v1269
        %v1426 = vpop.f32.mrf.mxu0
        %v1427 = vadd.f32 0.0, %v1426
        %v1428 = vpop.f32.mrf.mxu0
        %v1429 = vadd.f32 0.0, %v1428
        %1430 = vmatmul.bf16.gmra.mxu0 %v1272
        %v1431 = vpop.f32.mrf.mxu0
        %v1432 = vadd.f32 0.0, %v1431
        %v1433 = vpop.f32.mrf.mxu0
        %v1434 = vadd.f32 0.0, %v1433
        %1435 = vmatmul.bf16.gmra.mxu0 %v1275
        %v1436 = vpop.f32.mrf.mxu0
        %v1437 = vadd.f32 0.0, %v1436
        %v1438 = vpop.f32.mrf.mxu0
        %v1439 = vadd.f32 0.0, %v1438
        %1440 = vmatmul.bf16.gmra.mxu0 %v1278
        %v1441 = vpop.f32.mrf.mxu0
        %v1442 = vadd.f32 0.0, %v1441
        %v1443 = vpop.f32.mrf.mxu0
        %v1444 = vadd.f32 0.0, %v1443
        %1445 = vmatmul.bf16.gmra.mxu0 %v1281
        %v1446 = vpop.f32.mrf.mxu0
        %v1447 = vadd.f32 0.0, %v1446
        %v1448 = vpop.f32.mrf.mxu0
        %v1449 = vadd.f32 0.0, %v1448
        %1450 = vmatmul.bf16.gmra.mxu0 %v1284
        %v1451 = vpop.f32.mrf.mxu0
        %v1452 = vadd.f32 0.0, %v1451
        %v1453 = vpop.f32.mrf.mxu0
        %v1454 = vadd.f32 0.0, %v1453
        %1455 = vmatmul.bf16.gmra.mxu0 %v1287
        %v1456 = vpop.f32.mrf.mxu0
        %v1457 = vadd.f32 0.0, %v1456
        %v1458 = vpop.f32.mrf.mxu0
        %v1459 = vadd.f32 0.0, %v1458
        %1460 = vmatmul.bf16.gmra.mxu0 %v1290
        %v1461 = vpop.f32.mrf.mxu0
        %v1462 = vadd.f32 0.0, %v1461
        %v1463 = vpop.f32.mrf.mxu0
        %v1464 = vadd.f32 0.0, %v1463
        %1465 = vmatmul.bf16.gmra.mxu0 %v1293
        %v1466 = vpop.f32.mrf.mxu0
        %v1467 = vadd.f32 0.0, %v1466
        %v1468 = vpop.f32.mrf.mxu0
        %v1469 = vadd.f32 0.0, %v1468
        %1470 = vmatmul.bf16.gmra.mxu0 %v1296
        %v1471 = vpop.f32.mrf.mxu0
        %v1472 = vadd.f32 0.0, %v1471
        %v1473 = vpop.f32.mrf.mxu0
        %v1474 = vadd.f32 0.0, %v1473
        %1475 = vdwg.mxu0
        %1476 = vmatpush.bf16.msra.mxu0 0
        %1477 = vmatpush.bf16.msra.mxu0 0
        %1478 = vmatpush.bf16.msra.mxu0 0
        %1479 = vmatpush.bf16.msra.mxu0 0
        %1480 = vmatpush.bf16.msra.mxu0 0
        %1481 = vmatpush.bf16.msra.mxu0 0
        %1482 = vmatpush.bf16.msra.mxu0 %v1240
        %1483 = vmatpush.bf16.msra.mxu0 %v1236
        %1484 = vmatmul.bf16.gmra.mxu0 %v1251
        %v1485 = vpop.f32.mrf.mxu0
        %v1486 = vadd.f32 0.0, %v1485
        %v1487 = vpop.f32.mrf.mxu0
        %v1488 = vadd.f32 0.0, %v1487
        %1489 = vmatmul.bf16.gmra.mxu0 %v1254
        %v1490 = vpop.f32.mrf.mxu0
        %v1491 = vadd.f32 0.0, %v1490
        %v1492 = vpop.f32.mrf.mxu0
        %v1493 = vadd.f32 0.0, %v1492
        %1494 = vmatmul.bf16.gmra.mxu0 %v1257
        %v1495 = vpop.f32.mrf.mxu0
        %v1496 = vadd.f32 0.0, %v1495
        %v1497 = vpop.f32.mrf.mxu0
        %v1498 = vadd.f32 0.0, %v1497
        %1499 = vmatmul.bf16.gmra.mxu0 %v1260
        %v1500 = vpop.f32.mrf.mxu0
        %v1501 = vadd.f32 0.0, %v1500
        %v1502 = vpop.f32.mrf.mxu0
        %v1503 = vadd.f32 0.0, %v1502
        %1504 = vmatmul.bf16.gmra.mxu0 %v1263
        %v1505 = vpop.f32.mrf.mxu0
        %v1506 = vadd.f32 0.0, %v1505
        %v1507 = vpop.f32.mrf.mxu0
        %v1508 = vadd.f32 0.0, %v1507
        %1509 = vmatmul.bf16.gmra.mxu0 %v1266
        %v1510 = vpop.f32.mrf.mxu0
        %v1511 = vadd.f32 0.0, %v1510
        %v1512 = vpop.f32.mrf.mxu0
        %v1513 = vadd.f32 0.0, %v1512
        %1514 = vmatmul.bf16.gmra.mxu0 %v1269
        %v1515 = vpop.f32.mrf.mxu0
        %v1516 = vadd.f32 0.0, %v1515
        %v1517 = vpop.f32.mrf.mxu0
        %v1518 = vadd.f32 0.0, %v1517
        %1519 = vmatmul.bf16.gmra.mxu0 %v1272
        %v1520 = vpop.f32.mrf.mxu0
        %v1521 = vadd.f32 0.0, %v1520
        %v1522 = vpop.f32.mrf.mxu0
        %v1523 = vadd.f32 0.0, %v1522
        %1524 = vmatmul.bf16.gmra.mxu0 %v1275
        %v1525 = vpop.f32.mrf.mxu0
        %v1526 = vadd.f32 0.0, %v1525
        %v1527 = vpop.f32.mrf.mxu0
        %v1528 = vadd.f32 0.0, %v1527
        %1529 = vmatmul.bf16.gmra.mxu0 %v1278
        %v1530 = vpop.f32.mrf.mxu0
        %v1531 = vadd.f32 0.0, %v1530
        %v1532 = vpop.f32.mrf.mxu0
        %v1533 = vadd.f32 0.0, %v1532
        %1534 = vmatmul.bf16.gmra.mxu0 %v1281
        %v1535 = vpop.f32.mrf.mxu0
        %v1536 = vadd.f32 0.0, %v1535
        %v1537 = vpop.f32.mrf.mxu0
        %v1538 = vadd.f32 0.0, %v1537
        %1539 = vmatmul.bf16.gmra.mxu0 %v1284
        %v1540 = vpop.f32.mrf.mxu0
        %v1541 = vadd.f32 0.0, %v1540
        %v1542 = vpop.f32.mrf.mxu0
        %v1543 = vadd.f32 0.0, %v1542
        %1544 = vmatmul.bf16.gmra.mxu0 %v1287
        %v1545 = vpop.f32.mrf.mxu0
        %v1546 = vadd.f32 0.0, %v1545
        %v1547 = vpop.f32.mrf.mxu0
        %v1548 = vadd.f32 0.0, %v1547
        %1549 = vmatmul.bf16.gmra.mxu0 %v1290
        %v1550 = vpop.f32.mrf.mxu0
        %v1551 = vadd.f32 0.0, %v1550
        %v1552 = vpop.f32.mrf.mxu0
        %v1553 = vadd.f32 0.0, %v1552
        %1554 = vmatmul.bf16.gmra.mxu0 %v1293
        %v1555 = vpop.f32.mrf.mxu0
        %v1556 = vadd.f32 0.0, %v1555
        %v1557 = vpop.f32.mrf.mxu0
        %v1558 = vadd.f32 0.0, %v1557
        %1559 = vmatmul.bf16.gmra.mxu0 %v1296
        %v1560 = vpop.f32.mrf.mxu0
        %v1561 = vadd.f32 0.0, %v1560
        %v1562 = vpop.f32.mrf.mxu0
        %v1563 = vadd.f32 0.0, %v1562
        %1564 = vdwg.mxu0
        %1565 = vmatpush.bf16.msra.mxu0 0
        %1566 = vmatpush.bf16.msra.mxu0 0
        %1567 = vmatpush.bf16.msra.mxu0 0
        %1568 = vmatpush.bf16.msra.mxu0 0
        %1569 = vmatpush.bf16.msra.mxu0 0
        %1570 = vmatpush.bf16.msra.mxu0 0
        %1571 = vmatpush.bf16.msra.mxu0 %v1241
        %1572 = vmatpush.bf16.msra.mxu0 %v1237
        %1573 = vmatmul.bf16.gmra.mxu0 %v1251
        %v1574 = vpop.f32.mrf.mxu0
        %v1575 = vadd.f32 0.0, %v1574
        %v1576 = vpop.f32.mrf.mxu0
        %v1577 = vadd.f32 0.0, %v1576
        %1578 = vmatmul.bf16.gmra.mxu0 %v1254
        %v1579 = vpop.f32.mrf.mxu0
        %v1580 = vadd.f32 0.0, %v1579
        %v1581 = vpop.f32.mrf.mxu0
        %v1582 = vadd.f32 0.0, %v1581
        %1583 = vmatmul.bf16.gmra.mxu0 %v1257
        %v1584 = vpop.f32.mrf.mxu0
        %v1585 = vadd.f32 0.0, %v1584
        %v1586 = vpop.f32.mrf.mxu0
        %v1587 = vadd.f32 0.0, %v1586
        %1588 = vmatmul.bf16.gmra.mxu0 %v1260
        %v1589 = vpop.f32.mrf.mxu0
        %v1590 = vadd.f32 0.0, %v1589
        %v1591 = vpop.f32.mrf.mxu0
        %v1592 = vadd.f32 0.0, %v1591
        %1593 = vmatmul.bf16.gmra.mxu0 %v1263
        %v1594 = vpop.f32.mrf.mxu0
        %v1595 = vadd.f32 0.0, %v1594
        %v1596 = vpop.f32.mrf.mxu0
        %v1597 = vadd.f32 0.0, %v1596
        %1598 = vmatmul.bf16.gmra.mxu0 %v1266
        %v1599 = vpop.f32.mrf.mxu0
        %v1600 = vadd.f32 0.0, %v1599
        %v1601 = vpop.f32.mrf.mxu0
        %v1602 = vadd.f32 0.0, %v1601
        %1603 = vmatmul.bf16.gmra.mxu0 %v1269
        %v1604 = vpop.f32.mrf.mxu0
        %v1605 = vadd.f32 0.0, %v1604
        %v1606 = vpop.f32.mrf.mxu0
        %v1607 = vadd.f32 0.0, %v1606
        %1608 = vmatmul.bf16.gmra.mxu0 %v1272
        %v1609 = vpop.f32.mrf.mxu0
        %v1610 = vadd.f32 0.0, %v1609
        %v1611 = vpop.f32.mrf.mxu0
        %v1612 = vadd.f32 0.0, %v1611
        %1613 = vmatmul.bf16.gmra.mxu0 %v1275
        %v1614 = vpop.f32.mrf.mxu0
        %v1615 = vadd.f32 0.0, %v1614
        %v1616 = vpop.f32.mrf.mxu0
        %v1617 = vadd.f32 0.0, %v1616
        %1618 = vmatmul.bf16.gmra.mxu0 %v1278
        %v1619 = vpop.f32.mrf.mxu0
        %v1620 = vadd.f32 0.0, %v1619
        %v1621 = vpop.f32.mrf.mxu0
        %v1622 = vadd.f32 0.0, %v1621
        %1623 = vmatmul.bf16.gmra.mxu0 %v1281
        %v1624 = vpop.f32.mrf.mxu0
        %v1625 = vadd.f32 0.0, %v1624
        %v1626 = vpop.f32.mrf.mxu0
        %v1627 = vadd.f32 0.0, %v1626
        %1628 = vmatmul.bf16.gmra.mxu0 %v1284
        %v1629 = vpop.f32.mrf.mxu0
        %v1630 = vadd.f32 0.0, %v1629
        %v1631 = vpop.f32.mrf.mxu0
        %v1632 = vadd.f32 0.0, %v1631
        %1633 = vmatmul.bf16.gmra.mxu0 %v1287
        %v1634 = vpop.f32.mrf.mxu0
        %v1635 = vadd.f32 0.0, %v1634
        %v1636 = vpop.f32.mrf.mxu0
        %v1637 = vadd.f32 0.0, %v1636
        %1638 = vmatmul.bf16.gmra.mxu0 %v1290
        %v1639 = vpop.f32.mrf.mxu0
        %v1640 = vadd.f32 0.0, %v1639
        %v1641 = vpop.f32.mrf.mxu0
        %v1642 = vadd.f32 0.0, %v1641
        %1643 = vmatmul.bf16.gmra.mxu0 %v1293
        %v1644 = vpop.f32.mrf.mxu0
        %v1645 = vadd.f32 0.0, %v1644
        %v1646 = vpop.f32.mrf.mxu0
        %v1647 = vadd.f32 0.0, %v1646
        %1648 = vmatmul.bf16.gmra.mxu0 %v1296
        %v1649 = vpop.f32.mrf.mxu0
        %v1650 = vadd.f32 0.0, %v1649
        %v1651 = vpop.f32.mrf.mxu0
        %v1652 = vadd.f32 0.0, %v1651
        %1653 = vdwg.mxu0
        %v1658 = vunpack.c.l.b16 %v651
        %v1659 = vunpack.c.h.b16 %v651
        %v1660 = vunpack.c.l.b16 %v652
        %v1661 = vunpack.c.h.b16 %v652
        %v1662 = vunpack.c.l.b16 %v653
        %v1663 = vunpack.c.h.b16 %v653
        %v1664 = vunpack.c.l.b16 %v654
        %v1665 = vunpack.c.h.b16 %v654
        %v1666 = vpack.c.b16 %v1660, %v1658
        %v1667 = vpack.c.b16 %v1661, %v1659
        %v1668 = vpack.c.b16 %v1664, %v1662
        %v1669 = vpack.c.b16 %v1665, %v1663
        %1674 = vxpose.binary.xlu0.c.b16.start [1/16] %v1667, %v1666, 128
        %1675 = vxpose.binary.xlu0.c.b16.cont [2/16] %v1669, %v1668, 128
        %1676 = vxpose.binary.xlu0.c.b16.cont [3/16] 0, 0, 128
        %1677 = vxpose.binary.xlu0.c.b16.cont [4/16] 0, 0, 128
        %1678 = vxpose.binary.xlu0.c.b16.cont [5/16] 0, 0, 128
        %1679 = vxpose.binary.xlu0.c.b16.cont [6/16] 0, 0, 128
        %1680 = vxpose.binary.xlu0.c.b16.cont [7/16] 0, 0, 128
        %1681 = vxpose.binary.xlu0.c.b16.end [8/16] 0, 0, 128
        %v1682 = vpop.trf.xlu0
        %v1683 = vpop.trf.xlu0
        %v1684 = vpop.trf.xlu0
        %v1685 = vpop.trf.xlu0
        %v1686 = vpop.trf.xlu0
        %v1687 = vpop.trf.xlu0
        %v1688 = vpop.trf.xlu0
        %v1689 = vpop.trf.xlu0
        %v1690 = vpop.trf.xlu0
        %v1691 = vpop.trf.xlu0
        %v1692 = vpop.trf.xlu0
        %v1693 = vpop.trf.xlu0
        %v1694 = vpop.trf.xlu0
        %v1695 = vpop.trf.xlu0
        %v1696 = vpop.trf.xlu0
        %v1697 = vpop.trf.xlu0
        %v1706 = vunpack.c.l.b16 %v622
        %v1707 = vunpack.c.h.b16 %v622
        %v1708 = vunpack.c.l.b16 %v623
        %v1709 = vunpack.c.h.b16 %v623
        %v1710 = vunpack.c.l.b16 %v624
        %v1711 = vunpack.c.h.b16 %v624
        %v1712 = vunpack.c.l.b16 %v625
        %v1713 = vunpack.c.h.b16 %v625
        %v1714 = vunpack.c.l.b16 %v626
        %v1715 = vunpack.c.h.b16 %v626
        %v1716 = vunpack.c.l.b16 %v627
        %v1717 = vunpack.c.h.b16 %v627
        %v1718 = vunpack.c.l.b16 %v628
        %v1719 = vunpack.c.h.b16 %v628
        %v1720 = vunpack.c.l.b16 %v629
        %v1721 = vunpack.c.h.b16 %v629
        %v1722 = vpack.c.b16 %v1710, %v1706
        %v1723 = vpack.c.b16 %v1711, %v1707
        %v1724 = vpack.c.b16 %v1712, %v1708
        %v1725 = vpack.c.b16 %v1713, %v1709
        %v1726 = vpack.c.b16 %v1718, %v1714
        %v1727 = vpack.c.b16 %v1719, %v1715
        %v1728 = vpack.c.b16 %v1720, %v1716
        %v1729 = vpack.c.b16 %v1721, %v1717
        %v1739 = vsel %vm761, %v1682, 0
        %v1742 = vsel %vm761, %v1684, 0
        %v1745 = vsel %vm761, %v1686, 0
        %v1748 = vsel %vm761, %v1688, 0
        %v1751 = vsel %vm761, %v1690, 0
        %v1754 = vsel %vm761, %v1692, 0
        %v1757 = vsel %vm761, %v1694, 0
        %v1760 = vsel %vm761, %v1696, 0
        %v1763 = vsel %vm761, %v1683, 0
        %v1766 = vsel %vm761, %v1685, 0
        %v1769 = vsel %vm761, %v1687, 0
        %v1772 = vsel %vm761, %v1689, 0
        %v1775 = vsel %vm761, %v1691, 0
        %v1778 = vsel %vm761, %v1693, 0
        %v1781 = vsel %vm761, %v1695, 0
        %v1784 = vsel %vm761, %v1697, 0
        %1786 = vmatpush.bf16.msra.mxu0 0
        %1787 = vmatpush.bf16.msra.mxu0 0
        %1788 = vmatpush.bf16.msra.mxu0 0
        %1789 = vmatpush.bf16.msra.mxu0 0
        %1790 = vmatpush.bf16.msra.mxu0 0
        %1791 = vmatpush.bf16.msra.mxu0 0
        %1792 = vmatpush.bf16.msra.mxu0 %v1726
        %1793 = vmatpush.bf16.msra.mxu0 %v1722
        %1794 = vmatmul.bf16.gmra.mxu0 %v1739
        %v1795 = vpop.f32.mrf.mxu0
        %v1796 = vadd.f32 0.0, %v1795
        %v1797 = vpop.f32.mrf.mxu0
        %v1798 = vadd.f32 0.0, %v1797
        %1799 = vmatmul.bf16.gmra.mxu0 %v1742
        %v1800 = vpop.f32.mrf.mxu0
        %v1801 = vadd.f32 0.0, %v1800
        %v1802 = vpop.f32.mrf.mxu0
        %v1803 = vadd.f32 0.0, %v1802
        %1804 = vmatmul.bf16.gmra.mxu0 %v1745
        %v1805 = vpop.f32.mrf.mxu0
        %v1806 = vadd.f32 0.0, %v1805
        %v1807 = vpop.f32.mrf.mxu0
        %v1808 = vadd.f32 0.0, %v1807
        %1809 = vmatmul.bf16.gmra.mxu0 %v1748
        %v1810 = vpop.f32.mrf.mxu0
        %v1811 = vadd.f32 0.0, %v1810
        %v1812 = vpop.f32.mrf.mxu0
        %v1813 = vadd.f32 0.0, %v1812
        %1814 = vmatmul.bf16.gmra.mxu0 %v1751
        %v1815 = vpop.f32.mrf.mxu0
        %v1816 = vadd.f32 0.0, %v1815
        %v1817 = vpop.f32.mrf.mxu0
        %v1818 = vadd.f32 0.0, %v1817
        %1819 = vmatmul.bf16.gmra.mxu0 %v1754
        %v1820 = vpop.f32.mrf.mxu0
        %v1821 = vadd.f32 0.0, %v1820
        %v1822 = vpop.f32.mrf.mxu0
        %v1823 = vadd.f32 0.0, %v1822
        %1824 = vmatmul.bf16.gmra.mxu0 %v1757
        %v1825 = vpop.f32.mrf.mxu0
        %v1826 = vadd.f32 0.0, %v1825
        %v1827 = vpop.f32.mrf.mxu0
        %v1828 = vadd.f32 0.0, %v1827
        %1829 = vmatmul.bf16.gmra.mxu0 %v1760
        %v1830 = vpop.f32.mrf.mxu0
        %v1831 = vadd.f32 0.0, %v1830
        %v1832 = vpop.f32.mrf.mxu0
        %v1833 = vadd.f32 0.0, %v1832
        %1834 = vmatmul.bf16.gmra.mxu0 %v1763
        %v1835 = vpop.f32.mrf.mxu0
        %v1836 = vadd.f32 0.0, %v1835
        %v1837 = vpop.f32.mrf.mxu0
        %v1838 = vadd.f32 0.0, %v1837
        %1839 = vmatmul.bf16.gmra.mxu0 %v1766
        %v1840 = vpop.f32.mrf.mxu0
        %v1841 = vadd.f32 0.0, %v1840
        %v1842 = vpop.f32.mrf.mxu0
        %v1843 = vadd.f32 0.0, %v1842
        %1844 = vmatmul.bf16.gmra.mxu0 %v1769
        %v1845 = vpop.f32.mrf.mxu0
        %v1846 = vadd.f32 0.0, %v1845
        %v1847 = vpop.f32.mrf.mxu0
        %v1848 = vadd.f32 0.0, %v1847
        %1849 = vmatmul.bf16.gmra.mxu0 %v1772
        %v1850 = vpop.f32.mrf.mxu0
        %v1851 = vadd.f32 0.0, %v1850
        %v1852 = vpop.f32.mrf.mxu0
        %v1853 = vadd.f32 0.0, %v1852
        %1854 = vmatmul.bf16.gmra.mxu0 %v1775
        %v1855 = vpop.f32.mrf.mxu0
        %v1856 = vadd.f32 0.0, %v1855
        %v1857 = vpop.f32.mrf.mxu0
        %v1858 = vadd.f32 0.0, %v1857
        %1859 = vmatmul.bf16.gmra.mxu0 %v1778
        %v1860 = vpop.f32.mrf.mxu0
        %v1861 = vadd.f32 0.0, %v1860
        %v1862 = vpop.f32.mrf.mxu0
        %v1863 = vadd.f32 0.0, %v1862
        %1864 = vmatmul.bf16.gmra.mxu0 %v1781
        %v1865 = vpop.f32.mrf.mxu0
        %v1866 = vadd.f32 0.0, %v1865
        %v1867 = vpop.f32.mrf.mxu0
        %v1868 = vadd.f32 0.0, %v1867
        %1869 = vmatmul.bf16.gmra.mxu0 %v1784
        %v1870 = vpop.f32.mrf.mxu0
        %v1871 = vadd.f32 0.0, %v1870
        %v1872 = vpop.f32.mrf.mxu0
        %v1873 = vadd.f32 0.0, %v1872
        %1874 = vdwg.mxu0
        %1875 = vmatpush.bf16.msra.mxu0 0
        %1876 = vmatpush.bf16.msra.mxu0 0
        %1877 = vmatpush.bf16.msra.mxu0 0
        %1878 = vmatpush.bf16.msra.mxu0 0
        %1879 = vmatpush.bf16.msra.mxu0 0
        %1880 = vmatpush.bf16.msra.mxu0 0
        %1881 = vmatpush.bf16.msra.mxu0 %v1727
        %1882 = vmatpush.bf16.msra.mxu0 %v1723
        %1883 = vmatmul.bf16.gmra.mxu0 %v1739
        %v1884 = vpop.f32.mrf.mxu0
        %v1885 = vadd.f32 0.0, %v1884
        %v1886 = vpop.f32.mrf.mxu0
        %v1887 = vadd.f32 0.0, %v1886
        %1888 = vmatmul.bf16.gmra.mxu0 %v1742
        %v1889 = vpop.f32.mrf.mxu0
        %v1890 = vadd.f32 0.0, %v1889
        %v1891 = vpop.f32.mrf.mxu0
        %v1892 = vadd.f32 0.0, %v1891
        %1893 = vmatmul.bf16.gmra.mxu0 %v1745
        %v1894 = vpop.f32.mrf.mxu0
        %v1895 = vadd.f32 0.0, %v1894
        %v1896 = vpop.f32.mrf.mxu0
        %v1897 = vadd.f32 0.0, %v1896
        %1898 = vmatmul.bf16.gmra.mxu0 %v1748
        %v1899 = vpop.f32.mrf.mxu0
        %v1900 = vadd.f32 0.0, %v1899
        %v1901 = vpop.f32.mrf.mxu0
        %v1902 = vadd.f32 0.0, %v1901
        %1903 = vmatmul.bf16.gmra.mxu0 %v1751
        %v1904 = vpop.f32.mrf.mxu0
        %v1905 = vadd.f32 0.0, %v1904
        %v1906 = vpop.f32.mrf.mxu0
        %v1907 = vadd.f32 0.0, %v1906
        %1908 = vmatmul.bf16.gmra.mxu0 %v1754
        %v1909 = vpop.f32.mrf.mxu0
        %v1910 = vadd.f32 0.0, %v1909
        %v1911 = vpop.f32.mrf.mxu0
        %v1912 = vadd.f32 0.0, %v1911
        %1913 = vmatmul.bf16.gmra.mxu0 %v1757
        %v1914 = vpop.f32.mrf.mxu0
        %v1915 = vadd.f32 0.0, %v1914
        %v1916 = vpop.f32.mrf.mxu0
        %v1917 = vadd.f32 0.0, %v1916
        %1918 = vmatmul.bf16.gmra.mxu0 %v1760
        %v1919 = vpop.f32.mrf.mxu0
        %v1920 = vadd.f32 0.0, %v1919
        %v1921 = vpop.f32.mrf.mxu0
        %v1922 = vadd.f32 0.0, %v1921
        %1923 = vmatmul.bf16.gmra.mxu0 %v1763
        %v1924 = vpop.f32.mrf.mxu0
        %v1925 = vadd.f32 0.0, %v1924
        %v1926 = vpop.f32.mrf.mxu0
        %v1927 = vadd.f32 0.0, %v1926
        %1928 = vmatmul.bf16.gmra.mxu0 %v1766
        %v1929 = vpop.f32.mrf.mxu0
        %v1930 = vadd.f32 0.0, %v1929
        %v1931 = vpop.f32.mrf.mxu0
        %v1932 = vadd.f32 0.0, %v1931
        %1933 = vmatmul.bf16.gmra.mxu0 %v1769
        %v1934 = vpop.f32.mrf.mxu0
        %v1935 = vadd.f32 0.0, %v1934
        %v1936 = vpop.f32.mrf.mxu0
        %v1937 = vadd.f32 0.0, %v1936
        %1938 = vmatmul.bf16.gmra.mxu0 %v1772
        %v1939 = vpop.f32.mrf.mxu0
        %v1940 = vadd.f32 0.0, %v1939
        %v1941 = vpop.f32.mrf.mxu0
        %v1942 = vadd.f32 0.0, %v1941
        %1943 = vmatmul.bf16.gmra.mxu0 %v1775
        %v1944 = vpop.f32.mrf.mxu0
        %v1945 = vadd.f32 0.0, %v1944
        %v1946 = vpop.f32.mrf.mxu0
        %v1947 = vadd.f32 0.0, %v1946
        %1948 = vmatmul.bf16.gmra.mxu0 %v1778
        %v1949 = vpop.f32.mrf.mxu0
        %v1950 = vadd.f32 0.0, %v1949
        %v1951 = vpop.f32.mrf.mxu0
        %v1952 = vadd.f32 0.0, %v1951
        %1953 = vmatmul.bf16.gmra.mxu0 %v1781
        %v1954 = vpop.f32.mrf.mxu0
        %v1955 = vadd.f32 0.0, %v1954
        %v1956 = vpop.f32.mrf.mxu0
        %v1957 = vadd.f32 0.0, %v1956
        %1958 = vmatmul.bf16.gmra.mxu0 %v1784
        %v1959 = vpop.f32.mrf.mxu0
        %v1960 = vadd.f32 0.0, %v1959
        %v1961 = vpop.f32.mrf.mxu0
        %v1962 = vadd.f32 0.0, %v1961
        %1963 = vdwg.mxu0
        %1964 = vmatpush.bf16.msra.mxu0 0
        %1965 = vmatpush.bf16.msra.mxu0 0
        %1966 = vmatpush.bf16.msra.mxu0 0
        %1967 = vmatpush.bf16.msra.mxu0 0
        %1968 = vmatpush.bf16.msra.mxu0 0
        %1969 = vmatpush.bf16.msra.mxu0 0
        %1970 = vmatpush.bf16.msra.mxu0 %v1728
        %1971 = vmatpush.bf16.msra.mxu0 %v1724
        %1972 = vmatmul.bf16.gmra.mxu0 %v1739
        %v1973 = vpop.f32.mrf.mxu0
        %v1974 = vadd.f32 0.0, %v1973
        %v1975 = vpop.f32.mrf.mxu0
        %v1976 = vadd.f32 0.0, %v1975
        %1977 = vmatmul.bf16.gmra.mxu0 %v1742
        %v1978 = vpop.f32.mrf.mxu0
        %v1979 = vadd.f32 0.0, %v1978
        %v1980 = vpop.f32.mrf.mxu0
        %v1981 = vadd.f32 0.0, %v1980
        %1982 = vmatmul.bf16.gmra.mxu0 %v1745
        %v1983 = vpop.f32.mrf.mxu0
        %v1984 = vadd.f32 0.0, %v1983
        %v1985 = vpop.f32.mrf.mxu0
        %v1986 = vadd.f32 0.0, %v1985
        %1987 = vmatmul.bf16.gmra.mxu0 %v1748
        %v1988 = vpop.f32.mrf.mxu0
        %v1989 = vadd.f32 0.0, %v1988
        %v1990 = vpop.f32.mrf.mxu0
        %v1991 = vadd.f32 0.0, %v1990
        %1992 = vmatmul.bf16.gmra.mxu0 %v1751
        %v1993 = vpop.f32.mrf.mxu0
        %v1994 = vadd.f32 0.0, %v1993
        %v1995 = vpop.f32.mrf.mxu0
        %v1996 = vadd.f32 0.0, %v1995
        %1997 = vmatmul.bf16.gmra.mxu0 %v1754
        %v1998 = vpop.f32.mrf.mxu0
        %v1999 = vadd.f32 0.0, %v1998
        %v2000 = vpop.f32.mrf.mxu0
        %v2001 = vadd.f32 0.0, %v2000
        %2002 = vmatmul.bf16.gmra.mxu0 %v1757
        %v2003 = vpop.f32.mrf.mxu0
        %v2004 = vadd.f32 0.0, %v2003
        %v2005 = vpop.f32.mrf.mxu0
        %v2006 = vadd.f32 0.0, %v2005
        %2007 = vmatmul.bf16.gmra.mxu0 %v1760
        %v2008 = vpop.f32.mrf.mxu0
        %v2009 = vadd.f32 0.0, %v2008
        %v2010 = vpop.f32.mrf.mxu0
        %v2011 = vadd.f32 0.0, %v2010
        %2012 = vmatmul.bf16.gmra.mxu0 %v1763
        %v2013 = vpop.f32.mrf.mxu0
        %v2014 = vadd.f32 0.0, %v2013
        %v2015 = vpop.f32.mrf.mxu0
        %v2016 = vadd.f32 0.0, %v2015
        %2017 = vmatmul.bf16.gmra.mxu0 %v1766
        %v2018 = vpop.f32.mrf.mxu0
        %v2019 = vadd.f32 0.0, %v2018
        %v2020 = vpop.f32.mrf.mxu0
        %v2021 = vadd.f32 0.0, %v2020
        %2022 = vmatmul.bf16.gmra.mxu0 %v1769
        %v2023 = vpop.f32.mrf.mxu0
        %v2024 = vadd.f32 0.0, %v2023
        %v2025 = vpop.f32.mrf.mxu0
        %v2026 = vadd.f32 0.0, %v2025
        %2027 = vmatmul.bf16.gmra.mxu0 %v1772
        %v2028 = vpop.f32.mrf.mxu0
        %v2029 = vadd.f32 0.0, %v2028
        %v2030 = vpop.f32.mrf.mxu0
        %v2031 = vadd.f32 0.0, %v2030
        %2032 = vmatmul.bf16.gmra.mxu0 %v1775
        %v2033 = vpop.f32.mrf.mxu0
        %v2034 = vadd.f32 0.0, %v2033
        %v2035 = vpop.f32.mrf.mxu0
        %v2036 = vadd.f32 0.0, %v2035
        %2037 = vmatmul.bf16.gmra.mxu0 %v1778
        %v2038 = vpop.f32.mrf.mxu0
        %v2039 = vadd.f32 0.0, %v2038
        %v2040 = vpop.f32.mrf.mxu0
        %v2041 = vadd.f32 0.0, %v2040
        %2042 = vmatmul.bf16.gmra.mxu0 %v1781
        %v2043 = vpop.f32.mrf.mxu0
        %v2044 = vadd.f32 0.0, %v2043
        %v2045 = vpop.f32.mrf.mxu0
        %v2046 = vadd.f32 0.0, %v2045
        %2047 = vmatmul.bf16.gmra.mxu0 %v1784
        %v2048 = vpop.f32.mrf.mxu0
        %v2049 = vadd.f32 0.0, %v2048
        %v2050 = vpop.f32.mrf.mxu0
        %v2051 = vadd.f32 0.0, %v2050
        %2052 = vdwg.mxu0
        %2053 = vmatpush.bf16.msra.mxu0 0
        %2054 = vmatpush.bf16.msra.mxu0 0
        %2055 = vmatpush.bf16.msra.mxu0 0
        %2056 = vmatpush.bf16.msra.mxu0 0
        %2057 = vmatpush.bf16.msra.mxu0 0
        %2058 = vmatpush.bf16.msra.mxu0 0
        %2059 = vmatpush.bf16.msra.mxu0 %v1729
        %2060 = vmatpush.bf16.msra.mxu0 %v1725
        %2061 = vmatmul.bf16.gmra.mxu0 %v1739
        %v2062 = vpop.f32.mrf.mxu0
        %v2063 = vadd.f32 0.0, %v2062
        %v2064 = vpop.f32.mrf.mxu0
        %v2065 = vadd.f32 0.0, %v2064
        %2066 = vmatmul.bf16.gmra.mxu0 %v1742
        %v2067 = vpop.f32.mrf.mxu0
        %v2068 = vadd.f32 0.0, %v2067
        %v2069 = vpop.f32.mrf.mxu0
        %v2070 = vadd.f32 0.0, %v2069
        %2071 = vmatmul.bf16.gmra.mxu0 %v1745
        %v2072 = vpop.f32.mrf.mxu0
        %v2073 = vadd.f32 0.0, %v2072
        %v2074 = vpop.f32.mrf.mxu0
        %v2075 = vadd.f32 0.0, %v2074
        %2076 = vmatmul.bf16.gmra.mxu0 %v1748
        %v2077 = vpop.f32.mrf.mxu0
        %v2078 = vadd.f32 0.0, %v2077
        %v2079 = vpop.f32.mrf.mxu0
        %v2080 = vadd.f32 0.0, %v2079
        %2081 = vmatmul.bf16.gmra.mxu0 %v1751
        %v2082 = vpop.f32.mrf.mxu0
        %v2083 = vadd.f32 0.0, %v2082
        %v2084 = vpop.f32.mrf.mxu0
        %v2085 = vadd.f32 0.0, %v2084
        %2086 = vmatmul.bf16.gmra.mxu0 %v1754
        %v2087 = vpop.f32.mrf.mxu0
        %v2088 = vadd.f32 0.0, %v2087
        %v2089 = vpop.f32.mrf.mxu0
        %v2090 = vadd.f32 0.0, %v2089
        %2091 = vmatmul.bf16.gmra.mxu0 %v1757
        %v2092 = vpop.f32.mrf.mxu0
        %v2093 = vadd.f32 0.0, %v2092
        %v2094 = vpop.f32.mrf.mxu0
        %v2095 = vadd.f32 0.0, %v2094
        %2096 = vmatmul.bf16.gmra.mxu0 %v1760
        %v2097 = vpop.f32.mrf.mxu0
        %v2098 = vadd.f32 0.0, %v2097
        %v2099 = vpop.f32.mrf.mxu0
        %v2100 = vadd.f32 0.0, %v2099
        %2101 = vmatmul.bf16.gmra.mxu0 %v1763
        %v2102 = vpop.f32.mrf.mxu0
        %v2103 = vadd.f32 0.0, %v2102
        %v2104 = vpop.f32.mrf.mxu0
        %v2105 = vadd.f32 0.0, %v2104
        %2106 = vmatmul.bf16.gmra.mxu0 %v1766
        %v2107 = vpop.f32.mrf.mxu0
        %v2108 = vadd.f32 0.0, %v2107
        %v2109 = vpop.f32.mrf.mxu0
        %v2110 = vadd.f32 0.0, %v2109
        %2111 = vmatmul.bf16.gmra.mxu0 %v1769
        %v2112 = vpop.f32.mrf.mxu0
        %v2113 = vadd.f32 0.0, %v2112
        %v2114 = vpop.f32.mrf.mxu0
        %v2115 = vadd.f32 0.0, %v2114
        %2116 = vmatmul.bf16.gmra.mxu0 %v1772
        %v2117 = vpop.f32.mrf.mxu0
        %v2118 = vadd.f32 0.0, %v2117
        %v2119 = vpop.f32.mrf.mxu0
        %v2120 = vadd.f32 0.0, %v2119
        %2121 = vmatmul.bf16.gmra.mxu0 %v1775
        %v2122 = vpop.f32.mrf.mxu0
        %v2123 = vadd.f32 0.0, %v2122
        %v2124 = vpop.f32.mrf.mxu0
        %v2125 = vadd.f32 0.0, %v2124
        %2126 = vmatmul.bf16.gmra.mxu0 %v1778
        %v2127 = vpop.f32.mrf.mxu0
        %v2128 = vadd.f32 0.0, %v2127
        %v2129 = vpop.f32.mrf.mxu0
        %v2130 = vadd.f32 0.0, %v2129
        %2131 = vmatmul.bf16.gmra.mxu0 %v1781
        %v2132 = vpop.f32.mrf.mxu0
        %v2133 = vadd.f32 0.0, %v2132
        %v2134 = vpop.f32.mrf.mxu0
        %v2135 = vadd.f32 0.0, %v2134
        %2136 = vmatmul.bf16.gmra.mxu0 %v1784
        %v2137 = vpop.f32.mrf.mxu0
        %v2138 = vadd.f32 0.0, %v2137
        %v2139 = vpop.f32.mrf.mxu0
        %v2140 = vadd.f32 0.0, %v2139
        %2141 = vdwg.mxu0
        %v2146 = vunpack.c.l.b16 %v655
        %v2147 = vunpack.c.h.b16 %v655
        %v2148 = vunpack.c.l.b16 %v656
        %v2149 = vunpack.c.h.b16 %v656
        %v2150 = vunpack.c.l.b16 %v657
        %v2151 = vunpack.c.h.b16 %v657
        %v2152 = vunpack.c.l.b16 %v658
        %v2153 = vunpack.c.h.b16 %v658
        %v2154 = vpack.c.b16 %v2148, %v2146
        %v2155 = vpack.c.b16 %v2149, %v2147
        %v2156 = vpack.c.b16 %v2152, %v2150
        %v2157 = vpack.c.b16 %v2153, %v2151
        %2162 = vxpose.binary.xlu0.c.b16.start [1/16] %v2155, %v2154, 128
        %2163 = vxpose.binary.xlu0.c.b16.cont [2/16] %v2157, %v2156, 128
        %2164 = vxpose.binary.xlu0.c.b16.cont [3/16] 0, 0, 128
        %2165 = vxpose.binary.xlu0.c.b16.cont [4/16] 0, 0, 128
        %2166 = vxpose.binary.xlu0.c.b16.cont [5/16] 0, 0, 128
        %2167 = vxpose.binary.xlu0.c.b16.cont [6/16] 0, 0, 128
        %2168 = vxpose.binary.xlu0.c.b16.cont [7/16] 0, 0, 128
        %2169 = vxpose.binary.xlu0.c.b16.end [8/16] 0, 0, 128
        %v2170 = vpop.trf.xlu0
        %v2171 = vpop.trf.xlu0
        %v2172 = vpop.trf.xlu0
        %v2173 = vpop.trf.xlu0
        %v2174 = vpop.trf.xlu0
        %v2175 = vpop.trf.xlu0
        %v2176 = vpop.trf.xlu0
        %v2177 = vpop.trf.xlu0
        %v2178 = vpop.trf.xlu0
        %v2179 = vpop.trf.xlu0
        %v2180 = vpop.trf.xlu0
        %v2181 = vpop.trf.xlu0
        %v2182 = vpop.trf.xlu0
        %v2183 = vpop.trf.xlu0
        %v2184 = vpop.trf.xlu0
        %v2185 = vpop.trf.xlu0
        %v2194 = vunpack.c.l.b16 %v630
        %v2195 = vunpack.c.h.b16 %v630
        %v2196 = vunpack.c.l.b16 %v631
        %v2197 = vunpack.c.h.b16 %v631
        %v2198 = vunpack.c.l.b16 %v632
        %v2199 = vunpack.c.h.b16 %v632
        %v2200 = vunpack.c.l.b16 %v633
        %v2201 = vunpack.c.h.b16 %v633
        %v2202 = vunpack.c.l.b16 %v634
        %v2203 = vunpack.c.h.b16 %v634
        %v2204 = vunpack.c.l.b16 %v635
        %v2205 = vunpack.c.h.b16 %v635
        %v2206 = vunpack.c.l.b16 %v636
        %v2207 = vunpack.c.h.b16 %v636
        %v2208 = vunpack.c.l.b16 %v637
        %v2209 = vunpack.c.h.b16 %v637
        %v2210 = vpack.c.b16 %v2198, %v2194
        %v2211 = vpack.c.b16 %v2199, %v2195
        %v2212 = vpack.c.b16 %v2200, %v2196
        %v2213 = vpack.c.b16 %v2201, %v2197
        %v2214 = vpack.c.b16 %v2206, %v2202
        %v2215 = vpack.c.b16 %v2207, %v2203
        %v2216 = vpack.c.b16 %v2208, %v2204
        %v2217 = vpack.c.b16 %v2209, %v2205
        %v2227 = vsel %vm761, %v2170, 0
        %v2230 = vsel %vm761, %v2172, 0
        %v2233 = vsel %vm761, %v2174, 0
        %v2236 = vsel %vm761, %v2176, 0
        %v2239 = vsel %vm761, %v2178, 0
        %v2242 = vsel %vm761, %v2180, 0
        %v2245 = vsel %vm761, %v2182, 0
        %v2248 = vsel %vm761, %v2184, 0
        %v2251 = vsel %vm761, %v2171, 0
        %v2254 = vsel %vm761, %v2173, 0
        %v2257 = vsel %vm761, %v2175, 0
        %v2260 = vsel %vm761, %v2177, 0
        %v2263 = vsel %vm761, %v2179, 0
        %v2266 = vsel %vm761, %v2181, 0
        %v2269 = vsel %vm761, %v2183, 0
        %v2272 = vsel %vm761, %v2185, 0
        %2274 = vmatpush.bf16.msra.mxu0 0
        %2275 = vmatpush.bf16.msra.mxu0 0
        %2276 = vmatpush.bf16.msra.mxu0 0
        %2277 = vmatpush.bf16.msra.mxu0 0
        %2278 = vmatpush.bf16.msra.mxu0 0
        %2279 = vmatpush.bf16.msra.mxu0 0
        %2280 = vmatpush.bf16.msra.mxu0 %v2214
        %2281 = vmatpush.bf16.msra.mxu0 %v2210
        %2282 = vmatmul.bf16.gmra.mxu0 %v2227
        %v2283 = vpop.f32.mrf.mxu0
        %v2284 = vadd.f32 0.0, %v2283
        %v2285 = vpop.f32.mrf.mxu0
        %v2286 = vadd.f32 0.0, %v2285
        %2287 = vmatmul.bf16.gmra.mxu0 %v2230
        %v2288 = vpop.f32.mrf.mxu0
        %v2289 = vadd.f32 0.0, %v2288
        %v2290 = vpop.f32.mrf.mxu0
        %v2291 = vadd.f32 0.0, %v2290
        %2292 = vmatmul.bf16.gmra.mxu0 %v2233
        %v2293 = vpop.f32.mrf.mxu0
        %v2294 = vadd.f32 0.0, %v2293
        %v2295 = vpop.f32.mrf.mxu0
        %v2296 = vadd.f32 0.0, %v2295
        %2297 = vmatmul.bf16.gmra.mxu0 %v2236
        %v2298 = vpop.f32.mrf.mxu0
        %v2299 = vadd.f32 0.0, %v2298
        %v2300 = vpop.f32.mrf.mxu0
        %v2301 = vadd.f32 0.0, %v2300
        %2302 = vmatmul.bf16.gmra.mxu0 %v2239
        %v2303 = vpop.f32.mrf.mxu0
        %v2304 = vadd.f32 0.0, %v2303
        %v2305 = vpop.f32.mrf.mxu0
        %v2306 = vadd.f32 0.0, %v2305
        %2307 = vmatmul.bf16.gmra.mxu0 %v2242
        %v2308 = vpop.f32.mrf.mxu0
        %v2309 = vadd.f32 0.0, %v2308
        %v2310 = vpop.f32.mrf.mxu0
        %v2311 = vadd.f32 0.0, %v2310
        %2312 = vmatmul.bf16.gmra.mxu0 %v2245
        %v2313 = vpop.f32.mrf.mxu0
        %v2314 = vadd.f32 0.0, %v2313
        %v2315 = vpop.f32.mrf.mxu0
        %v2316 = vadd.f32 0.0, %v2315
        %2317 = vmatmul.bf16.gmra.mxu0 %v2248
        %v2318 = vpop.f32.mrf.mxu0
        %v2319 = vadd.f32 0.0, %v2318
        %v2320 = vpop.f32.mrf.mxu0
        %v2321 = vadd.f32 0.0, %v2320
        %2322 = vmatmul.bf16.gmra.mxu0 %v2251
        %v2323 = vpop.f32.mrf.mxu0
        %v2324 = vadd.f32 0.0, %v2323
        %v2325 = vpop.f32.mrf.mxu0
        %v2326 = vadd.f32 0.0, %v2325
        %2327 = vmatmul.bf16.gmra.mxu0 %v2254
        %v2328 = vpop.f32.mrf.mxu0
        %v2329 = vadd.f32 0.0, %v2328
        %v2330 = vpop.f32.mrf.mxu0
        %v2331 = vadd.f32 0.0, %v2330
        %2332 = vmatmul.bf16.gmra.mxu0 %v2257
        %v2333 = vpop.f32.mrf.mxu0
        %v2334 = vadd.f32 0.0, %v2333
        %v2335 = vpop.f32.mrf.mxu0
        %v2336 = vadd.f32 0.0, %v2335
        %2337 = vmatmul.bf16.gmra.mxu0 %v2260
        %v2338 = vpop.f32.mrf.mxu0
        %v2339 = vadd.f32 0.0, %v2338
        %v2340 = vpop.f32.mrf.mxu0
        %v2341 = vadd.f32 0.0, %v2340
        %2342 = vmatmul.bf16.gmra.mxu0 %v2263
        %v2343 = vpop.f32.mrf.mxu0
        %v2344 = vadd.f32 0.0, %v2343
        %v2345 = vpop.f32.mrf.mxu0
        %v2346 = vadd.f32 0.0, %v2345
        %2347 = vmatmul.bf16.gmra.mxu0 %v2266
        %v2348 = vpop.f32.mrf.mxu0
        %v2349 = vadd.f32 0.0, %v2348
        %v2350 = vpop.f32.mrf.mxu0
        %v2351 = vadd.f32 0.0, %v2350
        %2352 = vmatmul.bf16.gmra.mxu0 %v2269
        %v2353 = vpop.f32.mrf.mxu0
        %v2354 = vadd.f32 0.0, %v2353
        %v2355 = vpop.f32.mrf.mxu0
        %v2356 = vadd.f32 0.0, %v2355
        %2357 = vmatmul.bf16.gmra.mxu0 %v2272
        %v2358 = vpop.f32.mrf.mxu0
        %v2359 = vadd.f32 0.0, %v2358
        %v2360 = vpop.f32.mrf.mxu0
        %v2361 = vadd.f32 0.0, %v2360
        %2362 = vdwg.mxu0
        %2363 = vmatpush.bf16.msra.mxu0 0
        %2364 = vmatpush.bf16.msra.mxu0 0
        %2365 = vmatpush.bf16.msra.mxu0 0
        %2366 = vmatpush.bf16.msra.mxu0 0
        %2367 = vmatpush.bf16.msra.mxu0 0
        %2368 = vmatpush.bf16.msra.mxu0 0
        %2369 = vmatpush.bf16.msra.mxu0 %v2215
        %2370 = vmatpush.bf16.msra.mxu0 %v2211
        %2371 = vmatmul.bf16.gmra.mxu0 %v2227
        %v2372 = vpop.f32.mrf.mxu0
        %v2373 = vadd.f32 0.0, %v2372
        %v2374 = vpop.f32.mrf.mxu0
        %v2375 = vadd.f32 0.0, %v2374
        %2376 = vmatmul.bf16.gmra.mxu0 %v2230
        %v2377 = vpop.f32.mrf.mxu0
        %v2378 = vadd.f32 0.0, %v2377
        %v2379 = vpop.f32.mrf.mxu0
        %v2380 = vadd.f32 0.0, %v2379
        %2381 = vmatmul.bf16.gmra.mxu0 %v2233
        %v2382 = vpop.f32.mrf.mxu0
        %v2383 = vadd.f32 0.0, %v2382
        %v2384 = vpop.f32.mrf.mxu0
        %v2385 = vadd.f32 0.0, %v2384
        %2386 = vmatmul.bf16.gmra.mxu0 %v2236
        %v2387 = vpop.f32.mrf.mxu0
        %v2388 = vadd.f32 0.0, %v2387
        %v2389 = vpop.f32.mrf.mxu0
        %v2390 = vadd.f32 0.0, %v2389
        %2391 = vmatmul.bf16.gmra.mxu0 %v2239
        %v2392 = vpop.f32.mrf.mxu0
        %v2393 = vadd.f32 0.0, %v2392
        %v2394 = vpop.f32.mrf.mxu0
        %v2395 = vadd.f32 0.0, %v2394
        %2396 = vmatmul.bf16.gmra.mxu0 %v2242
        %v2397 = vpop.f32.mrf.mxu0
        %v2398 = vadd.f32 0.0, %v2397
        %v2399 = vpop.f32.mrf.mxu0
        %v2400 = vadd.f32 0.0, %v2399
        %2401 = vmatmul.bf16.gmra.mxu0 %v2245
        %v2402 = vpop.f32.mrf.mxu0
        %v2403 = vadd.f32 0.0, %v2402
        %v2404 = vpop.f32.mrf.mxu0
        %v2405 = vadd.f32 0.0, %v2404
        %2406 = vmatmul.bf16.gmra.mxu0 %v2248
        %v2407 = vpop.f32.mrf.mxu0
        %v2408 = vadd.f32 0.0, %v2407
        %v2409 = vpop.f32.mrf.mxu0
        %v2410 = vadd.f32 0.0, %v2409
        %2411 = vmatmul.bf16.gmra.mxu0 %v2251
        %v2412 = vpop.f32.mrf.mxu0
        %v2413 = vadd.f32 0.0, %v2412
        %v2414 = vpop.f32.mrf.mxu0
        %v2415 = vadd.f32 0.0, %v2414
        %2416 = vmatmul.bf16.gmra.mxu0 %v2254
        %v2417 = vpop.f32.mrf.mxu0
        %v2418 = vadd.f32 0.0, %v2417
        %v2419 = vpop.f32.mrf.mxu0
        %v2420 = vadd.f32 0.0, %v2419
        %2421 = vmatmul.bf16.gmra.mxu0 %v2257
        %v2422 = vpop.f32.mrf.mxu0
        %v2423 = vadd.f32 0.0, %v2422
        %v2424 = vpop.f32.mrf.mxu0
        %v2425 = vadd.f32 0.0, %v2424
        %2426 = vmatmul.bf16.gmra.mxu0 %v2260
        %v2427 = vpop.f32.mrf.mxu0
        %v2428 = vadd.f32 0.0, %v2427
        %v2429 = vpop.f32.mrf.mxu0
        %v2430 = vadd.f32 0.0, %v2429
        %2431 = vmatmul.bf16.gmra.mxu0 %v2263
        %v2432 = vpop.f32.mrf.mxu0
        %v2433 = vadd.f32 0.0, %v2432
        %v2434 = vpop.f32.mrf.mxu0
        %v2435 = vadd.f32 0.0, %v2434
        %2436 = vmatmul.bf16.gmra.mxu0 %v2266
        %v2437 = vpop.f32.mrf.mxu0
        %v2438 = vadd.f32 0.0, %v2437
        %v2439 = vpop.f32.mrf.mxu0
        %v2440 = vadd.f32 0.0, %v2439
        %2441 = vmatmul.bf16.gmra.mxu0 %v2269
        %v2442 = vpop.f32.mrf.mxu0
        %v2443 = vadd.f32 0.0, %v2442
        %v2444 = vpop.f32.mrf.mxu0
        %v2445 = vadd.f32 0.0, %v2444
        %2446 = vmatmul.bf16.gmra.mxu0 %v2272
        %v2447 = vpop.f32.mrf.mxu0
        %v2448 = vadd.f32 0.0, %v2447
        %v2449 = vpop.f32.mrf.mxu0
        %v2450 = vadd.f32 0.0, %v2449
        %2451 = vdwg.mxu0
        %2452 = vmatpush.bf16.msra.mxu0 0
        %2453 = vmatpush.bf16.msra.mxu0 0
        %2454 = vmatpush.bf16.msra.mxu0 0
        %2455 = vmatpush.bf16.msra.mxu0 0
        %2456 = vmatpush.bf16.msra.mxu0 0
        %2457 = vmatpush.bf16.msra.mxu0 0
        %2458 = vmatpush.bf16.msra.mxu0 %v2216
        %2459 = vmatpush.bf16.msra.mxu0 %v2212
        %2460 = vmatmul.bf16.gmra.mxu0 %v2227
        %v2461 = vpop.f32.mrf.mxu0
        %v2462 = vadd.f32 0.0, %v2461
        %v2463 = vpop.f32.mrf.mxu0
        %v2464 = vadd.f32 0.0, %v2463
        %2465 = vmatmul.bf16.gmra.mxu0 %v2230
        %v2466 = vpop.f32.mrf.mxu0
        %v2467 = vadd.f32 0.0, %v2466
        %v2468 = vpop.f32.mrf.mxu0
        %v2469 = vadd.f32 0.0, %v2468
        %2470 = vmatmul.bf16.gmra.mxu0 %v2233
        %v2471 = vpop.f32.mrf.mxu0
        %v2472 = vadd.f32 0.0, %v2471
        %v2473 = vpop.f32.mrf.mxu0
        %v2474 = vadd.f32 0.0, %v2473
        %2475 = vmatmul.bf16.gmra.mxu0 %v2236
        %v2476 = vpop.f32.mrf.mxu0
        %v2477 = vadd.f32 0.0, %v2476
        %v2478 = vpop.f32.mrf.mxu0
        %v2479 = vadd.f32 0.0, %v2478
        %2480 = vmatmul.bf16.gmra.mxu0 %v2239
        %v2481 = vpop.f32.mrf.mxu0
        %v2482 = vadd.f32 0.0, %v2481
        %v2483 = vpop.f32.mrf.mxu0
        %v2484 = vadd.f32 0.0, %v2483
        %2485 = vmatmul.bf16.gmra.mxu0 %v2242
        %v2486 = vpop.f32.mrf.mxu0
        %v2487 = vadd.f32 0.0, %v2486
        %v2488 = vpop.f32.mrf.mxu0
        %v2489 = vadd.f32 0.0, %v2488
        %2490 = vmatmul.bf16.gmra.mxu0 %v2245
        %v2491 = vpop.f32.mrf.mxu0
        %v2492 = vadd.f32 0.0, %v2491
        %v2493 = vpop.f32.mrf.mxu0
        %v2494 = vadd.f32 0.0, %v2493
        %2495 = vmatmul.bf16.gmra.mxu0 %v2248
        %v2496 = vpop.f32.mrf.mxu0
        %v2497 = vadd.f32 0.0, %v2496
        %v2498 = vpop.f32.mrf.mxu0
        %v2499 = vadd.f32 0.0, %v2498
        %2500 = vmatmul.bf16.gmra.mxu0 %v2251
        %v2501 = vpop.f32.mrf.mxu0
        %v2502 = vadd.f32 0.0, %v2501
        %v2503 = vpop.f32.mrf.mxu0
        %v2504 = vadd.f32 0.0, %v2503
        %2505 = vmatmul.bf16.gmra.mxu0 %v2254
        %v2506 = vpop.f32.mrf.mxu0
        %v2507 = vadd.f32 0.0, %v2506
        %v2508 = vpop.f32.mrf.mxu0
        %v2509 = vadd.f32 0.0, %v2508
        %2510 = vmatmul.bf16.gmra.mxu0 %v2257
        %v2511 = vpop.f32.mrf.mxu0
        %v2512 = vadd.f32 0.0, %v2511
        %v2513 = vpop.f32.mrf.mxu0
        %v2514 = vadd.f32 0.0, %v2513
        %2515 = vmatmul.bf16.gmra.mxu0 %v2260
        %v2516 = vpop.f32.mrf.mxu0
        %v2517 = vadd.f32 0.0, %v2516
        %v2518 = vpop.f32.mrf.mxu0
        %v2519 = vadd.f32 0.0, %v2518
        %2520 = vmatmul.bf16.gmra.mxu0 %v2263
        %v2521 = vpop.f32.mrf.mxu0
        %v2522 = vadd.f32 0.0, %v2521
        %v2523 = vpop.f32.mrf.mxu0
        %v2524 = vadd.f32 0.0, %v2523
        %2525 = vmatmul.bf16.gmra.mxu0 %v2266
        %v2526 = vpop.f32.mrf.mxu0
        %v2527 = vadd.f32 0.0, %v2526
        %v2528 = vpop.f32.mrf.mxu0
        %v2529 = vadd.f32 0.0, %v2528
        %2530 = vmatmul.bf16.gmra.mxu0 %v2269
        %v2531 = vpop.f32.mrf.mxu0
        %v2532 = vadd.f32 0.0, %v2531
        %v2533 = vpop.f32.mrf.mxu0
        %v2534 = vadd.f32 0.0, %v2533
        %2535 = vmatmul.bf16.gmra.mxu0 %v2272
        %v2536 = vpop.f32.mrf.mxu0
        %v2537 = vadd.f32 0.0, %v2536
        %v2538 = vpop.f32.mrf.mxu0
        %v2539 = vadd.f32 0.0, %v2538
        %2540 = vdwg.mxu0
        %2541 = vmatpush.bf16.msra.mxu0 0
        %2542 = vmatpush.bf16.msra.mxu0 0
        %2543 = vmatpush.bf16.msra.mxu0 0
        %2544 = vmatpush.bf16.msra.mxu0 0
        %2545 = vmatpush.bf16.msra.mxu0 0
        %2546 = vmatpush.bf16.msra.mxu0 0
        %2547 = vmatpush.bf16.msra.mxu0 %v2217
        %2548 = vmatpush.bf16.msra.mxu0 %v2213
        %2549 = vmatmul.bf16.gmra.mxu0 %v2227
        %v2550 = vpop.f32.mrf.mxu0
        %v2551 = vadd.f32 0.0, %v2550
        %v2552 = vpop.f32.mrf.mxu0
        %v2553 = vadd.f32 0.0, %v2552
        %2554 = vmatmul.bf16.gmra.mxu0 %v2230
        %v2555 = vpop.f32.mrf.mxu0
        %v2556 = vadd.f32 0.0, %v2555
        %v2557 = vpop.f32.mrf.mxu0
        %v2558 = vadd.f32 0.0, %v2557
        %2559 = vmatmul.bf16.gmra.mxu0 %v2233
        %v2560 = vpop.f32.mrf.mxu0
        %v2561 = vadd.f32 0.0, %v2560
        %v2562 = vpop.f32.mrf.mxu0
        %v2563 = vadd.f32 0.0, %v2562
        %2564 = vmatmul.bf16.gmra.mxu0 %v2236
        %v2565 = vpop.f32.mrf.mxu0
        %v2566 = vadd.f32 0.0, %v2565
        %v2567 = vpop.f32.mrf.mxu0
        %v2568 = vadd.f32 0.0, %v2567
        %2569 = vmatmul.bf16.gmra.mxu0 %v2239
        %v2570 = vpop.f32.mrf.mxu0
        %v2571 = vadd.f32 0.0, %v2570
        %v2572 = vpop.f32.mrf.mxu0
        %v2573 = vadd.f32 0.0, %v2572
        %2574 = vmatmul.bf16.gmra.mxu0 %v2242
        %v2575 = vpop.f32.mrf.mxu0
        %v2576 = vadd.f32 0.0, %v2575
        %v2577 = vpop.f32.mrf.mxu0
        %v2578 = vadd.f32 0.0, %v2577
        %2579 = vmatmul.bf16.gmra.mxu0 %v2245
        %v2580 = vpop.f32.mrf.mxu0
        %v2581 = vadd.f32 0.0, %v2580
        %v2582 = vpop.f32.mrf.mxu0
        %v2583 = vadd.f32 0.0, %v2582
        %2584 = vmatmul.bf16.gmra.mxu0 %v2248
        %v2585 = vpop.f32.mrf.mxu0
        %v2586 = vadd.f32 0.0, %v2585
        %v2587 = vpop.f32.mrf.mxu0
        %v2588 = vadd.f32 0.0, %v2587
        %2589 = vmatmul.bf16.gmra.mxu0 %v2251
        %v2590 = vpop.f32.mrf.mxu0
        %v2591 = vadd.f32 0.0, %v2590
        %v2592 = vpop.f32.mrf.mxu0
        %v2593 = vadd.f32 0.0, %v2592
        %2594 = vmatmul.bf16.gmra.mxu0 %v2254
        %v2595 = vpop.f32.mrf.mxu0
        %v2596 = vadd.f32 0.0, %v2595
        %v2597 = vpop.f32.mrf.mxu0
        %v2598 = vadd.f32 0.0, %v2597
        %2599 = vmatmul.bf16.gmra.mxu0 %v2257
        %v2600 = vpop.f32.mrf.mxu0
        %v2601 = vadd.f32 0.0, %v2600
        %v2602 = vpop.f32.mrf.mxu0
        %v2603 = vadd.f32 0.0, %v2602
        %2604 = vmatmul.bf16.gmra.mxu0 %v2260
        %v2605 = vpop.f32.mrf.mxu0
        %v2606 = vadd.f32 0.0, %v2605
        %v2607 = vpop.f32.mrf.mxu0
        %v2608 = vadd.f32 0.0, %v2607
        %2609 = vmatmul.bf16.gmra.mxu0 %v2263
        %v2610 = vpop.f32.mrf.mxu0
        %v2611 = vadd.f32 0.0, %v2610
        %v2612 = vpop.f32.mrf.mxu0
        %v2613 = vadd.f32 0.0, %v2612
        %2614 = vmatmul.bf16.gmra.mxu0 %v2266
        %v2615 = vpop.f32.mrf.mxu0
        %v2616 = vadd.f32 0.0, %v2615
        %v2617 = vpop.f32.mrf.mxu0
        %v2618 = vadd.f32 0.0, %v2617
        %2619 = vmatmul.bf16.gmra.mxu0 %v2269
        %v2620 = vpop.f32.mrf.mxu0
        %v2621 = vadd.f32 0.0, %v2620
        %v2622 = vpop.f32.mrf.mxu0
        %v2623 = vadd.f32 0.0, %v2622
        %2624 = vmatmul.bf16.gmra.mxu0 %v2272
        %v2625 = vpop.f32.mrf.mxu0
        %v2626 = vadd.f32 0.0, %v2625
        %v2627 = vpop.f32.mrf.mxu0
        %v2628 = vadd.f32 0.0, %v2627
        %2629 = vdwg.mxu0
        %v2630 = vld [vmem:[#allocation2] sm:$0xf]
        %v2631 = vld [vmem:[#allocation2 + $0x4] sm:$0xf]
        %v2632 = vld [vmem:[#allocation2 + $0x8] sm:$0xf]
        %v2633 = vld [vmem:[#allocation2 + $0xc] sm:$0xf]
        %v2634 = vmax.f32 %v820, %v822
        %v2635 = vmax.f32 %v2634, %v825
        %v2636 = vmax.f32 %v2635, %v827
        %v2637 = vmax.f32 %v2636, %v830
        %v2638 = vmax.f32 %v2637, %v832
        %v2639 = vmax.f32 %v2638, %v835
        %v2640 = vmax.f32 %v2639, %v837
        %v2641 = vmax.f32 %v2640, %v840
        %v2642 = vmax.f32 %v2641, %v842
        %v2643 = vmax.f32 %v2642, %v845
        %v2644 = vmax.f32 %v2643, %v847
        %v2645 = vmax.f32 %v2644, %v850
        %v2646 = vmax.f32 %v2645, %v852
        %v2647 = vmax.f32 %v2646, %v855
        %v2648 = vmax.f32 %v2647, %v857
        %v2649 = vmax.f32 %v2648, %v860
        %v2650 = vmax.f32 %v2649, %v862
        %v2651 = vmax.f32 %v2650, %v865
        %v2652 = vmax.f32 %v2651, %v867
        %v2653 = vmax.f32 %v2652, %v870
        %v2654 = vmax.f32 %v2653, %v872
        %v2655 = vmax.f32 %v2654, %v875
        %v2656 = vmax.f32 %v2655, %v877
        %v2657 = vmax.f32 %v2656, %v880
        %v2658 = vmax.f32 %v2657, %v882
        %v2659 = vmax.f32 %v2658, %v885
        %v2660 = vmax.f32 %v2659, %v887
        %v2661 = vmax.f32 %v2660, %v890
        %v2662 = vmax.f32 %v2661, %v892
        %v2663 = vmax.f32 %v2662, %v895
        %v2664 = vmax.f32 %v2663, %v897
        %v2665 = vrot.slane %v2664, 4
        %v2666 = vmax.f32 %v2664, %v2665
        %v2667 = vrot.slane %v2666, 2
        %v2668 = vmax.f32 %v2666, %v2667
        %v2669 = vrot.slane %v2668, 1
        %v2670 = vmax.f32 %v2668, %v2669
        %v2671 = vmax.f32 %v909, %v911
        %v2672 = vmax.f32 %v2671, %v914
        %v2673 = vmax.f32 %v2672, %v916
        %v2674 = vmax.f32 %v2673, %v919
        %v2675 = vmax.f32 %v2674, %v921
        %v2676 = vmax.f32 %v2675, %v924
        %v2677 = vmax.f32 %v2676, %v926
        %v2678 = vmax.f32 %v2677, %v929
        %v2679 = vmax.f32 %v2678, %v931
        %v2680 = vmax.f32 %v2679, %v934
        %v2681 = vmax.f32 %v2680, %v936
        %v2682 = vmax.f32 %v2681, %v939
        %v2683 = vmax.f32 %v2682, %v941
        %v2684 = vmax.f32 %v2683, %v944
        %v2685 = vmax.f32 %v2684, %v946
        %v2686 = vmax.f32 %v2685, %v949
        %v2687 = vmax.f32 %v2686, %v951
        %v2688 = vmax.f32 %v2687, %v954
        %v2689 = vmax.f32 %v2688, %v956
        %v2690 = vmax.f32 %v2689, %v959
        %v2691 = vmax.f32 %v2690, %v961
        %v2692 = vmax.f32 %v2691, %v964
        %v2693 = vmax.f32 %v2692, %v966
        %v2694 = vmax.f32 %v2693, %v969
        %v2695 = vmax.f32 %v2694, %v971
        %v2696 = vmax.f32 %v2695, %v974
        %v2697 = vmax.f32 %v2696, %v976
        %v2698 = vmax.f32 %v2697, %v979
        %v2699 = vmax.f32 %v2698, %v981
        %v2700 = vmax.f32 %v2699, %v984
        %v2701 = vmax.f32 %v2700, %v986
        %v2702 = vrot.slane %v2701, 4
        %v2703 = vmax.f32 %v2701, %v2702
        %v2704 = vrot.slane %v2703, 2
        %v2705 = vmax.f32 %v2703, %v2704
        %v2706 = vrot.slane %v2705, 1
        %v2707 = vmax.f32 %v2705, %v2706
        %v2708 = vmax.f32 %v998, %v1000
        %v2709 = vmax.f32 %v2708, %v1003
        %v2710 = vmax.f32 %v2709, %v1005
        %v2711 = vmax.f32 %v2710, %v1008
        %v2712 = vmax.f32 %v2711, %v1010
        %v2713 = vmax.f32 %v2712, %v1013
        %v2714 = vmax.f32 %v2713, %v1015
        %v2715 = vmax.f32 %v2714, %v1018
        %v2716 = vmax.f32 %v2715, %v1020
        %v2717 = vmax.f32 %v2716, %v1023
        %v2718 = vmax.f32 %v2717, %v1025
        %v2719 = vmax.f32 %v2718, %v1028
        %v2720 = vmax.f32 %v2719, %v1030
        %v2721 = vmax.f32 %v2720, %v1033
        %v2722 = vmax.f32 %v2721, %v1035
        %v2723 = vmax.f32 %v2722, %v1038
        %v2724 = vmax.f32 %v2723, %v1040
        %v2725 = vmax.f32 %v2724, %v1043
        %v2726 = vmax.f32 %v2725, %v1045
        %v2727 = vmax.f32 %v2726, %v1048
        %v2728 = vmax.f32 %v2727, %v1050
        %v2729 = vmax.f32 %v2728, %v1053
        %v2730 = vmax.f32 %v2729, %v1055
        %v2731 = vmax.f32 %v2730, %v1058
        %v2732 = vmax.f32 %v2731, %v1060
        %v2733 = vmax.f32 %v2732, %v1063
        %v2734 = vmax.f32 %v2733, %v1065
        %v2735 = vmax.f32 %v2734, %v1068
        %v2736 = vmax.f32 %v2735, %v1070
        %v2737 = vmax.f32 %v2736, %v1073
        %v2738 = vmax.f32 %v2737, %v1075
        %v2739 = vrot.slane %v2738, 4
        %v2740 = vmax.f32 %v2738, %v2739
        %v2741 = vrot.slane %v2740, 2
        %v2742 = vmax.f32 %v2740, %v2741
        %v2743 = vrot.slane %v2742, 1
        %v2744 = vmax.f32 %v2742, %v2743
        %v2745 = vmax.f32 %v1087, %v1089
        %v2746 = vmax.f32 %v2745, %v1092
        %v2747 = vmax.f32 %v2746, %v1094
        %v2748 = vmax.f32 %v2747, %v1097
        %v2749 = vmax.f32 %v2748, %v1099
        %v2750 = vmax.f32 %v2749, %v1102
        %v2751 = vmax.f32 %v2750, %v1104
        %v2752 = vmax.f32 %v2751, %v1107
        %v2753 = vmax.f32 %v2752, %v1109
        %v2754 = vmax.f32 %v2753, %v1112
        %v2755 = vmax.f32 %v2754, %v1114
        %v2756 = vmax.f32 %v2755, %v1117
        %v2757 = vmax.f32 %v2756, %v1119
        %v2758 = vmax.f32 %v2757, %v1122
        %v2759 = vmax.f32 %v2758, %v1124
        %v2760 = vmax.f32 %v2759, %v1127
        %v2761 = vmax.f32 %v2760, %v1129
        %v2762 = vmax.f32 %v2761, %v1132
        %v2763 = vmax.f32 %v2762, %v1134
        %v2764 = vmax.f32 %v2763, %v1137
        %v2765 = vmax.f32 %v2764, %v1139
        %v2766 = vmax.f32 %v2765, %v1142
        %v2767 = vmax.f32 %v2766, %v1144
        %v2768 = vmax.f32 %v2767, %v1147
        %v2769 = vmax.f32 %v2768, %v1149
        %v2770 = vmax.f32 %v2769, %v1152
        %v2771 = vmax.f32 %v2770, %v1154
        %v2772 = vmax.f32 %v2771, %v1157
        %v2773 = vmax.f32 %v2772, %v1159
        %v2774 = vmax.f32 %v2773, %v1162
        %v2775 = vmax.f32 %v2774, %v1164
        %v2776 = vrot.slane %v2775, 4
        %v2777 = vmax.f32 %v2775, %v2776
        %v2778 = vrot.slane %v2777, 2
        %v2779 = vmax.f32 %v2777, %v2778
        %v2780 = vrot.slane %v2779, 1
        %v2781 = vmax.f32 %v2779, %v2780
        %v2782 = vmax.f32 %v1308, %v1310
        %v2783 = vmax.f32 %v2782, %v1313
        %v2784 = vmax.f32 %v2783, %v1315
        %v2785 = vmax.f32 %v2784, %v1318
        %v2786 = vmax.f32 %v2785, %v1320
        %v2787 = vmax.f32 %v2786, %v1323
        %v2788 = vmax.f32 %v2787, %v1325
        %v2789 = vmax.f32 %v2788, %v1328
        %v2790 = vmax.f32 %v2789, %v1330
        %v2791 = vmax.f32 %v2790, %v1333
        %v2792 = vmax.f32 %v2791, %v1335
        %v2793 = vmax.f32 %v2792, %v1338
        %v2794 = vmax.f32 %v2793, %v1340
        %v2795 = vmax.f32 %v2794, %v1343
        %v2796 = vmax.f32 %v2795, %v1345
        %v2797 = vmax.f32 %v2796, %v1348
        %v2798 = vmax.f32 %v2797, %v1350
        %v2799 = vmax.f32 %v2798, %v1353
        %v2800 = vmax.f32 %v2799, %v1355
        %v2801 = vmax.f32 %v2800, %v1358
        %v2802 = vmax.f32 %v2801, %v1360
        %v2803 = vmax.f32 %v2802, %v1363
        %v2804 = vmax.f32 %v2803, %v1365
        %v2805 = vmax.f32 %v2804, %v1368
        %v2806 = vmax.f32 %v2805, %v1370
        %v2807 = vmax.f32 %v2806, %v1373
        %v2808 = vmax.f32 %v2807, %v1375
        %v2809 = vmax.f32 %v2808, %v1378
        %v2810 = vmax.f32 %v2809, %v1380
        %v2811 = vmax.f32 %v2810, %v1383
        %v2812 = vmax.f32 %v2811, %v1385
        %v2813 = vrot.slane %v2812, 4
        %v2814 = vmax.f32 %v2812, %v2813
        %v2815 = vrot.slane %v2814, 2
        %v2816 = vmax.f32 %v2814, %v2815
        %v2817 = vrot.slane %v2816, 1
        %v2818 = vmax.f32 %v2816, %v2817
        %v2819 = vmax.f32 %v1397, %v1399
        %v2820 = vmax.f32 %v2819, %v1402
        %v2821 = vmax.f32 %v2820, %v1404
        %v2822 = vmax.f32 %v2821, %v1407
        %v2823 = vmax.f32 %v2822, %v1409
        %v2824 = vmax.f32 %v2823, %v1412
        %v2825 = vmax.f32 %v2824, %v1414
        %v2826 = vmax.f32 %v2825, %v1417
        %v2827 = vmax.f32 %v2826, %v1419
        %v2828 = vmax.f32 %v2827, %v1422
        %v2829 = vmax.f32 %v2828, %v1424
        %v2830 = vmax.f32 %v2829, %v1427
        %v2831 = vmax.f32 %v2830, %v1429
        %v2832 = vmax.f32 %v2831, %v1432
        %v2833 = vmax.f32 %v2832, %v1434
        %v2834 = vmax.f32 %v2833, %v1437
        %v2835 = vmax.f32 %v2834, %v1439
        %v2836 = vmax.f32 %v2835, %v1442
        %v2837 = vmax.f32 %v2836, %v1444
        %v2838 = vmax.f32 %v2837, %v1447
        %v2839 = vmax.f32 %v2838, %v1449
        %v2840 = vmax.f32 %v2839, %v1452
        %v2841 = vmax.f32 %v2840, %v1454
        %v2842 = vmax.f32 %v2841, %v1457
        %v2843 = vmax.f32 %v2842, %v1459
        %v2844 = vmax.f32 %v2843, %v1462
        %v2845 = vmax.f32 %v2844, %v1464
        %v2846 = vmax.f32 %v2845, %v1467
        %v2847 = vmax.f32 %v2846, %v1469
        %v2848 = vmax.f32 %v2847, %v1472
        %v2849 = vmax.f32 %v2848, %v1474
        %v2850 = vrot.slane %v2849, 4
        %v2851 = vmax.f32 %v2849, %v2850
        %v2852 = vrot.slane %v2851, 2
        %v2853 = vmax.f32 %v2851, %v2852
        %v2854 = vrot.slane %v2853, 1
        %v2855 = vmax.f32 %v2853, %v2854
        %v2856 = vmax.f32 %v1486, %v1488
        %v2857 = vmax.f32 %v2856, %v1491
        %v2858 = vmax.f32 %v2857, %v1493
        %v2859 = vmax.f32 %v2858, %v1496
        %v2860 = vmax.f32 %v2859, %v1498
        %v2861 = vmax.f32 %v2860, %v1501
        %v2862 = vmax.f32 %v2861, %v1503
        %v2863 = vmax.f32 %v2862, %v1506
        %v2864 = vmax.f32 %v2863, %v1508
        %v2865 = vmax.f32 %v2864, %v1511
        %v2866 = vmax.f32 %v2865, %v1513
        %v2867 = vmax.f32 %v2866, %v1516
        %v2868 = vmax.f32 %v2867, %v1518
        %v2869 = vmax.f32 %v2868, %v1521
        %v2870 = vmax.f32 %v2869, %v1523
        %v2871 = vmax.f32 %v2870, %v1526
        %v2872 = vmax.f32 %v2871, %v1528
        %v2873 = vmax.f32 %v2872, %v1531
        %v2874 = vmax.f32 %v2873, %v1533
        %v2875 = vmax.f32 %v2874, %v1536
        %v2876 = vmax.f32 %v2875, %v1538
        %v2877 = vmax.f32 %v2876, %v1541
        %v2878 = vmax.f32 %v2877, %v1543
        %v2879 = vmax.f32 %v2878, %v1546
        %v2880 = vmax.f32 %v2879, %v1548
        %v2881 = vmax.f32 %v2880, %v1551
        %v2882 = vmax.f32 %v2881, %v1553
        %v2883 = vmax.f32 %v2882, %v1556
        %v2884 = vmax.f32 %v2883, %v1558
        %v2885 = vmax.f32 %v2884, %v1561
        %v2886 = vmax.f32 %v2885, %v1563
        %v2887 = vrot.slane %v2886, 4
        %v2888 = vmax.f32 %v2886, %v2887
        %v2889 = vrot.slane %v2888, 2
        %v2890 = vmax.f32 %v2888, %v2889
        %v2891 = vrot.slane %v2890, 1
        %v2892 = vmax.f32 %v2890, %v2891
        %v2893 = vmax.f32 %v1575, %v1577
        %v2894 = vmax.f32 %v2893, %v1580
        %v2895 = vmax.f32 %v2894, %v1582
        %v2896 = vmax.f32 %v2895, %v1585
        %v2897 = vmax.f32 %v2896, %v1587
        %v2898 = vmax.f32 %v2897, %v1590
        %v2899 = vmax.f32 %v2898, %v1592
        %v2900 = vmax.f32 %v2899, %v1595
        %v2901 = vmax.f32 %v2900, %v1597
        %v2902 = vmax.f32 %v2901, %v1600
        %v2903 = vmax.f32 %v2902, %v1602
        %v2904 = vmax.f32 %v2903, %v1605
        %v2905 = vmax.f32 %v2904, %v1607
        %v2906 = vmax.f32 %v2905, %v1610
        %v2907 = vmax.f32 %v2906, %v1612
        %v2908 = vmax.f32 %v2907, %v1615
        %v2909 = vmax.f32 %v2908, %v1617
        %v2910 = vmax.f32 %v2909, %v1620
        %v2911 = vmax.f32 %v2910, %v1622
        %v2912 = vmax.f32 %v2911, %v1625
        %v2913 = vmax.f32 %v2912, %v1627
        %v2914 = vmax.f32 %v2913, %v1630
        %v2915 = vmax.f32 %v2914, %v1632
        %v2916 = vmax.f32 %v2915, %v1635
        %v2917 = vmax.f32 %v2916, %v1637
        %v2918 = vmax.f32 %v2917, %v1640
        %v2919 = vmax.f32 %v2918, %v1642
        %v2920 = vmax.f32 %v2919, %v1645
        %v2921 = vmax.f32 %v2920, %v1647
        %v2922 = vmax.f32 %v2921, %v1650
        %v2923 = vmax.f32 %v2922, %v1652
        %v2924 = vrot.slane %v2923, 4
        %v2925 = vmax.f32 %v2923, %v2924
        %v2926 = vrot.slane %v2925, 2
        %v2927 = vmax.f32 %v2925, %v2926
        %v2928 = vrot.slane %v2927, 1
        %v2929 = vmax.f32 %v2927, %v2928
        %v2930 = vmax.f32 %v1796, %v1798
        %v2931 = vmax.f32 %v2930, %v1801
        %v2932 = vmax.f32 %v2931, %v1803
        %v2933 = vmax.f32 %v2932, %v1806
        %v2934 = vmax.f32 %v2933, %v1808
        %v2935 = vmax.f32 %v2934, %v1811
        %v2936 = vmax.f32 %v2935, %v1813
        %v2937 = vmax.f32 %v2936, %v1816
        %v2938 = vmax.f32 %v2937, %v1818
        %v2939 = vmax.f32 %v2938, %v1821
        %v2940 = vmax.f32 %v2939, %v1823
        %v2941 = vmax.f32 %v2940, %v1826
        %v2942 = vmax.f32 %v2941, %v1828
        %v2943 = vmax.f32 %v2942, %v1831
        %v2944 = vmax.f32 %v2943, %v1833
        %v2945 = vmax.f32 %v2944, %v1836
        %v2946 = vmax.f32 %v2945, %v1838
        %v2947 = vmax.f32 %v2946, %v1841
        %v2948 = vmax.f32 %v2947, %v1843
        %v2949 = vmax.f32 %v2948, %v1846
        %v2950 = vmax.f32 %v2949, %v1848
        %v2951 = vmax.f32 %v2950, %v1851
        %v2952 = vmax.f32 %v2951, %v1853
        %v2953 = vmax.f32 %v2952, %v1856
        %v2954 = vmax.f32 %v2953, %v1858
        %v2955 = vmax.f32 %v2954, %v1861
        %v2956 = vmax.f32 %v2955, %v1863
        %v2957 = vmax.f32 %v2956, %v1866
        %v2958 = vmax.f32 %v2957, %v1868
        %v2959 = vmax.f32 %v2958, %v1871
        %v2960 = vmax.f32 %v2959, %v1873
        %v2961 = vrot.slane %v2960, 4
        %v2962 = vmax.f32 %v2960, %v2961
        %v2963 = vrot.slane %v2962, 2
        %v2964 = vmax.f32 %v2962, %v2963
        %v2965 = vrot.slane %v2964, 1
        %v2966 = vmax.f32 %v2964, %v2965
        %v2967 = vmax.f32 %v1885, %v1887
        %v2968 = vmax.f32 %v2967, %v1890
        %v2969 = vmax.f32 %v2968, %v1892
        %v2970 = vmax.f32 %v2969, %v1895
        %v2971 = vmax.f32 %v2970, %v1897
        %v2972 = vmax.f32 %v2971, %v1900
        %v2973 = vmax.f32 %v2972, %v1902
        %v2974 = vmax.f32 %v2973, %v1905
        %v2975 = vmax.f32 %v2974, %v1907
        %v2976 = vmax.f32 %v2975, %v1910
        %v2977 = vmax.f32 %v2976, %v1912
        %v2978 = vmax.f32 %v2977, %v1915
        %v2979 = vmax.f32 %v2978, %v1917
        %v2980 = vmax.f32 %v2979, %v1920
        %v2981 = vmax.f32 %v2980, %v1922
        %v2982 = vmax.f32 %v2981, %v1925
        %v2983 = vmax.f32 %v2982, %v1927
        %v2984 = vmax.f32 %v2983, %v1930
        %v2985 = vmax.f32 %v2984, %v1932
        %v2986 = vmax.f32 %v2985, %v1935
        %v2987 = vmax.f32 %v2986, %v1937
        %v2988 = vmax.f32 %v2987, %v1940
        %v2989 = vmax.f32 %v2988, %v1942
        %v2990 = vmax.f32 %v2989, %v1945
        %v2991 = vmax.f32 %v2990, %v1947
        %v2992 = vmax.f32 %v2991, %v1950
        %v2993 = vmax.f32 %v2992, %v1952
        %v2994 = vmax.f32 %v2993, %v1955
        %v2995 = vmax.f32 %v2994, %v1957
        %v2996 = vmax.f32 %v2995, %v1960
        %v2997 = vmax.f32 %v2996, %v1962
        %v2998 = vrot.slane %v2997, 4
        %v2999 = vmax.f32 %v2997, %v2998
        %v3000 = vrot.slane %v2999, 2
        %v3001 = vmax.f32 %v2999, %v3000
        %v3002 = vrot.slane %v3001, 1
        %v3003 = vmax.f32 %v3001, %v3002
        %v3004 = vmax.f32 %v1974, %v1976
        %v3005 = vmax.f32 %v3004, %v1979
        %v3006 = vmax.f32 %v3005, %v1981
        %v3007 = vmax.f32 %v3006, %v1984
        %v3008 = vmax.f32 %v3007, %v1986
        %v3009 = vmax.f32 %v3008, %v1989
        %v3010 = vmax.f32 %v3009, %v1991
        %v3011 = vmax.f32 %v3010, %v1994
        %v3012 = vmax.f32 %v3011, %v1996
        %v3013 = vmax.f32 %v3012, %v1999
        %v3014 = vmax.f32 %v3013, %v2001
        %v3015 = vmax.f32 %v3014, %v2004
        %v3016 = vmax.f32 %v3015, %v2006
        %v3017 = vmax.f32 %v3016, %v2009
        %v3018 = vmax.f32 %v3017, %v2011
        %v3019 = vmax.f32 %v3018, %v2014
        %v3020 = vmax.f32 %v3019, %v2016
        %v3021 = vmax.f32 %v3020, %v2019
        %v3022 = vmax.f32 %v3021, %v2021
        %v3023 = vmax.f32 %v3022, %v2024
        %v3024 = vmax.f32 %v3023, %v2026
        %v3025 = vmax.f32 %v3024, %v2029
        %v3026 = vmax.f32 %v3025, %v2031
        %v3027 = vmax.f32 %v3026, %v2034
        %v3028 = vmax.f32 %v3027, %v2036
        %v3029 = vmax.f32 %v3028, %v2039
        %v3030 = vmax.f32 %v3029, %v2041
        %v3031 = vmax.f32 %v3030, %v2044
        %v3032 = vmax.f32 %v3031, %v2046
        %v3033 = vmax.f32 %v3032, %v2049
        %v3034 = vmax.f32 %v3033, %v2051
        %v3035 = vrot.slane %v3034, 4
        %v3036 = vmax.f32 %v3034, %v3035
        %v3037 = vrot.slane %v3036, 2
        %v3038 = vmax.f32 %v3036, %v3037
        %v3039 = vrot.slane %v3038, 1
        %v3040 = vmax.f32 %v3038, %v3039
        %v3041 = vmax.f32 %v2063, %v2065
        %v3042 = vmax.f32 %v3041, %v2068
        %v3043 = vmax.f32 %v3042, %v2070
        %v3044 = vmax.f32 %v3043, %v2073
        %v3045 = vmax.f32 %v3044, %v2075
        %v3046 = vmax.f32 %v3045, %v2078
        %v3047 = vmax.f32 %v3046, %v2080
        %v3048 = vmax.f32 %v3047, %v2083
        %v3049 = vmax.f32 %v3048, %v2085
        %v3050 = vmax.f32 %v3049, %v2088
        %v3051 = vmax.f32 %v3050, %v2090
        %v3052 = vmax.f32 %v3051, %v2093
        %v3053 = vmax.f32 %v3052, %v2095
        %v3054 = vmax.f32 %v3053, %v2098
        %v3055 = vmax.f32 %v3054, %v2100
        %v3056 = vmax.f32 %v3055, %v2103
        %v3057 = vmax.f32 %v3056, %v2105
        %v3058 = vmax.f32 %v3057, %v2108
        %v3059 = vmax.f32 %v3058, %v2110
        %v3060 = vmax.f32 %v3059, %v2113
        %v3061 = vmax.f32 %v3060, %v2115
        %v3062 = vmax.f32 %v3061, %v2118
        %v3063 = vmax.f32 %v3062, %v2120
        %v3064 = vmax.f32 %v3063, %v2123
        %v3065 = vmax.f32 %v3064, %v2125
        %v3066 = vmax.f32 %v3065, %v2128
        %v3067 = vmax.f32 %v3066, %v2130
        %v3068 = vmax.f32 %v3067, %v2133
        %v3069 = vmax.f32 %v3068, %v2135
        %v3070 = vmax.f32 %v3069, %v2138
        %v3071 = vmax.f32 %v3070, %v2140
        %v3072 = vrot.slane %v3071, 4
        %v3073 = vmax.f32 %v3071, %v3072
        %v3074 = vrot.slane %v3073, 2
        %v3075 = vmax.f32 %v3073, %v3074
        %v3076 = vrot.slane %v3075, 1
        %v3077 = vmax.f32 %v3075, %v3076
        %v3078 = vmax.f32 %v2284, %v2286
        %v3079 = vmax.f32 %v3078, %v2289
        %v3080 = vmax.f32 %v3079, %v2291
        %v3081 = vmax.f32 %v3080, %v2294
        %v3082 = vmax.f32 %v3081, %v2296
        %v3083 = vmax.f32 %v3082, %v2299
        %v3084 = vmax.f32 %v3083, %v2301
        %v3085 = vmax.f32 %v3084, %v2304
        %v3086 = vmax.f32 %v3085, %v2306
        %v3087 = vmax.f32 %v3086, %v2309
        %v3088 = vmax.f32 %v3087, %v2311
        %v3089 = vmax.f32 %v3088, %v2314
        %v3090 = vmax.f32 %v3089, %v2316
        %v3091 = vmax.f32 %v3090, %v2319
        %v3092 = vmax.f32 %v3091, %v2321
        %v3093 = vmax.f32 %v3092, %v2324
        %v3094 = vmax.f32 %v3093, %v2326
        %v3095 = vmax.f32 %v3094, %v2329
        %v3096 = vmax.f32 %v3095, %v2331
        %v3097 = vmax.f32 %v3096, %v2334
        %v3098 = vmax.f32 %v3097, %v2336
        %v3099 = vmax.f32 %v3098, %v2339
        %v3100 = vmax.f32 %v3099, %v2341
        %v3101 = vmax.f32 %v3100, %v2344
        %v3102 = vmax.f32 %v3101, %v2346
        %v3103 = vmax.f32 %v3102, %v2349
        %v3104 = vmax.f32 %v3103, %v2351
        %v3105 = vmax.f32 %v3104, %v2354
        %v3106 = vmax.f32 %v3105, %v2356
        %v3107 = vmax.f32 %v3106, %v2359
        %v3108 = vmax.f32 %v3107, %v2361
        %v3109 = vrot.slane %v3108, 4
        %v3110 = vmax.f32 %v3108, %v3109
        %v3111 = vrot.slane %v3110, 2
        %v3112 = vmax.f32 %v3110, %v3111
        %v3113 = vrot.slane %v3112, 1
        %v3114 = vmax.f32 %v3112, %v3113
        %v3115 = vmax.f32 %v2373, %v2375
        %v3116 = vmax.f32 %v3115, %v2378
        %v3117 = vmax.f32 %v3116, %v2380
        %v3118 = vmax.f32 %v3117, %v2383
        %v3119 = vmax.f32 %v3118, %v2385
        %v3120 = vmax.f32 %v3119, %v2388
        %v3121 = vmax.f32 %v3120, %v2390
        %v3122 = vmax.f32 %v3121, %v2393
        %v3123 = vmax.f32 %v3122, %v2395
        %v3124 = vmax.f32 %v3123, %v2398
        %v3125 = vmax.f32 %v3124, %v2400
        %v3126 = vmax.f32 %v3125, %v2403
        %v3127 = vmax.f32 %v3126, %v2405
        %v3128 = vmax.f32 %v3127, %v2408
        %v3129 = vmax.f32 %v3128, %v2410
        %v3130 = vmax.f32 %v3129, %v2413
        %v3131 = vmax.f32 %v3130, %v2415
        %v3132 = vmax.f32 %v3131, %v2418
        %v3133 = vmax.f32 %v3132, %v2420
        %v3134 = vmax.f32 %v3133, %v2423
        %v3135 = vmax.f32 %v3134, %v2425
        %v3136 = vmax.f32 %v3135, %v2428
        %v3137 = vmax.f32 %v3136, %v2430
        %v3138 = vmax.f32 %v3137, %v2433
        %v3139 = vmax.f32 %v3138, %v2435
        %v3140 = vmax.f32 %v3139, %v2438
        %v3141 = vmax.f32 %v3140, %v2440
        %v3142 = vmax.f32 %v3141, %v2443
        %v3143 = vmax.f32 %v3142, %v2445
        %v3144 = vmax.f32 %v3143, %v2448
        %v3145 = vmax.f32 %v3144, %v2450
        %v3146 = vrot.slane %v3145, 4
        %v3147 = vmax.f32 %v3145, %v3146
        %v3148 = vrot.slane %v3147, 2
        %v3149 = vmax.f32 %v3147, %v3148
        %v3150 = vrot.slane %v3149, 1
        %v3151 = vmax.f32 %v3149, %v3150
        %v3152 = vmax.f32 %v2462, %v2464
        %v3153 = vmax.f32 %v3152, %v2467
        %v3154 = vmax.f32 %v3153, %v2469
        %v3155 = vmax.f32 %v3154, %v2472
        %v3156 = vmax.f32 %v3155, %v2474
        %v3157 = vmax.f32 %v3156, %v2477
        %v3158 = vmax.f32 %v3157, %v2479
        %v3159 = vmax.f32 %v3158, %v2482
        %v3160 = vmax.f32 %v3159, %v2484
        %v3161 = vmax.f32 %v3160, %v2487
        %v3162 = vmax.f32 %v3161, %v2489
        %v3163 = vmax.f32 %v3162, %v2492
        %v3164 = vmax.f32 %v3163, %v2494
        %v3165 = vmax.f32 %v3164, %v2497
        %v3166 = vmax.f32 %v3165, %v2499
        %v3167 = vmax.f32 %v3166, %v2502
        %v3168 = vmax.f32 %v3167, %v2504
        %v3169 = vmax.f32 %v3168, %v2507
        %v3170 = vmax.f32 %v3169, %v2509
        %v3171 = vmax.f32 %v3170, %v2512
        %v3172 = vmax.f32 %v3171, %v2514
        %v3173 = vmax.f32 %v3172, %v2517
        %v3174 = vmax.f32 %v3173, %v2519
        %v3175 = vmax.f32 %v3174, %v2522
        %v3176 = vmax.f32 %v3175, %v2524
        %v3177 = vmax.f32 %v3176, %v2527
        %v3178 = vmax.f32 %v3177, %v2529
        %v3179 = vmax.f32 %v3178, %v2532
        %v3180 = vmax.f32 %v3179, %v2534
        %v3181 = vmax.f32 %v3180, %v2537
        %v3182 = vmax.f32 %v3181, %v2539
        %v3183 = vrot.slane %v3182, 4
        %v3184 = vmax.f32 %v3182, %v3183
        %v3185 = vrot.slane %v3184, 2
        %v3186 = vmax.f32 %v3184, %v3185
        %v3187 = vrot.slane %v3186, 1
        %v3188 = vmax.f32 %v3186, %v3187
        %v3189 = vmax.f32 %v2551, %v2553
        %v3190 = vmax.f32 %v3189, %v2556
        %v3191 = vmax.f32 %v3190, %v2558
        %v3192 = vmax.f32 %v3191, %v2561
        %v3193 = vmax.f32 %v3192, %v2563
        %v3194 = vmax.f32 %v3193, %v2566
        %v3195 = vmax.f32 %v3194, %v2568
        %v3196 = vmax.f32 %v3195, %v2571
        %v3197 = vmax.f32 %v3196, %v2573
        %v3198 = vmax.f32 %v3197, %v2576
        %v3199 = vmax.f32 %v3198, %v2578
        %v3200 = vmax.f32 %v3199, %v2581
        %v3201 = vmax.f32 %v3200, %v2583
        %v3202 = vmax.f32 %v3201, %v2586
        %v3203 = vmax.f32 %v3202, %v2588
        %v3204 = vmax.f32 %v3203, %v2591
        %v3205 = vmax.f32 %v3204, %v2593
        %v3206 = vmax.f32 %v3205, %v2596
        %v3207 = vmax.f32 %v3206, %v2598
        %v3208 = vmax.f32 %v3207, %v2601
        %v3209 = vmax.f32 %v3208, %v2603
        %v3210 = vmax.f32 %v3209, %v2606
        %v3211 = vmax.f32 %v3210, %v2608
        %v3212 = vmax.f32 %v3211, %v2611
        %v3213 = vmax.f32 %v3212, %v2613
        %v3214 = vmax.f32 %v3213, %v2616
        %v3215 = vmax.f32 %v3214, %v2618
        %v3216 = vmax.f32 %v3215, %v2621
        %v3217 = vmax.f32 %v3216, %v2623
        %v3218 = vmax.f32 %v3217, %v2626
        %v3219 = vmax.f32 %v3218, %v2628
        %v3220 = vrot.slane %v3219, 4
        %v3221 = vmax.f32 %v3219, %v3220
        %v3222 = vrot.slane %v3221, 2
        %v3223 = vmax.f32 %v3221, %v3222
        %v3224 = vrot.slane %v3223, 1
        %v3225 = vmax.f32 %v3223, %v3224
        %v3242 = vrot.slane %v2707, 7
        %v3243 = vrot.slane %v2744, 6
        %v3244 = vrot.slane %v2781, 5
        %v3245 = vrot.slane %v2855, 7
        %v3246 = vrot.slane %v2892, 6
        %v3247 = vrot.slane %v2929, 5
        %v3248 = vrot.slane %v3003, 7
        %v3249 = vrot.slane %v3040, 6
        %v3250 = vrot.slane %v3077, 5
        %v3251 = vrot.slane %v3151, 7
        %v3252 = vrot.slane %v3188, 6
        %v3253 = vrot.slane %v3225, 5
        %vm3254 = vcmask 1040384
        %v3255 = vsel %vm3254, %v2670, %v3242
        %vm3256 = vcmask 1042434
        %v3257 = vsel %vm3256, %v3243, %v3244
        %vm3258 = vcmask 1041408
        %v3259 = vsel %vm3258, %v3255, %v3257
        %v3260 = vsel %vm3254, %v2818, %v3245
        %v3261 = vsel %vm3256, %v3246, %v3247
        %v3262 = vsel %vm3258, %v3260, %v3261
        %v3263 = vsel %vm3254, %v2966, %v3248
        %v3264 = vsel %vm3256, %v3249, %v3250
        %v3265 = vsel %vm3258, %v3263, %v3264
        %v3266 = vsel %vm3254, %v3114, %v3251
        %v3267 = vsel %vm3256, %v3252, %v3253
        %v3268 = vsel %vm3258, %v3266, %v3267
        %v3273 = vmax.f32 %v2630, %v3259
        %v3274 = vmax.f32 %v2631, %v3262
        %v3275 = vmax.f32 %v2632, %v3265
        %v3276 = vmax.f32 %v2633, %v3268
        %v3277 = vsub.f32 %v2630, %v3273
        %v3278 = vsub.f32 %v2631, %v3274
        %v3279 = vsub.f32 %v2632, %v3275
        %v3280 = vsub.f32 %v2633, %v3276
        %v3281 = vmul.f32 %v3277, 1.442695
        %v3282 = vpow.pop %v3281
        %v3283 = vmul.f32 %v3278, 1.442695
        %v3284 = vpow.pop %v3283
        %v3285 = vmul.f32 %v3279, 1.442695
        %v3286 = vpow.pop %v3285
        %v3287 = vmul.f32 %v3280, 1.442695
        %v3288 = vpow.pop %v3287
        %v3293 = vperm.slane %v3273, 0
        %v3294 = vperm.slane %v3273, 1
        %v3295 = vperm.slane %v3273, 2
        %v3296 = vperm.slane %v3273, 3
        %v3297 = vperm.slane %v3274, 0
        %v3298 = vperm.slane %v3274, 1
        %v3299 = vperm.slane %v3274, 2
        %v3300 = vperm.slane %v3274, 3
        %v3301 = vperm.slane %v3275, 0
        %v3302 = vperm.slane %v3275, 1
        %v3303 = vperm.slane %v3275, 2
        %v3304 = vperm.slane %v3275, 3
        %v3305 = vperm.slane %v3276, 0
        %v3306 = vperm.slane %v3276, 1
        %v3307 = vperm.slane %v3276, 2
        %v3308 = vperm.slane %v3276, 3
        %v3325 = vsub.f32 %v820, %v3293
        %v3326 = vsub.f32 %v909, %v3294
        %v3327 = vsub.f32 %v998, %v3295
        %v3328 = vsub.f32 %v1087, %v3296
        %v3329 = vsub.f32 %v822, %v3293
        %v3330 = vsub.f32 %v911, %v3294
        %v3331 = vsub.f32 %v1000, %v3295
        %v3332 = vsub.f32 %v1089, %v3296
        %v3333 = vsub.f32 %v825, %v3293
        %v3334 = vsub.f32 %v914, %v3294
        %v3335 = vsub.f32 %v1003, %v3295
        %v3336 = vsub.f32 %v1092, %v3296
        %v3337 = vsub.f32 %v827, %v3293
        %v3338 = vsub.f32 %v916, %v3294
        %v3339 = vsub.f32 %v1005, %v3295
        %v3340 = vsub.f32 %v1094, %v3296
        %v3341 = vsub.f32 %v830, %v3293
        %v3342 = vsub.f32 %v919, %v3294
        %v3343 = vsub.f32 %v1008, %v3295
        %v3344 = vsub.f32 %v1097, %v3296
        %v3345 = vsub.f32 %v832, %v3293
        %v3346 = vsub.f32 %v921, %v3294
        %v3347 = vsub.f32 %v1010, %v3295
        %v3348 = vsub.f32 %v1099, %v3296
        %v3349 = vsub.f32 %v835, %v3293
        %v3350 = vsub.f32 %v924, %v3294
        %v3351 = vsub.f32 %v1013, %v3295
        %v3352 = vsub.f32 %v1102, %v3296
        %v3353 = vsub.f32 %v837, %v3293
        %v3354 = vsub.f32 %v926, %v3294
        %v3355 = vsub.f32 %v1015, %v3295
        %v3356 = vsub.f32 %v1104, %v3296
        %v3357 = vsub.f32 %v840, %v3293
        %v3358 = vsub.f32 %v929, %v3294
        %v3359 = vsub.f32 %v1018, %v3295
        %v3360 = vsub.f32 %v1107, %v3296
        %v3361 = vsub.f32 %v842, %v3293
        %v3362 = vsub.f32 %v931, %v3294
        %v3363 = vsub.f32 %v1020, %v3295
        %v3364 = vsub.f32 %v1109, %v3296
        %v3365 = vsub.f32 %v845, %v3293
        %v3366 = vsub.f32 %v934, %v3294
        %v3367 = vsub.f32 %v1023, %v3295
        %v3368 = vsub.f32 %v1112, %v3296
        %v3369 = vsub.f32 %v847, %v3293
        %v3370 = vsub.f32 %v936, %v3294
        %v3371 = vsub.f32 %v1025, %v3295
        %v3372 = vsub.f32 %v1114, %v3296
        %v3373 = vsub.f32 %v850, %v3293
        %v3374 = vsub.f32 %v939, %v3294
        %v3375 = vsub.f32 %v1028, %v3295
        %v3376 = vsub.f32 %v1117, %v3296
        %v3377 = vsub.f32 %v852, %v3293
        %v3378 = vsub.f32 %v941, %v3294
        %v3379 = vsub.f32 %v1030, %v3295
        %v3380 = vsub.f32 %v1119, %v3296
        %v3381 = vsub.f32 %v855, %v3293
        %v3382 = vsub.f32 %v944, %v3294
        %v3383 = vsub.f32 %v1033, %v3295
        %v3384 = vsub.f32 %v1122, %v3296
        %v3385 = vsub.f32 %v857, %v3293
        %v3386 = vsub.f32 %v946, %v3294
        %v3387 = vsub.f32 %v1035, %v3295
        %v3388 = vsub.f32 %v1124, %v3296
        %v3389 = vsub.f32 %v860, %v3293
        %v3390 = vsub.f32 %v949, %v3294
        %v3391 = vsub.f32 %v1038, %v3295
        %v3392 = vsub.f32 %v1127, %v3296
        %v3393 = vsub.f32 %v862, %v3293
        %v3394 = vsub.f32 %v951, %v3294
        %v3395 = vsub.f32 %v1040, %v3295
        %v3396 = vsub.f32 %v1129, %v3296
        %v3397 = vsub.f32 %v865, %v3293
        %v3398 = vsub.f32 %v954, %v3294
        %v3399 = vsub.f32 %v1043, %v3295
        %v3400 = vsub.f32 %v1132, %v3296
        %v3401 = vsub.f32 %v867, %v3293
        %v3402 = vsub.f32 %v956, %v3294
        %v3403 = vsub.f32 %v1045, %v3295
        %v3404 = vsub.f32 %v1134, %v3296
        %v3405 = vsub.f32 %v870, %v3293
        %v3406 = vsub.f32 %v959, %v3294
        %v3407 = vsub.f32 %v1048, %v3295
        %v3408 = vsub.f32 %v1137, %v3296
        %v3409 = vsub.f32 %v872, %v3293
        %v3410 = vsub.f32 %v961, %v3294
        %v3411 = vsub.f32 %v1050, %v3295
        %v3412 = vsub.f32 %v1139, %v3296
        %v3413 = vsub.f32 %v875, %v3293
        %v3414 = vsub.f32 %v964, %v3294
        %v3415 = vsub.f32 %v1053, %v3295
        %v3416 = vsub.f32 %v1142, %v3296
        %v3417 = vsub.f32 %v877, %v3293
        %v3418 = vsub.f32 %v966, %v3294
        %v3419 = vsub.f32 %v1055, %v3295
        %v3420 = vsub.f32 %v1144, %v3296
        %v3421 = vsub.f32 %v880, %v3293
        %v3422 = vsub.f32 %v969, %v3294
        %v3423 = vsub.f32 %v1058, %v3295
        %v3424 = vsub.f32 %v1147, %v3296
        %v3425 = vsub.f32 %v882, %v3293
        %v3426 = vsub.f32 %v971, %v3294
        %v3427 = vsub.f32 %v1060, %v3295
        %v3428 = vsub.f32 %v1149, %v3296
        %v3429 = vsub.f32 %v885, %v3293
        %v3430 = vsub.f32 %v974, %v3294
        %v3431 = vsub.f32 %v1063, %v3295
        %v3432 = vsub.f32 %v1152, %v3296
        %v3433 = vsub.f32 %v887, %v3293
        %v3434 = vsub.f32 %v976, %v3294
        %v3435 = vsub.f32 %v1065, %v3295
        %v3436 = vsub.f32 %v1154, %v3296
        %v3437 = vsub.f32 %v890, %v3293
        %v3438 = vsub.f32 %v979, %v3294
        %v3439 = vsub.f32 %v1068, %v3295
        %v3440 = vsub.f32 %v1157, %v3296
        %v3441 = vsub.f32 %v892, %v3293
        %v3442 = vsub.f32 %v981, %v3294
        %v3443 = vsub.f32 %v1070, %v3295
        %v3444 = vsub.f32 %v1159, %v3296
        %v3445 = vsub.f32 %v895, %v3293
        %v3446 = vsub.f32 %v984, %v3294
        %v3447 = vsub.f32 %v1073, %v3295
        %v3448 = vsub.f32 %v1162, %v3296
        %v3449 = vsub.f32 %v897, %v3293
        %v3450 = vsub.f32 %v986, %v3294
        %v3451 = vsub.f32 %v1075, %v3295
        %v3452 = vsub.f32 %v1164, %v3296
        %v3453 = vsub.f32 %v1308, %v3297
        %v3454 = vsub.f32 %v1397, %v3298
        %v3455 = vsub.f32 %v1486, %v3299
        %v3456 = vsub.f32 %v1575, %v3300
        %v3457 = vsub.f32 %v1310, %v3297
        %v3458 = vsub.f32 %v1399, %v3298
        %v3459 = vsub.f32 %v1488, %v3299
        %v3460 = vsub.f32 %v1577, %v3300
        %v3461 = vsub.f32 %v1313, %v3297
        %v3462 = vsub.f32 %v1402, %v3298
        %v3463 = vsub.f32 %v1491, %v3299
        %v3464 = vsub.f32 %v1580, %v3300
        %v3465 = vsub.f32 %v1315, %v3297
        %v3466 = vsub.f32 %v1404, %v3298
        %v3467 = vsub.f32 %v1493, %v3299
        %v3468 = vsub.f32 %v1582, %v3300
        %v3469 = vsub.f32 %v1318, %v3297
        %v3470 = vsub.f32 %v1407, %v3298
        %v3471 = vsub.f32 %v1496, %v3299
        %v3472 = vsub.f32 %v1585, %v3300
        %v3473 = vsub.f32 %v1320, %v3297
        %v3474 = vsub.f32 %v1409, %v3298
        %v3475 = vsub.f32 %v1498, %v3299
        %v3476 = vsub.f32 %v1587, %v3300
        %v3477 = vsub.f32 %v1323, %v3297
        %v3478 = vsub.f32 %v1412, %v3298
        %v3479 = vsub.f32 %v1501, %v3299
        %v3480 = vsub.f32 %v1590, %v3300
        %v3481 = vsub.f32 %v1325, %v3297
        %v3482 = vsub.f32 %v1414, %v3298
        %v3483 = vsub.f32 %v1503, %v3299
        %v3484 = vsub.f32 %v1592, %v3300
        %v3485 = vsub.f32 %v1328, %v3297
        %v3486 = vsub.f32 %v1417, %v3298
        %v3487 = vsub.f32 %v1506, %v3299
        %v3488 = vsub.f32 %v1595, %v3300
        %v3489 = vsub.f32 %v1330, %v3297
        %v3490 = vsub.f32 %v1419, %v3298
        %v3491 = vsub.f32 %v1508, %v3299
        %v3492 = vsub.f32 %v1597, %v3300
        %v3493 = vsub.f32 %v1333, %v3297
        %v3494 = vsub.f32 %v1422, %v3298
        %v3495 = vsub.f32 %v1511, %v3299
        %v3496 = vsub.f32 %v1600, %v3300
        %v3497 = vsub.f32 %v1335, %v3297
        %v3498 = vsub.f32 %v1424, %v3298
        %v3499 = vsub.f32 %v1513, %v3299
        %v3500 = vsub.f32 %v1602, %v3300
        %v3501 = vsub.f32 %v1338, %v3297
        %v3502 = vsub.f32 %v1427, %v3298
        %v3503 = vsub.f32 %v1516, %v3299
        %v3504 = vsub.f32 %v1605, %v3300
        %v3505 = vsub.f32 %v1340, %v3297
        %v3506 = vsub.f32 %v1429, %v3298
        %v3507 = vsub.f32 %v1518, %v3299
        %v3508 = vsub.f32 %v1607, %v3300
        %v3509 = vsub.f32 %v1343, %v3297
        %v3510 = vsub.f32 %v1432, %v3298
        %v3511 = vsub.f32 %v1521, %v3299
        %v3512 = vsub.f32 %v1610, %v3300
        %v3513 = vsub.f32 %v1345, %v3297
        %v3514 = vsub.f32 %v1434, %v3298
        %v3515 = vsub.f32 %v1523, %v3299
        %v3516 = vsub.f32 %v1612, %v3300
        %v3517 = vsub.f32 %v1348, %v3297
        %v3518 = vsub.f32 %v1437, %v3298
        %v3519 = vsub.f32 %v1526, %v3299
        %v3520 = vsub.f32 %v1615, %v3300
        %v3521 = vsub.f32 %v1350, %v3297
        %v3522 = vsub.f32 %v1439, %v3298
        %v3523 = vsub.f32 %v1528, %v3299
        %v3524 = vsub.f32 %v1617, %v3300
        %v3525 = vsub.f32 %v1353, %v3297
        %v3526 = vsub.f32 %v1442, %v3298
        %v3527 = vsub.f32 %v1531, %v3299
        %v3528 = vsub.f32 %v1620, %v3300
        %v3529 = vsub.f32 %v1355, %v3297
        %v3530 = vsub.f32 %v1444, %v3298
        %v3531 = vsub.f32 %v1533, %v3299
        %v3532 = vsub.f32 %v1622, %v3300
        %v3533 = vsub.f32 %v1358, %v3297
        %v3534 = vsub.f32 %v1447, %v3298
        %v3535 = vsub.f32 %v1536, %v3299
        %v3536 = vsub.f32 %v1625, %v3300
        %v3537 = vsub.f32 %v1360, %v3297
        %v3538 = vsub.f32 %v1449, %v3298
        %v3539 = vsub.f32 %v1538, %v3299
        %v3540 = vsub.f32 %v1627, %v3300
        %v3541 = vsub.f32 %v1363, %v3297
        %v3542 = vsub.f32 %v1452, %v3298
        %v3543 = vsub.f32 %v1541, %v3299
        %v3544 = vsub.f32 %v1630, %v3300
        %v3545 = vsub.f32 %v1365, %v3297
        %v3546 = vsub.f32 %v1454, %v3298
        %v3547 = vsub.f32 %v1543, %v3299
        %v3548 = vsub.f32 %v1632, %v3300
        %v3549 = vsub.f32 %v1368, %v3297
        %v3550 = vsub.f32 %v1457, %v3298
        %v3551 = vsub.f32 %v1546, %v3299
        %v3552 = vsub.f32 %v1635, %v3300
        %v3553 = vsub.f32 %v1370, %v3297
        %v3554 = vsub.f32 %v1459, %v3298
        %v3555 = vsub.f32 %v1548, %v3299
        %v3556 = vsub.f32 %v1637, %v3300
        %v3557 = vsub.f32 %v1373, %v3297
        %v3558 = vsub.f32 %v1462, %v3298
        %v3559 = vsub.f32 %v1551, %v3299
        %v3560 = vsub.f32 %v1640, %v3300
        %v3561 = vsub.f32 %v1375, %v3297
        %v3562 = vsub.f32 %v1464, %v3298
        %v3563 = vsub.f32 %v1553, %v3299
        %v3564 = vsub.f32 %v1642, %v3300
        %v3565 = vsub.f32 %v1378, %v3297
        %v3566 = vsub.f32 %v1467, %v3298
        %v3567 = vsub.f32 %v1556, %v3299
        %v3568 = vsub.f32 %v1645, %v3300
        %v3569 = vsub.f32 %v1380, %v3297
        %v3570 = vsub.f32 %v1469, %v3298
        %v3571 = vsub.f32 %v1558, %v3299
        %v3572 = vsub.f32 %v1647, %v3300
        %v3573 = vsub.f32 %v1383, %v3297
        %v3574 = vsub.f32 %v1472, %v3298
        %v3575 = vsub.f32 %v1561, %v3299
        %v3576 = vsub.f32 %v1650, %v3300
        %v3577 = vsub.f32 %v1385, %v3297
        %v3578 = vsub.f32 %v1474, %v3298
        %v3579 = vsub.f32 %v1563, %v3299
        %v3580 = vsub.f32 %v1652, %v3300
        %v3581 = vsub.f32 %v1796, %v3301
        %v3582 = vsub.f32 %v1885, %v3302
        %v3583 = vsub.f32 %v1974, %v3303
        %v3584 = vsub.f32 %v2063, %v3304
        %v3585 = vsub.f32 %v1798, %v3301
        %v3586 = vsub.f32 %v1887, %v3302
        %v3587 = vsub.f32 %v1976, %v3303
        %v3588 = vsub.f32 %v2065, %v3304
        %v3589 = vsub.f32 %v1801, %v3301
        %v3590 = vsub.f32 %v1890, %v3302
        %v3591 = vsub.f32 %v1979, %v3303
        %v3592 = vsub.f32 %v2068, %v3304
        %v3593 = vsub.f32 %v1803, %v3301
        %v3594 = vsub.f32 %v1892, %v3302
        %v3595 = vsub.f32 %v1981, %v3303
        %v3596 = vsub.f32 %v2070, %v3304
        %v3597 = vsub.f32 %v1806, %v3301
        %v3598 = vsub.f32 %v1895, %v3302
        %v3599 = vsub.f32 %v1984, %v3303
        %v3600 = vsub.f32 %v2073, %v3304
        %v3601 = vsub.f32 %v1808, %v3301
        %v3602 = vsub.f32 %v1897, %v3302
        %v3603 = vsub.f32 %v1986, %v3303
        %v3604 = vsub.f32 %v2075, %v3304
        %v3605 = vsub.f32 %v1811, %v3301
        %v3606 = vsub.f32 %v1900, %v3302
        %v3607 = vsub.f32 %v1989, %v3303
        %v3608 = vsub.f32 %v2078, %v3304
        %v3609 = vsub.f32 %v1813, %v3301
        %v3610 = vsub.f32 %v1902, %v3302
        %v3611 = vsub.f32 %v1991, %v3303
        %v3612 = vsub.f32 %v2080, %v3304
        %v3613 = vsub.f32 %v1816, %v3301
        %v3614 = vsub.f32 %v1905, %v3302
        %v3615 = vsub.f32 %v1994, %v3303
        %v3616 = vsub.f32 %v2083, %v3304
        %v3617 = vsub.f32 %v1818, %v3301
        %v3618 = vsub.f32 %v1907, %v3302
        %v3619 = vsub.f32 %v1996, %v3303
        %v3620 = vsub.f32 %v2085, %v3304
        %v3621 = vsub.f32 %v1821, %v3301
        %v3622 = vsub.f32 %v1910, %v3302
        %v3623 = vsub.f32 %v1999, %v3303
        %v3624 = vsub.f32 %v2088, %v3304
        %v3625 = vsub.f32 %v1823, %v3301
        %v3626 = vsub.f32 %v1912, %v3302
        %v3627 = vsub.f32 %v2001, %v3303
        %v3628 = vsub.f32 %v2090, %v3304
        %v3629 = vsub.f32 %v1826, %v3301
        %v3630 = vsub.f32 %v1915, %v3302
        %v3631 = vsub.f32 %v2004, %v3303
        %v3632 = vsub.f32 %v2093, %v3304
        %v3633 = vsub.f32 %v1828, %v3301
        %v3634 = vsub.f32 %v1917, %v3302
        %v3635 = vsub.f32 %v2006, %v3303
        %v3636 = vsub.f32 %v2095, %v3304
        %v3637 = vsub.f32 %v1831, %v3301
        %v3638 = vsub.f32 %v1920, %v3302
        %v3639 = vsub.f32 %v2009, %v3303
        %v3640 = vsub.f32 %v2098, %v3304
        %v3641 = vsub.f32 %v1833, %v3301
        %v3642 = vsub.f32 %v1922, %v3302
        %v3643 = vsub.f32 %v2011, %v3303
        %v3644 = vsub.f32 %v2100, %v3304
        %v3645 = vsub.f32 %v1836, %v3301
        %v3646 = vsub.f32 %v1925, %v3302
        %v3647 = vsub.f32 %v2014, %v3303
        %v3648 = vsub.f32 %v2103, %v3304
        %v3649 = vsub.f32 %v1838, %v3301
        %v3650 = vsub.f32 %v1927, %v3302
        %v3651 = vsub.f32 %v2016, %v3303
        %v3652 = vsub.f32 %v2105, %v3304
        %v3653 = vsub.f32 %v1841, %v3301
        %v3654 = vsub.f32 %v1930, %v3302
        %v3655 = vsub.f32 %v2019, %v3303
        %v3656 = vsub.f32 %v2108, %v3304
        %v3657 = vsub.f32 %v1843, %v3301
        %v3658 = vsub.f32 %v1932, %v3302
        %v3659 = vsub.f32 %v2021, %v3303
        %v3660 = vsub.f32 %v2110, %v3304
        %v3661 = vsub.f32 %v1846, %v3301
        %v3662 = vsub.f32 %v1935, %v3302
        %v3663 = vsub.f32 %v2024, %v3303
        %v3664 = vsub.f32 %v2113, %v3304
        %v3665 = vsub.f32 %v1848, %v3301
        %v3666 = vsub.f32 %v1937, %v3302
        %v3667 = vsub.f32 %v2026, %v3303
        %v3668 = vsub.f32 %v2115, %v3304
        %v3669 = vsub.f32 %v1851, %v3301
        %v3670 = vsub.f32 %v1940, %v3302
        %v3671 = vsub.f32 %v2029, %v3303
        %v3672 = vsub.f32 %v2118, %v3304
        %v3673 = vsub.f32 %v1853, %v3301
        %v3674 = vsub.f32 %v1942, %v3302
        %v3675 = vsub.f32 %v2031, %v3303
        %v3676 = vsub.f32 %v2120, %v3304
        %v3677 = vsub.f32 %v1856, %v3301
        %v3678 = vsub.f32 %v1945, %v3302
        %v3679 = vsub.f32 %v2034, %v3303
        %v3680 = vsub.f32 %v2123, %v3304
        %v3681 = vsub.f32 %v1858, %v3301
        %v3682 = vsub.f32 %v1947, %v3302
        %v3683 = vsub.f32 %v2036, %v3303
        %v3684 = vsub.f32 %v2125, %v3304
        %v3685 = vsub.f32 %v1861, %v3301
        %v3686 = vsub.f32 %v1950, %v3302
        %v3687 = vsub.f32 %v2039, %v3303
        %v3688 = vsub.f32 %v2128, %v3304
        %v3689 = vsub.f32 %v1863, %v3301
        %v3690 = vsub.f32 %v1952, %v3302
        %v3691 = vsub.f32 %v2041, %v3303
        %v3692 = vsub.f32 %v2130, %v3304
        %v3693 = vsub.f32 %v1866, %v3301
        %v3694 = vsub.f32 %v1955, %v3302
        %v3695 = vsub.f32 %v2044, %v3303
        %v3696 = vsub.f32 %v2133, %v3304
        %v3697 = vsub.f32 %v1868, %v3301
        %v3698 = vsub.f32 %v1957, %v3302
        %v3699 = vsub.f32 %v2046, %v3303
        %v3700 = vsub.f32 %v2135, %v3304
        %v3701 = vsub.f32 %v1871, %v3301
        %v3702 = vsub.f32 %v1960, %v3302
        %v3703 = vsub.f32 %v2049, %v3303
        %v3704 = vsub.f32 %v2138, %v3304
        %v3705 = vsub.f32 %v1873, %v3301
        %v3706 = vsub.f32 %v1962, %v3302
        %v3707 = vsub.f32 %v2051, %v3303
        %v3708 = vsub.f32 %v2140, %v3304
        %v3709 = vsub.f32 %v2284, %v3305
        %v3710 = vsub.f32 %v2373, %v3306
        %v3711 = vsub.f32 %v2462, %v3307
        %v3712 = vsub.f32 %v2551, %v3308
        %v3713 = vsub.f32 %v2286, %v3305
        %v3714 = vsub.f32 %v2375, %v3306
        %v3715 = vsub.f32 %v2464, %v3307
        %v3716 = vsub.f32 %v2553, %v3308
        %v3717 = vsub.f32 %v2289, %v3305
        %v3718 = vsub.f32 %v2378, %v3306
        %v3719 = vsub.f32 %v2467, %v3307
        %v3720 = vsub.f32 %v2556, %v3308
        %v3721 = vsub.f32 %v2291, %v3305
        %v3722 = vsub.f32 %v2380, %v3306
        %v3723 = vsub.f32 %v2469, %v3307
        %v3724 = vsub.f32 %v2558, %v3308
        %v3725 = vsub.f32 %v2294, %v3305
        %v3726 = vsub.f32 %v2383, %v3306
        %v3727 = vsub.f32 %v2472, %v3307
        %v3728 = vsub.f32 %v2561, %v3308
        %v3729 = vsub.f32 %v2296, %v3305
        %v3730 = vsub.f32 %v2385, %v3306
        %v3731 = vsub.f32 %v2474, %v3307
        %v3732 = vsub.f32 %v2563, %v3308
        %v3733 = vsub.f32 %v2299, %v3305
        %v3734 = vsub.f32 %v2388, %v3306
        %v3735 = vsub.f32 %v2477, %v3307
        %v3736 = vsub.f32 %v2566, %v3308
        %v3737 = vsub.f32 %v2301, %v3305
        %v3738 = vsub.f32 %v2390, %v3306
        %v3739 = vsub.f32 %v2479, %v3307
        %v3740 = vsub.f32 %v2568, %v3308
        %v3741 = vsub.f32 %v2304, %v3305
        %v3742 = vsub.f32 %v2393, %v3306
        %v3743 = vsub.f32 %v2482, %v3307
        %v3744 = vsub.f32 %v2571, %v3308
        %v3745 = vsub.f32 %v2306, %v3305
        %v3746 = vsub.f32 %v2395, %v3306
        %v3747 = vsub.f32 %v2484, %v3307
        %v3748 = vsub.f32 %v2573, %v3308
        %v3749 = vsub.f32 %v2309, %v3305
        %v3750 = vsub.f32 %v2398, %v3306
        %v3751 = vsub.f32 %v2487, %v3307
        %v3752 = vsub.f32 %v2576, %v3308
        %v3753 = vsub.f32 %v2311, %v3305
        %v3754 = vsub.f32 %v2400, %v3306
        %v3755 = vsub.f32 %v2489, %v3307
        %v3756 = vsub.f32 %v2578, %v3308
        %v3757 = vsub.f32 %v2314, %v3305
        %v3758 = vsub.f32 %v2403, %v3306
        %v3759 = vsub.f32 %v2492, %v3307
        %v3760 = vsub.f32 %v2581, %v3308
        %v3761 = vsub.f32 %v2316, %v3305
        %v3762 = vsub.f32 %v2405, %v3306
        %v3763 = vsub.f32 %v2494, %v3307
        %v3764 = vsub.f32 %v2583, %v3308
        %v3765 = vsub.f32 %v2319, %v3305
        %v3766 = vsub.f32 %v2408, %v3306
        %v3767 = vsub.f32 %v2497, %v3307
        %v3768 = vsub.f32 %v2586, %v3308
        %v3769 = vsub.f32 %v2321, %v3305
        %v3770 = vsub.f32 %v2410, %v3306
        %v3771 = vsub.f32 %v2499, %v3307
        %v3772 = vsub.f32 %v2588, %v3308
        %v3773 = vsub.f32 %v2324, %v3305
        %v3774 = vsub.f32 %v2413, %v3306
        %v3775 = vsub.f32 %v2502, %v3307
        %v3776 = vsub.f32 %v2591, %v3308
        %v3777 = vsub.f32 %v2326, %v3305
        %v3778 = vsub.f32 %v2415, %v3306
        %v3779 = vsub.f32 %v2504, %v3307
        %v3780 = vsub.f32 %v2593, %v3308
        %v3781 = vsub.f32 %v2329, %v3305
        %v3782 = vsub.f32 %v2418, %v3306
        %v3783 = vsub.f32 %v2507, %v3307
        %v3784 = vsub.f32 %v2596, %v3308
        %v3785 = vsub.f32 %v2331, %v3305
        %v3786 = vsub.f32 %v2420, %v3306
        %v3787 = vsub.f32 %v2509, %v3307
        %v3788 = vsub.f32 %v2598, %v3308
        %v3789 = vsub.f32 %v2334, %v3305
        %v3790 = vsub.f32 %v2423, %v3306
        %v3791 = vsub.f32 %v2512, %v3307
        %v3792 = vsub.f32 %v2601, %v3308
        %v3793 = vsub.f32 %v2336, %v3305
        %v3794 = vsub.f32 %v2425, %v3306
        %v3795 = vsub.f32 %v2514, %v3307
        %v3796 = vsub.f32 %v2603, %v3308
        %v3797 = vsub.f32 %v2339, %v3305
        %v3798 = vsub.f32 %v2428, %v3306
        %v3799 = vsub.f32 %v2517, %v3307
        %v3800 = vsub.f32 %v2606, %v3308
        %v3801 = vsub.f32 %v2341, %v3305
        %v3802 = vsub.f32 %v2430, %v3306
        %v3803 = vsub.f32 %v2519, %v3307
        %v3804 = vsub.f32 %v2608, %v3308
        %v3805 = vsub.f32 %v2344, %v3305
        %v3806 = vsub.f32 %v2433, %v3306
        %v3807 = vsub.f32 %v2522, %v3307
        %v3808 = vsub.f32 %v2611, %v3308
        %v3809 = vsub.f32 %v2346, %v3305
        %v3810 = vsub.f32 %v2435, %v3306
        %v3811 = vsub.f32 %v2524, %v3307
        %v3812 = vsub.f32 %v2613, %v3308
        %v3813 = vsub.f32 %v2349, %v3305
        %v3814 = vsub.f32 %v2438, %v3306
        %v3815 = vsub.f32 %v2527, %v3307
        %v3816 = vsub.f32 %v2616, %v3308
        %v3817 = vsub.f32 %v2351, %v3305
        %v3818 = vsub.f32 %v2440, %v3306
        %v3819 = vsub.f32 %v2529, %v3307
        %v3820 = vsub.f32 %v2618, %v3308
        %v3821 = vsub.f32 %v2354, %v3305
        %v3822 = vsub.f32 %v2443, %v3306
        %v3823 = vsub.f32 %v2532, %v3307
        %v3824 = vsub.f32 %v2621, %v3308
        %v3825 = vsub.f32 %v2356, %v3305
        %v3826 = vsub.f32 %v2445, %v3306
        %v3827 = vsub.f32 %v2534, %v3307
        %v3828 = vsub.f32 %v2623, %v3308
        %v3829 = vsub.f32 %v2359, %v3305
        %v3830 = vsub.f32 %v2448, %v3306
        %v3831 = vsub.f32 %v2537, %v3307
        %v3832 = vsub.f32 %v2626, %v3308
        %v3833 = vsub.f32 %v2361, %v3305
        %v3834 = vsub.f32 %v2450, %v3306
        %v3835 = vsub.f32 %v2539, %v3307
        %v3836 = vsub.f32 %v2628, %v3308
        %v3837 = vpack.c.bf16 %v3326, %v3325
        %v3838 = vpack.c.bf16 %v3328, %v3327
        %v3839 = vpack.c.bf16 %v3330, %v3329
        %v3840 = vpack.c.bf16 %v3332, %v3331
        %v3841 = vpack.c.bf16 %v3334, %v3333
        %v3842 = vpack.c.bf16 %v3336, %v3335
        %v3843 = vpack.c.bf16 %v3338, %v3337
        %v3844 = vpack.c.bf16 %v3340, %v3339
        %v3845 = vpack.c.bf16 %v3342, %v3341
        %v3846 = vpack.c.bf16 %v3344, %v3343
        %v3847 = vpack.c.bf16 %v3346, %v3345
        %v3848 = vpack.c.bf16 %v3348, %v3347
        %v3849 = vpack.c.bf16 %v3350, %v3349
        %v3850 = vpack.c.bf16 %v3352, %v3351
        %v3851 = vpack.c.bf16 %v3354, %v3353
        %v3852 = vpack.c.bf16 %v3356, %v3355
        %v3853 = vpack.c.bf16 %v3358, %v3357
        %v3854 = vpack.c.bf16 %v3360, %v3359
        %v3855 = vpack.c.bf16 %v3362, %v3361
        %v3856 = vpack.c.bf16 %v3364, %v3363
        %v3857 = vpack.c.bf16 %v3366, %v3365
        %v3858 = vpack.c.bf16 %v3368, %v3367
        %v3859 = vpack.c.bf16 %v3370, %v3369
        %v3860 = vpack.c.bf16 %v3372, %v3371
        %v3861 = vpack.c.bf16 %v3374, %v3373
        %v3862 = vpack.c.bf16 %v3376, %v3375
        %v3863 = vpack.c.bf16 %v3378, %v3377
        %v3864 = vpack.c.bf16 %v3380, %v3379
        %v3865 = vpack.c.bf16 %v3382, %v3381
        %v3866 = vpack.c.bf16 %v3384, %v3383
        %v3867 = vpack.c.bf16 %v3386, %v3385
        %v3868 = vpack.c.bf16 %v3388, %v3387
        %v3869 = vpack.c.bf16 %v3390, %v3389
        %v3870 = vpack.c.bf16 %v3392, %v3391
        %v3871 = vpack.c.bf16 %v3394, %v3393
        %v3872 = vpack.c.bf16 %v3396, %v3395
        %v3873 = vpack.c.bf16 %v3398, %v3397
        %v3874 = vpack.c.bf16 %v3400, %v3399
        %v3875 = vpack.c.bf16 %v3402, %v3401
        %v3876 = vpack.c.bf16 %v3404, %v3403
        %v3877 = vpack.c.bf16 %v3406, %v3405
        %v3878 = vpack.c.bf16 %v3408, %v3407
        %v3879 = vpack.c.bf16 %v3410, %v3409
        %v3880 = vpack.c.bf16 %v3412, %v3411
        %v3881 = vpack.c.bf16 %v3414, %v3413
        %v3882 = vpack.c.bf16 %v3416, %v3415
        %v3883 = vpack.c.bf16 %v3418, %v3417
        %v3884 = vpack.c.bf16 %v3420, %v3419
        %v3885 = vpack.c.bf16 %v3422, %v3421
        %v3886 = vpack.c.bf16 %v3424, %v3423
        %v3887 = vpack.c.bf16 %v3426, %v3425
        %v3888 = vpack.c.bf16 %v3428, %v3427
        %v3889 = vpack.c.bf16 %v3430, %v3429
        %v3890 = vpack.c.bf16 %v3432, %v3431
        %v3891 = vpack.c.bf16 %v3434, %v3433
        %v3892 = vpack.c.bf16 %v3436, %v3435
        %v3893 = vpack.c.bf16 %v3438, %v3437
        %v3894 = vpack.c.bf16 %v3440, %v3439
        %v3895 = vpack.c.bf16 %v3442, %v3441
        %v3896 = vpack.c.bf16 %v3444, %v3443
        %v3897 = vpack.c.bf16 %v3446, %v3445
        %v3898 = vpack.c.bf16 %v3448, %v3447
        %v3899 = vpack.c.bf16 %v3450, %v3449
        %v3900 = vpack.c.bf16 %v3452, %v3451
        %v3901 = vpack.c.bf16 %v3454, %v3453
        %v3902 = vpack.c.bf16 %v3456, %v3455
        %v3903 = vpack.c.bf16 %v3458, %v3457
        %v3904 = vpack.c.bf16 %v3460, %v3459
        %v3905 = vpack.c.bf16 %v3462, %v3461
        %v3906 = vpack.c.bf16 %v3464, %v3463
        %v3907 = vpack.c.bf16 %v3466, %v3465
        %v3908 = vpack.c.bf16 %v3468, %v3467
        %v3909 = vpack.c.bf16 %v3470, %v3469
        %v3910 = vpack.c.bf16 %v3472, %v3471
        %v3911 = vpack.c.bf16 %v3474, %v3473
        %v3912 = vpack.c.bf16 %v3476, %v3475
        %v3913 = vpack.c.bf16 %v3478, %v3477
        %v3914 = vpack.c.bf16 %v3480, %v3479
        %v3915 = vpack.c.bf16 %v3482, %v3481
        %v3916 = vpack.c.bf16 %v3484, %v3483
        %v3917 = vpack.c.bf16 %v3486, %v3485
        %v3918 = vpack.c.bf16 %v3488, %v3487
        %v3919 = vpack.c.bf16 %v3490, %v3489
        %v3920 = vpack.c.bf16 %v3492, %v3491
        %v3921 = vpack.c.bf16 %v3494, %v3493
        %v3922 = vpack.c.bf16 %v3496, %v3495
        %v3923 = vpack.c.bf16 %v3498, %v3497
        %v3924 = vpack.c.bf16 %v3500, %v3499
        %v3925 = vpack.c.bf16 %v3502, %v3501
        %v3926 = vpack.c.bf16 %v3504, %v3503
        %v3927 = vpack.c.bf16 %v3506, %v3505
        %v3928 = vpack.c.bf16 %v3508, %v3507
        %v3929 = vpack.c.bf16 %v3510, %v3509
        %v3930 = vpack.c.bf16 %v3512, %v3511
        %v3931 = vpack.c.bf16 %v3514, %v3513
        %v3932 = vpack.c.bf16 %v3516, %v3515
        %v3933 = vpack.c.bf16 %v3518, %v3517
        %v3934 = vpack.c.bf16 %v3520, %v3519
        %v3935 = vpack.c.bf16 %v3522, %v3521
        %v3936 = vpack.c.bf16 %v3524, %v3523
        %v3937 = vpack.c.bf16 %v3526, %v3525
        %v3938 = vpack.c.bf16 %v3528, %v3527
        %v3939 = vpack.c.bf16 %v3530, %v3529
        %v3940 = vpack.c.bf16 %v3532, %v3531
        %v3941 = vpack.c.bf16 %v3534, %v3533
        %v3942 = vpack.c.bf16 %v3536, %v3535
        %v3943 = vpack.c.bf16 %v3538, %v3537
        %v3944 = vpack.c.bf16 %v3540, %v3539
        %v3945 = vpack.c.bf16 %v3542, %v3541
        %v3946 = vpack.c.bf16 %v3544, %v3543
        %v3947 = vpack.c.bf16 %v3546, %v3545
        %v3948 = vpack.c.bf16 %v3548, %v3547
        %v3949 = vpack.c.bf16 %v3550, %v3549
        %v3950 = vpack.c.bf16 %v3552, %v3551
        %v3951 = vpack.c.bf16 %v3554, %v3553
        %v3952 = vpack.c.bf16 %v3556, %v3555
        %v3953 = vpack.c.bf16 %v3558, %v3557
        %v3954 = vpack.c.bf16 %v3560, %v3559
        %v3955 = vpack.c.bf16 %v3562, %v3561
        %v3956 = vpack.c.bf16 %v3564, %v3563
        %v3957 = vpack.c.bf16 %v3566, %v3565
        %v3958 = vpack.c.bf16 %v3568, %v3567
        %v3959 = vpack.c.bf16 %v3570, %v3569
        %v3960 = vpack.c.bf16 %v3572, %v3571
        %v3961 = vpack.c.bf16 %v3574, %v3573
        %v3962 = vpack.c.bf16 %v3576, %v3575
        %v3963 = vpack.c.bf16 %v3578, %v3577
        %v3964 = vpack.c.bf16 %v3580, %v3579
        %v3965 = vpack.c.bf16 %v3582, %v3581
        %v3966 = vpack.c.bf16 %v3584, %v3583
        %v3967 = vpack.c.bf16 %v3586, %v3585
        %v3968 = vpack.c.bf16 %v3588, %v3587
        %v3969 = vpack.c.bf16 %v3590, %v3589
        %v3970 = vpack.c.bf16 %v3592, %v3591
        %v3971 = vpack.c.bf16 %v3594, %v3593
        %v3972 = vpack.c.bf16 %v3596, %v3595
        %v3973 = vpack.c.bf16 %v3598, %v3597
        %v3974 = vpack.c.bf16 %v3600, %v3599
        %v3975 = vpack.c.bf16 %v3602, %v3601
        %v3976 = vpack.c.bf16 %v3604, %v3603
        %v3977 = vpack.c.bf16 %v3606, %v3605
        %v3978 = vpack.c.bf16 %v3608, %v3607
        %v3979 = vpack.c.bf16 %v3610, %v3609
        %v3980 = vpack.c.bf16 %v3612, %v3611
        %v3981 = vpack.c.bf16 %v3614, %v3613
        %v3982 = vpack.c.bf16 %v3616, %v3615
        %v3983 = vpack.c.bf16 %v3618, %v3617
        %v3984 = vpack.c.bf16 %v3620, %v3619
        %v3985 = vpack.c.bf16 %v3622, %v3621
        %v3986 = vpack.c.bf16 %v3624, %v3623
        %v3987 = vpack.c.bf16 %v3626, %v3625
        %v3988 = vpack.c.bf16 %v3628, %v3627
        %v3989 = vpack.c.bf16 %v3630, %v3629
        %v3990 = vpack.c.bf16 %v3632, %v3631
        %v3991 = vpack.c.bf16 %v3634, %v3633
        %v3992 = vpack.c.bf16 %v3636, %v3635
        %v3993 = vpack.c.bf16 %v3638, %v3637
        %v3994 = vpack.c.bf16 %v3640, %v3639
        %v3995 = vpack.c.bf16 %v3642, %v3641
        %v3996 = vpack.c.bf16 %v3644, %v3643
        %v3997 = vpack.c.bf16 %v3646, %v3645
        %v3998 = vpack.c.bf16 %v3648, %v3647
        %v3999 = vpack.c.bf16 %v3650, %v3649
        %v4000 = vpack.c.bf16 %v3652, %v3651
        %v4001 = vpack.c.bf16 %v3654, %v3653
        %v4002 = vpack.c.bf16 %v3656, %v3655
        %v4003 = vpack.c.bf16 %v3658, %v3657
        %v4004 = vpack.c.bf16 %v3660, %v3659
        %v4005 = vpack.c.bf16 %v3662, %v3661
        %v4006 = vpack.c.bf16 %v3664, %v3663
        %v4007 = vpack.c.bf16 %v3666, %v3665
        %v4008 = vpack.c.bf16 %v3668, %v3667
        %v4009 = vpack.c.bf16 %v3670, %v3669
        %v4010 = vpack.c.bf16 %v3672, %v3671
        %v4011 = vpack.c.bf16 %v3674, %v3673
        %v4012 = vpack.c.bf16 %v3676, %v3675
        %v4013 = vpack.c.bf16 %v3678, %v3677
        %v4014 = vpack.c.bf16 %v3680, %v3679
        %v4015 = vpack.c.bf16 %v3682, %v3681
        %v4016 = vpack.c.bf16 %v3684, %v3683
        %v4017 = vpack.c.bf16 %v3686, %v3685
        %v4018 = vpack.c.bf16 %v3688, %v3687
        %v4019 = vpack.c.bf16 %v3690, %v3689
        %v4020 = vpack.c.bf16 %v3692, %v3691
        %v4021 = vpack.c.bf16 %v3694, %v3693
        %v4022 = vpack.c.bf16 %v3696, %v3695
        %v4023 = vpack.c.bf16 %v3698, %v3697
        %v4024 = vpack.c.bf16 %v3700, %v3699
        %v4025 = vpack.c.bf16 %v3702, %v3701
        %v4026 = vpack.c.bf16 %v3704, %v3703
        %v4027 = vpack.c.bf16 %v3706, %v3705
        %v4028 = vpack.c.bf16 %v3708, %v3707
        %v4029 = vpack.c.bf16 %v3710, %v3709
        %v4030 = vpack.c.bf16 %v3712, %v3711
        %v4031 = vpack.c.bf16 %v3714, %v3713
        %v4032 = vpack.c.bf16 %v3716, %v3715
        %v4033 = vpack.c.bf16 %v3718, %v3717
        %v4034 = vpack.c.bf16 %v3720, %v3719
        %v4035 = vpack.c.bf16 %v3722, %v3721
        %v4036 = vpack.c.bf16 %v3724, %v3723
        %v4037 = vpack.c.bf16 %v3726, %v3725
        %v4038 = vpack.c.bf16 %v3728, %v3727
        %v4039 = vpack.c.bf16 %v3730, %v3729
        %v4040 = vpack.c.bf16 %v3732, %v3731
        %v4041 = vpack.c.bf16 %v3734, %v3733
        %v4042 = vpack.c.bf16 %v3736, %v3735
        %v4043 = vpack.c.bf16 %v3738, %v3737
        %v4044 = vpack.c.bf16 %v3740, %v3739
        %v4045 = vpack.c.bf16 %v3742, %v3741
        %v4046 = vpack.c.bf16 %v3744, %v3743
        %v4047 = vpack.c.bf16 %v3746, %v3745
        %v4048 = vpack.c.bf16 %v3748, %v3747
        %v4049 = vpack.c.bf16 %v3750, %v3749
        %v4050 = vpack.c.bf16 %v3752, %v3751
        %v4051 = vpack.c.bf16 %v3754, %v3753
        %v4052 = vpack.c.bf16 %v3756, %v3755
        %v4053 = vpack.c.bf16 %v3758, %v3757
        %v4054 = vpack.c.bf16 %v3760, %v3759
        %v4055 = vpack.c.bf16 %v3762, %v3761
        %v4056 = vpack.c.bf16 %v3764, %v3763
        %v4057 = vpack.c.bf16 %v3766, %v3765
        %v4058 = vpack.c.bf16 %v3768, %v3767
        %v4059 = vpack.c.bf16 %v3770, %v3769
        %v4060 = vpack.c.bf16 %v3772, %v3771
        %v4061 = vpack.c.bf16 %v3774, %v3773
        %v4062 = vpack.c.bf16 %v3776, %v3775
        %v4063 = vpack.c.bf16 %v3778, %v3777
        %v4064 = vpack.c.bf16 %v3780, %v3779
        %v4065 = vpack.c.bf16 %v3782, %v3781
        %v4066 = vpack.c.bf16 %v3784, %v3783
        %v4067 = vpack.c.bf16 %v3786, %v3785
        %v4068 = vpack.c.bf16 %v3788, %v3787
        %v4069 = vpack.c.bf16 %v3790, %v3789
        %v4070 = vpack.c.bf16 %v3792, %v3791
        %v4071 = vpack.c.bf16 %v3794, %v3793
        %v4072 = vpack.c.bf16 %v3796, %v3795
        %v4073 = vpack.c.bf16 %v3798, %v3797
        %v4074 = vpack.c.bf16 %v3800, %v3799
        %v4075 = vpack.c.bf16 %v3802, %v3801
        %v4076 = vpack.c.bf16 %v3804, %v3803
        %v4077 = vpack.c.bf16 %v3806, %v3805
        %v4078 = vpack.c.bf16 %v3808, %v3807
        %v4079 = vpack.c.bf16 %v3810, %v3809
        %v4080 = vpack.c.bf16 %v3812, %v3811
        %v4081 = vpack.c.bf16 %v3814, %v3813
        %v4082 = vpack.c.bf16 %v3816, %v3815
        %v4083 = vpack.c.bf16 %v3818, %v3817
        %v4084 = vpack.c.bf16 %v3820, %v3819
        %v4085 = vpack.c.bf16 %v3822, %v3821
        %v4086 = vpack.c.bf16 %v3824, %v3823
        %v4087 = vpack.c.bf16 %v3826, %v3825
        %v4088 = vpack.c.bf16 %v3828, %v3827
        %v4089 = vpack.c.bf16 %v3830, %v3829
        %v4090 = vpack.c.bf16 %v3832, %v3831
        %v4091 = vpack.c.bf16 %v3834, %v3833
        %v4092 = vpack.c.bf16 %v3836, %v3835
        %v4093 = vunpack.c.l.bf16 %v3837
        %v4094 = vunpack.c.h.bf16 %v3837
        %v4095 = vunpack.c.l.bf16 %v3838
        %v4096 = vunpack.c.h.bf16 %v3838
        %v4097 = vunpack.c.l.bf16 %v3839
        %v4098 = vunpack.c.h.bf16 %v3839
        %v4099 = vunpack.c.l.bf16 %v3840
        %v4100 = vunpack.c.h.bf16 %v3840
        %v4101 = vunpack.c.l.bf16 %v3841
        %v4102 = vunpack.c.h.bf16 %v3841
        %v4103 = vunpack.c.l.bf16 %v3842
        %v4104 = vunpack.c.h.bf16 %v3842
        %v4105 = vunpack.c.l.bf16 %v3843
        %v4106 = vunpack.c.h.bf16 %v3843
        %v4107 = vunpack.c.l.bf16 %v3844
        %v4108 = vunpack.c.h.bf16 %v3844
        %v4109 = vunpack.c.l.bf16 %v3845
        %v4110 = vunpack.c.h.bf16 %v3845
        %v4111 = vunpack.c.l.bf16 %v3846
        %v4112 = vunpack.c.h.bf16 %v3846
        %v4113 = vunpack.c.l.bf16 %v3847
        %v4114 = vunpack.c.h.bf16 %v3847
        %v4115 = vunpack.c.l.bf16 %v3848
        %v4116 = vunpack.c.h.bf16 %v3848
        %v4117 = vunpack.c.l.bf16 %v3849
        %v4118 = vunpack.c.h.bf16 %v3849
        %v4119 = vunpack.c.l.bf16 %v3850
        %v4120 = vunpack.c.h.bf16 %v3850
        %v4121 = vunpack.c.l.bf16 %v3851
        %v4122 = vunpack.c.h.bf16 %v3851
        %v4123 = vunpack.c.l.bf16 %v3852
        %v4124 = vunpack.c.h.bf16 %v3852
        %v4125 = vunpack.c.l.bf16 %v3853
        %v4126 = vunpack.c.h.bf16 %v3853
        %v4127 = vunpack.c.l.bf16 %v3854
        %v4128 = vunpack.c.h.bf16 %v3854
        %v4129 = vunpack.c.l.bf16 %v3855
        %v4130 = vunpack.c.h.bf16 %v3855
        %v4131 = vunpack.c.l.bf16 %v3856
        %v4132 = vunpack.c.h.bf16 %v3856
        %v4133 = vunpack.c.l.bf16 %v3857
        %v4134 = vunpack.c.h.bf16 %v3857
        %v4135 = vunpack.c.l.bf16 %v3858
        %v4136 = vunpack.c.h.bf16 %v3858
        %v4137 = vunpack.c.l.bf16 %v3859
        %v4138 = vunpack.c.h.bf16 %v3859
        %v4139 = vunpack.c.l.bf16 %v3860
        %v4140 = vunpack.c.h.bf16 %v3860
        %v4141 = vunpack.c.l.bf16 %v3861
        %v4142 = vunpack.c.h.bf16 %v3861
        %v4143 = vunpack.c.l.bf16 %v3862
        %v4144 = vunpack.c.h.bf16 %v3862
        %v4145 = vunpack.c.l.bf16 %v3863
        %v4146 = vunpack.c.h.bf16 %v3863
        %v4147 = vunpack.c.l.bf16 %v3864
        %v4148 = vunpack.c.h.bf16 %v3864
        %v4149 = vunpack.c.l.bf16 %v3865
        %v4150 = vunpack.c.h.bf16 %v3865
        %v4151 = vunpack.c.l.bf16 %v3866
        %v4152 = vunpack.c.h.bf16 %v3866
        %v4153 = vunpack.c.l.bf16 %v3867
        %v4154 = vunpack.c.h.bf16 %v3867
        %v4155 = vunpack.c.l.bf16 %v3868
        %v4156 = vunpack.c.h.bf16 %v3868
        %v4157 = vunpack.c.l.bf16 %v3869
        %v4158 = vunpack.c.h.bf16 %v3869
        %v4159 = vunpack.c.l.bf16 %v3870
        %v4160 = vunpack.c.h.bf16 %v3870
        %v4161 = vunpack.c.l.bf16 %v3871
        %v4162 = vunpack.c.h.bf16 %v3871
        %v4163 = vunpack.c.l.bf16 %v3872
        %v4164 = vunpack.c.h.bf16 %v3872
        %v4165 = vunpack.c.l.bf16 %v3873
        %v4166 = vunpack.c.h.bf16 %v3873
        %v4167 = vunpack.c.l.bf16 %v3874
        %v4168 = vunpack.c.h.bf16 %v3874
        %v4169 = vunpack.c.l.bf16 %v3875
        %v4170 = vunpack.c.h.bf16 %v3875
        %v4171 = vunpack.c.l.bf16 %v3876
        %v4172 = vunpack.c.h.bf16 %v3876
        %v4173 = vunpack.c.l.bf16 %v3877
        %v4174 = vunpack.c.h.bf16 %v3877
        %v4175 = vunpack.c.l.bf16 %v3878
        %v4176 = vunpack.c.h.bf16 %v3878
        %v4177 = vunpack.c.l.bf16 %v3879
        %v4178 = vunpack.c.h.bf16 %v3879
        %v4179 = vunpack.c.l.bf16 %v3880
        %v4180 = vunpack.c.h.bf16 %v3880
        %v4181 = vunpack.c.l.bf16 %v3881
        %v4182 = vunpack.c.h.bf16 %v3881
        %v4183 = vunpack.c.l.bf16 %v3882
        %v4184 = vunpack.c.h.bf16 %v3882
        %v4185 = vunpack.c.l.bf16 %v3883
        %v4186 = vunpack.c.h.bf16 %v3883
        %v4187 = vunpack.c.l.bf16 %v3884
        %v4188 = vunpack.c.h.bf16 %v3884
        %v4189 = vunpack.c.l.bf16 %v3885
        %v4190 = vunpack.c.h.bf16 %v3885
        %v4191 = vunpack.c.l.bf16 %v3886
        %v4192 = vunpack.c.h.bf16 %v3886
        %v4193 = vunpack.c.l.bf16 %v3887
        %v4194 = vunpack.c.h.bf16 %v3887
        %v4195 = vunpack.c.l.bf16 %v3888
        %v4196 = vunpack.c.h.bf16 %v3888
        %v4197 = vunpack.c.l.bf16 %v3889
        %v4198 = vunpack.c.h.bf16 %v3889
        %v4199 = vunpack.c.l.bf16 %v3890
        %v4200 = vunpack.c.h.bf16 %v3890
        %v4201 = vunpack.c.l.bf16 %v3891
        %v4202 = vunpack.c.h.bf16 %v3891
        %v4203 = vunpack.c.l.bf16 %v3892
        %v4204 = vunpack.c.h.bf16 %v3892
        %v4205 = vunpack.c.l.bf16 %v3893
        %v4206 = vunpack.c.h.bf16 %v3893
        %v4207 = vunpack.c.l.bf16 %v3894
        %v4208 = vunpack.c.h.bf16 %v3894
        %v4209 = vunpack.c.l.bf16 %v3895
        %v4210 = vunpack.c.h.bf16 %v3895
        %v4211 = vunpack.c.l.bf16 %v3896
        %v4212 = vunpack.c.h.bf16 %v3896
        %v4213 = vunpack.c.l.bf16 %v3897
        %v4214 = vunpack.c.h.bf16 %v3897
        %v4215 = vunpack.c.l.bf16 %v3898
        %v4216 = vunpack.c.h.bf16 %v3898
        %v4217 = vunpack.c.l.bf16 %v3899
        %v4218 = vunpack.c.h.bf16 %v3899
        %v4219 = vunpack.c.l.bf16 %v3900
        %v4220 = vunpack.c.h.bf16 %v3900
        %v4221 = vunpack.c.l.bf16 %v3901
        %v4222 = vunpack.c.h.bf16 %v3901
        %v4223 = vunpack.c.l.bf16 %v3902
        %v4224 = vunpack.c.h.bf16 %v3902
        %v4225 = vunpack.c.l.bf16 %v3903
        %v4226 = vunpack.c.h.bf16 %v3903
        %v4227 = vunpack.c.l.bf16 %v3904
        %v4228 = vunpack.c.h.bf16 %v3904
        %v4229 = vunpack.c.l.bf16 %v3905
        %v4230 = vunpack.c.h.bf16 %v3905
        %v4231 = vunpack.c.l.bf16 %v3906
        %v4232 = vunpack.c.h.bf16 %v3906
        %v4233 = vunpack.c.l.bf16 %v3907
        %v4234 = vunpack.c.h.bf16 %v3907
        %v4235 = vunpack.c.l.bf16 %v3908
        %v4236 = vunpack.c.h.bf16 %v3908
        %v4237 = vunpack.c.l.bf16 %v3909
        %v4238 = vunpack.c.h.bf16 %v3909
        %v4239 = vunpack.c.l.bf16 %v3910
        %v4240 = vunpack.c.h.bf16 %v3910
        %v4241 = vunpack.c.l.bf16 %v3911
        %v4242 = vunpack.c.h.bf16 %v3911
        %v4243 = vunpack.c.l.bf16 %v3912
        %v4244 = vunpack.c.h.bf16 %v3912
        %v4245 = vunpack.c.l.bf16 %v3913
        %v4246 = vunpack.c.h.bf16 %v3913
        %v4247 = vunpack.c.l.bf16 %v3914
        %v4248 = vunpack.c.h.bf16 %v3914
        %v4249 = vunpack.c.l.bf16 %v3915
        %v4250 = vunpack.c.h.bf16 %v3915
        %v4251 = vunpack.c.l.bf16 %v3916
        %v4252 = vunpack.c.h.bf16 %v3916
        %v4253 = vunpack.c.l.bf16 %v3917
        %v4254 = vunpack.c.h.bf16 %v3917
        %v4255 = vunpack.c.l.bf16 %v3918
        %v4256 = vunpack.c.h.bf16 %v3918
        %v4257 = vunpack.c.l.bf16 %v3919
        %v4258 = vunpack.c.h.bf16 %v3919
        %v4259 = vunpack.c.l.bf16 %v3920
        %v4260 = vunpack.c.h.bf16 %v3920
        %v4261 = vunpack.c.l.bf16 %v3921
        %v4262 = vunpack.c.h.bf16 %v3921
        %v4263 = vunpack.c.l.bf16 %v3922
        %v4264 = vunpack.c.h.bf16 %v3922
        %v4265 = vunpack.c.l.bf16 %v3923
        %v4266 = vunpack.c.h.bf16 %v3923
        %v4267 = vunpack.c.l.bf16 %v3924
        %v4268 = vunpack.c.h.bf16 %v3924
        %v4269 = vunpack.c.l.bf16 %v3925
        %v4270 = vunpack.c.h.bf16 %v3925
        %v4271 = vunpack.c.l.bf16 %v3926
        %v4272 = vunpack.c.h.bf16 %v3926
        %v4273 = vunpack.c.l.bf16 %v3927
        %v4274 = vunpack.c.h.bf16 %v3927
        %v4275 = vunpack.c.l.bf16 %v3928
        %v4276 = vunpack.c.h.bf16 %v3928
        %v4277 = vunpack.c.l.bf16 %v3929
        %v4278 = vunpack.c.h.bf16 %v3929
        %v4279 = vunpack.c.l.bf16 %v3930
        %v4280 = vunpack.c.h.bf16 %v3930
        %v4281 = vunpack.c.l.bf16 %v3931
        %v4282 = vunpack.c.h.bf16 %v3931
        %v4283 = vunpack.c.l.bf16 %v3932
        %v4284 = vunpack.c.h.bf16 %v3932
        %v4285 = vunpack.c.l.bf16 %v3933
        %v4286 = vunpack.c.h.bf16 %v3933
        %v4287 = vunpack.c.l.bf16 %v3934
        %v4288 = vunpack.c.h.bf16 %v3934
        %v4289 = vunpack.c.l.bf16 %v3935
        %v4290 = vunpack.c.h.bf16 %v3935
        %v4291 = vunpack.c.l.bf16 %v3936
        %v4292 = vunpack.c.h.bf16 %v3936
        %v4293 = vunpack.c.l.bf16 %v3937
        %v4294 = vunpack.c.h.bf16 %v3937
        %v4295 = vunpack.c.l.bf16 %v3938
        %v4296 = vunpack.c.h.bf16 %v3938
        %v4297 = vunpack.c.l.bf16 %v3939
        %v4298 = vunpack.c.h.bf16 %v3939
        %v4299 = vunpack.c.l.bf16 %v3940
        %v4300 = vunpack.c.h.bf16 %v3940
        %v4301 = vunpack.c.l.bf16 %v3941
        %v4302 = vunpack.c.h.bf16 %v3941
        %v4303 = vunpack.c.l.bf16 %v3942
        %v4304 = vunpack.c.h.bf16 %v3942
        %v4305 = vunpack.c.l.bf16 %v3943
        %v4306 = vunpack.c.h.bf16 %v3943
        %v4307 = vunpack.c.l.bf16 %v3944
        %v4308 = vunpack.c.h.bf16 %v3944
        %v4309 = vunpack.c.l.bf16 %v3945
        %v4310 = vunpack.c.h.bf16 %v3945
        %v4311 = vunpack.c.l.bf16 %v3946
        %v4312 = vunpack.c.h.bf16 %v3946
        %v4313 = vunpack.c.l.bf16 %v3947
        %v4314 = vunpack.c.h.bf16 %v3947
        %v4315 = vunpack.c.l.bf16 %v3948
        %v4316 = vunpack.c.h.bf16 %v3948
        %v4317 = vunpack.c.l.bf16 %v3949
        %v4318 = vunpack.c.h.bf16 %v3949
        %v4319 = vunpack.c.l.bf16 %v3950
        %v4320 = vunpack.c.h.bf16 %v3950
        %v4321 = vunpack.c.l.bf16 %v3951
        %v4322 = vunpack.c.h.bf16 %v3951
        %v4323 = vunpack.c.l.bf16 %v3952
        %v4324 = vunpack.c.h.bf16 %v3952
        %v4325 = vunpack.c.l.bf16 %v3953
        %v4326 = vunpack.c.h.bf16 %v3953
        %v4327 = vunpack.c.l.bf16 %v3954
        %v4328 = vunpack.c.h.bf16 %v3954
        %v4329 = vunpack.c.l.bf16 %v3955
        %v4330 = vunpack.c.h.bf16 %v3955
        %v4331 = vunpack.c.l.bf16 %v3956
        %v4332 = vunpack.c.h.bf16 %v3956
        %v4333 = vunpack.c.l.bf16 %v3957
        %v4334 = vunpack.c.h.bf16 %v3957
        %v4335 = vunpack.c.l.bf16 %v3958
        %v4336 = vunpack.c.h.bf16 %v3958
        %v4337 = vunpack.c.l.bf16 %v3959
        %v4338 = vunpack.c.h.bf16 %v3959
        %v4339 = vunpack.c.l.bf16 %v3960
        %v4340 = vunpack.c.h.bf16 %v3960
        %v4341 = vunpack.c.l.bf16 %v3961
        %v4342 = vunpack.c.h.bf16 %v3961
        %v4343 = vunpack.c.l.bf16 %v3962
        %v4344 = vunpack.c.h.bf16 %v3962
        %v4345 = vunpack.c.l.bf16 %v3963
        %v4346 = vunpack.c.h.bf16 %v3963
        %v4347 = vunpack.c.l.bf16 %v3964
        %v4348 = vunpack.c.h.bf16 %v3964
        %v4349 = vunpack.c.l.bf16 %v3965
        %v4350 = vunpack.c.h.bf16 %v3965
        %v4351 = vunpack.c.l.bf16 %v3966
        %v4352 = vunpack.c.h.bf16 %v3966
        %v4353 = vunpack.c.l.bf16 %v3967
        %v4354 = vunpack.c.h.bf16 %v3967
        %v4355 = vunpack.c.l.bf16 %v3968
        %v4356 = vunpack.c.h.bf16 %v3968
        %v4357 = vunpack.c.l.bf16 %v3969
        %v4358 = vunpack.c.h.bf16 %v3969
        %v4359 = vunpack.c.l.bf16 %v3970
        %v4360 = vunpack.c.h.bf16 %v3970
        %v4361 = vunpack.c.l.bf16 %v3971
        %v4362 = vunpack.c.h.bf16 %v3971
        %v4363 = vunpack.c.l.bf16 %v3972
        %v4364 = vunpack.c.h.bf16 %v3972
        %v4365 = vunpack.c.l.bf16 %v3973
        %v4366 = vunpack.c.h.bf16 %v3973
        %v4367 = vunpack.c.l.bf16 %v3974
        %v4368 = vunpack.c.h.bf16 %v3974
        %v4369 = vunpack.c.l.bf16 %v3975
        %v4370 = vunpack.c.h.bf16 %v3975
        %v4371 = vunpack.c.l.bf16 %v3976
        %v4372 = vunpack.c.h.bf16 %v3976
        %v4373 = vunpack.c.l.bf16 %v3977
        %v4374 = vunpack.c.h.bf16 %v3977
        %v4375 = vunpack.c.l.bf16 %v3978
        %v4376 = vunpack.c.h.bf16 %v3978
        %v4377 = vunpack.c.l.bf16 %v3979
        %v4378 = vunpack.c.h.bf16 %v3979
        %v4379 = vunpack.c.l.bf16 %v3980
        %v4380 = vunpack.c.h.bf16 %v3980
        %v4381 = vunpack.c.l.bf16 %v3981
        %v4382 = vunpack.c.h.bf16 %v3981
        %v4383 = vunpack.c.l.bf16 %v3982
        %v4384 = vunpack.c.h.bf16 %v3982
        %v4385 = vunpack.c.l.bf16 %v3983
        %v4386 = vunpack.c.h.bf16 %v3983
        %v4387 = vunpack.c.l.bf16 %v3984
        %v4388 = vunpack.c.h.bf16 %v3984
        %v4389 = vunpack.c.l.bf16 %v3985
        %v4390 = vunpack.c.h.bf16 %v3985
        %v4391 = vunpack.c.l.bf16 %v3986
        %v4392 = vunpack.c.h.bf16 %v3986
        %v4393 = vunpack.c.l.bf16 %v3987
        %v4394 = vunpack.c.h.bf16 %v3987
        %v4395 = vunpack.c.l.bf16 %v3988
        %v4396 = vunpack.c.h.bf16 %v3988
        %v4397 = vunpack.c.l.bf16 %v3989
        %v4398 = vunpack.c.h.bf16 %v3989
        %v4399 = vunpack.c.l.bf16 %v3990
        %v4400 = vunpack.c.h.bf16 %v3990
        %v4401 = vunpack.c.l.bf16 %v3991
        %v4402 = vunpack.c.h.bf16 %v3991
        %v4403 = vunpack.c.l.bf16 %v3992
        %v4404 = vunpack.c.h.bf16 %v3992
        %v4405 = vunpack.c.l.bf16 %v3993
        %v4406 = vunpack.c.h.bf16 %v3993
        %v4407 = vunpack.c.l.bf16 %v3994
        %v4408 = vunpack.c.h.bf16 %v3994
        %v4409 = vunpack.c.l.bf16 %v3995
        %v4410 = vunpack.c.h.bf16 %v3995
        %v4411 = vunpack.c.l.bf16 %v3996
        %v4412 = vunpack.c.h.bf16 %v3996
        %v4413 = vunpack.c.l.bf16 %v3997
        %v4414 = vunpack.c.h.bf16 %v3997
        %v4415 = vunpack.c.l.bf16 %v3998
        %v4416 = vunpack.c.h.bf16 %v3998
        %v4417 = vunpack.c.l.bf16 %v3999
        %v4418 = vunpack.c.h.bf16 %v3999
        %v4419 = vunpack.c.l.bf16 %v4000
        %v4420 = vunpack.c.h.bf16 %v4000
        %v4421 = vunpack.c.l.bf16 %v4001
        %v4422 = vunpack.c.h.bf16 %v4001
        %v4423 = vunpack.c.l.bf16 %v4002
        %v4424 = vunpack.c.h.bf16 %v4002
        %v4425 = vunpack.c.l.bf16 %v4003
        %v4426 = vunpack.c.h.bf16 %v4003
        %v4427 = vunpack.c.l.bf16 %v4004
        %v4428 = vunpack.c.h.bf16 %v4004
        %v4429 = vunpack.c.l.bf16 %v4005
        %v4430 = vunpack.c.h.bf16 %v4005
        %v4431 = vunpack.c.l.bf16 %v4006
        %v4432 = vunpack.c.h.bf16 %v4006
        %v4433 = vunpack.c.l.bf16 %v4007
        %v4434 = vunpack.c.h.bf16 %v4007
        %v4435 = vunpack.c.l.bf16 %v4008
        %v4436 = vunpack.c.h.bf16 %v4008
        %v4437 = vunpack.c.l.bf16 %v4009
        %v4438 = vunpack.c.h.bf16 %v4009
        %v4439 = vunpack.c.l.bf16 %v4010
        %v4440 = vunpack.c.h.bf16 %v4010
        %v4441 = vunpack.c.l.bf16 %v4011
        %v4442 = vunpack.c.h.bf16 %v4011
        %v4443 = vunpack.c.l.bf16 %v4012
        %v4444 = vunpack.c.h.bf16 %v4012
        %v4445 = vunpack.c.l.bf16 %v4013
        %v4446 = vunpack.c.h.bf16 %v4013
        %v4447 = vunpack.c.l.bf16 %v4014
        %v4448 = vunpack.c.h.bf16 %v4014
        %v4449 = vunpack.c.l.bf16 %v4015
        %v4450 = vunpack.c.h.bf16 %v4015
        %v4451 = vunpack.c.l.bf16 %v4016
        %v4452 = vunpack.c.h.bf16 %v4016
        %v4453 = vunpack.c.l.bf16 %v4017
        %v4454 = vunpack.c.h.bf16 %v4017
        %v4455 = vunpack.c.l.bf16 %v4018
        %v4456 = vunpack.c.h.bf16 %v4018
        %v4457 = vunpack.c.l.bf16 %v4019
        %v4458 = vunpack.c.h.bf16 %v4019
        %v4459 = vunpack.c.l.bf16 %v4020
        %v4460 = vunpack.c.h.bf16 %v4020
        %v4461 = vunpack.c.l.bf16 %v4021
        %v4462 = vunpack.c.h.bf16 %v4021
        %v4463 = vunpack.c.l.bf16 %v4022
        %v4464 = vunpack.c.h.bf16 %v4022
        %v4465 = vunpack.c.l.bf16 %v4023
        %v4466 = vunpack.c.h.bf16 %v4023
        %v4467 = vunpack.c.l.bf16 %v4024
        %v4468 = vunpack.c.h.bf16 %v4024
        %v4469 = vunpack.c.l.bf16 %v4025
        %v4470 = vunpack.c.h.bf16 %v4025
        %v4471 = vunpack.c.l.bf16 %v4026
        %v4472 = vunpack.c.h.bf16 %v4026
        %v4473 = vunpack.c.l.bf16 %v4027
        %v4474 = vunpack.c.h.bf16 %v4027
        %v4475 = vunpack.c.l.bf16 %v4028
        %v4476 = vunpack.c.h.bf16 %v4028
        %v4477 = vunpack.c.l.bf16 %v4029
        %v4478 = vunpack.c.h.bf16 %v4029
        %v4479 = vunpack.c.l.bf16 %v4030
        %v4480 = vunpack.c.h.bf16 %v4030
        %v4481 = vunpack.c.l.bf16 %v4031
        %v4482 = vunpack.c.h.bf16 %v4031
        %v4483 = vunpack.c.l.bf16 %v4032
        %v4484 = vunpack.c.h.bf16 %v4032
        %v4485 = vunpack.c.l.bf16 %v4033
        %v4486 = vunpack.c.h.bf16 %v4033
        %v4487 = vunpack.c.l.bf16 %v4034
        %v4488 = vunpack.c.h.bf16 %v4034
        %v4489 = vunpack.c.l.bf16 %v4035
        %v4490 = vunpack.c.h.bf16 %v4035
        %v4491 = vunpack.c.l.bf16 %v4036
        %v4492 = vunpack.c.h.bf16 %v4036
        %v4493 = vunpack.c.l.bf16 %v4037
        %v4494 = vunpack.c.h.bf16 %v4037
        %v4495 = vunpack.c.l.bf16 %v4038
        %v4496 = vunpack.c.h.bf16 %v4038
        %v4497 = vunpack.c.l.bf16 %v4039
        %v4498 = vunpack.c.h.bf16 %v4039
        %v4499 = vunpack.c.l.bf16 %v4040
        %v4500 = vunpack.c.h.bf16 %v4040
        %v4501 = vunpack.c.l.bf16 %v4041
        %v4502 = vunpack.c.h.bf16 %v4041
        %v4503 = vunpack.c.l.bf16 %v4042
        %v4504 = vunpack.c.h.bf16 %v4042
        %v4505 = vunpack.c.l.bf16 %v4043
        %v4506 = vunpack.c.h.bf16 %v4043
        %v4507 = vunpack.c.l.bf16 %v4044
        %v4508 = vunpack.c.h.bf16 %v4044
        %v4509 = vunpack.c.l.bf16 %v4045
        %v4510 = vunpack.c.h.bf16 %v4045
        %v4511 = vunpack.c.l.bf16 %v4046
        %v4512 = vunpack.c.h.bf16 %v4046
        %v4513 = vunpack.c.l.bf16 %v4047
        %v4514 = vunpack.c.h.bf16 %v4047
        %v4515 = vunpack.c.l.bf16 %v4048
        %v4516 = vunpack.c.h.bf16 %v4048
        %v4517 = vunpack.c.l.bf16 %v4049
        %v4518 = vunpack.c.h.bf16 %v4049
        %v4519 = vunpack.c.l.bf16 %v4050
        %v4520 = vunpack.c.h.bf16 %v4050
        %v4521 = vunpack.c.l.bf16 %v4051
        %v4522 = vunpack.c.h.bf16 %v4051
        %v4523 = vunpack.c.l.bf16 %v4052
        %v4524 = vunpack.c.h.bf16 %v4052
        %v4525 = vunpack.c.l.bf16 %v4053
        %v4526 = vunpack.c.h.bf16 %v4053
        %v4527 = vunpack.c.l.bf16 %v4054
        %v4528 = vunpack.c.h.bf16 %v4054
        %v4529 = vunpack.c.l.bf16 %v4055
        %v4530 = vunpack.c.h.bf16 %v4055
        %v4531 = vunpack.c.l.bf16 %v4056
        %v4532 = vunpack.c.h.bf16 %v4056
        %v4533 = vunpack.c.l.bf16 %v4057
        %v4534 = vunpack.c.h.bf16 %v4057
        %v4535 = vunpack.c.l.bf16 %v4058
        %v4536 = vunpack.c.h.bf16 %v4058
        %v4537 = vunpack.c.l.bf16 %v4059
        %v4538 = vunpack.c.h.bf16 %v4059
        %v4539 = vunpack.c.l.bf16 %v4060
        %v4540 = vunpack.c.h.bf16 %v4060
        %v4541 = vunpack.c.l.bf16 %v4061
        %v4542 = vunpack.c.h.bf16 %v4061
        %v4543 = vunpack.c.l.bf16 %v4062
        %v4544 = vunpack.c.h.bf16 %v4062
        %v4545 = vunpack.c.l.bf16 %v4063
        %v4546 = vunpack.c.h.bf16 %v4063
        %v4547 = vunpack.c.l.bf16 %v4064
        %v4548 = vunpack.c.h.bf16 %v4064
        %v4549 = vunpack.c.l.bf16 %v4065
        %v4550 = vunpack.c.h.bf16 %v4065
        %v4551 = vunpack.c.l.bf16 %v4066
        %v4552 = vunpack.c.h.bf16 %v4066
        %v4553 = vunpack.c.l.bf16 %v4067
        %v4554 = vunpack.c.h.bf16 %v4067
        %v4555 = vunpack.c.l.bf16 %v4068
        %v4556 = vunpack.c.h.bf16 %v4068
        %v4557 = vunpack.c.l.bf16 %v4069
        %v4558 = vunpack.c.h.bf16 %v4069
        %v4559 = vunpack.c.l.bf16 %v4070
        %v4560 = vunpack.c.h.bf16 %v4070
        %v4561 = vunpack.c.l.bf16 %v4071
        %v4562 = vunpack.c.h.bf16 %v4071
        %v4563 = vunpack.c.l.bf16 %v4072
        %v4564 = vunpack.c.h.bf16 %v4072
        %v4565 = vunpack.c.l.bf16 %v4073
        %v4566 = vunpack.c.h.bf16 %v4073
        %v4567 = vunpack.c.l.bf16 %v4074
        %v4568 = vunpack.c.h.bf16 %v4074
        %v4569 = vunpack.c.l.bf16 %v4075
        %v4570 = vunpack.c.h.bf16 %v4075
        %v4571 = vunpack.c.l.bf16 %v4076
        %v4572 = vunpack.c.h.bf16 %v4076
        %v4573 = vunpack.c.l.bf16 %v4077
        %v4574 = vunpack.c.h.bf16 %v4077
        %v4575 = vunpack.c.l.bf16 %v4078
        %v4576 = vunpack.c.h.bf16 %v4078
        %v4577 = vunpack.c.l.bf16 %v4079
        %v4578 = vunpack.c.h.bf16 %v4079
        %v4579 = vunpack.c.l.bf16 %v4080
        %v4580 = vunpack.c.h.bf16 %v4080
        %v4581 = vunpack.c.l.bf16 %v4081
        %v4582 = vunpack.c.h.bf16 %v4081
        %v4583 = vunpack.c.l.bf16 %v4082
        %v4584 = vunpack.c.h.bf16 %v4082
        %v4585 = vunpack.c.l.bf16 %v4083
        %v4586 = vunpack.c.h.bf16 %v4083
        %v4587 = vunpack.c.l.bf16 %v4084
        %v4588 = vunpack.c.h.bf16 %v4084
        %v4589 = vunpack.c.l.bf16 %v4085
        %v4590 = vunpack.c.h.bf16 %v4085
        %v4591 = vunpack.c.l.bf16 %v4086
        %v4592 = vunpack.c.h.bf16 %v4086
        %v4593 = vunpack.c.l.bf16 %v4087
        %v4594 = vunpack.c.h.bf16 %v4087
        %v4595 = vunpack.c.l.bf16 %v4088
        %v4596 = vunpack.c.h.bf16 %v4088
        %v4597 = vunpack.c.l.bf16 %v4089
        %v4598 = vunpack.c.h.bf16 %v4089
        %v4599 = vunpack.c.l.bf16 %v4090
        %v4600 = vunpack.c.h.bf16 %v4090
        %v4601 = vunpack.c.l.bf16 %v4091
        %v4602 = vunpack.c.h.bf16 %v4091
        %v4603 = vunpack.c.l.bf16 %v4092
        %v4604 = vunpack.c.h.bf16 %v4092
        %v4605 = vmul.f32 %v4093, 1.442695
        %v4606 = vpow.pop %v4605
        %v4607 = vmul.f32 %v4094, 1.442695
        %v4608 = vpow.pop %v4607
        %v4609 = vmul.f32 %v4095, 1.442695
        %v4610 = vpow.pop %v4609
        %v4611 = vmul.f32 %v4096, 1.442695
        %v4612 = vpow.pop %v4611
        %v4613 = vmul.f32 %v4097, 1.442695
        %v4614 = vpow.pop %v4613
        %v4615 = vmul.f32 %v4098, 1.442695
        %v4616 = vpow.pop %v4615
        %v4617 = vmul.f32 %v4099, 1.442695
        %v4618 = vpow.pop %v4617
        %v4619 = vmul.f32 %v4100, 1.442695
        %v4620 = vpow.pop %v4619
        %v4621 = vmul.f32 %v4101, 1.442695
        %v4622 = vpow.pop %v4621
        %v4623 = vmul.f32 %v4102, 1.442695
        %v4624 = vpow.pop %v4623
        %v4625 = vmul.f32 %v4103, 1.442695
        %v4626 = vpow.pop %v4625
        %v4627 = vmul.f32 %v4104, 1.442695
        %v4628 = vpow.pop %v4627
        %v4629 = vmul.f32 %v4105, 1.442695
        %v4630 = vpow.pop %v4629
        %v4631 = vmul.f32 %v4106, 1.442695
        %v4632 = vpow.pop %v4631
        %v4633 = vmul.f32 %v4107, 1.442695
        %v4634 = vpow.pop %v4633
        %v4635 = vmul.f32 %v4108, 1.442695
        %v4636 = vpow.pop %v4635
        %v4637 = vmul.f32 %v4109, 1.442695
        %v4638 = vpow.pop %v4637
        %v4639 = vmul.f32 %v4110, 1.442695
        %v4640 = vpow.pop %v4639
        %v4641 = vmul.f32 %v4111, 1.442695
        %v4642 = vpow.pop %v4641
        %v4643 = vmul.f32 %v4112, 1.442695
        %v4644 = vpow.pop %v4643
        %v4645 = vmul.f32 %v4113, 1.442695
        %v4646 = vpow.pop %v4645
        %v4647 = vmul.f32 %v4114, 1.442695
        %v4648 = vpow.pop %v4647
        %v4649 = vmul.f32 %v4115, 1.442695
        %v4650 = vpow.pop %v4649
        %v4651 = vmul.f32 %v4116, 1.442695
        %v4652 = vpow.pop %v4651
        %v4653 = vmul.f32 %v4117, 1.442695
        %v4654 = vpow.pop %v4653
        %v4655 = vmul.f32 %v4118, 1.442695
        %v4656 = vpow.pop %v4655
        %v4657 = vmul.f32 %v4119, 1.442695
        %v4658 = vpow.pop %v4657
        %v4659 = vmul.f32 %v4120, 1.442695
        %v4660 = vpow.pop %v4659
        %v4661 = vmul.f32 %v4121, 1.442695
        %v4662 = vpow.pop %v4661
        %v4663 = vmul.f32 %v4122, 1.442695
        %v4664 = vpow.pop %v4663
        %v4665 = vmul.f32 %v4123, 1.442695
        %v4666 = vpow.pop %v4665
        %v4667 = vmul.f32 %v4124, 1.442695
        %v4668 = vpow.pop %v4667
        %v4669 = vmul.f32 %v4125, 1.442695
        %v4670 = vpow.pop %v4669
        %v4671 = vmul.f32 %v4126, 1.442695
        %v4672 = vpow.pop %v4671
        %v4673 = vmul.f32 %v4127, 1.442695
        %v4674 = vpow.pop %v4673
        %v4675 = vmul.f32 %v4128, 1.442695
        %v4676 = vpow.pop %v4675
        %v4677 = vmul.f32 %v4129, 1.442695
        %v4678 = vpow.pop %v4677
        %v4679 = vmul.f32 %v4130, 1.442695
        %v4680 = vpow.pop %v4679
        %v4681 = vmul.f32 %v4131, 1.442695
        %v4682 = vpow.pop %v4681
        %v4683 = vmul.f32 %v4132, 1.442695
        %v4684 = vpow.pop %v4683
        %v4685 = vmul.f32 %v4133, 1.442695
        %v4686 = vpow.pop %v4685
        %v4687 = vmul.f32 %v4134, 1.442695
        %v4688 = vpow.pop %v4687
        %v4689 = vmul.f32 %v4135, 1.442695
        %v4690 = vpow.pop %v4689
        %v4691 = vmul.f32 %v4136, 1.442695
        %v4692 = vpow.pop %v4691
        %v4693 = vmul.f32 %v4137, 1.442695
        %v4694 = vpow.pop %v4693
        %v4695 = vmul.f32 %v4138, 1.442695
        %v4696 = vpow.pop %v4695
        %v4697 = vmul.f32 %v4139, 1.442695
        %v4698 = vpow.pop %v4697
        %v4699 = vmul.f32 %v4140, 1.442695
        %v4700 = vpow.pop %v4699
        %v4701 = vmul.f32 %v4141, 1.442695
        %v4702 = vpow.pop %v4701
        %v4703 = vmul.f32 %v4142, 1.442695
        %v4704 = vpow.pop %v4703
        %v4705 = vmul.f32 %v4143, 1.442695
        %v4706 = vpow.pop %v4705
        %v4707 = vmul.f32 %v4144, 1.442695
        %v4708 = vpow.pop %v4707
        %v4709 = vmul.f32 %v4145, 1.442695
        %v4710 = vpow.pop %v4709
        %v4711 = vmul.f32 %v4146, 1.442695
        %v4712 = vpow.pop %v4711
        %v4713 = vmul.f32 %v4147, 1.442695
        %v4714 = vpow.pop %v4713
        %v4715 = vmul.f32 %v4148, 1.442695
        %v4716 = vpow.pop %v4715
        %v4717 = vmul.f32 %v4149, 1.442695
        %v4718 = vpow.pop %v4717
        %v4719 = vmul.f32 %v4150, 1.442695
        %v4720 = vpow.pop %v4719
        %v4721 = vmul.f32 %v4151, 1.442695
        %v4722 = vpow.pop %v4721
        %v4723 = vmul.f32 %v4152, 1.442695
        %v4724 = vpow.pop %v4723
        %v4725 = vmul.f32 %v4153, 1.442695
        %v4726 = vpow.pop %v4725
        %v4727 = vmul.f32 %v4154, 1.442695
        %v4728 = vpow.pop %v4727
        %v4729 = vmul.f32 %v4155, 1.442695
        %v4730 = vpow.pop %v4729
        %v4731 = vmul.f32 %v4156, 1.442695
        %v4732 = vpow.pop %v4731
        %v4733 = vmul.f32 %v4157, 1.442695
        %v4734 = vpow.pop %v4733
        %v4735 = vmul.f32 %v4158, 1.442695
        %v4736 = vpow.pop %v4735
        %v4737 = vmul.f32 %v4159, 1.442695
        %v4738 = vpow.pop %v4737
        %v4739 = vmul.f32 %v4160, 1.442695
        %v4740 = vpow.pop %v4739
        %v4741 = vmul.f32 %v4161, 1.442695
        %v4742 = vpow.pop %v4741
        %v4743 = vmul.f32 %v4162, 1.442695
        %v4744 = vpow.pop %v4743
        %v4745 = vmul.f32 %v4163, 1.442695
        %v4746 = vpow.pop %v4745
        %v4747 = vmul.f32 %v4164, 1.442695
        %v4748 = vpow.pop %v4747
        %v4749 = vmul.f32 %v4165, 1.442695
        %v4750 = vpow.pop %v4749
        %v4751 = vmul.f32 %v4166, 1.442695
        %v4752 = vpow.pop %v4751
        %v4753 = vmul.f32 %v4167, 1.442695
        %v4754 = vpow.pop %v4753
        %v4755 = vmul.f32 %v4168, 1.442695
        %v4756 = vpow.pop %v4755
        %v4757 = vmul.f32 %v4169, 1.442695
        %v4758 = vpow.pop %v4757
        %v4759 = vmul.f32 %v4170, 1.442695
        %v4760 = vpow.pop %v4759
        %v4761 = vmul.f32 %v4171, 1.442695
        %v4762 = vpow.pop %v4761
        %v4763 = vmul.f32 %v4172, 1.442695
        %v4764 = vpow.pop %v4763
        %v4765 = vmul.f32 %v4173, 1.442695
        %v4766 = vpow.pop %v4765
        %v4767 = vmul.f32 %v4174, 1.442695
        %v4768 = vpow.pop %v4767
        %v4769 = vmul.f32 %v4175, 1.442695
        %v4770 = vpow.pop %v4769
        %v4771 = vmul.f32 %v4176, 1.442695
        %v4772 = vpow.pop %v4771
        %v4773 = vmul.f32 %v4177, 1.442695
        %v4774 = vpow.pop %v4773
        %v4775 = vmul.f32 %v4178, 1.442695
        %v4776 = vpow.pop %v4775
        %v4777 = vmul.f32 %v4179, 1.442695
        %v4778 = vpow.pop %v4777
        %v4779 = vmul.f32 %v4180, 1.442695
        %v4780 = vpow.pop %v4779
        %v4781 = vmul.f32 %v4181, 1.442695
        %v4782 = vpow.pop %v4781
        %v4783 = vmul.f32 %v4182, 1.442695
        %v4784 = vpow.pop %v4783
        %v4785 = vmul.f32 %v4183, 1.442695
        %v4786 = vpow.pop %v4785
        %v4787 = vmul.f32 %v4184, 1.442695
        %v4788 = vpow.pop %v4787
        %v4789 = vmul.f32 %v4185, 1.442695
        %v4790 = vpow.pop %v4789
        %v4791 = vmul.f32 %v4186, 1.442695
        %v4792 = vpow.pop %v4791
        %v4793 = vmul.f32 %v4187, 1.442695
        %v4794 = vpow.pop %v4793
        %v4795 = vmul.f32 %v4188, 1.442695
        %v4796 = vpow.pop %v4795
        %v4797 = vmul.f32 %v4189, 1.442695
        %v4798 = vpow.pop %v4797
        %v4799 = vmul.f32 %v4190, 1.442695
        %v4800 = vpow.pop %v4799
        %v4801 = vmul.f32 %v4191, 1.442695
        %v4802 = vpow.pop %v4801
        %v4803 = vmul.f32 %v4192, 1.442695
        %v4804 = vpow.pop %v4803
        %v4805 = vmul.f32 %v4193, 1.442695
        %v4806 = vpow.pop %v4805
        %v4807 = vmul.f32 %v4194, 1.442695
        %v4808 = vpow.pop %v4807
        %v4809 = vmul.f32 %v4195, 1.442695
        %v4810 = vpow.pop %v4809
        %v4811 = vmul.f32 %v4196, 1.442695
        %v4812 = vpow.pop %v4811
        %v4813 = vmul.f32 %v4197, 1.442695
        %v4814 = vpow.pop %v4813
        %v4815 = vmul.f32 %v4198, 1.442695
        %v4816 = vpow.pop %v4815
        %v4817 = vmul.f32 %v4199, 1.442695
        %v4818 = vpow.pop %v4817
        %v4819 = vmul.f32 %v4200, 1.442695
        %v4820 = vpow.pop %v4819
        %v4821 = vmul.f32 %v4201, 1.442695
        %v4822 = vpow.pop %v4821
        %v4823 = vmul.f32 %v4202, 1.442695
        %v4824 = vpow.pop %v4823
        %v4825 = vmul.f32 %v4203, 1.442695
        %v4826 = vpow.pop %v4825
        %v4827 = vmul.f32 %v4204, 1.442695
        %v4828 = vpow.pop %v4827
        %v4829 = vmul.f32 %v4205, 1.442695
        %v4830 = vpow.pop %v4829
        %v4831 = vmul.f32 %v4206, 1.442695
        %v4832 = vpow.pop %v4831
        %v4833 = vmul.f32 %v4207, 1.442695
        %v4834 = vpow.pop %v4833
        %v4835 = vmul.f32 %v4208, 1.442695
        %v4836 = vpow.pop %v4835
        %v4837 = vmul.f32 %v4209, 1.442695
        %v4838 = vpow.pop %v4837
        %v4839 = vmul.f32 %v4210, 1.442695
        %v4840 = vpow.pop %v4839
        %v4841 = vmul.f32 %v4211, 1.442695
        %v4842 = vpow.pop %v4841
        %v4843 = vmul.f32 %v4212, 1.442695
        %v4844 = vpow.pop %v4843
        %v4845 = vmul.f32 %v4213, 1.442695
        %v4846 = vpow.pop %v4845
        %v4847 = vmul.f32 %v4214, 1.442695
        %v4848 = vpow.pop %v4847
        %v4849 = vmul.f32 %v4215, 1.442695
        %v4850 = vpow.pop %v4849
        %v4851 = vmul.f32 %v4216, 1.442695
        %v4852 = vpow.pop %v4851
        %v4853 = vmul.f32 %v4217, 1.442695
        %v4854 = vpow.pop %v4853
        %v4855 = vmul.f32 %v4218, 1.442695
        %v4856 = vpow.pop %v4855
        %v4857 = vmul.f32 %v4219, 1.442695
        %v4858 = vpow.pop %v4857
        %v4859 = vmul.f32 %v4220, 1.442695
        %v4860 = vpow.pop %v4859
        %v4861 = vmul.f32 %v4221, 1.442695
        %v4862 = vpow.pop %v4861
        %v4863 = vmul.f32 %v4222, 1.442695
        %v4864 = vpow.pop %v4863
        %v4865 = vmul.f32 %v4223, 1.442695
        %v4866 = vpow.pop %v4865
        %v4867 = vmul.f32 %v4224, 1.442695
        %v4868 = vpow.pop %v4867
        %v4869 = vmul.f32 %v4225, 1.442695
        %v4870 = vpow.pop %v4869
        %v4871 = vmul.f32 %v4226, 1.442695
        %v4872 = vpow.pop %v4871
        %v4873 = vmul.f32 %v4227, 1.442695
        %v4874 = vpow.pop %v4873
        %v4875 = vmul.f32 %v4228, 1.442695
        %v4876 = vpow.pop %v4875
        %v4877 = vmul.f32 %v4229, 1.442695
        %v4878 = vpow.pop %v4877
        %v4879 = vmul.f32 %v4230, 1.442695
        %v4880 = vpow.pop %v4879
        %v4881 = vmul.f32 %v4231, 1.442695
        %v4882 = vpow.pop %v4881
        %v4883 = vmul.f32 %v4232, 1.442695
        %v4884 = vpow.pop %v4883
        %v4885 = vmul.f32 %v4233, 1.442695
        %v4886 = vpow.pop %v4885
        %v4887 = vmul.f32 %v4234, 1.442695
        %v4888 = vpow.pop %v4887
        %v4889 = vmul.f32 %v4235, 1.442695
        %v4890 = vpow.pop %v4889
        %v4891 = vmul.f32 %v4236, 1.442695
        %v4892 = vpow.pop %v4891
        %v4893 = vmul.f32 %v4237, 1.442695
        %v4894 = vpow.pop %v4893
        %v4895 = vmul.f32 %v4238, 1.442695
        %v4896 = vpow.pop %v4895
        %v4897 = vmul.f32 %v4239, 1.442695
        %v4898 = vpow.pop %v4897
        %v4899 = vmul.f32 %v4240, 1.442695
        %v4900 = vpow.pop %v4899
        %v4901 = vmul.f32 %v4241, 1.442695
        %v4902 = vpow.pop %v4901
        %v4903 = vmul.f32 %v4242, 1.442695
        %v4904 = vpow.pop %v4903
        %v4905 = vmul.f32 %v4243, 1.442695
        %v4906 = vpow.pop %v4905
        %v4907 = vmul.f32 %v4244, 1.442695
        %v4908 = vpow.pop %v4907
        %v4909 = vmul.f32 %v4245, 1.442695
        %v4910 = vpow.pop %v4909
        %v4911 = vmul.f32 %v4246, 1.442695
        %v4912 = vpow.pop %v4911
        %v4913 = vmul.f32 %v4247, 1.442695
        %v4914 = vpow.pop %v4913
        %v4915 = vmul.f32 %v4248, 1.442695
        %v4916 = vpow.pop %v4915
        %v4917 = vmul.f32 %v4249, 1.442695
        %v4918 = vpow.pop %v4917
        %v4919 = vmul.f32 %v4250, 1.442695
        %v4920 = vpow.pop %v4919
        %v4921 = vmul.f32 %v4251, 1.442695
        %v4922 = vpow.pop %v4921
        %v4923 = vmul.f32 %v4252, 1.442695
        %v4924 = vpow.pop %v4923
        %v4925 = vmul.f32 %v4253, 1.442695
        %v4926 = vpow.pop %v4925
        %v4927 = vmul.f32 %v4254, 1.442695
        %v4928 = vpow.pop %v4927
        %v4929 = vmul.f32 %v4255, 1.442695
        %v4930 = vpow.pop %v4929
        %v4931 = vmul.f32 %v4256, 1.442695
        %v4932 = vpow.pop %v4931
        %v4933 = vmul.f32 %v4257, 1.442695
        %v4934 = vpow.pop %v4933
        %v4935 = vmul.f32 %v4258, 1.442695
        %v4936 = vpow.pop %v4935
        %v4937 = vmul.f32 %v4259, 1.442695
        %v4938 = vpow.pop %v4937
        %v4939 = vmul.f32 %v4260, 1.442695
        %v4940 = vpow.pop %v4939
        %v4941 = vmul.f32 %v4261, 1.442695
        %v4942 = vpow.pop %v4941
        %v4943 = vmul.f32 %v4262, 1.442695
        %v4944 = vpow.pop %v4943
        %v4945 = vmul.f32 %v4263, 1.442695
        %v4946 = vpow.pop %v4945
        %v4947 = vmul.f32 %v4264, 1.442695
        %v4948 = vpow.pop %v4947
        %v4949 = vmul.f32 %v4265, 1.442695
        %v4950 = vpow.pop %v4949
        %v4951 = vmul.f32 %v4266, 1.442695
        %v4952 = vpow.pop %v4951
        %v4953 = vmul.f32 %v4267, 1.442695
        %v4954 = vpow.pop %v4953
        %v4955 = vmul.f32 %v4268, 1.442695
        %v4956 = vpow.pop %v4955
        %v4957 = vmul.f32 %v4269, 1.442695
        %v4958 = vpow.pop %v4957
        %v4959 = vmul.f32 %v4270, 1.442695
        %v4960 = vpow.pop %v4959
        %v4961 = vmul.f32 %v4271, 1.442695
        %v4962 = vpow.pop %v4961
        %v4963 = vmul.f32 %v4272, 1.442695
        %v4964 = vpow.pop %v4963
        %v4965 = vmul.f32 %v4273, 1.442695
        %v4966 = vpow.pop %v4965
        %v4967 = vmul.f32 %v4274, 1.442695
        %v4968 = vpow.pop %v4967
        %v4969 = vmul.f32 %v4275, 1.442695
        %v4970 = vpow.pop %v4969
        %v4971 = vmul.f32 %v4276, 1.442695
        %v4972 = vpow.pop %v4971
        %v4973 = vmul.f32 %v4277, 1.442695
        %v4974 = vpow.pop %v4973
        %v4975 = vmul.f32 %v4278, 1.442695
        %v4976 = vpow.pop %v4975
        %v4977 = vmul.f32 %v4279, 1.442695
        %v4978 = vpow.pop %v4977
        %v4979 = vmul.f32 %v4280, 1.442695
        %v4980 = vpow.pop %v4979
        %v4981 = vmul.f32 %v4281, 1.442695
        %v4982 = vpow.pop %v4981
        %v4983 = vmul.f32 %v4282, 1.442695
        %v4984 = vpow.pop %v4983
        %v4985 = vmul.f32 %v4283, 1.442695
        %v4986 = vpow.pop %v4985
        %v4987 = vmul.f32 %v4284, 1.442695
        %v4988 = vpow.pop %v4987
        %v4989 = vmul.f32 %v4285, 1.442695
        %v4990 = vpow.pop %v4989
        %v4991 = vmul.f32 %v4286, 1.442695
        %v4992 = vpow.pop %v4991
        %v4993 = vmul.f32 %v4287, 1.442695
        %v4994 = vpow.pop %v4993
        %v4995 = vmul.f32 %v4288, 1.442695
        %v4996 = vpow.pop %v4995
        %v4997 = vmul.f32 %v4289, 1.442695
        %v4998 = vpow.pop %v4997
        %v4999 = vmul.f32 %v4290, 1.442695
        %v5000 = vpow.pop %v4999
        %v5001 = vmul.f32 %v4291, 1.442695
        %v5002 = vpow.pop %v5001
        %v5003 = vmul.f32 %v4292, 1.442695
        %v5004 = vpow.pop %v5003
        %v5005 = vmul.f32 %v4293, 1.442695
        %v5006 = vpow.pop %v5005
        %v5007 = vmul.f32 %v4294, 1.442695
        %v5008 = vpow.pop %v5007
        %v5009 = vmul.f32 %v4295, 1.442695
        %v5010 = vpow.pop %v5009
        %v5011 = vmul.f32 %v4296, 1.442695
        %v5012 = vpow.pop %v5011
        %v5013 = vmul.f32 %v4297, 1.442695
        %v5014 = vpow.pop %v5013
        %v5015 = vmul.f32 %v4298, 1.442695
        %v5016 = vpow.pop %v5015
        %v5017 = vmul.f32 %v4299, 1.442695
        %v5018 = vpow.pop %v5017
        %v5019 = vmul.f32 %v4300, 1.442695
        %v5020 = vpow.pop %v5019
        %v5021 = vmul.f32 %v4301, 1.442695
        %v5022 = vpow.pop %v5021
        %v5023 = vmul.f32 %v4302, 1.442695
        %v5024 = vpow.pop %v5023
        %v5025 = vmul.f32 %v4303, 1.442695
        %v5026 = vpow.pop %v5025
        %v5027 = vmul.f32 %v4304, 1.442695
        %v5028 = vpow.pop %v5027
        %v5029 = vmul.f32 %v4305, 1.442695
        %v5030 = vpow.pop %v5029
        %v5031 = vmul.f32 %v4306, 1.442695
        %v5032 = vpow.pop %v5031
        %v5033 = vmul.f32 %v4307, 1.442695
        %v5034 = vpow.pop %v5033
        %v5035 = vmul.f32 %v4308, 1.442695
        %v5036 = vpow.pop %v5035
        %v5037 = vmul.f32 %v4309, 1.442695
        %v5038 = vpow.pop %v5037
        %v5039 = vmul.f32 %v4310, 1.442695
        %v5040 = vpow.pop %v5039
        %v5041 = vmul.f32 %v4311, 1.442695
        %v5042 = vpow.pop %v5041
        %v5043 = vmul.f32 %v4312, 1.442695
        %v5044 = vpow.pop %v5043
        %v5045 = vmul.f32 %v4313, 1.442695
        %v5046 = vpow.pop %v5045
        %v5047 = vmul.f32 %v4314, 1.442695
        %v5048 = vpow.pop %v5047
        %v5049 = vmul.f32 %v4315, 1.442695
        %v5050 = vpow.pop %v5049
        %v5051 = vmul.f32 %v4316, 1.442695
        %v5052 = vpow.pop %v5051
        %v5053 = vmul.f32 %v4317, 1.442695
        %v5054 = vpow.pop %v5053
        %v5055 = vmul.f32 %v4318, 1.442695
        %v5056 = vpow.pop %v5055
        %v5057 = vmul.f32 %v4319, 1.442695
        %v5058 = vpow.pop %v5057
        %v5059 = vmul.f32 %v4320, 1.442695
        %v5060 = vpow.pop %v5059
        %v5061 = vmul.f32 %v4321, 1.442695
        %v5062 = vpow.pop %v5061
        %v5063 = vmul.f32 %v4322, 1.442695
        %v5064 = vpow.pop %v5063
        %v5065 = vmul.f32 %v4323, 1.442695
        %v5066 = vpow.pop %v5065
        %v5067 = vmul.f32 %v4324, 1.442695
        %v5068 = vpow.pop %v5067
        %v5069 = vmul.f32 %v4325, 1.442695
        %v5070 = vpow.pop %v5069
        %v5071 = vmul.f32 %v4326, 1.442695
        %v5072 = vpow.pop %v5071
        %v5073 = vmul.f32 %v4327, 1.442695
        %v5074 = vpow.pop %v5073
        %v5075 = vmul.f32 %v4328, 1.442695
        %v5076 = vpow.pop %v5075
        %v5077 = vmul.f32 %v4329, 1.442695
        %v5078 = vpow.pop %v5077
        %v5079 = vmul.f32 %v4330, 1.442695
        %v5080 = vpow.pop %v5079
        %v5081 = vmul.f32 %v4331, 1.442695
        %v5082 = vpow.pop %v5081
        %v5083 = vmul.f32 %v4332, 1.442695
        %v5084 = vpow.pop %v5083
        %v5085 = vmul.f32 %v4333, 1.442695
        %v5086 = vpow.pop %v5085
        %v5087 = vmul.f32 %v4334, 1.442695
        %v5088 = vpow.pop %v5087
        %v5089 = vmul.f32 %v4335, 1.442695
        %v5090 = vpow.pop %v5089
        %v5091 = vmul.f32 %v4336, 1.442695
        %v5092 = vpow.pop %v5091
        %v5093 = vmul.f32 %v4337, 1.442695
        %v5094 = vpow.pop %v5093
        %v5095 = vmul.f32 %v4338, 1.442695
        %v5096 = vpow.pop %v5095
        %v5097 = vmul.f32 %v4339, 1.442695
        %v5098 = vpow.pop %v5097
        %v5099 = vmul.f32 %v4340, 1.442695
        %v5100 = vpow.pop %v5099
        %v5101 = vmul.f32 %v4341, 1.442695
        %v5102 = vpow.pop %v5101
        %v5103 = vmul.f32 %v4342, 1.442695
        %v5104 = vpow.pop %v5103
        %v5105 = vmul.f32 %v4343, 1.442695
        %v5106 = vpow.pop %v5105
        %v5107 = vmul.f32 %v4344, 1.442695
        %v5108 = vpow.pop %v5107
        %v5109 = vmul.f32 %v4345, 1.442695
        %v5110 = vpow.pop %v5109
        %v5111 = vmul.f32 %v4346, 1.442695
        %v5112 = vpow.pop %v5111
        %v5113 = vmul.f32 %v4347, 1.442695
        %v5114 = vpow.pop %v5113
        %v5115 = vmul.f32 %v4348, 1.442695
        %v5116 = vpow.pop %v5115
        %v5117 = vmul.f32 %v4349, 1.442695
        %v5118 = vpow.pop %v5117
        %v5119 = vmul.f32 %v4350, 1.442695
        %v5120 = vpow.pop %v5119
        %v5121 = vmul.f32 %v4351, 1.442695
        %v5122 = vpow.pop %v5121
        %v5123 = vmul.f32 %v4352, 1.442695
        %v5124 = vpow.pop %v5123
        %v5125 = vmul.f32 %v4353, 1.442695
        %v5126 = vpow.pop %v5125
        %v5127 = vmul.f32 %v4354, 1.442695
        %v5128 = vpow.pop %v5127
        %v5129 = vmul.f32 %v4355, 1.442695
        %v5130 = vpow.pop %v5129
        %v5131 = vmul.f32 %v4356, 1.442695
        %v5132 = vpow.pop %v5131
        %v5133 = vmul.f32 %v4357, 1.442695
        %v5134 = vpow.pop %v5133
        %v5135 = vmul.f32 %v4358, 1.442695
        %v5136 = vpow.pop %v5135
        %v5137 = vmul.f32 %v4359, 1.442695
        %v5138 = vpow.pop %v5137
        %v5139 = vmul.f32 %v4360, 1.442695
        %v5140 = vpow.pop %v5139
        %v5141 = vmul.f32 %v4361, 1.442695
        %v5142 = vpow.pop %v5141
        %v5143 = vmul.f32 %v4362, 1.442695
        %v5144 = vpow.pop %v5143
        %v5145 = vmul.f32 %v4363, 1.442695
        %v5146 = vpow.pop %v5145
        %v5147 = vmul.f32 %v4364, 1.442695
        %v5148 = vpow.pop %v5147
        %v5149 = vmul.f32 %v4365, 1.442695
        %v5150 = vpow.pop %v5149
        %v5151 = vmul.f32 %v4366, 1.442695
        %v5152 = vpow.pop %v5151
        %v5153 = vmul.f32 %v4367, 1.442695
        %v5154 = vpow.pop %v5153
        %v5155 = vmul.f32 %v4368, 1.442695
        %v5156 = vpow.pop %v5155
        %v5157 = vmul.f32 %v4369, 1.442695
        %v5158 = vpow.pop %v5157
        %v5159 = vmul.f32 %v4370, 1.442695
        %v5160 = vpow.pop %v5159
        %v5161 = vmul.f32 %v4371, 1.442695
        %v5162 = vpow.pop %v5161
        %v5163 = vmul.f32 %v4372, 1.442695
        %v5164 = vpow.pop %v5163
        %v5165 = vmul.f32 %v4373, 1.442695
        %v5166 = vpow.pop %v5165
        %v5167 = vmul.f32 %v4374, 1.442695
        %v5168 = vpow.pop %v5167
        %v5169 = vmul.f32 %v4375, 1.442695
        %v5170 = vpow.pop %v5169
        %v5171 = vmul.f32 %v4376, 1.442695
        %v5172 = vpow.pop %v5171
        %v5173 = vmul.f32 %v4377, 1.442695
        %v5174 = vpow.pop %v5173
        %v5175 = vmul.f32 %v4378, 1.442695
        %v5176 = vpow.pop %v5175
        %v5177 = vmul.f32 %v4379, 1.442695
        %v5178 = vpow.pop %v5177
        %v5179 = vmul.f32 %v4380, 1.442695
        %v5180 = vpow.pop %v5179
        %v5181 = vmul.f32 %v4381, 1.442695
        %v5182 = vpow.pop %v5181
        %v5183 = vmul.f32 %v4382, 1.442695
        %v5184 = vpow.pop %v5183
        %v5185 = vmul.f32 %v4383, 1.442695
        %v5186 = vpow.pop %v5185
        %v5187 = vmul.f32 %v4384, 1.442695
        %v5188 = vpow.pop %v5187
        %v5189 = vmul.f32 %v4385, 1.442695
        %v5190 = vpow.pop %v5189
        %v5191 = vmul.f32 %v4386, 1.442695
        %v5192 = vpow.pop %v5191
        %v5193 = vmul.f32 %v4387, 1.442695
        %v5194 = vpow.pop %v5193
        %v5195 = vmul.f32 %v4388, 1.442695
        %v5196 = vpow.pop %v5195
        %v5197 = vmul.f32 %v4389, 1.442695
        %v5198 = vpow.pop %v5197
        %v5199 = vmul.f32 %v4390, 1.442695
        %v5200 = vpow.pop %v5199
        %v5201 = vmul.f32 %v4391, 1.442695
        %v5202 = vpow.pop %v5201
        %v5203 = vmul.f32 %v4392, 1.442695
        %v5204 = vpow.pop %v5203
        %v5205 = vmul.f32 %v4393, 1.442695
        %v5206 = vpow.pop %v5205
        %v5207 = vmul.f32 %v4394, 1.442695
        %v5208 = vpow.pop %v5207
        %v5209 = vmul.f32 %v4395, 1.442695
        %v5210 = vpow.pop %v5209
        %v5211 = vmul.f32 %v4396, 1.442695
        %v5212 = vpow.pop %v5211
        %v5213 = vmul.f32 %v4397, 1.442695
        %v5214 = vpow.pop %v5213
        %v5215 = vmul.f32 %v4398, 1.442695
        %v5216 = vpow.pop %v5215
        %v5217 = vmul.f32 %v4399, 1.442695
        %v5218 = vpow.pop %v5217
        %v5219 = vmul.f32 %v4400, 1.442695
        %v5220 = vpow.pop %v5219
        %v5221 = vmul.f32 %v4401, 1.442695
        %v5222 = vpow.pop %v5221
        %v5223 = vmul.f32 %v4402, 1.442695
        %v5224 = vpow.pop %v5223
        %v5225 = vmul.f32 %v4403, 1.442695
        %v5226 = vpow.pop %v5225
        %v5227 = vmul.f32 %v4404, 1.442695
        %v5228 = vpow.pop %v5227
        %v5229 = vmul.f32 %v4405, 1.442695
        %v5230 = vpow.pop %v5229
        %v5231 = vmul.f32 %v4406, 1.442695
        %v5232 = vpow.pop %v5231
        %v5233 = vmul.f32 %v4407, 1.442695
        %v5234 = vpow.pop %v5233
        %v5235 = vmul.f32 %v4408, 1.442695
        %v5236 = vpow.pop %v5235
        %v5237 = vmul.f32 %v4409, 1.442695
        %v5238 = vpow.pop %v5237
        %v5239 = vmul.f32 %v4410, 1.442695
        %v5240 = vpow.pop %v5239
        %v5241 = vmul.f32 %v4411, 1.442695
        %v5242 = vpow.pop %v5241
        %v5243 = vmul.f32 %v4412, 1.442695
        %v5244 = vpow.pop %v5243
        %v5245 = vmul.f32 %v4413, 1.442695
        %v5246 = vpow.pop %v5245
        %v5247 = vmul.f32 %v4414, 1.442695
        %v5248 = vpow.pop %v5247
        %v5249 = vmul.f32 %v4415, 1.442695
        %v5250 = vpow.pop %v5249
        %v5251 = vmul.f32 %v4416, 1.442695
        %v5252 = vpow.pop %v5251
        %v5253 = vmul.f32 %v4417, 1.442695
        %v5254 = vpow.pop %v5253
        %v5255 = vmul.f32 %v4418, 1.442695
        %v5256 = vpow.pop %v5255
        %v5257 = vmul.f32 %v4419, 1.442695
        %v5258 = vpow.pop %v5257
        %v5259 = vmul.f32 %v4420, 1.442695
        %v5260 = vpow.pop %v5259
        %v5261 = vmul.f32 %v4421, 1.442695
        %v5262 = vpow.pop %v5261
        %v5263 = vmul.f32 %v4422, 1.442695
        %v5264 = vpow.pop %v5263
        %v5265 = vmul.f32 %v4423, 1.442695
        %v5266 = vpow.pop %v5265
        %v5267 = vmul.f32 %v4424, 1.442695
        %v5268 = vpow.pop %v5267
        %v5269 = vmul.f32 %v4425, 1.442695
        %v5270 = vpow.pop %v5269
        %v5271 = vmul.f32 %v4426, 1.442695
        %v5272 = vpow.pop %v5271
        %v5273 = vmul.f32 %v4427, 1.442695
        %v5274 = vpow.pop %v5273
        %v5275 = vmul.f32 %v4428, 1.442695
        %v5276 = vpow.pop %v5275
        %v5277 = vmul.f32 %v4429, 1.442695
        %v5278 = vpow.pop %v5277
        %v5279 = vmul.f32 %v4430, 1.442695
        %v5280 = vpow.pop %v5279
        %v5281 = vmul.f32 %v4431, 1.442695
        %v5282 = vpow.pop %v5281
        %v5283 = vmul.f32 %v4432, 1.442695
        %v5284 = vpow.pop %v5283
        %v5285 = vmul.f32 %v4433, 1.442695
        %v5286 = vpow.pop %v5285
        %v5287 = vmul.f32 %v4434, 1.442695
        %v5288 = vpow.pop %v5287
        %v5289 = vmul.f32 %v4435, 1.442695
        %v5290 = vpow.pop %v5289
        %v5291 = vmul.f32 %v4436, 1.442695
        %v5292 = vpow.pop %v5291
        %v5293 = vmul.f32 %v4437, 1.442695
        %v5294 = vpow.pop %v5293
        %v5295 = vmul.f32 %v4438, 1.442695
        %v5296 = vpow.pop %v5295
        %v5297 = vmul.f32 %v4439, 1.442695
        %v5298 = vpow.pop %v5297
        %v5299 = vmul.f32 %v4440, 1.442695
        %v5300 = vpow.pop %v5299
        %v5301 = vmul.f32 %v4441, 1.442695
        %v5302 = vpow.pop %v5301
        %v5303 = vmul.f32 %v4442, 1.442695
        %v5304 = vpow.pop %v5303
        %v5305 = vmul.f32 %v4443, 1.442695
        %v5306 = vpow.pop %v5305
        %v5307 = vmul.f32 %v4444, 1.442695
        %v5308 = vpow.pop %v5307
        %v5309 = vmul.f32 %v4445, 1.442695
        %v5310 = vpow.pop %v5309
        %v5311 = vmul.f32 %v4446, 1.442695
        %v5312 = vpow.pop %v5311
        %v5313 = vmul.f32 %v4447, 1.442695
        %v5314 = vpow.pop %v5313
        %v5315 = vmul.f32 %v4448, 1.442695
        %v5316 = vpow.pop %v5315
        %v5317 = vmul.f32 %v4449, 1.442695
        %v5318 = vpow.pop %v5317
        %v5319 = vmul.f32 %v4450, 1.442695
        %v5320 = vpow.pop %v5319
        %v5321 = vmul.f32 %v4451, 1.442695
        %v5322 = vpow.pop %v5321
        %v5323 = vmul.f32 %v4452, 1.442695
        %v5324 = vpow.pop %v5323
        %v5325 = vmul.f32 %v4453, 1.442695
        %v5326 = vpow.pop %v5325
        %v5327 = vmul.f32 %v4454, 1.442695
        %v5328 = vpow.pop %v5327
        %v5329 = vmul.f32 %v4455, 1.442695
        %v5330 = vpow.pop %v5329
        %v5331 = vmul.f32 %v4456, 1.442695
        %v5332 = vpow.pop %v5331
        %v5333 = vmul.f32 %v4457, 1.442695
        %v5334 = vpow.pop %v5333
        %v5335 = vmul.f32 %v4458, 1.442695
        %v5336 = vpow.pop %v5335
        %v5337 = vmul.f32 %v4459, 1.442695
        %v5338 = vpow.pop %v5337
        %v5339 = vmul.f32 %v4460, 1.442695
        %v5340 = vpow.pop %v5339
        %v5341 = vmul.f32 %v4461, 1.442695
        %v5342 = vpow.pop %v5341
        %v5343 = vmul.f32 %v4462, 1.442695
        %v5344 = vpow.pop %v5343
        %v5345 = vmul.f32 %v4463, 1.442695
        %v5346 = vpow.pop %v5345
        %v5347 = vmul.f32 %v4464, 1.442695
        %v5348 = vpow.pop %v5347
        %v5349 = vmul.f32 %v4465, 1.442695
        %v5350 = vpow.pop %v5349
        %v5351 = vmul.f32 %v4466, 1.442695
        %v5352 = vpow.pop %v5351
        %v5353 = vmul.f32 %v4467, 1.442695
        %v5354 = vpow.pop %v5353
        %v5355 = vmul.f32 %v4468, 1.442695
        %v5356 = vpow.pop %v5355
        %v5357 = vmul.f32 %v4469, 1.442695
        %v5358 = vpow.pop %v5357
        %v5359 = vmul.f32 %v4470, 1.442695
        %v5360 = vpow.pop %v5359
        %v5361 = vmul.f32 %v4471, 1.442695
        %v5362 = vpow.pop %v5361
        %v5363 = vmul.f32 %v4472, 1.442695
        %v5364 = vpow.pop %v5363
        %v5365 = vmul.f32 %v4473, 1.442695
        %v5366 = vpow.pop %v5365
        %v5367 = vmul.f32 %v4474, 1.442695
        %v5368 = vpow.pop %v5367
        %v5369 = vmul.f32 %v4475, 1.442695
        %v5370 = vpow.pop %v5369
        %v5371 = vmul.f32 %v4476, 1.442695
        %v5372 = vpow.pop %v5371
        %v5373 = vmul.f32 %v4477, 1.442695
        %v5374 = vpow.pop %v5373
        %v5375 = vmul.f32 %v4478, 1.442695
        %v5376 = vpow.pop %v5375
        %v5377 = vmul.f32 %v4479, 1.442695
        %v5378 = vpow.pop %v5377
        %v5379 = vmul.f32 %v4480, 1.442695
        %v5380 = vpow.pop %v5379
        %v5381 = vmul.f32 %v4481, 1.442695
        %v5382 = vpow.pop %v5381
        %v5383 = vmul.f32 %v4482, 1.442695
        %v5384 = vpow.pop %v5383
        %v5385 = vmul.f32 %v4483, 1.442695
        %v5386 = vpow.pop %v5385
        %v5387 = vmul.f32 %v4484, 1.442695
        %v5388 = vpow.pop %v5387
        %v5389 = vmul.f32 %v4485, 1.442695
        %v5390 = vpow.pop %v5389
        %v5391 = vmul.f32 %v4486, 1.442695
        %v5392 = vpow.pop %v5391
        %v5393 = vmul.f32 %v4487, 1.442695
        %v5394 = vpow.pop %v5393
        %v5395 = vmul.f32 %v4488, 1.442695
        %v5396 = vpow.pop %v5395
        %v5397 = vmul.f32 %v4489, 1.442695
        %v5398 = vpow.pop %v5397
        %v5399 = vmul.f32 %v4490, 1.442695
        %v5400 = vpow.pop %v5399
        %v5401 = vmul.f32 %v4491, 1.442695
        %v5402 = vpow.pop %v5401
        %v5403 = vmul.f32 %v4492, 1.442695
        %v5404 = vpow.pop %v5403
        %v5405 = vmul.f32 %v4493, 1.442695
        %v5406 = vpow.pop %v5405
        %v5407 = vmul.f32 %v4494, 1.442695
        %v5408 = vpow.pop %v5407
        %v5409 = vmul.f32 %v4495, 1.442695
        %v5410 = vpow.pop %v5409
        %v5411 = vmul.f32 %v4496, 1.442695
        %v5412 = vpow.pop %v5411
        %v5413 = vmul.f32 %v4497, 1.442695
        %v5414 = vpow.pop %v5413
        %v5415 = vmul.f32 %v4498, 1.442695
        %v5416 = vpow.pop %v5415
        %v5417 = vmul.f32 %v4499, 1.442695
        %v5418 = vpow.pop %v5417
        %v5419 = vmul.f32 %v4500, 1.442695
        %v5420 = vpow.pop %v5419
        %v5421 = vmul.f32 %v4501, 1.442695
        %v5422 = vpow.pop %v5421
        %v5423 = vmul.f32 %v4502, 1.442695
        %v5424 = vpow.pop %v5423
        %v5425 = vmul.f32 %v4503, 1.442695
        %v5426 = vpow.pop %v5425
        %v5427 = vmul.f32 %v4504, 1.442695
        %v5428 = vpow.pop %v5427
        %v5429 = vmul.f32 %v4505, 1.442695
        %v5430 = vpow.pop %v5429
        %v5431 = vmul.f32 %v4506, 1.442695
        %v5432 = vpow.pop %v5431
        %v5433 = vmul.f32 %v4507, 1.442695
        %v5434 = vpow.pop %v5433
        %v5435 = vmul.f32 %v4508, 1.442695
        %v5436 = vpow.pop %v5435
        %v5437 = vmul.f32 %v4509, 1.442695
        %v5438 = vpow.pop %v5437
        %v5439 = vmul.f32 %v4510, 1.442695
        %v5440 = vpow.pop %v5439
        %v5441 = vmul.f32 %v4511, 1.442695
        %v5442 = vpow.pop %v5441
        %v5443 = vmul.f32 %v4512, 1.442695
        %v5444 = vpow.pop %v5443
        %v5445 = vmul.f32 %v4513, 1.442695
        %v5446 = vpow.pop %v5445
        %v5447 = vmul.f32 %v4514, 1.442695
        %v5448 = vpow.pop %v5447
        %v5449 = vmul.f32 %v4515, 1.442695
        %v5450 = vpow.pop %v5449
        %v5451 = vmul.f32 %v4516, 1.442695
        %v5452 = vpow.pop %v5451
        %v5453 = vmul.f32 %v4517, 1.442695
        %v5454 = vpow.pop %v5453
        %v5455 = vmul.f32 %v4518, 1.442695
        %v5456 = vpow.pop %v5455
        %v5457 = vmul.f32 %v4519, 1.442695
        %v5458 = vpow.pop %v5457
        %v5459 = vmul.f32 %v4520, 1.442695
        %v5460 = vpow.pop %v5459
        %v5461 = vmul.f32 %v4521, 1.442695
        %v5462 = vpow.pop %v5461
        %v5463 = vmul.f32 %v4522, 1.442695
        %v5464 = vpow.pop %v5463
        %v5465 = vmul.f32 %v4523, 1.442695
        %v5466 = vpow.pop %v5465
        %v5467 = vmul.f32 %v4524, 1.442695
        %v5468 = vpow.pop %v5467
        %v5469 = vmul.f32 %v4525, 1.442695
        %v5470 = vpow.pop %v5469
        %v5471 = vmul.f32 %v4526, 1.442695
        %v5472 = vpow.pop %v5471
        %v5473 = vmul.f32 %v4527, 1.442695
        %v5474 = vpow.pop %v5473
        %v5475 = vmul.f32 %v4528, 1.442695
        %v5476 = vpow.pop %v5475
        %v5477 = vmul.f32 %v4529, 1.442695
        %v5478 = vpow.pop %v5477
        %v5479 = vmul.f32 %v4530, 1.442695
        %v5480 = vpow.pop %v5479
        %v5481 = vmul.f32 %v4531, 1.442695
        %v5482 = vpow.pop %v5481
        %v5483 = vmul.f32 %v4532, 1.442695
        %v5484 = vpow.pop %v5483
        %v5485 = vmul.f32 %v4533, 1.442695
        %v5486 = vpow.pop %v5485
        %v5487 = vmul.f32 %v4534, 1.442695
        %v5488 = vpow.pop %v5487
        %v5489 = vmul.f32 %v4535, 1.442695
        %v5490 = vpow.pop %v5489
        %v5491 = vmul.f32 %v4536, 1.442695
        %v5492 = vpow.pop %v5491
        %v5493 = vmul.f32 %v4537, 1.442695
        %v5494 = vpow.pop %v5493
        %v5495 = vmul.f32 %v4538, 1.442695
        %v5496 = vpow.pop %v5495
        %v5497 = vmul.f32 %v4539, 1.442695
        %v5498 = vpow.pop %v5497
        %v5499 = vmul.f32 %v4540, 1.442695
        %v5500 = vpow.pop %v5499
        %v5501 = vmul.f32 %v4541, 1.442695
        %v5502 = vpow.pop %v5501
        %v5503 = vmul.f32 %v4542, 1.442695
        %v5504 = vpow.pop %v5503
        %v5505 = vmul.f32 %v4543, 1.442695
        %v5506 = vpow.pop %v5505
        %v5507 = vmul.f32 %v4544, 1.442695
        %v5508 = vpow.pop %v5507
        %v5509 = vmul.f32 %v4545, 1.442695
        %v5510 = vpow.pop %v5509
        %v5511 = vmul.f32 %v4546, 1.442695
        %v5512 = vpow.pop %v5511
        %v5513 = vmul.f32 %v4547, 1.442695
        %v5514 = vpow.pop %v5513
        %v5515 = vmul.f32 %v4548, 1.442695
        %v5516 = vpow.pop %v5515
        %v5517 = vmul.f32 %v4549, 1.442695
        %v5518 = vpow.pop %v5517
        %v5519 = vmul.f32 %v4550, 1.442695
        %v5520 = vpow.pop %v5519
        %v5521 = vmul.f32 %v4551, 1.442695
        %v5522 = vpow.pop %v5521
        %v5523 = vmul.f32 %v4552, 1.442695
        %v5524 = vpow.pop %v5523
        %v5525 = vmul.f32 %v4553, 1.442695
        %v5526 = vpow.pop %v5525
        %v5527 = vmul.f32 %v4554, 1.442695
        %v5528 = vpow.pop %v5527
        %v5529 = vmul.f32 %v4555, 1.442695
        %v5530 = vpow.pop %v5529
        %v5531 = vmul.f32 %v4556, 1.442695
        %v5532 = vpow.pop %v5531
        %v5533 = vmul.f32 %v4557, 1.442695
        %v5534 = vpow.pop %v5533
        %v5535 = vmul.f32 %v4558, 1.442695
        %v5536 = vpow.pop %v5535
        %v5537 = vmul.f32 %v4559, 1.442695
        %v5538 = vpow.pop %v5537
        %v5539 = vmul.f32 %v4560, 1.442695
        %v5540 = vpow.pop %v5539
        %v5541 = vmul.f32 %v4561, 1.442695
        %v5542 = vpow.pop %v5541
        %v5543 = vmul.f32 %v4562, 1.442695
        %v5544 = vpow.pop %v5543
        %v5545 = vmul.f32 %v4563, 1.442695
        %v5546 = vpow.pop %v5545
        %v5547 = vmul.f32 %v4564, 1.442695
        %v5548 = vpow.pop %v5547
        %v5549 = vmul.f32 %v4565, 1.442695
        %v5550 = vpow.pop %v5549
        %v5551 = vmul.f32 %v4566, 1.442695
        %v5552 = vpow.pop %v5551
        %v5553 = vmul.f32 %v4567, 1.442695
        %v5554 = vpow.pop %v5553
        %v5555 = vmul.f32 %v4568, 1.442695
        %v5556 = vpow.pop %v5555
        %v5557 = vmul.f32 %v4569, 1.442695
        %v5558 = vpow.pop %v5557
        %v5559 = vmul.f32 %v4570, 1.442695
        %v5560 = vpow.pop %v5559
        %v5561 = vmul.f32 %v4571, 1.442695
        %v5562 = vpow.pop %v5561
        %v5563 = vmul.f32 %v4572, 1.442695
        %v5564 = vpow.pop %v5563
        %v5565 = vmul.f32 %v4573, 1.442695
        %v5566 = vpow.pop %v5565
        %v5567 = vmul.f32 %v4574, 1.442695
        %v5568 = vpow.pop %v5567
        %v5569 = vmul.f32 %v4575, 1.442695
        %v5570 = vpow.pop %v5569
        %v5571 = vmul.f32 %v4576, 1.442695
        %v5572 = vpow.pop %v5571
        %v5573 = vmul.f32 %v4577, 1.442695
        %v5574 = vpow.pop %v5573
        %v5575 = vmul.f32 %v4578, 1.442695
        %v5576 = vpow.pop %v5575
        %v5577 = vmul.f32 %v4579, 1.442695
        %v5578 = vpow.pop %v5577
        %v5579 = vmul.f32 %v4580, 1.442695
        %v5580 = vpow.pop %v5579
        %v5581 = vmul.f32 %v4581, 1.442695
        %v5582 = vpow.pop %v5581
        %v5583 = vmul.f32 %v4582, 1.442695
        %v5584 = vpow.pop %v5583
        %v5585 = vmul.f32 %v4583, 1.442695
        %v5586 = vpow.pop %v5585
        %v5587 = vmul.f32 %v4584, 1.442695
        %v5588 = vpow.pop %v5587
        %v5589 = vmul.f32 %v4585, 1.442695
        %v5590 = vpow.pop %v5589
        %v5591 = vmul.f32 %v4586, 1.442695
        %v5592 = vpow.pop %v5591
        %v5593 = vmul.f32 %v4587, 1.442695
        %v5594 = vpow.pop %v5593
        %v5595 = vmul.f32 %v4588, 1.442695
        %v5596 = vpow.pop %v5595
        %v5597 = vmul.f32 %v4589, 1.442695
        %v5598 = vpow.pop %v5597
        %v5599 = vmul.f32 %v4590, 1.442695
        %v5600 = vpow.pop %v5599
        %v5601 = vmul.f32 %v4591, 1.442695
        %v5602 = vpow.pop %v5601
        %v5603 = vmul.f32 %v4592, 1.442695
        %v5604 = vpow.pop %v5603
        %v5605 = vmul.f32 %v4593, 1.442695
        %v5606 = vpow.pop %v5605
        %v5607 = vmul.f32 %v4594, 1.442695
        %v5608 = vpow.pop %v5607
        %v5609 = vmul.f32 %v4595, 1.442695
        %v5610 = vpow.pop %v5609
        %v5611 = vmul.f32 %v4596, 1.442695
        %v5612 = vpow.pop %v5611
        %v5613 = vmul.f32 %v4597, 1.442695
        %v5614 = vpow.pop %v5613
        %v5615 = vmul.f32 %v4598, 1.442695
        %v5616 = vpow.pop %v5615
        %v5617 = vmul.f32 %v4599, 1.442695
        %v5618 = vpow.pop %v5617
        %v5619 = vmul.f32 %v4600, 1.442695
        %v5620 = vpow.pop %v5619
        %v5621 = vmul.f32 %v4601, 1.442695
        %v5622 = vpow.pop %v5621
        %v5623 = vmul.f32 %v4602, 1.442695
        %v5624 = vpow.pop %v5623
        %v5625 = vmul.f32 %v4603, 1.442695
        %v5626 = vpow.pop %v5625
        %v5627 = vmul.f32 %v4604, 1.442695
        %v5628 = vpow.pop %v5627
        %v5629 = vpack.c.bf16 %v4608, %v4606
        %v5630 = vpack.c.bf16 %v4612, %v4610
        %v5631 = vpack.c.bf16 %v4616, %v4614
        %v5632 = vpack.c.bf16 %v4620, %v4618
        %v5633 = vpack.c.bf16 %v4624, %v4622
        %v5634 = vpack.c.bf16 %v4628, %v4626
        %v5635 = vpack.c.bf16 %v4632, %v4630
        %v5636 = vpack.c.bf16 %v4636, %v4634
        %v5637 = vpack.c.bf16 %v4640, %v4638
        %v5638 = vpack.c.bf16 %v4644, %v4642
        %v5639 = vpack.c.bf16 %v4648, %v4646
        %v5640 = vpack.c.bf16 %v4652, %v4650
        %v5641 = vpack.c.bf16 %v4656, %v4654
        %v5642 = vpack.c.bf16 %v4660, %v4658
        %v5643 = vpack.c.bf16 %v4664, %v4662
        %v5644 = vpack.c.bf16 %v4668, %v4666
        %v5645 = vpack.c.bf16 %v4672, %v4670
        %v5646 = vpack.c.bf16 %v4676, %v4674
        %v5647 = vpack.c.bf16 %v4680, %v4678
        %v5648 = vpack.c.bf16 %v4684, %v4682
        %v5649 = vpack.c.bf16 %v4688, %v4686
        %v5650 = vpack.c.bf16 %v4692, %v4690
        %v5651 = vpack.c.bf16 %v4696, %v4694
        %v5652 = vpack.c.bf16 %v4700, %v4698
        %v5653 = vpack.c.bf16 %v4704, %v4702
        %v5654 = vpack.c.bf16 %v4708, %v4706
        %v5655 = vpack.c.bf16 %v4712, %v4710
        %v5656 = vpack.c.bf16 %v4716, %v4714
        %v5657 = vpack.c.bf16 %v4720, %v4718
        %v5658 = vpack.c.bf16 %v4724, %v4722
        %v5659 = vpack.c.bf16 %v4728, %v4726
        %v5660 = vpack.c.bf16 %v4732, %v4730
        %v5661 = vpack.c.bf16 %v4736, %v4734
        %v5662 = vpack.c.bf16 %v4740, %v4738
        %v5663 = vpack.c.bf16 %v4744, %v4742
        %v5664 = vpack.c.bf16 %v4748, %v4746
        %v5665 = vpack.c.bf16 %v4752, %v4750
        %v5666 = vpack.c.bf16 %v4756, %v4754
        %v5667 = vpack.c.bf16 %v4760, %v4758
        %v5668 = vpack.c.bf16 %v4764, %v4762
        %v5669 = vpack.c.bf16 %v4768, %v4766
        %v5670 = vpack.c.bf16 %v4772, %v4770
        %v5671 = vpack.c.bf16 %v4776, %v4774
        %v5672 = vpack.c.bf16 %v4780, %v4778
        %v5673 = vpack.c.bf16 %v4784, %v4782
        %v5674 = vpack.c.bf16 %v4788, %v4786
        %v5675 = vpack.c.bf16 %v4792, %v4790
        %v5676 = vpack.c.bf16 %v4796, %v4794
        %v5677 = vpack.c.bf16 %v4800, %v4798
        %v5678 = vpack.c.bf16 %v4804, %v4802
        %v5679 = vpack.c.bf16 %v4808, %v4806
        %v5680 = vpack.c.bf16 %v4812, %v4810
        %v5681 = vpack.c.bf16 %v4816, %v4814
        %v5682 = vpack.c.bf16 %v4820, %v4818
        %v5683 = vpack.c.bf16 %v4824, %v4822
        %v5684 = vpack.c.bf16 %v4828, %v4826
        %v5685 = vpack.c.bf16 %v4832, %v4830
        %v5686 = vpack.c.bf16 %v4836, %v4834
        %v5687 = vpack.c.bf16 %v4840, %v4838
        %v5688 = vpack.c.bf16 %v4844, %v4842
        %v5689 = vpack.c.bf16 %v4848, %v4846
        %v5690 = vpack.c.bf16 %v4852, %v4850
        %v5691 = vpack.c.bf16 %v4856, %v4854
        %v5692 = vpack.c.bf16 %v4860, %v4858
        %v5693 = vpack.c.bf16 %v4864, %v4862
        %v5694 = vpack.c.bf16 %v4868, %v4866
        %v5695 = vpack.c.bf16 %v4872, %v4870
        %v5696 = vpack.c.bf16 %v4876, %v4874
        %v5697 = vpack.c.bf16 %v4880, %v4878
        %v5698 = vpack.c.bf16 %v4884, %v4882
        %v5699 = vpack.c.bf16 %v4888, %v4886
        %v5700 = vpack.c.bf16 %v4892, %v4890
        %v5701 = vpack.c.bf16 %v4896, %v4894
        %v5702 = vpack.c.bf16 %v4900, %v4898
        %v5703 = vpack.c.bf16 %v4904, %v4902
        %v5704 = vpack.c.bf16 %v4908, %v4906
        %v5705 = vpack.c.bf16 %v4912, %v4910
        %v5706 = vpack.c.bf16 %v4916, %v4914
        %v5707 = vpack.c.bf16 %v4920, %v4918
        %v5708 = vpack.c.bf16 %v4924, %v4922
        %v5709 = vpack.c.bf16 %v4928, %v4926
        %v5710 = vpack.c.bf16 %v4932, %v4930
        %v5711 = vpack.c.bf16 %v4936, %v4934
        %v5712 = vpack.c.bf16 %v4940, %v4938
        %v5713 = vpack.c.bf16 %v4944, %v4942
        %v5714 = vpack.c.bf16 %v4948, %v4946
        %v5715 = vpack.c.bf16 %v4952, %v4950
        %v5716 = vpack.c.bf16 %v4956, %v4954
        %v5717 = vpack.c.bf16 %v4960, %v4958
        %v5718 = vpack.c.bf16 %v4964, %v4962
        %v5719 = vpack.c.bf16 %v4968, %v4966
        %v5720 = vpack.c.bf16 %v4972, %v4970
        %v5721 = vpack.c.bf16 %v4976, %v4974
        %v5722 = vpack.c.bf16 %v4980, %v4978
        %v5723 = vpack.c.bf16 %v4984, %v4982
        %v5724 = vpack.c.bf16 %v4988, %v4986
        %v5725 = vpack.c.bf16 %v4992, %v4990
        %v5726 = vpack.c.bf16 %v4996, %v4994
        %v5727 = vpack.c.bf16 %v5000, %v4998
        %v5728 = vpack.c.bf16 %v5004, %v5002
        %v5729 = vpack.c.bf16 %v5008, %v5006
        %v5730 = vpack.c.bf16 %v5012, %v5010
        %v5731 = vpack.c.bf16 %v5016, %v5014
        %v5732 = vpack.c.bf16 %v5020, %v5018
        %v5733 = vpack.c.bf16 %v5024, %v5022
        %v5734 = vpack.c.bf16 %v5028, %v5026
        %v5735 = vpack.c.bf16 %v5032, %v5030
        %v5736 = vpack.c.bf16 %v5036, %v5034
        %v5737 = vpack.c.bf16 %v5040, %v5038
        %v5738 = vpack.c.bf16 %v5044, %v5042
        %v5739 = vpack.c.bf16 %v5048, %v5046
        %v5740 = vpack.c.bf16 %v5052, %v5050
        %v5741 = vpack.c.bf16 %v5056, %v5054
        %v5742 = vpack.c.bf16 %v5060, %v5058
        %v5743 = vpack.c.bf16 %v5064, %v5062
        %v5744 = vpack.c.bf16 %v5068, %v5066
        %v5745 = vpack.c.bf16 %v5072, %v5070
        %v5746 = vpack.c.bf16 %v5076, %v5074
        %v5747 = vpack.c.bf16 %v5080, %v5078
        %v5748 = vpack.c.bf16 %v5084, %v5082
        %v5749 = vpack.c.bf16 %v5088, %v5086
        %v5750 = vpack.c.bf16 %v5092, %v5090
        %v5751 = vpack.c.bf16 %v5096, %v5094
        %v5752 = vpack.c.bf16 %v5100, %v5098
        %v5753 = vpack.c.bf16 %v5104, %v5102
        %v5754 = vpack.c.bf16 %v5108, %v5106
        %v5755 = vpack.c.bf16 %v5112, %v5110
        %v5756 = vpack.c.bf16 %v5116, %v5114
        %v5757 = vpack.c.bf16 %v5120, %v5118
        %v5758 = vpack.c.bf16 %v5124, %v5122
        %v5759 = vpack.c.bf16 %v5128, %v5126
        %v5760 = vpack.c.bf16 %v5132, %v5130
        %v5761 = vpack.c.bf16 %v5136, %v5134
        %v5762 = vpack.c.bf16 %v5140, %v5138
        %v5763 = vpack.c.bf16 %v5144, %v5142
        %v5764 = vpack.c.bf16 %v5148, %v5146
        %v5765 = vpack.c.bf16 %v5152, %v5150
        %v5766 = vpack.c.bf16 %v5156, %v5154
        %v5767 = vpack.c.bf16 %v5160, %v5158
        %v5768 = vpack.c.bf16 %v5164, %v5162
        %v5769 = vpack.c.bf16 %v5168, %v5166
        %v5770 = vpack.c.bf16 %v5172, %v5170
        %v5771 = vpack.c.bf16 %v5176, %v5174
        %v5772 = vpack.c.bf16 %v5180, %v5178
        %v5773 = vpack.c.bf16 %v5184, %v5182
        %v5774 = vpack.c.bf16 %v5188, %v5186
        %v5775 = vpack.c.bf16 %v5192, %v5190
        %v5776 = vpack.c.bf16 %v5196, %v5194
        %v5777 = vpack.c.bf16 %v5200, %v5198
        %v5778 = vpack.c.bf16 %v5204, %v5202
        %v5779 = vpack.c.bf16 %v5208, %v5206
        %v5780 = vpack.c.bf16 %v5212, %v5210
        %v5781 = vpack.c.bf16 %v5216, %v5214
        %v5782 = vpack.c.bf16 %v5220, %v5218
        %v5783 = vpack.c.bf16 %v5224, %v5222
        %v5784 = vpack.c.bf16 %v5228, %v5226
        %v5785 = vpack.c.bf16 %v5232, %v5230
        %v5786 = vpack.c.bf16 %v5236, %v5234
        %v5787 = vpack.c.bf16 %v5240, %v5238
        %v5788 = vpack.c.bf16 %v5244, %v5242
        %v5789 = vpack.c.bf16 %v5248, %v5246
        %v5790 = vpack.c.bf16 %v5252, %v5250
        %v5791 = vpack.c.bf16 %v5256, %v5254
        %v5792 = vpack.c.bf16 %v5260, %v5258
        %v5793 = vpack.c.bf16 %v5264, %v5262
        %v5794 = vpack.c.bf16 %v5268, %v5266
        %v5795 = vpack.c.bf16 %v5272, %v5270
        %v5796 = vpack.c.bf16 %v5276, %v5274
        %v5797 = vpack.c.bf16 %v5280, %v5278
        %v5798 = vpack.c.bf16 %v5284, %v5282
        %v5799 = vpack.c.bf16 %v5288, %v5286
        %v5800 = vpack.c.bf16 %v5292, %v5290
        %v5801 = vpack.c.bf16 %v5296, %v5294
        %v5802 = vpack.c.bf16 %v5300, %v5298
        %v5803 = vpack.c.bf16 %v5304, %v5302
        %v5804 = vpack.c.bf16 %v5308, %v5306
        %v5805 = vpack.c.bf16 %v5312, %v5310
        %v5806 = vpack.c.bf16 %v5316, %v5314
        %v5807 = vpack.c.bf16 %v5320, %v5318
        %v5808 = vpack.c.bf16 %v5324, %v5322
        %v5809 = vpack.c.bf16 %v5328, %v5326
        %v5810 = vpack.c.bf16 %v5332, %v5330
        %v5811 = vpack.c.bf16 %v5336, %v5334
        %v5812 = vpack.c.bf16 %v5340, %v5338
        %v5813 = vpack.c.bf16 %v5344, %v5342
        %v5814 = vpack.c.bf16 %v5348, %v5346
        %v5815 = vpack.c.bf16 %v5352, %v5350
        %v5816 = vpack.c.bf16 %v5356, %v5354
        %v5817 = vpack.c.bf16 %v5360, %v5358
        %v5818 = vpack.c.bf16 %v5364, %v5362
        %v5819 = vpack.c.bf16 %v5368, %v5366
        %v5820 = vpack.c.bf16 %v5372, %v5370
        %v5821 = vpack.c.bf16 %v5376, %v5374
        %v5822 = vpack.c.bf16 %v5380, %v5378
        %v5823 = vpack.c.bf16 %v5384, %v5382
        %v5824 = vpack.c.bf16 %v5388, %v5386
        %v5825 = vpack.c.bf16 %v5392, %v5390
        %v5826 = vpack.c.bf16 %v5396, %v5394
        %v5827 = vpack.c.bf16 %v5400, %v5398
        %v5828 = vpack.c.bf16 %v5404, %v5402
        %v5829 = vpack.c.bf16 %v5408, %v5406
        %v5830 = vpack.c.bf16 %v5412, %v5410
        %v5831 = vpack.c.bf16 %v5416, %v5414
        %v5832 = vpack.c.bf16 %v5420, %v5418
        %v5833 = vpack.c.bf16 %v5424, %v5422
        %v5834 = vpack.c.bf16 %v5428, %v5426
        %v5835 = vpack.c.bf16 %v5432, %v5430
        %v5836 = vpack.c.bf16 %v5436, %v5434
        %v5837 = vpack.c.bf16 %v5440, %v5438
        %v5838 = vpack.c.bf16 %v5444, %v5442
        %v5839 = vpack.c.bf16 %v5448, %v5446
        %v5840 = vpack.c.bf16 %v5452, %v5450
        %v5841 = vpack.c.bf16 %v5456, %v5454
        %v5842 = vpack.c.bf16 %v5460, %v5458
        %v5843 = vpack.c.bf16 %v5464, %v5462
        %v5844 = vpack.c.bf16 %v5468, %v5466
        %v5845 = vpack.c.bf16 %v5472, %v5470
        %v5846 = vpack.c.bf16 %v5476, %v5474
        %v5847 = vpack.c.bf16 %v5480, %v5478
        %v5848 = vpack.c.bf16 %v5484, %v5482
        %v5849 = vpack.c.bf16 %v5488, %v5486
        %v5850 = vpack.c.bf16 %v5492, %v5490
        %v5851 = vpack.c.bf16 %v5496, %v5494
        %v5852 = vpack.c.bf16 %v5500, %v5498
        %v5853 = vpack.c.bf16 %v5504, %v5502
        %v5854 = vpack.c.bf16 %v5508, %v5506
        %v5855 = vpack.c.bf16 %v5512, %v5510
        %v5856 = vpack.c.bf16 %v5516, %v5514
        %v5857 = vpack.c.bf16 %v5520, %v5518
        %v5858 = vpack.c.bf16 %v5524, %v5522
        %v5859 = vpack.c.bf16 %v5528, %v5526
        %v5860 = vpack.c.bf16 %v5532, %v5530
        %v5861 = vpack.c.bf16 %v5536, %v5534
        %v5862 = vpack.c.bf16 %v5540, %v5538
        %v5863 = vpack.c.bf16 %v5544, %v5542
        %v5864 = vpack.c.bf16 %v5548, %v5546
        %v5865 = vpack.c.bf16 %v5552, %v5550
        %v5866 = vpack.c.bf16 %v5556, %v5554
        %v5867 = vpack.c.bf16 %v5560, %v5558
        %v5868 = vpack.c.bf16 %v5564, %v5562
        %v5869 = vpack.c.bf16 %v5568, %v5566
        %v5870 = vpack.c.bf16 %v5572, %v5570
        %v5871 = vpack.c.bf16 %v5576, %v5574
        %v5872 = vpack.c.bf16 %v5580, %v5578
        %v5873 = vpack.c.bf16 %v5584, %v5582
        %v5874 = vpack.c.bf16 %v5588, %v5586
        %v5875 = vpack.c.bf16 %v5592, %v5590
        %v5876 = vpack.c.bf16 %v5596, %v5594
        %v5877 = vpack.c.bf16 %v5600, %v5598
        %v5878 = vpack.c.bf16 %v5604, %v5602
        %v5879 = vpack.c.bf16 %v5608, %v5606
        %v5880 = vpack.c.bf16 %v5612, %v5610
        %v5881 = vpack.c.bf16 %v5616, %v5614
        %v5882 = vpack.c.bf16 %v5620, %v5618
        %v5883 = vpack.c.bf16 %v5624, %v5622
        %v5884 = vpack.c.bf16 %v5628, %v5626
        %v5885 = vld [vmem:[#allocation3] sm:$0xf]
        %v5886 = vld [vmem:[#allocation3 + $0x4] sm:$0xf]
        %v5887 = vld [vmem:[#allocation3 + $0x8] sm:$0xf]
        %v5888 = vld [vmem:[#allocation3 + $0xc] sm:$0xf]
        %v5889 = vmul.f32 %v3282, %v5885
        %v5890 = vmul.f32 %v3284, %v5886
        %v5891 = vmul.f32 %v3286, %v5887
        %v5892 = vmul.f32 %v3288, %v5888
        %v5893 = vunpack.c.l.bf16 %v5629
        %v5894 = vunpack.c.h.bf16 %v5629
        %v5895 = vunpack.c.l.bf16 %v5630
        %v5896 = vunpack.c.h.bf16 %v5630
        %v5897 = vunpack.c.l.bf16 %v5631
        %v5898 = vunpack.c.h.bf16 %v5631
        %v5899 = vunpack.c.l.bf16 %v5632
        %v5900 = vunpack.c.h.bf16 %v5632
        %v5901 = vunpack.c.l.bf16 %v5633
        %v5902 = vunpack.c.h.bf16 %v5633
        %v5903 = vunpack.c.l.bf16 %v5634
        %v5904 = vunpack.c.h.bf16 %v5634
        %v5905 = vunpack.c.l.bf16 %v5635
        %v5906 = vunpack.c.h.bf16 %v5635
        %v5907 = vunpack.c.l.bf16 %v5636
        %v5908 = vunpack.c.h.bf16 %v5636
        %v5909 = vunpack.c.l.bf16 %v5637
        %v5910 = vunpack.c.h.bf16 %v5637
        %v5911 = vunpack.c.l.bf16 %v5638
        %v5912 = vunpack.c.h.bf16 %v5638
        %v5913 = vunpack.c.l.bf16 %v5639
        %v5914 = vunpack.c.h.bf16 %v5639
        %v5915 = vunpack.c.l.bf16 %v5640
        %v5916 = vunpack.c.h.bf16 %v5640
        %v5917 = vunpack.c.l.bf16 %v5641
        %v5918 = vunpack.c.h.bf16 %v5641
        %v5919 = vunpack.c.l.bf16 %v5642
        %v5920 = vunpack.c.h.bf16 %v5642
        %v5921 = vunpack.c.l.bf16 %v5643
        %v5922 = vunpack.c.h.bf16 %v5643
        %v5923 = vunpack.c.l.bf16 %v5644
        %v5924 = vunpack.c.h.bf16 %v5644
        %v5925 = vunpack.c.l.bf16 %v5645
        %v5926 = vunpack.c.h.bf16 %v5645
        %v5927 = vunpack.c.l.bf16 %v5646
        %v5928 = vunpack.c.h.bf16 %v5646
        %v5929 = vunpack.c.l.bf16 %v5647
        %v5930 = vunpack.c.h.bf16 %v5647
        %v5931 = vunpack.c.l.bf16 %v5648
        %v5932 = vunpack.c.h.bf16 %v5648
        %v5933 = vunpack.c.l.bf16 %v5649
        %v5934 = vunpack.c.h.bf16 %v5649
        %v5935 = vunpack.c.l.bf16 %v5650
        %v5936 = vunpack.c.h.bf16 %v5650
        %v5937 = vunpack.c.l.bf16 %v5651
        %v5938 = vunpack.c.h.bf16 %v5651
        %v5939 = vunpack.c.l.bf16 %v5652
        %v5940 = vunpack.c.h.bf16 %v5652
        %v5941 = vunpack.c.l.bf16 %v5653
        %v5942 = vunpack.c.h.bf16 %v5653
        %v5943 = vunpack.c.l.bf16 %v5654
        %v5944 = vunpack.c.h.bf16 %v5654
        %v5945 = vunpack.c.l.bf16 %v5655
        %v5946 = vunpack.c.h.bf16 %v5655
        %v5947 = vunpack.c.l.bf16 %v5656
        %v5948 = vunpack.c.h.bf16 %v5656
        %v5949 = vunpack.c.l.bf16 %v5657
        %v5950 = vunpack.c.h.bf16 %v5657
        %v5951 = vunpack.c.l.bf16 %v5658
        %v5952 = vunpack.c.h.bf16 %v5658
        %v5953 = vunpack.c.l.bf16 %v5659
        %v5954 = vunpack.c.h.bf16 %v5659
        %v5955 = vunpack.c.l.bf16 %v5660
        %v5956 = vunpack.c.h.bf16 %v5660
        %v5957 = vunpack.c.l.bf16 %v5661
        %v5958 = vunpack.c.h.bf16 %v5661
        %v5959 = vunpack.c.l.bf16 %v5662
        %v5960 = vunpack.c.h.bf16 %v5662
        %v5961 = vunpack.c.l.bf16 %v5663
        %v5962 = vunpack.c.h.bf16 %v5663
        %v5963 = vunpack.c.l.bf16 %v5664
        %v5964 = vunpack.c.h.bf16 %v5664
        %v5965 = vunpack.c.l.bf16 %v5665
        %v5966 = vunpack.c.h.bf16 %v5665
        %v5967 = vunpack.c.l.bf16 %v5666
        %v5968 = vunpack.c.h.bf16 %v5666
        %v5969 = vunpack.c.l.bf16 %v5667
        %v5970 = vunpack.c.h.bf16 %v5667
        %v5971 = vunpack.c.l.bf16 %v5668
        %v5972 = vunpack.c.h.bf16 %v5668
        %v5973 = vunpack.c.l.bf16 %v5669
        %v5974 = vunpack.c.h.bf16 %v5669
        %v5975 = vunpack.c.l.bf16 %v5670
        %v5976 = vunpack.c.h.bf16 %v5670
        %v5977 = vunpack.c.l.bf16 %v5671
        %v5978 = vunpack.c.h.bf16 %v5671
        %v5979 = vunpack.c.l.bf16 %v5672
        %v5980 = vunpack.c.h.bf16 %v5672
        %v5981 = vunpack.c.l.bf16 %v5673
        %v5982 = vunpack.c.h.bf16 %v5673
        %v5983 = vunpack.c.l.bf16 %v5674
        %v5984 = vunpack.c.h.bf16 %v5674
        %v5985 = vunpack.c.l.bf16 %v5675
        %v5986 = vunpack.c.h.bf16 %v5675
        %v5987 = vunpack.c.l.bf16 %v5676
        %v5988 = vunpack.c.h.bf16 %v5676
        %v5989 = vunpack.c.l.bf16 %v5677
        %v5990 = vunpack.c.h.bf16 %v5677
        %v5991 = vunpack.c.l.bf16 %v5678
        %v5992 = vunpack.c.h.bf16 %v5678
        %v5993 = vunpack.c.l.bf16 %v5679
        %v5994 = vunpack.c.h.bf16 %v5679
        %v5995 = vunpack.c.l.bf16 %v5680
        %v5996 = vunpack.c.h.bf16 %v5680
        %v5997 = vunpack.c.l.bf16 %v5681
        %v5998 = vunpack.c.h.bf16 %v5681
        %v5999 = vunpack.c.l.bf16 %v5682
        %v6000 = vunpack.c.h.bf16 %v5682
        %v6001 = vunpack.c.l.bf16 %v5683
        %v6002 = vunpack.c.h.bf16 %v5683
        %v6003 = vunpack.c.l.bf16 %v5684
        %v6004 = vunpack.c.h.bf16 %v5684
        %v6005 = vunpack.c.l.bf16 %v5685
        %v6006 = vunpack.c.h.bf16 %v5685
        %v6007 = vunpack.c.l.bf16 %v5686
        %v6008 = vunpack.c.h.bf16 %v5686
        %v6009 = vunpack.c.l.bf16 %v5687
        %v6010 = vunpack.c.h.bf16 %v5687
        %v6011 = vunpack.c.l.bf16 %v5688
        %v6012 = vunpack.c.h.bf16 %v5688
        %v6013 = vunpack.c.l.bf16 %v5689
        %v6014 = vunpack.c.h.bf16 %v5689
        %v6015 = vunpack.c.l.bf16 %v5690
        %v6016 = vunpack.c.h.bf16 %v5690
        %v6017 = vunpack.c.l.bf16 %v5691
        %v6018 = vunpack.c.h.bf16 %v5691
        %v6019 = vunpack.c.l.bf16 %v5692
        %v6020 = vunpack.c.h.bf16 %v5692
        %v6021 = vunpack.c.l.bf16 %v5693
        %v6022 = vunpack.c.h.bf16 %v5693
        %v6023 = vunpack.c.l.bf16 %v5694
        %v6024 = vunpack.c.h.bf16 %v5694
        %v6025 = vunpack.c.l.bf16 %v5695
        %v6026 = vunpack.c.h.bf16 %v5695
        %v6027 = vunpack.c.l.bf16 %v5696
        %v6028 = vunpack.c.h.bf16 %v5696
        %v6029 = vunpack.c.l.bf16 %v5697
        %v6030 = vunpack.c.h.bf16 %v5697
        %v6031 = vunpack.c.l.bf16 %v5698
        %v6032 = vunpack.c.h.bf16 %v5698
        %v6033 = vunpack.c.l.bf16 %v5699
        %v6034 = vunpack.c.h.bf16 %v5699
        %v6035 = vunpack.c.l.bf16 %v5700
        %v6036 = vunpack.c.h.bf16 %v5700
        %v6037 = vunpack.c.l.bf16 %v5701
        %v6038 = vunpack.c.h.bf16 %v5701
        %v6039 = vunpack.c.l.bf16 %v5702
        %v6040 = vunpack.c.h.bf16 %v5702
        %v6041 = vunpack.c.l.bf16 %v5703
        %v6042 = vunpack.c.h.bf16 %v5703
        %v6043 = vunpack.c.l.bf16 %v5704
        %v6044 = vunpack.c.h.bf16 %v5704
        %v6045 = vunpack.c.l.bf16 %v5705
        %v6046 = vunpack.c.h.bf16 %v5705
        %v6047 = vunpack.c.l.bf16 %v5706
        %v6048 = vunpack.c.h.bf16 %v5706
        %v6049 = vunpack.c.l.bf16 %v5707
        %v6050 = vunpack.c.h.bf16 %v5707
        %v6051 = vunpack.c.l.bf16 %v5708
        %v6052 = vunpack.c.h.bf16 %v5708
        %v6053 = vunpack.c.l.bf16 %v5709
        %v6054 = vunpack.c.h.bf16 %v5709
        %v6055 = vunpack.c.l.bf16 %v5710
        %v6056 = vunpack.c.h.bf16 %v5710
        %v6057 = vunpack.c.l.bf16 %v5711
        %v6058 = vunpack.c.h.bf16 %v5711
        %v6059 = vunpack.c.l.bf16 %v5712
        %v6060 = vunpack.c.h.bf16 %v5712
        %v6061 = vunpack.c.l.bf16 %v5713
        %v6062 = vunpack.c.h.bf16 %v5713
        %v6063 = vunpack.c.l.bf16 %v5714
        %v6064 = vunpack.c.h.bf16 %v5714
        %v6065 = vunpack.c.l.bf16 %v5715
        %v6066 = vunpack.c.h.bf16 %v5715
        %v6067 = vunpack.c.l.bf16 %v5716
        %v6068 = vunpack.c.h.bf16 %v5716
        %v6069 = vunpack.c.l.bf16 %v5717
        %v6070 = vunpack.c.h.bf16 %v5717
        %v6071 = vunpack.c.l.bf16 %v5718
        %v6072 = vunpack.c.h.bf16 %v5718
        %v6073 = vunpack.c.l.bf16 %v5719
        %v6074 = vunpack.c.h.bf16 %v5719
        %v6075 = vunpack.c.l.bf16 %v5720
        %v6076 = vunpack.c.h.bf16 %v5720
        %v6077 = vunpack.c.l.bf16 %v5721
        %v6078 = vunpack.c.h.bf16 %v5721
        %v6079 = vunpack.c.l.bf16 %v5722
        %v6080 = vunpack.c.h.bf16 %v5722
        %v6081 = vunpack.c.l.bf16 %v5723
        %v6082 = vunpack.c.h.bf16 %v5723
        %v6083 = vunpack.c.l.bf16 %v5724
        %v6084 = vunpack.c.h.bf16 %v5724
        %v6085 = vunpack.c.l.bf16 %v5725
        %v6086 = vunpack.c.h.bf16 %v5725
        %v6087 = vunpack.c.l.bf16 %v5726
        %v6088 = vunpack.c.h.bf16 %v5726
        %v6089 = vunpack.c.l.bf16 %v5727
        %v6090 = vunpack.c.h.bf16 %v5727
        %v6091 = vunpack.c.l.bf16 %v5728
        %v6092 = vunpack.c.h.bf16 %v5728
        %v6093 = vunpack.c.l.bf16 %v5729
        %v6094 = vunpack.c.h.bf16 %v5729
        %v6095 = vunpack.c.l.bf16 %v5730
        %v6096 = vunpack.c.h.bf16 %v5730
        %v6097 = vunpack.c.l.bf16 %v5731
        %v6098 = vunpack.c.h.bf16 %v5731
        %v6099 = vunpack.c.l.bf16 %v5732
        %v6100 = vunpack.c.h.bf16 %v5732
        %v6101 = vunpack.c.l.bf16 %v5733
        %v6102 = vunpack.c.h.bf16 %v5733
        %v6103 = vunpack.c.l.bf16 %v5734
        %v6104 = vunpack.c.h.bf16 %v5734
        %v6105 = vunpack.c.l.bf16 %v5735
        %v6106 = vunpack.c.h.bf16 %v5735
        %v6107 = vunpack.c.l.bf16 %v5736
        %v6108 = vunpack.c.h.bf16 %v5736
        %v6109 = vunpack.c.l.bf16 %v5737
        %v6110 = vunpack.c.h.bf16 %v5737
        %v6111 = vunpack.c.l.bf16 %v5738
        %v6112 = vunpack.c.h.bf16 %v5738
        %v6113 = vunpack.c.l.bf16 %v5739
        %v6114 = vunpack.c.h.bf16 %v5739
        %v6115 = vunpack.c.l.bf16 %v5740
        %v6116 = vunpack.c.h.bf16 %v5740
        %v6117 = vunpack.c.l.bf16 %v5741
        %v6118 = vunpack.c.h.bf16 %v5741
        %v6119 = vunpack.c.l.bf16 %v5742
        %v6120 = vunpack.c.h.bf16 %v5742
        %v6121 = vunpack.c.l.bf16 %v5743
        %v6122 = vunpack.c.h.bf16 %v5743
        %v6123 = vunpack.c.l.bf16 %v5744
        %v6124 = vunpack.c.h.bf16 %v5744
        %v6125 = vunpack.c.l.bf16 %v5745
        %v6126 = vunpack.c.h.bf16 %v5745
        %v6127 = vunpack.c.l.bf16 %v5746
        %v6128 = vunpack.c.h.bf16 %v5746
        %v6129 = vunpack.c.l.bf16 %v5747
        %v6130 = vunpack.c.h.bf16 %v5747
        %v6131 = vunpack.c.l.bf16 %v5748
        %v6132 = vunpack.c.h.bf16 %v5748
        %v6133 = vunpack.c.l.bf16 %v5749
        %v6134 = vunpack.c.h.bf16 %v5749
        %v6135 = vunpack.c.l.bf16 %v5750
        %v6136 = vunpack.c.h.bf16 %v5750
        %v6137 = vunpack.c.l.bf16 %v5751
        %v6138 = vunpack.c.h.bf16 %v5751
        %v6139 = vunpack.c.l.bf16 %v5752
        %v6140 = vunpack.c.h.bf16 %v5752
        %v6141 = vunpack.c.l.bf16 %v5753
        %v6142 = vunpack.c.h.bf16 %v5753
        %v6143 = vunpack.c.l.bf16 %v5754
        %v6144 = vunpack.c.h.bf16 %v5754
        %v6145 = vunpack.c.l.bf16 %v5755
        %v6146 = vunpack.c.h.bf16 %v5755
        %v6147 = vunpack.c.l.bf16 %v5756
        %v6148 = vunpack.c.h.bf16 %v5756
        %v6149 = vunpack.c.l.bf16 %v5757
        %v6150 = vunpack.c.h.bf16 %v5757
        %v6151 = vunpack.c.l.bf16 %v5758
        %v6152 = vunpack.c.h.bf16 %v5758
        %v6153 = vunpack.c.l.bf16 %v5759
        %v6154 = vunpack.c.h.bf16 %v5759
        %v6155 = vunpack.c.l.bf16 %v5760
        %v6156 = vunpack.c.h.bf16 %v5760
        %v6157 = vunpack.c.l.bf16 %v5761
        %v6158 = vunpack.c.h.bf16 %v5761
        %v6159 = vunpack.c.l.bf16 %v5762
        %v6160 = vunpack.c.h.bf16 %v5762
        %v6161 = vunpack.c.l.bf16 %v5763
        %v6162 = vunpack.c.h.bf16 %v5763
        %v6163 = vunpack.c.l.bf16 %v5764
        %v6164 = vunpack.c.h.bf16 %v5764
        %v6165 = vunpack.c.l.bf16 %v5765
        %v6166 = vunpack.c.h.bf16 %v5765
        %v6167 = vunpack.c.l.bf16 %v5766
        %v6168 = vunpack.c.h.bf16 %v5766
        %v6169 = vunpack.c.l.bf16 %v5767
        %v6170 = vunpack.c.h.bf16 %v5767
        %v6171 = vunpack.c.l.bf16 %v5768
        %v6172 = vunpack.c.h.bf16 %v5768
        %v6173 = vunpack.c.l.bf16 %v5769
        %v6174 = vunpack.c.h.bf16 %v5769
        %v6175 = vunpack.c.l.bf16 %v5770
        %v6176 = vunpack.c.h.bf16 %v5770
        %v6177 = vunpack.c.l.bf16 %v5771
        %v6178 = vunpack.c.h.bf16 %v5771
        %v6179 = vunpack.c.l.bf16 %v5772
        %v6180 = vunpack.c.h.bf16 %v5772
        %v6181 = vunpack.c.l.bf16 %v5773
        %v6182 = vunpack.c.h.bf16 %v5773
        %v6183 = vunpack.c.l.bf16 %v5774
        %v6184 = vunpack.c.h.bf16 %v5774
        %v6185 = vunpack.c.l.bf16 %v5775
        %v6186 = vunpack.c.h.bf16 %v5775
        %v6187 = vunpack.c.l.bf16 %v5776
        %v6188 = vunpack.c.h.bf16 %v5776
        %v6189 = vunpack.c.l.bf16 %v5777
        %v6190 = vunpack.c.h.bf16 %v5777
        %v6191 = vunpack.c.l.bf16 %v5778
        %v6192 = vunpack.c.h.bf16 %v5778
        %v6193 = vunpack.c.l.bf16 %v5779
        %v6194 = vunpack.c.h.bf16 %v5779
        %v6195 = vunpack.c.l.bf16 %v5780
        %v6196 = vunpack.c.h.bf16 %v5780
        %v6197 = vunpack.c.l.bf16 %v5781
        %v6198 = vunpack.c.h.bf16 %v5781
        %v6199 = vunpack.c.l.bf16 %v5782
        %v6200 = vunpack.c.h.bf16 %v5782
        %v6201 = vunpack.c.l.bf16 %v5783
        %v6202 = vunpack.c.h.bf16 %v5783
        %v6203 = vunpack.c.l.bf16 %v5784
        %v6204 = vunpack.c.h.bf16 %v5784
        %v6205 = vunpack.c.l.bf16 %v5785
        %v6206 = vunpack.c.h.bf16 %v5785
        %v6207 = vunpack.c.l.bf16 %v5786
        %v6208 = vunpack.c.h.bf16 %v5786
        %v6209 = vunpack.c.l.bf16 %v5787
        %v6210 = vunpack.c.h.bf16 %v5787
        %v6211 = vunpack.c.l.bf16 %v5788
        %v6212 = vunpack.c.h.bf16 %v5788
        %v6213 = vunpack.c.l.bf16 %v5789
        %v6214 = vunpack.c.h.bf16 %v5789
        %v6215 = vunpack.c.l.bf16 %v5790
        %v6216 = vunpack.c.h.bf16 %v5790
        %v6217 = vunpack.c.l.bf16 %v5791
        %v6218 = vunpack.c.h.bf16 %v5791
        %v6219 = vunpack.c.l.bf16 %v5792
        %v6220 = vunpack.c.h.bf16 %v5792
        %v6221 = vunpack.c.l.bf16 %v5793
        %v6222 = vunpack.c.h.bf16 %v5793
        %v6223 = vunpack.c.l.bf16 %v5794
        %v6224 = vunpack.c.h.bf16 %v5794
        %v6225 = vunpack.c.l.bf16 %v5795
        %v6226 = vunpack.c.h.bf16 %v5795
        %v6227 = vunpack.c.l.bf16 %v5796
        %v6228 = vunpack.c.h.bf16 %v5796
        %v6229 = vunpack.c.l.bf16 %v5797
        %v6230 = vunpack.c.h.bf16 %v5797
        %v6231 = vunpack.c.l.bf16 %v5798
        %v6232 = vunpack.c.h.bf16 %v5798
        %v6233 = vunpack.c.l.bf16 %v5799
        %v6234 = vunpack.c.h.bf16 %v5799
        %v6235 = vunpack.c.l.bf16 %v5800
        %v6236 = vunpack.c.h.bf16 %v5800
        %v6237 = vunpack.c.l.bf16 %v5801
        %v6238 = vunpack.c.h.bf16 %v5801
        %v6239 = vunpack.c.l.bf16 %v5802
        %v6240 = vunpack.c.h.bf16 %v5802
        %v6241 = vunpack.c.l.bf16 %v5803
        %v6242 = vunpack.c.h.bf16 %v5803
        %v6243 = vunpack.c.l.bf16 %v5804
        %v6244 = vunpack.c.h.bf16 %v5804
        %v6245 = vunpack.c.l.bf16 %v5805
        %v6246 = vunpack.c.h.bf16 %v5805
        %v6247 = vunpack.c.l.bf16 %v5806
        %v6248 = vunpack.c.h.bf16 %v5806
        %v6249 = vunpack.c.l.bf16 %v5807
        %v6250 = vunpack.c.h.bf16 %v5807
        %v6251 = vunpack.c.l.bf16 %v5808
        %v6252 = vunpack.c.h.bf16 %v5808
        %v6253 = vunpack.c.l.bf16 %v5809
        %v6254 = vunpack.c.h.bf16 %v5809
        %v6255 = vunpack.c.l.bf16 %v5810
        %v6256 = vunpack.c.h.bf16 %v5810
        %v6257 = vunpack.c.l.bf16 %v5811
        %v6258 = vunpack.c.h.bf16 %v5811
        %v6259 = vunpack.c.l.bf16 %v5812
        %v6260 = vunpack.c.h.bf16 %v5812
        %v6261 = vunpack.c.l.bf16 %v5813
        %v6262 = vunpack.c.h.bf16 %v5813
        %v6263 = vunpack.c.l.bf16 %v5814
        %v6264 = vunpack.c.h.bf16 %v5814
        %v6265 = vunpack.c.l.bf16 %v5815
        %v6266 = vunpack.c.h.bf16 %v5815
        %v6267 = vunpack.c.l.bf16 %v5816
        %v6268 = vunpack.c.h.bf16 %v5816
        %v6269 = vunpack.c.l.bf16 %v5817
        %v6270 = vunpack.c.h.bf16 %v5817
        %v6271 = vunpack.c.l.bf16 %v5818
        %v6272 = vunpack.c.h.bf16 %v5818
        %v6273 = vunpack.c.l.bf16 %v5819
        %v6274 = vunpack.c.h.bf16 %v5819
        %v6275 = vunpack.c.l.bf16 %v5820
        %v6276 = vunpack.c.h.bf16 %v5820
        %v6277 = vunpack.c.l.bf16 %v5821
        %v6278 = vunpack.c.h.bf16 %v5821
        %v6279 = vunpack.c.l.bf16 %v5822
        %v6280 = vunpack.c.h.bf16 %v5822
        %v6281 = vunpack.c.l.bf16 %v5823
        %v6282 = vunpack.c.h.bf16 %v5823
        %v6283 = vunpack.c.l.bf16 %v5824
        %v6284 = vunpack.c.h.bf16 %v5824
        %v6285 = vunpack.c.l.bf16 %v5825
        %v6286 = vunpack.c.h.bf16 %v5825
        %v6287 = vunpack.c.l.bf16 %v5826
        %v6288 = vunpack.c.h.bf16 %v5826
        %v6289 = vunpack.c.l.bf16 %v5827
        %v6290 = vunpack.c.h.bf16 %v5827
        %v6291 = vunpack.c.l.bf16 %v5828
        %v6292 = vunpack.c.h.bf16 %v5828
        %v6293 = vunpack.c.l.bf16 %v5829
        %v6294 = vunpack.c.h.bf16 %v5829
        %v6295 = vunpack.c.l.bf16 %v5830
        %v6296 = vunpack.c.h.bf16 %v5830
        %v6297 = vunpack.c.l.bf16 %v5831
        %v6298 = vunpack.c.h.bf16 %v5831
        %v6299 = vunpack.c.l.bf16 %v5832
        %v6300 = vunpack.c.h.bf16 %v5832
        %v6301 = vunpack.c.l.bf16 %v5833
        %v6302 = vunpack.c.h.bf16 %v5833
        %v6303 = vunpack.c.l.bf16 %v5834
        %v6304 = vunpack.c.h.bf16 %v5834
        %v6305 = vunpack.c.l.bf16 %v5835
        %v6306 = vunpack.c.h.bf16 %v5835
        %v6307 = vunpack.c.l.bf16 %v5836
        %v6308 = vunpack.c.h.bf16 %v5836
        %v6309 = vunpack.c.l.bf16 %v5837
        %v6310 = vunpack.c.h.bf16 %v5837
        %v6311 = vunpack.c.l.bf16 %v5838
        %v6312 = vunpack.c.h.bf16 %v5838
        %v6313 = vunpack.c.l.bf16 %v5839
        %v6314 = vunpack.c.h.bf16 %v5839
        %v6315 = vunpack.c.l.bf16 %v5840
        %v6316 = vunpack.c.h.bf16 %v5840
        %v6317 = vunpack.c.l.bf16 %v5841
        %v6318 = vunpack.c.h.bf16 %v5841
        %v6319 = vunpack.c.l.bf16 %v5842
        %v6320 = vunpack.c.h.bf16 %v5842
        %v6321 = vunpack.c.l.bf16 %v5843
        %v6322 = vunpack.c.h.bf16 %v5843
        %v6323 = vunpack.c.l.bf16 %v5844
        %v6324 = vunpack.c.h.bf16 %v5844
        %v6325 = vunpack.c.l.bf16 %v5845
        %v6326 = vunpack.c.h.bf16 %v5845
        %v6327 = vunpack.c.l.bf16 %v5846
        %v6328 = vunpack.c.h.bf16 %v5846
        %v6329 = vunpack.c.l.bf16 %v5847
        %v6330 = vunpack.c.h.bf16 %v5847
        %v6331 = vunpack.c.l.bf16 %v5848
        %v6332 = vunpack.c.h.bf16 %v5848
        %v6333 = vunpack.c.l.bf16 %v5849
        %v6334 = vunpack.c.h.bf16 %v5849
        %v6335 = vunpack.c.l.bf16 %v5850
        %v6336 = vunpack.c.h.bf16 %v5850
        %v6337 = vunpack.c.l.bf16 %v5851
        %v6338 = vunpack.c.h.bf16 %v5851
        %v6339 = vunpack.c.l.bf16 %v5852
        %v6340 = vunpack.c.h.bf16 %v5852
        %v6341 = vunpack.c.l.bf16 %v5853
        %v6342 = vunpack.c.h.bf16 %v5853
        %v6343 = vunpack.c.l.bf16 %v5854
        %v6344 = vunpack.c.h.bf16 %v5854
        %v6345 = vunpack.c.l.bf16 %v5855
        %v6346 = vunpack.c.h.bf16 %v5855
        %v6347 = vunpack.c.l.bf16 %v5856
        %v6348 = vunpack.c.h.bf16 %v5856
        %v6349 = vunpack.c.l.bf16 %v5857
        %v6350 = vunpack.c.h.bf16 %v5857
        %v6351 = vunpack.c.l.bf16 %v5858
        %v6352 = vunpack.c.h.bf16 %v5858
        %v6353 = vunpack.c.l.bf16 %v5859
        %v6354 = vunpack.c.h.bf16 %v5859
        %v6355 = vunpack.c.l.bf16 %v5860
        %v6356 = vunpack.c.h.bf16 %v5860
        %v6357 = vunpack.c.l.bf16 %v5861
        %v6358 = vunpack.c.h.bf16 %v5861
        %v6359 = vunpack.c.l.bf16 %v5862
        %v6360 = vunpack.c.h.bf16 %v5862
        %v6361 = vunpack.c.l.bf16 %v5863
        %v6362 = vunpack.c.h.bf16 %v5863
        %v6363 = vunpack.c.l.bf16 %v5864
        %v6364 = vunpack.c.h.bf16 %v5864
        %v6365 = vunpack.c.l.bf16 %v5865
        %v6366 = vunpack.c.h.bf16 %v5865
        %v6367 = vunpack.c.l.bf16 %v5866
        %v6368 = vunpack.c.h.bf16 %v5866
        %v6369 = vunpack.c.l.bf16 %v5867
        %v6370 = vunpack.c.h.bf16 %v5867
        %v6371 = vunpack.c.l.bf16 %v5868
        %v6372 = vunpack.c.h.bf16 %v5868
        %v6373 = vunpack.c.l.bf16 %v5869
        %v6374 = vunpack.c.h.bf16 %v5869
        %v6375 = vunpack.c.l.bf16 %v5870
        %v6376 = vunpack.c.h.bf16 %v5870
        %v6377 = vunpack.c.l.bf16 %v5871
        %v6378 = vunpack.c.h.bf16 %v5871
        %v6379 = vunpack.c.l.bf16 %v5872
        %v6380 = vunpack.c.h.bf16 %v5872
        %v6381 = vunpack.c.l.bf16 %v5873
        %v6382 = vunpack.c.h.bf16 %v5873
        %v6383 = vunpack.c.l.bf16 %v5874
        %v6384 = vunpack.c.h.bf16 %v5874
        %v6385 = vunpack.c.l.bf16 %v5875
        %v6386 = vunpack.c.h.bf16 %v5875
        %v6387 = vunpack.c.l.bf16 %v5876
        %v6388 = vunpack.c.h.bf16 %v5876
        %v6389 = vunpack.c.l.bf16 %v5877
        %v6390 = vunpack.c.h.bf16 %v5877
        %v6391 = vunpack.c.l.bf16 %v5878
        %v6392 = vunpack.c.h.bf16 %v5878
        %v6393 = vunpack.c.l.bf16 %v5879
        %v6394 = vunpack.c.h.bf16 %v5879
        %v6395 = vunpack.c.l.bf16 %v5880
        %v6396 = vunpack.c.h.bf16 %v5880
        %v6397 = vunpack.c.l.bf16 %v5881
        %v6398 = vunpack.c.h.bf16 %v5881
        %v6399 = vunpack.c.l.bf16 %v5882
        %v6400 = vunpack.c.h.bf16 %v5882
        %v6401 = vunpack.c.l.bf16 %v5883
        %v6402 = vunpack.c.h.bf16 %v5883
        %v6403 = vunpack.c.l.bf16 %v5884
        %v6404 = vunpack.c.h.bf16 %v5884
        %v6405 = vadd.f32 %v5893, %v5897
        %v6406 = vadd.f32 %v6405, %v5901
        %v6407 = vadd.f32 %v6406, %v5905
        %v6408 = vadd.f32 %v6407, %v5909
        %v6409 = vadd.f32 %v6408, %v5913
        %v6410 = vadd.f32 %v6409, %v5917
        %v6411 = vadd.f32 %v6410, %v5921
        %v6412 = vadd.f32 %v6411, %v5925
        %v6413 = vadd.f32 %v6412, %v5929
        %v6414 = vadd.f32 %v6413, %v5933
        %v6415 = vadd.f32 %v6414, %v5937
        %v6416 = vadd.f32 %v6415, %v5941
        %v6417 = vadd.f32 %v6416, %v5945
        %v6418 = vadd.f32 %v6417, %v5949
        %v6419 = vadd.f32 %v6418, %v5953
        %v6420 = vadd.f32 %v6419, %v5957
        %v6421 = vadd.f32 %v6420, %v5961
        %v6422 = vadd.f32 %v6421, %v5965
        %v6423 = vadd.f32 %v6422, %v5969
        %v6424 = vadd.f32 %v6423, %v5973
        %v6425 = vadd.f32 %v6424, %v5977
        %v6426 = vadd.f32 %v6425, %v5981
        %v6427 = vadd.f32 %v6426, %v5985
        %v6428 = vadd.f32 %v6427, %v5989
        %v6429 = vadd.f32 %v6428, %v5993
        %v6430 = vadd.f32 %v6429, %v5997
        %v6431 = vadd.f32 %v6430, %v6001
        %v6432 = vadd.f32 %v6431, %v6005
        %v6433 = vadd.f32 %v6432, %v6009
        %v6434 = vadd.f32 %v6433, %v6013
        %v6435 = vadd.f32 %v6434, %v6017
        %v6436 = vrot.slane %v6435, 4
        %v6437 = vadd.f32 %v6435, %v6436
        %v6438 = vrot.slane %v6437, 2
        %v6439 = vadd.f32 %v6437, %v6438
        %v6440 = vrot.slane %v6439, 1
        %v6441 = vadd.f32 %v6439, %v6440
        %v6442 = vadd.f32 %v5894, %v5898
        %v6443 = vadd.f32 %v6442, %v5902
        %v6444 = vadd.f32 %v6443, %v5906
        %v6445 = vadd.f32 %v6444, %v5910
        %v6446 = vadd.f32 %v6445, %v5914
        %v6447 = vadd.f32 %v6446, %v5918
        %v6448 = vadd.f32 %v6447, %v5922
        %v6449 = vadd.f32 %v6448, %v5926
        %v6450 = vadd.f32 %v6449, %v5930
        %v6451 = vadd.f32 %v6450, %v5934
        %v6452 = vadd.f32 %v6451, %v5938
        %v6453 = vadd.f32 %v6452, %v5942
        %v6454 = vadd.f32 %v6453, %v5946
        %v6455 = vadd.f32 %v6454, %v5950
        %v6456 = vadd.f32 %v6455, %v5954
        %v6457 = vadd.f32 %v6456, %v5958
        %v6458 = vadd.f32 %v6457, %v5962
        %v6459 = vadd.f32 %v6458, %v5966
        %v6460 = vadd.f32 %v6459, %v5970
        %v6461 = vadd.f32 %v6460, %v5974
        %v6462 = vadd.f32 %v6461, %v5978
        %v6463 = vadd.f32 %v6462, %v5982
        %v6464 = vadd.f32 %v6463, %v5986
        %v6465 = vadd.f32 %v6464, %v5990
        %v6466 = vadd.f32 %v6465, %v5994
        %v6467 = vadd.f32 %v6466, %v5998
        %v6468 = vadd.f32 %v6467, %v6002
        %v6469 = vadd.f32 %v6468, %v6006
        %v6470 = vadd.f32 %v6469, %v6010
        %v6471 = vadd.f32 %v6470, %v6014
        %v6472 = vadd.f32 %v6471, %v6018
        %v6473 = vrot.slane %v6472, 4
        %v6474 = vadd.f32 %v6472, %v6473
        %v6475 = vrot.slane %v6474, 2
        %v6476 = vadd.f32 %v6474, %v6475
        %v6477 = vrot.slane %v6476, 1
        %v6478 = vadd.f32 %v6476, %v6477
        %v6479 = vadd.f32 %v5895, %v5899
        %v6480 = vadd.f32 %v6479, %v5903
        %v6481 = vadd.f32 %v6480, %v5907
        %v6482 = vadd.f32 %v6481, %v5911
        %v6483 = vadd.f32 %v6482, %v5915
        %v6484 = vadd.f32 %v6483, %v5919
        %v6485 = vadd.f32 %v6484, %v5923
        %v6486 = vadd.f32 %v6485, %v5927
        %v6487 = vadd.f32 %v6486, %v5931
        %v6488 = vadd.f32 %v6487, %v5935
        %v6489 = vadd.f32 %v6488, %v5939
        %v6490 = vadd.f32 %v6489, %v5943
        %v6491 = vadd.f32 %v6490, %v5947
        %v6492 = vadd.f32 %v6491, %v5951
        %v6493 = vadd.f32 %v6492, %v5955
        %v6494 = vadd.f32 %v6493, %v5959
        %v6495 = vadd.f32 %v6494, %v5963
        %v6496 = vadd.f32 %v6495, %v5967
        %v6497 = vadd.f32 %v6496, %v5971
        %v6498 = vadd.f32 %v6497, %v5975
        %v6499 = vadd.f32 %v6498, %v5979
        %v6500 = vadd.f32 %v6499, %v5983
        %v6501 = vadd.f32 %v6500, %v5987
        %v6502 = vadd.f32 %v6501, %v5991
        %v6503 = vadd.f32 %v6502, %v5995
        %v6504 = vadd.f32 %v6503, %v5999
        %v6505 = vadd.f32 %v6504, %v6003
        %v6506 = vadd.f32 %v6505, %v6007
        %v6507 = vadd.f32 %v6506, %v6011
        %v6508 = vadd.f32 %v6507, %v6015
        %v6509 = vadd.f32 %v6508, %v6019
        %v6510 = vrot.slane %v6509, 4
        %v6511 = vadd.f32 %v6509, %v6510
        %v6512 = vrot.slane %v6511, 2
        %v6513 = vadd.f32 %v6511, %v6512
        %v6514 = vrot.slane %v6513, 1
        %v6515 = vadd.f32 %v6513, %v6514
        %v6516 = vadd.f32 %v5896, %v5900
        %v6517 = vadd.f32 %v6516, %v5904
        %v6518 = vadd.f32 %v6517, %v5908
        %v6519 = vadd.f32 %v6518, %v5912
        %v6520 = vadd.f32 %v6519, %v5916
        %v6521 = vadd.f32 %v6520, %v5920
        %v6522 = vadd.f32 %v6521, %v5924
        %v6523 = vadd.f32 %v6522, %v5928
        %v6524 = vadd.f32 %v6523, %v5932
        %v6525 = vadd.f32 %v6524, %v5936
        %v6526 = vadd.f32 %v6525, %v5940
        %v6527 = vadd.f32 %v6526, %v5944
        %v6528 = vadd.f32 %v6527, %v5948
        %v6529 = vadd.f32 %v6528, %v5952
        %v6530 = vadd.f32 %v6529, %v5956
        %v6531 = vadd.f32 %v6530, %v5960
        %v6532 = vadd.f32 %v6531, %v5964
        %v6533 = vadd.f32 %v6532, %v5968
        %v6534 = vadd.f32 %v6533, %v5972
        %v6535 = vadd.f32 %v6534, %v5976
        %v6536 = vadd.f32 %v6535, %v5980
        %v6537 = vadd.f32 %v6536, %v5984
        %v6538 = vadd.f32 %v6537, %v5988
        %v6539 = vadd.f32 %v6538, %v5992
        %v6540 = vadd.f32 %v6539, %v5996
        %v6541 = vadd.f32 %v6540, %v6000
        %v6542 = vadd.f32 %v6541, %v6004
        %v6543 = vadd.f32 %v6542, %v6008
        %v6544 = vadd.f32 %v6543, %v6012
        %v6545 = vadd.f32 %v6544, %v6016
        %v6546 = vadd.f32 %v6545, %v6020
        %v6547 = vrot.slane %v6546, 4
        %v6548 = vadd.f32 %v6546, %v6547
        %v6549 = vrot.slane %v6548, 2
        %v6550 = vadd.f32 %v6548, %v6549
        %v6551 = vrot.slane %v6550, 1
        %v6552 = vadd.f32 %v6550, %v6551
        %v6553 = vadd.f32 %v6021, %v6025
        %v6554 = vadd.f32 %v6553, %v6029
        %v6555 = vadd.f32 %v6554, %v6033
        %v6556 = vadd.f32 %v6555, %v6037
        %v6557 = vadd.f32 %v6556, %v6041
        %v6558 = vadd.f32 %v6557, %v6045
        %v6559 = vadd.f32 %v6558, %v6049
        %v6560 = vadd.f32 %v6559, %v6053
        %v6561 = vadd.f32 %v6560, %v6057
        %v6562 = vadd.f32 %v6561, %v6061
        %v6563 = vadd.f32 %v6562, %v6065
        %v6564 = vadd.f32 %v6563, %v6069
        %v6565 = vadd.f32 %v6564, %v6073
        %v6566 = vadd.f32 %v6565, %v6077
        %v6567 = vadd.f32 %v6566, %v6081
        %v6568 = vadd.f32 %v6567, %v6085
        %v6569 = vadd.f32 %v6568, %v6089
        %v6570 = vadd.f32 %v6569, %v6093
        %v6571 = vadd.f32 %v6570, %v6097
        %v6572 = vadd.f32 %v6571, %v6101
        %v6573 = vadd.f32 %v6572, %v6105
        %v6574 = vadd.f32 %v6573, %v6109
        %v6575 = vadd.f32 %v6574, %v6113
        %v6576 = vadd.f32 %v6575, %v6117
        %v6577 = vadd.f32 %v6576, %v6121
        %v6578 = vadd.f32 %v6577, %v6125
        %v6579 = vadd.f32 %v6578, %v6129
        %v6580 = vadd.f32 %v6579, %v6133
        %v6581 = vadd.f32 %v6580, %v6137
        %v6582 = vadd.f32 %v6581, %v6141
        %v6583 = vadd.f32 %v6582, %v6145
        %v6584 = vrot.slane %v6583, 4
        %v6585 = vadd.f32 %v6583, %v6584
        %v6586 = vrot.slane %v6585, 2
        %v6587 = vadd.f32 %v6585, %v6586
        %v6588 = vrot.slane %v6587, 1
        %v6589 = vadd.f32 %v6587, %v6588
        %v6590 = vadd.f32 %v6022, %v6026
        %v6591 = vadd.f32 %v6590, %v6030
        %v6592 = vadd.f32 %v6591, %v6034
        %v6593 = vadd.f32 %v6592, %v6038
        %v6594 = vadd.f32 %v6593, %v6042
        %v6595 = vadd.f32 %v6594, %v6046
        %v6596 = vadd.f32 %v6595, %v6050
        %v6597 = vadd.f32 %v6596, %v6054
        %v6598 = vadd.f32 %v6597, %v6058
        %v6599 = vadd.f32 %v6598, %v6062
        %v6600 = vadd.f32 %v6599, %v6066
        %v6601 = vadd.f32 %v6600, %v6070
        %v6602 = vadd.f32 %v6601, %v6074
        %v6603 = vadd.f32 %v6602, %v6078
        %v6604 = vadd.f32 %v6603, %v6082
        %v6605 = vadd.f32 %v6604, %v6086
        %v6606 = vadd.f32 %v6605, %v6090
        %v6607 = vadd.f32 %v6606, %v6094
        %v6608 = vadd.f32 %v6607, %v6098
        %v6609 = vadd.f32 %v6608, %v6102
        %v6610 = vadd.f32 %v6609, %v6106
        %v6611 = vadd.f32 %v6610, %v6110
        %v6612 = vadd.f32 %v6611, %v6114
        %v6613 = vadd.f32 %v6612, %v6118
        %v6614 = vadd.f32 %v6613, %v6122
        %v6615 = vadd.f32 %v6614, %v6126
        %v6616 = vadd.f32 %v6615, %v6130
        %v6617 = vadd.f32 %v6616, %v6134
        %v6618 = vadd.f32 %v6617, %v6138
        %v6619 = vadd.f32 %v6618, %v6142
        %v6620 = vadd.f32 %v6619, %v6146
        %v6621 = vrot.slane %v6620, 4
        %v6622 = vadd.f32 %v6620, %v6621
        %v6623 = vrot.slane %v6622, 2
        %v6624 = vadd.f32 %v6622, %v6623
        %v6625 = vrot.slane %v6624, 1
        %v6626 = vadd.f32 %v6624, %v6625
        %v6627 = vadd.f32 %v6023, %v6027
        %v6628 = vadd.f32 %v6627, %v6031
        %v6629 = vadd.f32 %v6628, %v6035
        %v6630 = vadd.f32 %v6629, %v6039
        %v6631 = vadd.f32 %v6630, %v6043
        %v6632 = vadd.f32 %v6631, %v6047
        %v6633 = vadd.f32 %v6632, %v6051
        %v6634 = vadd.f32 %v6633, %v6055
        %v6635 = vadd.f32 %v6634, %v6059
        %v6636 = vadd.f32 %v6635, %v6063
        %v6637 = vadd.f32 %v6636, %v6067
        %v6638 = vadd.f32 %v6637, %v6071
        %v6639 = vadd.f32 %v6638, %v6075
        %v6640 = vadd.f32 %v6639, %v6079
        %v6641 = vadd.f32 %v6640, %v6083
        %v6642 = vadd.f32 %v6641, %v6087
        %v6643 = vadd.f32 %v6642, %v6091
        %v6644 = vadd.f32 %v6643, %v6095
        %v6645 = vadd.f32 %v6644, %v6099
        %v6646 = vadd.f32 %v6645, %v6103
        %v6647 = vadd.f32 %v6646, %v6107
        %v6648 = vadd.f32 %v6647, %v6111
        %v6649 = vadd.f32 %v6648, %v6115
        %v6650 = vadd.f32 %v6649, %v6119
        %v6651 = vadd.f32 %v6650, %v6123
        %v6652 = vadd.f32 %v6651, %v6127
        %v6653 = vadd.f32 %v6652, %v6131
        %v6654 = vadd.f32 %v6653, %v6135
        %v6655 = vadd.f32 %v6654, %v6139
        %v6656 = vadd.f32 %v6655, %v6143
        %v6657 = vadd.f32 %v6656, %v6147
        %v6658 = vrot.slane %v6657, 4
        %v6659 = vadd.f32 %v6657, %v6658
        %v6660 = vrot.slane %v6659, 2
        %v6661 = vadd.f32 %v6659, %v6660
        %v6662 = vrot.slane %v6661, 1
        %v6663 = vadd.f32 %v6661, %v6662
        %v6664 = vadd.f32 %v6024, %v6028
        %v6665 = vadd.f32 %v6664, %v6032
        %v6666 = vadd.f32 %v6665, %v6036
        %v6667 = vadd.f32 %v6666, %v6040
        %v6668 = vadd.f32 %v6667, %v6044
        %v6669 = vadd.f32 %v6668, %v6048
        %v6670 = vadd.f32 %v6669, %v6052
        %v6671 = vadd.f32 %v6670, %v6056
        %v6672 = vadd.f32 %v6671, %v6060
        %v6673 = vadd.f32 %v6672, %v6064
        %v6674 = vadd.f32 %v6673, %v6068
        %v6675 = vadd.f32 %v6674, %v6072
        %v6676 = vadd.f32 %v6675, %v6076
        %v6677 = vadd.f32 %v6676, %v6080
        %v6678 = vadd.f32 %v6677, %v6084
        %v6679 = vadd.f32 %v6678, %v6088
        %v6680 = vadd.f32 %v6679, %v6092
        %v6681 = vadd.f32 %v6680, %v6096
        %v6682 = vadd.f32 %v6681, %v6100
        %v6683 = vadd.f32 %v6682, %v6104
        %v6684 = vadd.f32 %v6683, %v6108
        %v6685 = vadd.f32 %v6684, %v6112
        %v6686 = vadd.f32 %v6685, %v6116
        %v6687 = vadd.f32 %v6686, %v6120
        %v6688 = vadd.f32 %v6687, %v6124
        %v6689 = vadd.f32 %v6688, %v6128
        %v6690 = vadd.f32 %v6689, %v6132
        %v6691 = vadd.f32 %v6690, %v6136
        %v6692 = vadd.f32 %v6691, %v6140
        %v6693 = vadd.f32 %v6692, %v6144
        %v6694 = vadd.f32 %v6693, %v6148
        %v6695 = vrot.slane %v6694, 4
        %v6696 = vadd.f32 %v6694, %v6695
        %v6697 = vrot.slane %v6696, 2
        %v6698 = vadd.f32 %v6696, %v6697
        %v6699 = vrot.slane %v6698, 1
        %v6700 = vadd.f32 %v6698, %v6699
        %v6701 = vadd.f32 %v6149, %v6153
        %v6702 = vadd.f32 %v6701, %v6157
        %v6703 = vadd.f32 %v6702, %v6161
        %v6704 = vadd.f32 %v6703, %v6165
        %v6705 = vadd.f32 %v6704, %v6169
        %v6706 = vadd.f32 %v6705, %v6173
        %v6707 = vadd.f32 %v6706, %v6177
        %v6708 = vadd.f32 %v6707, %v6181
        %v6709 = vadd.f32 %v6708, %v6185
        %v6710 = vadd.f32 %v6709, %v6189
        %v6711 = vadd.f32 %v6710, %v6193
        %v6712 = vadd.f32 %v6711, %v6197
        %v6713 = vadd.f32 %v6712, %v6201
        %v6714 = vadd.f32 %v6713, %v6205
        %v6715 = vadd.f32 %v6714, %v6209
        %v6716 = vadd.f32 %v6715, %v6213
        %v6717 = vadd.f32 %v6716, %v6217
        %v6718 = vadd.f32 %v6717, %v6221
        %v6719 = vadd.f32 %v6718, %v6225
        %v6720 = vadd.f32 %v6719, %v6229
        %v6721 = vadd.f32 %v6720, %v6233
        %v6722 = vadd.f32 %v6721, %v6237
        %v6723 = vadd.f32 %v6722, %v6241
        %v6724 = vadd.f32 %v6723, %v6245
        %v6725 = vadd.f32 %v6724, %v6249
        %v6726 = vadd.f32 %v6725, %v6253
        %v6727 = vadd.f32 %v6726, %v6257
        %v6728 = vadd.f32 %v6727, %v6261
        %v6729 = vadd.f32 %v6728, %v6265
        %v6730 = vadd.f32 %v6729, %v6269
        %v6731 = vadd.f32 %v6730, %v6273
        %v6732 = vrot.slane %v6731, 4
        %v6733 = vadd.f32 %v6731, %v6732
        %v6734 = vrot.slane %v6733, 2
        %v6735 = vadd.f32 %v6733, %v6734
        %v6736 = vrot.slane %v6735, 1
        %v6737 = vadd.f32 %v6735, %v6736
        %v6738 = vadd.f32 %v6150, %v6154
        %v6739 = vadd.f32 %v6738, %v6158
        %v6740 = vadd.f32 %v6739, %v6162
        %v6741 = vadd.f32 %v6740, %v6166
        %v6742 = vadd.f32 %v6741, %v6170
        %v6743 = vadd.f32 %v6742, %v6174
        %v6744 = vadd.f32 %v6743, %v6178
        %v6745 = vadd.f32 %v6744, %v6182
        %v6746 = vadd.f32 %v6745, %v6186
        %v6747 = vadd.f32 %v6746, %v6190
        %v6748 = vadd.f32 %v6747, %v6194
        %v6749 = vadd.f32 %v6748, %v6198
        %v6750 = vadd.f32 %v6749, %v6202
        %v6751 = vadd.f32 %v6750, %v6206
        %v6752 = vadd.f32 %v6751, %v6210
        %v6753 = vadd.f32 %v6752, %v6214
        %v6754 = vadd.f32 %v6753, %v6218
        %v6755 = vadd.f32 %v6754, %v6222
        %v6756 = vadd.f32 %v6755, %v6226
        %v6757 = vadd.f32 %v6756, %v6230
        %v6758 = vadd.f32 %v6757, %v6234
        %v6759 = vadd.f32 %v6758, %v6238
        %v6760 = vadd.f32 %v6759, %v6242
        %v6761 = vadd.f32 %v6760, %v6246
        %v6762 = vadd.f32 %v6761, %v6250
        %v6763 = vadd.f32 %v6762, %v6254
        %v6764 = vadd.f32 %v6763, %v6258
        %v6765 = vadd.f32 %v6764, %v6262
        %v6766 = vadd.f32 %v6765, %v6266
        %v6767 = vadd.f32 %v6766, %v6270
        %v6768 = vadd.f32 %v6767, %v6274
        %v6769 = vrot.slane %v6768, 4
        %v6770 = vadd.f32 %v6768, %v6769
        %v6771 = vrot.slane %v6770, 2
        %v6772 = vadd.f32 %v6770, %v6771
        %v6773 = vrot.slane %v6772, 1
        %v6774 = vadd.f32 %v6772, %v6773
        %v6775 = vadd.f32 %v6151, %v6155
        %v6776 = vadd.f32 %v6775, %v6159
        %v6777 = vadd.f32 %v6776, %v6163
        %v6778 = vadd.f32 %v6777, %v6167
        %v6779 = vadd.f32 %v6778, %v6171
        %v6780 = vadd.f32 %v6779, %v6175
        %v6781 = vadd.f32 %v6780, %v6179
        %v6782 = vadd.f32 %v6781, %v6183
        %v6783 = vadd.f32 %v6782, %v6187
        %v6784 = vadd.f32 %v6783, %v6191
        %v6785 = vadd.f32 %v6784, %v6195
        %v6786 = vadd.f32 %v6785, %v6199
        %v6787 = vadd.f32 %v6786, %v6203
        %v6788 = vadd.f32 %v6787, %v6207
        %v6789 = vadd.f32 %v6788, %v6211
        %v6790 = vadd.f32 %v6789, %v6215
        %v6791 = vadd.f32 %v6790, %v6219
        %v6792 = vadd.f32 %v6791, %v6223
        %v6793 = vadd.f32 %v6792, %v6227
        %v6794 = vadd.f32 %v6793, %v6231
        %v6795 = vadd.f32 %v6794, %v6235
        %v6796 = vadd.f32 %v6795, %v6239
        %v6797 = vadd.f32 %v6796, %v6243
        %v6798 = vadd.f32 %v6797, %v6247
        %v6799 = vadd.f32 %v6798, %v6251
        %v6800 = vadd.f32 %v6799, %v6255
        %v6801 = vadd.f32 %v6800, %v6259
        %v6802 = vadd.f32 %v6801, %v6263
        %v6803 = vadd.f32 %v6802, %v6267
        %v6804 = vadd.f32 %v6803, %v6271
        %v6805 = vadd.f32 %v6804, %v6275
        %v6806 = vrot.slane %v6805, 4
        %v6807 = vadd.f32 %v6805, %v6806
        %v6808 = vrot.slane %v6807, 2
        %v6809 = vadd.f32 %v6807, %v6808
        %v6810 = vrot.slane %v6809, 1
        %v6811 = vadd.f32 %v6809, %v6810
        %v6812 = vadd.f32 %v6152, %v6156
        %v6813 = vadd.f32 %v6812, %v6160
        %v6814 = vadd.f32 %v6813, %v6164
        %v6815 = vadd.f32 %v6814, %v6168
        %v6816 = vadd.f32 %v6815, %v6172
        %v6817 = vadd.f32 %v6816, %v6176
        %v6818 = vadd.f32 %v6817, %v6180
        %v6819 = vadd.f32 %v6818, %v6184
        %v6820 = vadd.f32 %v6819, %v6188
        %v6821 = vadd.f32 %v6820, %v6192
        %v6822 = vadd.f32 %v6821, %v6196
        %v6823 = vadd.f32 %v6822, %v6200
        %v6824 = vadd.f32 %v6823, %v6204
        %v6825 = vadd.f32 %v6824, %v6208
        %v6826 = vadd.f32 %v6825, %v6212
        %v6827 = vadd.f32 %v6826, %v6216
        %v6828 = vadd.f32 %v6827, %v6220
        %v6829 = vadd.f32 %v6828, %v6224
        %v6830 = vadd.f32 %v6829, %v6228
        %v6831 = vadd.f32 %v6830, %v6232
        %v6832 = vadd.f32 %v6831, %v6236
        %v6833 = vadd.f32 %v6832, %v6240
        %v6834 = vadd.f32 %v6833, %v6244
        %v6835 = vadd.f32 %v6834, %v6248
        %v6836 = vadd.f32 %v6835, %v6252
        %v6837 = vadd.f32 %v6836, %v6256
        %v6838 = vadd.f32 %v6837, %v6260
        %v6839 = vadd.f32 %v6838, %v6264
        %v6840 = vadd.f32 %v6839, %v6268
        %v6841 = vadd.f32 %v6840, %v6272
        %v6842 = vadd.f32 %v6841, %v6276
        %v6843 = vrot.slane %v6842, 4
        %v6844 = vadd.f32 %v6842, %v6843
        %v6845 = vrot.slane %v6844, 2
        %v6846 = vadd.f32 %v6844, %v6845
        %v6847 = vrot.slane %v6846, 1
        %v6848 = vadd.f32 %v6846, %v6847
        %v6849 = vadd.f32 %v6277, %v6281
        %v6850 = vadd.f32 %v6849, %v6285
        %v6851 = vadd.f32 %v6850, %v6289
        %v6852 = vadd.f32 %v6851, %v6293
        %v6853 = vadd.f32 %v6852, %v6297
        %v6854 = vadd.f32 %v6853, %v6301
        %v6855 = vadd.f32 %v6854, %v6305
        %v6856 = vadd.f32 %v6855, %v6309
        %v6857 = vadd.f32 %v6856, %v6313
        %v6858 = vadd.f32 %v6857, %v6317
        %v6859 = vadd.f32 %v6858, %v6321
        %v6860 = vadd.f32 %v6859, %v6325
        %v6861 = vadd.f32 %v6860, %v6329
        %v6862 = vadd.f32 %v6861, %v6333
        %v6863 = vadd.f32 %v6862, %v6337
        %v6864 = vadd.f32 %v6863, %v6341
        %v6865 = vadd.f32 %v6864, %v6345
        %v6866 = vadd.f32 %v6865, %v6349
        %v6867 = vadd.f32 %v6866, %v6353
        %v6868 = vadd.f32 %v6867, %v6357
        %v6869 = vadd.f32 %v6868, %v6361
        %v6870 = vadd.f32 %v6869, %v6365
        %v6871 = vadd.f32 %v6870, %v6369
        %v6872 = vadd.f32 %v6871, %v6373
        %v6873 = vadd.f32 %v6872, %v6377
        %v6874 = vadd.f32 %v6873, %v6381
        %v6875 = vadd.f32 %v6874, %v6385
        %v6876 = vadd.f32 %v6875, %v6389
        %v6877 = vadd.f32 %v6876, %v6393
        %v6878 = vadd.f32 %v6877, %v6397
        %v6879 = vadd.f32 %v6878, %v6401
        %v6880 = vrot.slane %v6879, 4
        %v6881 = vadd.f32 %v6879, %v6880
        %v6882 = vrot.slane %v6881, 2
        %v6883 = vadd.f32 %v6881, %v6882
        %v6884 = vrot.slane %v6883, 1
        %v6885 = vadd.f32 %v6883, %v6884
        %v6886 = vadd.f32 %v6278, %v6282
        %v6887 = vadd.f32 %v6886, %v6286
        %v6888 = vadd.f32 %v6887, %v6290
        %v6889 = vadd.f32 %v6888, %v6294
        %v6890 = vadd.f32 %v6889, %v6298
        %v6891 = vadd.f32 %v6890, %v6302
        %v6892 = vadd.f32 %v6891, %v6306
        %v6893 = vadd.f32 %v6892, %v6310
        %v6894 = vadd.f32 %v6893, %v6314
        %v6895 = vadd.f32 %v6894, %v6318
        %v6896 = vadd.f32 %v6895, %v6322
        %v6897 = vadd.f32 %v6896, %v6326
        %v6898 = vadd.f32 %v6897, %v6330
        %v6899 = vadd.f32 %v6898, %v6334
        %v6900 = vadd.f32 %v6899, %v6338
        %v6901 = vadd.f32 %v6900, %v6342
        %v6902 = vadd.f32 %v6901, %v6346
        %v6903 = vadd.f32 %v6902, %v6350
        %v6904 = vadd.f32 %v6903, %v6354
        %v6905 = vadd.f32 %v6904, %v6358
        %v6906 = vadd.f32 %v6905, %v6362
        %v6907 = vadd.f32 %v6906, %v6366
        %v6908 = vadd.f32 %v6907, %v6370
        %v6909 = vadd.f32 %v6908, %v6374
        %v6910 = vadd.f32 %v6909, %v6378
        %v6911 = vadd.f32 %v6910, %v6382
        %v6912 = vadd.f32 %v6911, %v6386
        %v6913 = vadd.f32 %v6912, %v6390
        %v6914 = vadd.f32 %v6913, %v6394
        %v6915 = vadd.f32 %v6914, %v6398
        %v6916 = vadd.f32 %v6915, %v6402
        %v6917 = vrot.slane %v6916, 4
        %v6918 = vadd.f32 %v6916, %v6917
        %v6919 = vrot.slane %v6918, 2
        %v6920 = vadd.f32 %v6918, %v6919
        %v6921 = vrot.slane %v6920, 1
        %v6922 = vadd.f32 %v6920, %v6921
        %v6923 = vadd.f32 %v6279, %v6283
        %v6924 = vadd.f32 %v6923, %v6287
        %v6925 = vadd.f32 %v6924, %v6291
        %v6926 = vadd.f32 %v6925, %v6295
        %v6927 = vadd.f32 %v6926, %v6299
        %v6928 = vadd.f32 %v6927, %v6303
        %v6929 = vadd.f32 %v6928, %v6307
        %v6930 = vadd.f32 %v6929, %v6311
        %v6931 = vadd.f32 %v6930, %v6315
        %v6932 = vadd.f32 %v6931, %v6319
        %v6933 = vadd.f32 %v6932, %v6323
        %v6934 = vadd.f32 %v6933, %v6327
        %v6935 = vadd.f32 %v6934, %v6331
        %v6936 = vadd.f32 %v6935, %v6335
        %v6937 = vadd.f32 %v6936, %v6339
        %v6938 = vadd.f32 %v6937, %v6343
        %v6939 = vadd.f32 %v6938, %v6347
        %v6940 = vadd.f32 %v6939, %v6351
        %v6941 = vadd.f32 %v6940, %v6355
        %v6942 = vadd.f32 %v6941, %v6359
        %v6943 = vadd.f32 %v6942, %v6363
        %v6944 = vadd.f32 %v6943, %v6367
        %v6945 = vadd.f32 %v6944, %v6371
        %v6946 = vadd.f32 %v6945, %v6375
        %v6947 = vadd.f32 %v6946, %v6379
        %v6948 = vadd.f32 %v6947, %v6383
        %v6949 = vadd.f32 %v6948, %v6387
        %v6950 = vadd.f32 %v6949, %v6391
        %v6951 = vadd.f32 %v6950, %v6395
        %v6952 = vadd.f32 %v6951, %v6399
        %v6953 = vadd.f32 %v6952, %v6403
        %v6954 = vrot.slane %v6953, 4
        %v6955 = vadd.f32 %v6953, %v6954
        %v6956 = vrot.slane %v6955, 2
        %v6957 = vadd.f32 %v6955, %v6956
        %v6958 = vrot.slane %v6957, 1
        %v6959 = vadd.f32 %v6957, %v6958
        %v6960 = vadd.f32 %v6280, %v6284
        %v6961 = vadd.f32 %v6960, %v6288
        %v6962 = vadd.f32 %v6961, %v6292
        %v6963 = vadd.f32 %v6962, %v6296
        %v6964 = vadd.f32 %v6963, %v6300
        %v6965 = vadd.f32 %v6964, %v6304
        %v6966 = vadd.f32 %v6965, %v6308
        %v6967 = vadd.f32 %v6966, %v6312
        %v6968 = vadd.f32 %v6967, %v6316
        %v6969 = vadd.f32 %v6968, %v6320
        %v6970 = vadd.f32 %v6969, %v6324
        %v6971 = vadd.f32 %v6970, %v6328
        %v6972 = vadd.f32 %v6971, %v6332
        %v6973 = vadd.f32 %v6972, %v6336
        %v6974 = vadd.f32 %v6973, %v6340
        %v6975 = vadd.f32 %v6974, %v6344
        %v6976 = vadd.f32 %v6975, %v6348
        %v6977 = vadd.f32 %v6976, %v6352
        %v6978 = vadd.f32 %v6977, %v6356
        %v6979 = vadd.f32 %v6978, %v6360
        %v6980 = vadd.f32 %v6979, %v6364
        %v6981 = vadd.f32 %v6980, %v6368
        %v6982 = vadd.f32 %v6981, %v6372
        %v6983 = vadd.f32 %v6982, %v6376
        %v6984 = vadd.f32 %v6983, %v6380
        %v6985 = vadd.f32 %v6984, %v6384
        %v6986 = vadd.f32 %v6985, %v6388
        %v6987 = vadd.f32 %v6986, %v6392
        %v6988 = vadd.f32 %v6987, %v6396
        %v6989 = vadd.f32 %v6988, %v6400
        %v6990 = vadd.f32 %v6989, %v6404
        %v6991 = vrot.slane %v6990, 4
        %v6992 = vadd.f32 %v6990, %v6991
        %v6993 = vrot.slane %v6992, 2
        %v6994 = vadd.f32 %v6992, %v6993
        %v6995 = vrot.slane %v6994, 1
        %v6996 = vadd.f32 %v6994, %v6995
        %v7013 = vrot.slane %v6478, 7
        %v7014 = vrot.slane %v6515, 6
        %v7015 = vrot.slane %v6552, 5
        %v7016 = vrot.slane %v6626, 7
        %v7017 = vrot.slane %v6663, 6
        %v7018 = vrot.slane %v6700, 5
        %v7019 = vrot.slane %v6774, 7
        %v7020 = vrot.slane %v6811, 6
        %v7021 = vrot.slane %v6848, 5
        %v7022 = vrot.slane %v6922, 7
        %v7023 = vrot.slane %v6959, 6
        %v7024 = vrot.slane %v6996, 5
        %v7025 = vsel %vm3254, %v6441, %v7013
        %v7026 = vsel %vm3256, %v7014, %v7015
        %v7027 = vsel %vm3258, %v7025, %v7026
        %v7028 = vsel %vm3254, %v6589, %v7016
        %v7029 = vsel %vm3256, %v7017, %v7018
        %v7030 = vsel %vm3258, %v7028, %v7029
        %v7031 = vsel %vm3254, %v6737, %v7019
        %v7032 = vsel %vm3256, %v7020, %v7021
        %v7033 = vsel %vm3258, %v7031, %v7032
        %v7034 = vsel %vm3254, %v6885, %v7022
        %v7035 = vsel %vm3256, %v7023, %v7024
        %v7036 = vsel %vm3258, %v7034, %v7035
        %v7041 = vadd.f32 %v5889, %v7027
        %v7042 = vadd.f32 %v5890, %v7030
        %v7043 = vadd.f32 %v5891, %v7033
        %v7044 = vadd.f32 %v5892, %v7036
        %v7045 = vlaneseq
        %vm7046 = vcmp.ge.s32.totalorder %v7045, 0
        %vm7047 = vcmp.lt.s32.totalorder %v7045, 512
        %vm7048 = vmand %vm7046, %vm7047
        %7049 = vst.msk [vmem:[#allocation3] sm:$0xf] %vm7048, %v7041
        %7050 = vst.msk [vmem:[#allocation3 + $0x4] sm:$0xf] %vm7048, %v7042
        %7051 = vst.msk [vmem:[#allocation3 + $0x8] sm:$0xf] %vm7048, %v7043
        %7052 = vst.msk [vmem:[#allocation3 + $0xc] sm:$0xf] %vm7048, %v7044
        %v7057 = vunpack.c.l.b16 %v661
        %v7058 = vunpack.c.h.b16 %v661
        %v7059 = vunpack.c.l.b16 %v662
        %v7060 = vunpack.c.h.b16 %v662
        %v7061 = vunpack.c.l.b16 %v663
        %v7062 = vunpack.c.h.b16 %v663
        %v7063 = vunpack.c.l.b16 %v664
        %v7064 = vunpack.c.h.b16 %v664
        %v7065 = vpack.c.b16 %v7059, %v7057
        %v7066 = vpack.c.b16 %v7060, %v7058
        %v7067 = vpack.c.b16 %v7063, %v7061
        %v7068 = vpack.c.b16 %v7064, %v7062
        %v7137 = vunpack.c.l.b16 %v5629
        %v7138 = vunpack.c.h.b16 %v5629
        %v7139 = vunpack.c.l.b16 %v5630
        %v7140 = vunpack.c.h.b16 %v5630
        %v7141 = vunpack.c.l.b16 %v5631
        %v7142 = vunpack.c.h.b16 %v5631
        %v7143 = vunpack.c.l.b16 %v5632
        %v7144 = vunpack.c.h.b16 %v5632
        %v7145 = vunpack.c.l.b16 %v5633
        %v7146 = vunpack.c.h.b16 %v5633
        %v7147 = vunpack.c.l.b16 %v5634
        %v7148 = vunpack.c.h.b16 %v5634
        %v7149 = vunpack.c.l.b16 %v5635
        %v7150 = vunpack.c.h.b16 %v5635
        %v7151 = vunpack.c.l.b16 %v5636
        %v7152 = vunpack.c.h.b16 %v5636
        %v7153 = vunpack.c.l.b16 %v5637
        %v7154 = vunpack.c.h.b16 %v5637
        %v7155 = vunpack.c.l.b16 %v5638
        %v7156 = vunpack.c.h.b16 %v5638
        %v7157 = vunpack.c.l.b16 %v5639
        %v7158 = vunpack.c.h.b16 %v5639
        %v7159 = vunpack.c.l.b16 %v5640
        %v7160 = vunpack.c.h.b16 %v5640
        %v7161 = vunpack.c.l.b16 %v5641
        %v7162 = vunpack.c.h.b16 %v5641
        %v7163 = vunpack.c.l.b16 %v5642
        %v7164 = vunpack.c.h.b16 %v5642
        %v7165 = vunpack.c.l.b16 %v5643
        %v7166 = vunpack.c.h.b16 %v5643
        %v7167 = vunpack.c.l.b16 %v5644
        %v7168 = vunpack.c.h.b16 %v5644
        %v7169 = vunpack.c.l.b16 %v5645
        %v7170 = vunpack.c.h.b16 %v5645
        %v7171 = vunpack.c.l.b16 %v5646
        %v7172 = vunpack.c.h.b16 %v5646
        %v7173 = vunpack.c.l.b16 %v5647
        %v7174 = vunpack.c.h.b16 %v5647
        %v7175 = vunpack.c.l.b16 %v5648
        %v7176 = vunpack.c.h.b16 %v5648
        %v7177 = vunpack.c.l.b16 %v5649
        %v7178 = vunpack.c.h.b16 %v5649
        %v7179 = vunpack.c.l.b16 %v5650
        %v7180 = vunpack.c.h.b16 %v5650
        %v7181 = vunpack.c.l.b16 %v5651
        %v7182 = vunpack.c.h.b16 %v5651
        %v7183 = vunpack.c.l.b16 %v5652
        %v7184 = vunpack.c.h.b16 %v5652
        %v7185 = vunpack.c.l.b16 %v5653
        %v7186 = vunpack.c.h.b16 %v5653
        %v7187 = vunpack.c.l.b16 %v5654
        %v7188 = vunpack.c.h.b16 %v5654
        %v7189 = vunpack.c.l.b16 %v5655
        %v7190 = vunpack.c.h.b16 %v5655
        %v7191 = vunpack.c.l.b16 %v5656
        %v7192 = vunpack.c.h.b16 %v5656
        %v7193 = vunpack.c.l.b16 %v5657
        %v7194 = vunpack.c.h.b16 %v5657
        %v7195 = vunpack.c.l.b16 %v5658
        %v7196 = vunpack.c.h.b16 %v5658
        %v7197 = vunpack.c.l.b16 %v5659
        %v7198 = vunpack.c.h.b16 %v5659
        %v7199 = vunpack.c.l.b16 %v5660
        %v7200 = vunpack.c.h.b16 %v5660
        %v7201 = vunpack.c.l.b16 %v5661
        %v7202 = vunpack.c.h.b16 %v5661
        %v7203 = vunpack.c.l.b16 %v5662
        %v7204 = vunpack.c.h.b16 %v5662
        %v7205 = vunpack.c.l.b16 %v5663
        %v7206 = vunpack.c.h.b16 %v5663
        %v7207 = vunpack.c.l.b16 %v5664
        %v7208 = vunpack.c.h.b16 %v5664
        %v7209 = vunpack.c.l.b16 %v5665
        %v7210 = vunpack.c.h.b16 %v5665
        %v7211 = vunpack.c.l.b16 %v5666
        %v7212 = vunpack.c.h.b16 %v5666
        %v7213 = vunpack.c.l.b16 %v5667
        %v7214 = vunpack.c.h.b16 %v5667
        %v7215 = vunpack.c.l.b16 %v5668
        %v7216 = vunpack.c.h.b16 %v5668
        %v7217 = vunpack.c.l.b16 %v5669
        %v7218 = vunpack.c.h.b16 %v5669
        %v7219 = vunpack.c.l.b16 %v5670
        %v7220 = vunpack.c.h.b16 %v5670
        %v7221 = vunpack.c.l.b16 %v5671
        %v7222 = vunpack.c.h.b16 %v5671
        %v7223 = vunpack.c.l.b16 %v5672
        %v7224 = vunpack.c.h.b16 %v5672
        %v7225 = vunpack.c.l.b16 %v5673
        %v7226 = vunpack.c.h.b16 %v5673
        %v7227 = vunpack.c.l.b16 %v5674
        %v7228 = vunpack.c.h.b16 %v5674
        %v7229 = vunpack.c.l.b16 %v5675
        %v7230 = vunpack.c.h.b16 %v5675
        %v7231 = vunpack.c.l.b16 %v5676
        %v7232 = vunpack.c.h.b16 %v5676
        %v7233 = vunpack.c.l.b16 %v5677
        %v7234 = vunpack.c.h.b16 %v5677
        %v7235 = vunpack.c.l.b16 %v5678
        %v7236 = vunpack.c.h.b16 %v5678
        %v7237 = vunpack.c.l.b16 %v5679
        %v7238 = vunpack.c.h.b16 %v5679
        %v7239 = vunpack.c.l.b16 %v5680
        %v7240 = vunpack.c.h.b16 %v5680
        %v7241 = vunpack.c.l.b16 %v5681
        %v7242 = vunpack.c.h.b16 %v5681
        %v7243 = vunpack.c.l.b16 %v5682
        %v7244 = vunpack.c.h.b16 %v5682
        %v7245 = vunpack.c.l.b16 %v5683
        %v7246 = vunpack.c.h.b16 %v5683
        %v7247 = vunpack.c.l.b16 %v5684
        %v7248 = vunpack.c.h.b16 %v5684
        %v7249 = vunpack.c.l.b16 %v5685
        %v7250 = vunpack.c.h.b16 %v5685
        %v7251 = vunpack.c.l.b16 %v5686
        %v7252 = vunpack.c.h.b16 %v5686
        %v7253 = vunpack.c.l.b16 %v5687
        %v7254 = vunpack.c.h.b16 %v5687
        %v7255 = vunpack.c.l.b16 %v5688
        %v7256 = vunpack.c.h.b16 %v5688
        %v7257 = vunpack.c.l.b16 %v5689
        %v7258 = vunpack.c.h.b16 %v5689
        %v7259 = vunpack.c.l.b16 %v5690
        %v7260 = vunpack.c.h.b16 %v5690
        %v7261 = vunpack.c.l.b16 %v5691
        %v7262 = vunpack.c.h.b16 %v5691
        %v7263 = vunpack.c.l.b16 %v5692
        %v7264 = vunpack.c.h.b16 %v5692
        %v7265 = vpack.c.b16 %v7141, %v7137
        %v7266 = vpack.c.b16 %v7142, %v7138
        %v7267 = vpack.c.b16 %v7143, %v7139
        %v7268 = vpack.c.b16 %v7144, %v7140
        %v7269 = vpack.c.b16 %v7149, %v7145
        %v7270 = vpack.c.b16 %v7150, %v7146
        %v7271 = vpack.c.b16 %v7151, %v7147
        %v7272 = vpack.c.b16 %v7152, %v7148
        %v7273 = vpack.c.b16 %v7157, %v7153
        %v7274 = vpack.c.b16 %v7158, %v7154
        %v7275 = vpack.c.b16 %v7159, %v7155
        %v7276 = vpack.c.b16 %v7160, %v7156
        %v7277 = vpack.c.b16 %v7165, %v7161
        %v7278 = vpack.c.b16 %v7166, %v7162
        %v7279 = vpack.c.b16 %v7167, %v7163
        %v7280 = vpack.c.b16 %v7168, %v7164
        %v7281 = vpack.c.b16 %v7173, %v7169
        %v7282 = vpack.c.b16 %v7174, %v7170
        %v7283 = vpack.c.b16 %v7175, %v7171
        %v7284 = vpack.c.b16 %v7176, %v7172
        %v7285 = vpack.c.b16 %v7181, %v7177
        %v7286 = vpack.c.b16 %v7182, %v7178
        %v7287 = vpack.c.b16 %v7183, %v7179
        %v7288 = vpack.c.b16 %v7184, %v7180
        %v7289 = vpack.c.b16 %v7189, %v7185
        %v7290 = vpack.c.b16 %v7190, %v7186
        %v7291 = vpack.c.b16 %v7191, %v7187
        %v7292 = vpack.c.b16 %v7192, %v7188
        %v7293 = vpack.c.b16 %v7197, %v7193
        %v7294 = vpack.c.b16 %v7198, %v7194
        %v7295 = vpack.c.b16 %v7199, %v7195
        %v7296 = vpack.c.b16 %v7200, %v7196
        %v7297 = vpack.c.b16 %v7205, %v7201
        %v7298 = vpack.c.b16 %v7206, %v7202
        %v7299 = vpack.c.b16 %v7207, %v7203
        %v7300 = vpack.c.b16 %v7208, %v7204
        %v7301 = vpack.c.b16 %v7213, %v7209
        %v7302 = vpack.c.b16 %v7214, %v7210
        %v7303 = vpack.c.b16 %v7215, %v7211
        %v7304 = vpack.c.b16 %v7216, %v7212
        %v7305 = vpack.c.b16 %v7221, %v7217
        %v7306 = vpack.c.b16 %v7222, %v7218
        %v7307 = vpack.c.b16 %v7223, %v7219
        %v7308 = vpack.c.b16 %v7224, %v7220
        %v7309 = vpack.c.b16 %v7229, %v7225
        %v7310 = vpack.c.b16 %v7230, %v7226
        %v7311 = vpack.c.b16 %v7231, %v7227
        %v7312 = vpack.c.b16 %v7232, %v7228
        %v7313 = vpack.c.b16 %v7237, %v7233
        %v7314 = vpack.c.b16 %v7238, %v7234
        %v7315 = vpack.c.b16 %v7239, %v7235
        %v7316 = vpack.c.b16 %v7240, %v7236
        %v7317 = vpack.c.b16 %v7245, %v7241
        %v7318 = vpack.c.b16 %v7246, %v7242
        %v7319 = vpack.c.b16 %v7247, %v7243
        %v7320 = vpack.c.b16 %v7248, %v7244
        %v7321 = vpack.c.b16 %v7253, %v7249
        %v7322 = vpack.c.b16 %v7254, %v7250
        %v7323 = vpack.c.b16 %v7255, %v7251
        %v7324 = vpack.c.b16 %v7256, %v7252
        %v7325 = vpack.c.b16 %v7261, %v7257
        %v7326 = vpack.c.b16 %v7262, %v7258
        %v7327 = vpack.c.b16 %v7263, %v7259
        %v7328 = vpack.c.b16 %v7264, %v7260
        %7393 = vmatpush.bf16.msra.mxu0 %v7293
        %7394 = vmatpush.bf16.msra.mxu0 %v7289
        %7395 = vmatpush.bf16.msra.mxu0 %v7285
        %7396 = vmatpush.bf16.msra.mxu0 %v7281
        %7397 = vmatpush.bf16.msra.mxu0 %v7277
        %7398 = vmatpush.bf16.msra.mxu0 %v7273
        %7399 = vmatpush.bf16.msra.mxu0 %v7269
        %7400 = vmatpush.bf16.msra.mxu0 %v7265
        %7401 = vmatmul.bf16.gmra.mxu0 %v7065
        %v7402 = vpop.f32.mrf.mxu0
        %v7403 = vadd.f32 0.0, %v7402
        %v7404 = vpop.f32.mrf.mxu0
        %v7405 = vadd.f32 0.0, %v7404
        %7406 = vmatmul.bf16.gmra.mxu0 %v7067
        %v7407 = vpop.f32.mrf.mxu0
        %v7408 = vadd.f32 0.0, %v7407
        %v7409 = vpop.f32.mrf.mxu0
        %v7410 = vadd.f32 0.0, %v7409
        %7411 = vdwg.mxu0
        %7412 = vmatpush.bf16.msra.mxu0 %v7325
        %7413 = vmatpush.bf16.msra.mxu0 %v7321
        %7414 = vmatpush.bf16.msra.mxu0 %v7317
        %7415 = vmatpush.bf16.msra.mxu0 %v7313
        %7416 = vmatpush.bf16.msra.mxu0 %v7309
        %7417 = vmatpush.bf16.msra.mxu0 %v7305
        %7418 = vmatpush.bf16.msra.mxu0 %v7301
        %7419 = vmatpush.bf16.msra.mxu0 %v7297
        %7420 = vmatmul.bf16.gmra.mxu0 %v7066
        %v7421 = vpop.f32.mrf.mxu0
        %v7422 = vadd.f32 %v7403, %v7421
        %v7423 = vpop.f32.mrf.mxu0
        %v7424 = vadd.f32 %v7405, %v7423
        %7425 = vmatmul.bf16.gmra.mxu0 %v7068
        %v7426 = vpop.f32.mrf.mxu0
        %v7427 = vadd.f32 %v7408, %v7426
        %v7428 = vpop.f32.mrf.mxu0
        %v7429 = vadd.f32 %v7410, %v7428
        %7430 = vdwg.mxu0
        %7431 = vmatpush.bf16.msra.mxu0 %v7294
        %7432 = vmatpush.bf16.msra.mxu0 %v7290
        %7433 = vmatpush.bf16.msra.mxu0 %v7286
        %7434 = vmatpush.bf16.msra.mxu0 %v7282
        %7435 = vmatpush.bf16.msra.mxu0 %v7278
        %7436 = vmatpush.bf16.msra.mxu0 %v7274
        %7437 = vmatpush.bf16.msra.mxu0 %v7270
        %7438 = vmatpush.bf16.msra.mxu0 %v7266
        %7439 = vmatmul.bf16.gmra.mxu0 %v7065
        %v7440 = vpop.f32.mrf.mxu0
        %v7441 = vadd.f32 0.0, %v7440
        %v7442 = vpop.f32.mrf.mxu0
        %v7443 = vadd.f32 0.0, %v7442
        %7444 = vmatmul.bf16.gmra.mxu0 %v7067
        %v7445 = vpop.f32.mrf.mxu0
        %v7446 = vadd.f32 0.0, %v7445
        %v7447 = vpop.f32.mrf.mxu0
        %v7448 = vadd.f32 0.0, %v7447
        %7449 = vdwg.mxu0
        %7450 = vmatpush.bf16.msra.mxu0 %v7326
        %7451 = vmatpush.bf16.msra.mxu0 %v7322
        %7452 = vmatpush.bf16.msra.mxu0 %v7318
        %7453 = vmatpush.bf16.msra.mxu0 %v7314
        %7454 = vmatpush.bf16.msra.mxu0 %v7310
        %7455 = vmatpush.bf16.msra.mxu0 %v7306
        %7456 = vmatpush.bf16.msra.mxu0 %v7302
        %7457 = vmatpush.bf16.msra.mxu0 %v7298
        %7458 = vmatmul.bf16.gmra.mxu0 %v7066
        %v7459 = vpop.f32.mrf.mxu0
        %v7460 = vadd.f32 %v7441, %v7459
        %v7461 = vpop.f32.mrf.mxu0
        %v7462 = vadd.f32 %v7443, %v7461
        %7463 = vmatmul.bf16.gmra.mxu0 %v7068
        %v7464 = vpop.f32.mrf.mxu0
        %v7465 = vadd.f32 %v7446, %v7464
        %v7466 = vpop.f32.mrf.mxu0
        %v7467 = vadd.f32 %v7448, %v7466
        %7468 = vdwg.mxu0
        %7469 = vmatpush.bf16.msra.mxu0 %v7295
        %7470 = vmatpush.bf16.msra.mxu0 %v7291
        %7471 = vmatpush.bf16.msra.mxu0 %v7287
        %7472 = vmatpush.bf16.msra.mxu0 %v7283
        %7473 = vmatpush.bf16.msra.mxu0 %v7279
        %7474 = vmatpush.bf16.msra.mxu0 %v7275
        %7475 = vmatpush.bf16.msra.mxu0 %v7271
        %7476 = vmatpush.bf16.msra.mxu0 %v7267
        %7477 = vmatmul.bf16.gmra.mxu0 %v7065
        %v7478 = vpop.f32.mrf.mxu0
        %v7479 = vadd.f32 0.0, %v7478
        %v7480 = vpop.f32.mrf.mxu0
        %v7481 = vadd.f32 0.0, %v7480
        %7482 = vmatmul.bf16.gmra.mxu0 %v7067
        %v7483 = vpop.f32.mrf.mxu0
        %v7484 = vadd.f32 0.0, %v7483
        %v7485 = vpop.f32.mrf.mxu0
        %v7486 = vadd.f32 0.0, %v7485
        %7487 = vdwg.mxu0
        %7488 = vmatpush.bf16.msra.mxu0 %v7327
        %7489 = vmatpush.bf16.msra.mxu0 %v7323
        %7490 = vmatpush.bf16.msra.mxu0 %v7319
        %7491 = vmatpush.bf16.msra.mxu0 %v7315
        %7492 = vmatpush.bf16.msra.mxu0 %v7311
        %7493 = vmatpush.bf16.msra.mxu0 %v7307
        %7494 = vmatpush.bf16.msra.mxu0 %v7303
        %7495 = vmatpush.bf16.msra.mxu0 %v7299
        %7496 = vmatmul.bf16.gmra.mxu0 %v7066
        %v7497 = vpop.f32.mrf.mxu0
        %v7498 = vadd.f32 %v7479, %v7497
        %v7499 = vpop.f32.mrf.mxu0
        %v7500 = vadd.f32 %v7481, %v7499
        %7501 = vmatmul.bf16.gmra.mxu0 %v7068
        %v7502 = vpop.f32.mrf.mxu0
        %v7503 = vadd.f32 %v7484, %v7502
        %v7504 = vpop.f32.mrf.mxu0
        %v7505 = vadd.f32 %v7486, %v7504
        %7506 = vdwg.mxu0
        %7507 = vmatpush.bf16.msra.mxu0 %v7296
        %7508 = vmatpush.bf16.msra.mxu0 %v7292
        %7509 = vmatpush.bf16.msra.mxu0 %v7288
        %7510 = vmatpush.bf16.msra.mxu0 %v7284
        %7511 = vmatpush.bf16.msra.mxu0 %v7280
        %7512 = vmatpush.bf16.msra.mxu0 %v7276
        %7513 = vmatpush.bf16.msra.mxu0 %v7272
        %7514 = vmatpush.bf16.msra.mxu0 %v7268
        %7515 = vmatmul.bf16.gmra.mxu0 %v7065
        %v7516 = vpop.f32.mrf.mxu0
        %v7517 = vadd.f32 0.0, %v7516
        %v7518 = vpop.f32.mrf.mxu0
        %v7519 = vadd.f32 0.0, %v7518
        %7520 = vmatmul.bf16.gmra.mxu0 %v7067
        %v7521 = vpop.f32.mrf.mxu0
        %v7522 = vadd.f32 0.0, %v7521
        %v7523 = vpop.f32.mrf.mxu0
        %v7524 = vadd.f32 0.0, %v7523
        %7525 = vdwg.mxu0
        %7526 = vmatpush.bf16.msra.mxu0 %v7328
        %7527 = vmatpush.bf16.msra.mxu0 %v7324
        %7528 = vmatpush.bf16.msra.mxu0 %v7320
        %7529 = vmatpush.bf16.msra.mxu0 %v7316
        %7530 = vmatpush.bf16.msra.mxu0 %v7312
        %7531 = vmatpush.bf16.msra.mxu0 %v7308
        %7532 = vmatpush.bf16.msra.mxu0 %v7304
        %7533 = vmatpush.bf16.msra.mxu0 %v7300
        %7534 = vmatmul.bf16.gmra.mxu0 %v7066
        %v7535 = vpop.f32.mrf.mxu0
        %v7536 = vadd.f32 %v7517, %v7535
        %v7537 = vpop.f32.mrf.mxu0
        %v7538 = vadd.f32 %v7519, %v7537
        %7539 = vmatmul.bf16.gmra.mxu0 %v7068
        %v7540 = vpop.f32.mrf.mxu0
        %v7541 = vadd.f32 %v7522, %v7540
        %v7542 = vpop.f32.mrf.mxu0
        %v7543 = vadd.f32 %v7524, %v7542
        %7544 = vdwg.mxu0
        %v7549 = vunpack.c.l.b16 %v665
        %v7550 = vunpack.c.h.b16 %v665
        %v7551 = vunpack.c.l.b16 %v666
        %v7552 = vunpack.c.h.b16 %v666
        %v7553 = vunpack.c.l.b16 %v667
        %v7554 = vunpack.c.h.b16 %v667
        %v7555 = vunpack.c.l.b16 %v668
        %v7556 = vunpack.c.h.b16 %v668
        %v7557 = vpack.c.b16 %v7551, %v7549
        %v7558 = vpack.c.b16 %v7552, %v7550
        %v7559 = vpack.c.b16 %v7555, %v7553
        %v7560 = vpack.c.b16 %v7556, %v7554
        %v7629 = vunpack.c.l.b16 %v5693
        %v7630 = vunpack.c.h.b16 %v5693
        %v7631 = vunpack.c.l.b16 %v5694
        %v7632 = vunpack.c.h.b16 %v5694
        %v7633 = vunpack.c.l.b16 %v5695
        %v7634 = vunpack.c.h.b16 %v5695
        %v7635 = vunpack.c.l.b16 %v5696
        %v7636 = vunpack.c.h.b16 %v5696
        %v7637 = vunpack.c.l.b16 %v5697
        %v7638 = vunpack.c.h.b16 %v5697
        %v7639 = vunpack.c.l.b16 %v5698
        %v7640 = vunpack.c.h.b16 %v5698
        %v7641 = vunpack.c.l.b16 %v5699
        %v7642 = vunpack.c.h.b16 %v5699
        %v7643 = vunpack.c.l.b16 %v5700
        %v7644 = vunpack.c.h.b16 %v5700
        %v7645 = vunpack.c.l.b16 %v5701
        %v7646 = vunpack.c.h.b16 %v5701
        %v7647 = vunpack.c.l.b16 %v5702
        %v7648 = vunpack.c.h.b16 %v5702
        %v7649 = vunpack.c.l.b16 %v5703
        %v7650 = vunpack.c.h.b16 %v5703
        %v7651 = vunpack.c.l.b16 %v5704
        %v7652 = vunpack.c.h.b16 %v5704
        %v7653 = vunpack.c.l.b16 %v5705
        %v7654 = vunpack.c.h.b16 %v5705
        %v7655 = vunpack.c.l.b16 %v5706
        %v7656 = vunpack.c.h.b16 %v5706
        %v7657 = vunpack.c.l.b16 %v5707
        %v7658 = vunpack.c.h.b16 %v5707
        %v7659 = vunpack.c.l.b16 %v5708
        %v7660 = vunpack.c.h.b16 %v5708
        %v7661 = vunpack.c.l.b16 %v5709
        %v7662 = vunpack.c.h.b16 %v5709
        %v7663 = vunpack.c.l.b16 %v5710
        %v7664 = vunpack.c.h.b16 %v5710
        %v7665 = vunpack.c.l.b16 %v5711
        %v7666 = vunpack.c.h.b16 %v5711
        %v7667 = vunpack.c.l.b16 %v5712
        %v7668 = vunpack.c.h.b16 %v5712
        %v7669 = vunpack.c.l.b16 %v5713
        %v7670 = vunpack.c.h.b16 %v5713
        %v7671 = vunpack.c.l.b16 %v5714
        %v7672 = vunpack.c.h.b16 %v5714
        %v7673 = vunpack.c.l.b16 %v5715
        %v7674 = vunpack.c.h.b16 %v5715
        %v7675 = vunpack.c.l.b16 %v5716
        %v7676 = vunpack.c.h.b16 %v5716
        %v7677 = vunpack.c.l.b16 %v5717
        %v7678 = vunpack.c.h.b16 %v5717
        %v7679 = vunpack.c.l.b16 %v5718
        %v7680 = vunpack.c.h.b16 %v5718
        %v7681 = vunpack.c.l.b16 %v5719
        %v7682 = vunpack.c.h.b16 %v5719
        %v7683 = vunpack.c.l.b16 %v5720
        %v7684 = vunpack.c.h.b16 %v5720
        %v7685 = vunpack.c.l.b16 %v5721
        %v7686 = vunpack.c.h.b16 %v5721
        %v7687 = vunpack.c.l.b16 %v5722
        %v7688 = vunpack.c.h.b16 %v5722
        %v7689 = vunpack.c.l.b16 %v5723
        %v7690 = vunpack.c.h.b16 %v5723
        %v7691 = vunpack.c.l.b16 %v5724
        %v7692 = vunpack.c.h.b16 %v5724
        %v7693 = vunpack.c.l.b16 %v5725
        %v7694 = vunpack.c.h.b16 %v5725
        %v7695 = vunpack.c.l.b16 %v5726
        %v7696 = vunpack.c.h.b16 %v5726
        %v7697 = vunpack.c.l.b16 %v5727
        %v7698 = vunpack.c.h.b16 %v5727
        %v7699 = vunpack.c.l.b16 %v5728
        %v7700 = vunpack.c.h.b16 %v5728
        %v7701 = vunpack.c.l.b16 %v5729
        %v7702 = vunpack.c.h.b16 %v5729
        %v7703 = vunpack.c.l.b16 %v5730
        %v7704 = vunpack.c.h.b16 %v5730
        %v7705 = vunpack.c.l.b16 %v5731
        %v7706 = vunpack.c.h.b16 %v5731
        %v7707 = vunpack.c.l.b16 %v5732
        %v7708 = vunpack.c.h.b16 %v5732
        %v7709 = vunpack.c.l.b16 %v5733
        %v7710 = vunpack.c.h.b16 %v5733
        %v7711 = vunpack.c.l.b16 %v5734
        %v7712 = vunpack.c.h.b16 %v5734
        %v7713 = vunpack.c.l.b16 %v5735
        %v7714 = vunpack.c.h.b16 %v5735
        %v7715 = vunpack.c.l.b16 %v5736
        %v7716 = vunpack.c.h.b16 %v5736
        %v7717 = vunpack.c.l.b16 %v5737
        %v7718 = vunpack.c.h.b16 %v5737
        %v7719 = vunpack.c.l.b16 %v5738
        %v7720 = vunpack.c.h.b16 %v5738
        %v7721 = vunpack.c.l.b16 %v5739
        %v7722 = vunpack.c.h.b16 %v5739
        %v7723 = vunpack.c.l.b16 %v5740
        %v7724 = vunpack.c.h.b16 %v5740
        %v7725 = vunpack.c.l.b16 %v5741
        %v7726 = vunpack.c.h.b16 %v5741
        %v7727 = vunpack.c.l.b16 %v5742
        %v7728 = vunpack.c.h.b16 %v5742
        %v7729 = vunpack.c.l.b16 %v5743
        %v7730 = vunpack.c.h.b16 %v5743
        %v7731 = vunpack.c.l.b16 %v5744
        %v7732 = vunpack.c.h.b16 %v5744
        %v7733 = vunpack.c.l.b16 %v5745
        %v7734 = vunpack.c.h.b16 %v5745
        %v7735 = vunpack.c.l.b16 %v5746
        %v7736 = vunpack.c.h.b16 %v5746
        %v7737 = vunpack.c.l.b16 %v5747
        %v7738 = vunpack.c.h.b16 %v5747
        %v7739 = vunpack.c.l.b16 %v5748
        %v7740 = vunpack.c.h.b16 %v5748
        %v7741 = vunpack.c.l.b16 %v5749
        %v7742 = vunpack.c.h.b16 %v5749
        %v7743 = vunpack.c.l.b16 %v5750
        %v7744 = vunpack.c.h.b16 %v5750
        %v7745 = vunpack.c.l.b16 %v5751
        %v7746 = vunpack.c.h.b16 %v5751
        %v7747 = vunpack.c.l.b16 %v5752
        %v7748 = vunpack.c.h.b16 %v5752
        %v7749 = vunpack.c.l.b16 %v5753
        %v7750 = vunpack.c.h.b16 %v5753
        %v7751 = vunpack.c.l.b16 %v5754
        %v7752 = vunpack.c.h.b16 %v5754
        %v7753 = vunpack.c.l.b16 %v5755
        %v7754 = vunpack.c.h.b16 %v5755
        %v7755 = vunpack.c.l.b16 %v5756
        %v7756 = vunpack.c.h.b16 %v5756
        %v7757 = vpack.c.b16 %v7633, %v7629
        %v7758 = vpack.c.b16 %v7634, %v7630
        %v7759 = vpack.c.b16 %v7635, %v7631
        %v7760 = vpack.c.b16 %v7636, %v7632
        %v7761 = vpack.c.b16 %v7641, %v7637
        %v7762 = vpack.c.b16 %v7642, %v7638
        %v7763 = vpack.c.b16 %v7643, %v7639
        %v7764 = vpack.c.b16 %v7644, %v7640
        %v7765 = vpack.c.b16 %v7649, %v7645
        %v7766 = vpack.c.b16 %v7650, %v7646
        %v7767 = vpack.c.b16 %v7651, %v7647
        %v7768 = vpack.c.b16 %v7652, %v7648
        %v7769 = vpack.c.b16 %v7657, %v7653
        %v7770 = vpack.c.b16 %v7658, %v7654
        %v7771 = vpack.c.b16 %v7659, %v7655
        %v7772 = vpack.c.b16 %v7660, %v7656
        %v7773 = vpack.c.b16 %v7665, %v7661
        %v7774 = vpack.c.b16 %v7666, %v7662
        %v7775 = vpack.c.b16 %v7667, %v7663
        %v7776 = vpack.c.b16 %v7668, %v7664
        %v7777 = vpack.c.b16 %v7673, %v7669
        %v7778 = vpack.c.b16 %v7674, %v7670
        %v7779 = vpack.c.b16 %v7675, %v7671
        %v7780 = vpack.c.b16 %v7676, %v7672
        %v7781 = vpack.c.b16 %v7681, %v7677
        %v7782 = vpack.c.b16 %v7682, %v7678
        %v7783 = vpack.c.b16 %v7683, %v7679
        %v7784 = vpack.c.b16 %v7684, %v7680
        %v7785 = vpack.c.b16 %v7689, %v7685
        %v7786 = vpack.c.b16 %v7690, %v7686
        %v7787 = vpack.c.b16 %v7691, %v7687
        %v7788 = vpack.c.b16 %v7692, %v7688
        %v7789 = vpack.c.b16 %v7697, %v7693
        %v7790 = vpack.c.b16 %v7698, %v7694
        %v7791 = vpack.c.b16 %v7699, %v7695
        %v7792 = vpack.c.b16 %v7700, %v7696
        %v7793 = vpack.c.b16 %v7705, %v7701
        %v7794 = vpack.c.b16 %v7706, %v7702
        %v7795 = vpack.c.b16 %v7707, %v7703
        %v7796 = vpack.c.b16 %v7708, %v7704
        %v7797 = vpack.c.b16 %v7713, %v7709
        %v7798 = vpack.c.b16 %v7714, %v7710
        %v7799 = vpack.c.b16 %v7715, %v7711
        %v7800 = vpack.c.b16 %v7716, %v7712
        %v7801 = vpack.c.b16 %v7721, %v7717
        %v7802 = vpack.c.b16 %v7722, %v7718
        %v7803 = vpack.c.b16 %v7723, %v7719
        %v7804 = vpack.c.b16 %v7724, %v7720
        %v7805 = vpack.c.b16 %v7729, %v7725
        %v7806 = vpack.c.b16 %v7730, %v7726
        %v7807 = vpack.c.b16 %v7731, %v7727
        %v7808 = vpack.c.b16 %v7732, %v7728
        %v7809 = vpack.c.b16 %v7737, %v7733
        %v7810 = vpack.c.b16 %v7738, %v7734
        %v7811 = vpack.c.b16 %v7739, %v7735
        %v7812 = vpack.c.b16 %v7740, %v7736
        %v7813 = vpack.c.b16 %v7745, %v7741
        %v7814 = vpack.c.b16 %v7746, %v7742
        %v7815 = vpack.c.b16 %v7747, %v7743
        %v7816 = vpack.c.b16 %v7748, %v7744
        %v7817 = vpack.c.b16 %v7753, %v7749
        %v7818 = vpack.c.b16 %v7754, %v7750
        %v7819 = vpack.c.b16 %v7755, %v7751
        %v7820 = vpack.c.b16 %v7756, %v7752
        %7885 = vmatpush.bf16.msra.mxu0 %v7785
        %7886 = vmatpush.bf16.msra.mxu0 %v7781
        %7887 = vmatpush.bf16.msra.mxu0 %v7777
        %7888 = vmatpush.bf16.msra.mxu0 %v7773
        %7889 = vmatpush.bf16.msra.mxu0 %v7769
        %7890 = vmatpush.bf16.msra.mxu0 %v7765
        %7891 = vmatpush.bf16.msra.mxu0 %v7761
        %7892 = vmatpush.bf16.msra.mxu0 %v7757
        %7893 = vmatmul.bf16.gmra.mxu0 %v7557
        %v7894 = vpop.f32.mrf.mxu0
        %v7895 = vadd.f32 0.0, %v7894
        %v7896 = vpop.f32.mrf.mxu0
        %v7897 = vadd.f32 0.0, %v7896
        %7898 = vmatmul.bf16.gmra.mxu0 %v7559
        %v7899 = vpop.f32.mrf.mxu0
        %v7900 = vadd.f32 0.0, %v7899
        %v7901 = vpop.f32.mrf.mxu0
        %v7902 = vadd.f32 0.0, %v7901
        %7903 = vdwg.mxu0
        %7904 = vmatpush.bf16.msra.mxu0 %v7817
        %7905 = vmatpush.bf16.msra.mxu0 %v7813
        %7906 = vmatpush.bf16.msra.mxu0 %v7809
        %7907 = vmatpush.bf16.msra.mxu0 %v7805
        %7908 = vmatpush.bf16.msra.mxu0 %v7801
        %7909 = vmatpush.bf16.msra.mxu0 %v7797
        %7910 = vmatpush.bf16.msra.mxu0 %v7793
        %7911 = vmatpush.bf16.msra.mxu0 %v7789
        %7912 = vmatmul.bf16.gmra.mxu0 %v7558
        %v7913 = vpop.f32.mrf.mxu0
        %v7914 = vadd.f32 %v7895, %v7913
        %v7915 = vpop.f32.mrf.mxu0
        %v7916 = vadd.f32 %v7897, %v7915
        %7917 = vmatmul.bf16.gmra.mxu0 %v7560
        %v7918 = vpop.f32.mrf.mxu0
        %v7919 = vadd.f32 %v7900, %v7918
        %v7920 = vpop.f32.mrf.mxu0
        %v7921 = vadd.f32 %v7902, %v7920
        %7922 = vdwg.mxu0
        %7923 = vmatpush.bf16.msra.mxu0 %v7786
        %7924 = vmatpush.bf16.msra.mxu0 %v7782
        %7925 = vmatpush.bf16.msra.mxu0 %v7778
        %7926 = vmatpush.bf16.msra.mxu0 %v7774
        %7927 = vmatpush.bf16.msra.mxu0 %v7770
        %7928 = vmatpush.bf16.msra.mxu0 %v7766
        %7929 = vmatpush.bf16.msra.mxu0 %v7762
        %7930 = vmatpush.bf16.msra.mxu0 %v7758
        %7931 = vmatmul.bf16.gmra.mxu0 %v7557
        %v7932 = vpop.f32.mrf.mxu0
        %v7933 = vadd.f32 0.0, %v7932
        %v7934 = vpop.f32.mrf.mxu0
        %v7935 = vadd.f32 0.0, %v7934
        %7936 = vmatmul.bf16.gmra.mxu0 %v7559
        %v7937 = vpop.f32.mrf.mxu0
        %v7938 = vadd.f32 0.0, %v7937
        %v7939 = vpop.f32.mrf.mxu0
        %v7940 = vadd.f32 0.0, %v7939
        %7941 = vdwg.mxu0
        %7942 = vmatpush.bf16.msra.mxu0 %v7818
        %7943 = vmatpush.bf16.msra.mxu0 %v7814
        %7944 = vmatpush.bf16.msra.mxu0 %v7810
        %7945 = vmatpush.bf16.msra.mxu0 %v7806
        %7946 = vmatpush.bf16.msra.mxu0 %v7802
        %7947 = vmatpush.bf16.msra.mxu0 %v7798
        %7948 = vmatpush.bf16.msra.mxu0 %v7794
        %7949 = vmatpush.bf16.msra.mxu0 %v7790
        %7950 = vmatmul.bf16.gmra.mxu0 %v7558
        %v7951 = vpop.f32.mrf.mxu0
        %v7952 = vadd.f32 %v7933, %v7951
        %v7953 = vpop.f32.mrf.mxu0
        %v7954 = vadd.f32 %v7935, %v7953
        %7955 = vmatmul.bf16.gmra.mxu0 %v7560
        %v7956 = vpop.f32.mrf.mxu0
        %v7957 = vadd.f32 %v7938, %v7956
        %v7958 = vpop.f32.mrf.mxu0
        %v7959 = vadd.f32 %v7940, %v7958
        %7960 = vdwg.mxu0
        %7961 = vmatpush.bf16.msra.mxu0 %v7787
        %7962 = vmatpush.bf16.msra.mxu0 %v7783
        %7963 = vmatpush.bf16.msra.mxu0 %v7779
        %7964 = vmatpush.bf16.msra.mxu0 %v7775
        %7965 = vmatpush.bf16.msra.mxu0 %v7771
        %7966 = vmatpush.bf16.msra.mxu0 %v7767
        %7967 = vmatpush.bf16.msra.mxu0 %v7763
        %7968 = vmatpush.bf16.msra.mxu0 %v7759
        %7969 = vmatmul.bf16.gmra.mxu0 %v7557
        %v7970 = vpop.f32.mrf.mxu0
        %v7971 = vadd.f32 0.0, %v7970
        %v7972 = vpop.f32.mrf.mxu0
        %v7973 = vadd.f32 0.0, %v7972
        %7974 = vmatmul.bf16.gmra.mxu0 %v7559
        %v7975 = vpop.f32.mrf.mxu0
        %v7976 = vadd.f32 0.0, %v7975
        %v7977 = vpop.f32.mrf.mxu0
        %v7978 = vadd.f32 0.0, %v7977
        %7979 = vdwg.mxu0
        %7980 = vmatpush.bf16.msra.mxu0 %v7819
        %7981 = vmatpush.bf16.msra.mxu0 %v7815
        %7982 = vmatpush.bf16.msra.mxu0 %v7811
        %7983 = vmatpush.bf16.msra.mxu0 %v7807
        %7984 = vmatpush.bf16.msra.mxu0 %v7803
        %7985 = vmatpush.bf16.msra.mxu0 %v7799
        %7986 = vmatpush.bf16.msra.mxu0 %v7795
        %7987 = vmatpush.bf16.msra.mxu0 %v7791
        %7988 = vmatmul.bf16.gmra.mxu0 %v7558
        %v7989 = vpop.f32.mrf.mxu0
        %v7990 = vadd.f32 %v7971, %v7989
        %v7991 = vpop.f32.mrf.mxu0
        %v7992 = vadd.f32 %v7973, %v7991
        %7993 = vmatmul.bf16.gmra.mxu0 %v7560
        %v7994 = vpop.f32.mrf.mxu0
        %v7995 = vadd.f32 %v7976, %v7994
        %v7996 = vpop.f32.mrf.mxu0
        %v7997 = vadd.f32 %v7978, %v7996
        %7998 = vdwg.mxu0
        %7999 = vmatpush.bf16.msra.mxu0 %v7788
        %8000 = vmatpush.bf16.msra.mxu0 %v7784
        %8001 = vmatpush.bf16.msra.mxu0 %v7780
        %8002 = vmatpush.bf16.msra.mxu0 %v7776
        %8003 = vmatpush.bf16.msra.mxu0 %v7772
        %8004 = vmatpush.bf16.msra.mxu0 %v7768
        %8005 = vmatpush.bf16.msra.mxu0 %v7764
        %8006 = vmatpush.bf16.msra.mxu0 %v7760
        %8007 = vmatmul.bf16.gmra.mxu0 %v7557
        %v8008 = vpop.f32.mrf.mxu0
        %v8009 = vadd.f32 0.0, %v8008
        %v8010 = vpop.f32.mrf.mxu0
        %v8011 = vadd.f32 0.0, %v8010
        %8012 = vmatmul.bf16.gmra.mxu0 %v7559
        %v8013 = vpop.f32.mrf.mxu0
        %v8014 = vadd.f32 0.0, %v8013
        %v8015 = vpop.f32.mrf.mxu0
        %v8016 = vadd.f32 0.0, %v8015
        %8017 = vdwg.mxu0
        %8018 = vmatpush.bf16.msra.mxu0 %v7820
        %8019 = vmatpush.bf16.msra.mxu0 %v7816
        %8020 = vmatpush.bf16.msra.mxu0 %v7812
        %8021 = vmatpush.bf16.msra.mxu0 %v7808
        %8022 = vmatpush.bf16.msra.mxu0 %v7804
        %8023 = vmatpush.bf16.msra.mxu0 %v7800
        %8024 = vmatpush.bf16.msra.mxu0 %v7796
        %8025 = vmatpush.bf16.msra.mxu0 %v7792
        %8026 = vmatmul.bf16.gmra.mxu0 %v7558
        %v8027 = vpop.f32.mrf.mxu0
        %v8028 = vadd.f32 %v8009, %v8027
        %v8029 = vpop.f32.mrf.mxu0
        %v8030 = vadd.f32 %v8011, %v8029
        %8031 = vmatmul.bf16.gmra.mxu0 %v7560
        %v8032 = vpop.f32.mrf.mxu0
        %v8033 = vadd.f32 %v8014, %v8032
        %v8034 = vpop.f32.mrf.mxu0
        %v8035 = vadd.f32 %v8016, %v8034
        %8036 = vdwg.mxu0
        %v8041 = vunpack.c.l.b16 %v669
        %v8042 = vunpack.c.h.b16 %v669
        %v8043 = vunpack.c.l.b16 %v670
        %v8044 = vunpack.c.h.b16 %v670
        %v8045 = vunpack.c.l.b16 %v671
        %v8046 = vunpack.c.h.b16 %v671
        %v8047 = vunpack.c.l.b16 %v672
        %v8048 = vunpack.c.h.b16 %v672
        %v8049 = vpack.c.b16 %v8043, %v8041
        %v8050 = vpack.c.b16 %v8044, %v8042
        %v8051 = vpack.c.b16 %v8047, %v8045
        %v8052 = vpack.c.b16 %v8048, %v8046
        %v8121 = vunpack.c.l.b16 %v5757
        %v8122 = vunpack.c.h.b16 %v5757
        %v8123 = vunpack.c.l.b16 %v5758
        %v8124 = vunpack.c.h.b16 %v5758
        %v8125 = vunpack.c.l.b16 %v5759
        %v8126 = vunpack.c.h.b16 %v5759
        %v8127 = vunpack.c.l.b16 %v5760
        %v8128 = vunpack.c.h.b16 %v5760
        %v8129 = vunpack.c.l.b16 %v5761
        %v8130 = vunpack.c.h.b16 %v5761
        %v8131 = vunpack.c.l.b16 %v5762
        %v8132 = vunpack.c.h.b16 %v5762
        %v8133 = vunpack.c.l.b16 %v5763
        %v8134 = vunpack.c.h.b16 %v5763
        %v8135 = vunpack.c.l.b16 %v5764
        %v8136 = vunpack.c.h.b16 %v5764
        %v8137 = vunpack.c.l.b16 %v5765
        %v8138 = vunpack.c.h.b16 %v5765
        %v8139 = vunpack.c.l.b16 %v5766
        %v8140 = vunpack.c.h.b16 %v5766
        %v8141 = vunpack.c.l.b16 %v5767
        %v8142 = vunpack.c.h.b16 %v5767
        %v8143 = vunpack.c.l.b16 %v5768
        %v8144 = vunpack.c.h.b16 %v5768
        %v8145 = vunpack.c.l.b16 %v5769
        %v8146 = vunpack.c.h.b16 %v5769
        %v8147 = vunpack.c.l.b16 %v5770
        %v8148 = vunpack.c.h.b16 %v5770
        %v8149 = vunpack.c.l.b16 %v5771
        %v8150 = vunpack.c.h.b16 %v5771
        %v8151 = vunpack.c.l.b16 %v5772
        %v8152 = vunpack.c.h.b16 %v5772
        %v8153 = vunpack.c.l.b16 %v5773
        %v8154 = vunpack.c.h.b16 %v5773
        %v8155 = vunpack.c.l.b16 %v5774
        %v8156 = vunpack.c.h.b16 %v5774
        %v8157 = vunpack.c.l.b16 %v5775
        %v8158 = vunpack.c.h.b16 %v5775
        %v8159 = vunpack.c.l.b16 %v5776
        %v8160 = vunpack.c.h.b16 %v5776
        %v8161 = vunpack.c.l.b16 %v5777
        %v8162 = vunpack.c.h.b16 %v5777
        %v8163 = vunpack.c.l.b16 %v5778
        %v8164 = vunpack.c.h.b16 %v5778
        %v8165 = vunpack.c.l.b16 %v5779
        %v8166 = vunpack.c.h.b16 %v5779
        %v8167 = vunpack.c.l.b16 %v5780
        %v8168 = vunpack.c.h.b16 %v5780
        %v8169 = vunpack.c.l.b16 %v5781
        %v8170 = vunpack.c.h.b16 %v5781
        %v8171 = vunpack.c.l.b16 %v5782
        %v8172 = vunpack.c.h.b16 %v5782
        %v8173 = vunpack.c.l.b16 %v5783
        %v8174 = vunpack.c.h.b16 %v5783
        %v8175 = vunpack.c.l.b16 %v5784
        %v8176 = vunpack.c.h.b16 %v5784
        %v8177 = vunpack.c.l.b16 %v5785
        %v8178 = vunpack.c.h.b16 %v5785
        %v8179 = vunpack.c.l.b16 %v5786
        %v8180 = vunpack.c.h.b16 %v5786
        %v8181 = vunpack.c.l.b16 %v5787
        %v8182 = vunpack.c.h.b16 %v5787
        %v8183 = vunpack.c.l.b16 %v5788
        %v8184 = vunpack.c.h.b16 %v5788
        %v8185 = vunpack.c.l.b16 %v5789
        %v8186 = vunpack.c.h.b16 %v5789
        %v8187 = vunpack.c.l.b16 %v5790
        %v8188 = vunpack.c.h.b16 %v5790
        %v8189 = vunpack.c.l.b16 %v5791
        %v8190 = vunpack.c.h.b16 %v5791
        %v8191 = vunpack.c.l.b16 %v5792
        %v8192 = vunpack.c.h.b16 %v5792
        %v8193 = vunpack.c.l.b16 %v5793
        %v8194 = vunpack.c.h.b16 %v5793
        %v8195 = vunpack.c.l.b16 %v5794
        %v8196 = vunpack.c.h.b16 %v5794
        %v8197 = vunpack.c.l.b16 %v5795
        %v8198 = vunpack.c.h.b16 %v5795
        %v8199 = vunpack.c.l.b16 %v5796
        %v8200 = vunpack.c.h.b16 %v5796
        %v8201 = vunpack.c.l.b16 %v5797
        %v8202 = vunpack.c.h.b16 %v5797
        %v8203 = vunpack.c.l.b16 %v5798
        %v8204 = vunpack.c.h.b16 %v5798
        %v8205 = vunpack.c.l.b16 %v5799
        %v8206 = vunpack.c.h.b16 %v5799
        %v8207 = vunpack.c.l.b16 %v5800
        %v8208 = vunpack.c.h.b16 %v5800
        %v8209 = vunpack.c.l.b16 %v5801
        %v8210 = vunpack.c.h.b16 %v5801
        %v8211 = vunpack.c.l.b16 %v5802
        %v8212 = vunpack.c.h.b16 %v5802
        %v8213 = vunpack.c.l.b16 %v5803
        %v8214 = vunpack.c.h.b16 %v5803
        %v8215 = vunpack.c.l.b16 %v5804
        %v8216 = vunpack.c.h.b16 %v5804
        %v8217 = vunpack.c.l.b16 %v5805
        %v8218 = vunpack.c.h.b16 %v5805
        %v8219 = vunpack.c.l.b16 %v5806
        %v8220 = vunpack.c.h.b16 %v5806
        %v8221 = vunpack.c.l.b16 %v5807
        %v8222 = vunpack.c.h.b16 %v5807
        %v8223 = vunpack.c.l.b16 %v5808
        %v8224 = vunpack.c.h.b16 %v5808
        %v8225 = vunpack.c.l.b16 %v5809
        %v8226 = vunpack.c.h.b16 %v5809
        %v8227 = vunpack.c.l.b16 %v5810
        %v8228 = vunpack.c.h.b16 %v5810
        %v8229 = vunpack.c.l.b16 %v5811
        %v8230 = vunpack.c.h.b16 %v5811
        %v8231 = vunpack.c.l.b16 %v5812
        %v8232 = vunpack.c.h.b16 %v5812
        %v8233 = vunpack.c.l.b16 %v5813
        %v8234 = vunpack.c.h.b16 %v5813
        %v8235 = vunpack.c.l.b16 %v5814
        %v8236 = vunpack.c.h.b16 %v5814
        %v8237 = vunpack.c.l.b16 %v5815
        %v8238 = vunpack.c.h.b16 %v5815
        %v8239 = vunpack.c.l.b16 %v5816
        %v8240 = vunpack.c.h.b16 %v5816
        %v8241 = vunpack.c.l.b16 %v5817
        %v8242 = vunpack.c.h.b16 %v5817
        %v8243 = vunpack.c.l.b16 %v5818
        %v8244 = vunpack.c.h.b16 %v5818
        %v8245 = vunpack.c.l.b16 %v5819
        %v8246 = vunpack.c.h.b16 %v5819
        %v8247 = vunpack.c.l.b16 %v5820
        %v8248 = vunpack.c.h.b16 %v5820
        %v8249 = vpack.c.b16 %v8125, %v8121
        %v8250 = vpack.c.b16 %v8126, %v8122
        %v8251 = vpack.c.b16 %v8127, %v8123
        %v8252 = vpack.c.b16 %v8128, %v8124
        %v8253 = vpack.c.b16 %v8133, %v8129
        %v8254 = vpack.c.b16 %v8134, %v8130
        %v8255 = vpack.c.b16 %v8135, %v8131
        %v8256 = vpack.c.b16 %v8136, %v8132
        %v8257 = vpack.c.b16 %v8141, %v8137
        %v8258 = vpack.c.b16 %v8142, %v8138
        %v8259 = vpack.c.b16 %v8143, %v8139
        %v8260 = vpack.c.b16 %v8144, %v8140
        %v8261 = vpack.c.b16 %v8149, %v8145
        %v8262 = vpack.c.b16 %v8150, %v8146
        %v8263 = vpack.c.b16 %v8151, %v8147
        %v8264 = vpack.c.b16 %v8152, %v8148
        %v8265 = vpack.c.b16 %v8157, %v8153
        %v8266 = vpack.c.b16 %v8158, %v8154
        %v8267 = vpack.c.b16 %v8159, %v8155
        %v8268 = vpack.c.b16 %v8160, %v8156
        %v8269 = vpack.c.b16 %v8165, %v8161
        %v8270 = vpack.c.b16 %v8166, %v8162
        %v8271 = vpack.c.b16 %v8167, %v8163
        %v8272 = vpack.c.b16 %v8168, %v8164
        %v8273 = vpack.c.b16 %v8173, %v8169
        %v8274 = vpack.c.b16 %v8174, %v8170
        %v8275 = vpack.c.b16 %v8175, %v8171
        %v8276 = vpack.c.b16 %v8176, %v8172
        %v8277 = vpack.c.b16 %v8181, %v8177
        %v8278 = vpack.c.b16 %v8182, %v8178
        %v8279 = vpack.c.b16 %v8183, %v8179
        %v8280 = vpack.c.b16 %v8184, %v8180
        %v8281 = vpack.c.b16 %v8189, %v8185
        %v8282 = vpack.c.b16 %v8190, %v8186
        %v8283 = vpack.c.b16 %v8191, %v8187
        %v8284 = vpack.c.b16 %v8192, %v8188
        %v8285 = vpack.c.b16 %v8197, %v8193
        %v8286 = vpack.c.b16 %v8198, %v8194
        %v8287 = vpack.c.b16 %v8199, %v8195
        %v8288 = vpack.c.b16 %v8200, %v8196
        %v8289 = vpack.c.b16 %v8205, %v8201
        %v8290 = vpack.c.b16 %v8206, %v8202
        %v8291 = vpack.c.b16 %v8207, %v8203
        %v8292 = vpack.c.b16 %v8208, %v8204
        %v8293 = vpack.c.b16 %v8213, %v8209
        %v8294 = vpack.c.b16 %v8214, %v8210
        %v8295 = vpack.c.b16 %v8215, %v8211
        %v8296 = vpack.c.b16 %v8216, %v8212
        %v8297 = vpack.c.b16 %v8221, %v8217
        %v8298 = vpack.c.b16 %v8222, %v8218
        %v8299 = vpack.c.b16 %v8223, %v8219
        %v8300 = vpack.c.b16 %v8224, %v8220
        %v8301 = vpack.c.b16 %v8229, %v8225
        %v8302 = vpack.c.b16 %v8230, %v8226
        %v8303 = vpack.c.b16 %v8231, %v8227
        %v8304 = vpack.c.b16 %v8232, %v8228
        %v8305 = vpack.c.b16 %v8237, %v8233
        %v8306 = vpack.c.b16 %v8238, %v8234
        %v8307 = vpack.c.b16 %v8239, %v8235
        %v8308 = vpack.c.b16 %v8240, %v8236
        %v8309 = vpack.c.b16 %v8245, %v8241
        %v8310 = vpack.c.b16 %v8246, %v8242
        %v8311 = vpack.c.b16 %v8247, %v8243
        %v8312 = vpack.c.b16 %v8248, %v8244
        %8377 = vmatpush.bf16.msra.mxu0 %v8277
        %8378 = vmatpush.bf16.msra.mxu0 %v8273
        %8379 = vmatpush.bf16.msra.mxu0 %v8269
        %8380 = vmatpush.bf16.msra.mxu0 %v8265
        %8381 = vmatpush.bf16.msra.mxu0 %v8261
        %8382 = vmatpush.bf16.msra.mxu0 %v8257
        %8383 = vmatpush.bf16.msra.mxu0 %v8253
        %8384 = vmatpush.bf16.msra.mxu0 %v8249
        %8385 = vmatmul.bf16.gmra.mxu0 %v8049
        %v8386 = vpop.f32.mrf.mxu0
        %v8387 = vadd.f32 0.0, %v8386
        %v8388 = vpop.f32.mrf.mxu0
        %v8389 = vadd.f32 0.0, %v8388
        %8390 = vmatmul.bf16.gmra.mxu0 %v8051
        %v8391 = vpop.f32.mrf.mxu0
        %v8392 = vadd.f32 0.0, %v8391
        %v8393 = vpop.f32.mrf.mxu0
        %v8394 = vadd.f32 0.0, %v8393
        %8395 = vdwg.mxu0
        %8396 = vmatpush.bf16.msra.mxu0 %v8309
        %8397 = vmatpush.bf16.msra.mxu0 %v8305
        %8398 = vmatpush.bf16.msra.mxu0 %v8301
        %8399 = vmatpush.bf16.msra.mxu0 %v8297
        %8400 = vmatpush.bf16.msra.mxu0 %v8293
        %8401 = vmatpush.bf16.msra.mxu0 %v8289
        %8402 = vmatpush.bf16.msra.mxu0 %v8285
        %8403 = vmatpush.bf16.msra.mxu0 %v8281
        %8404 = vmatmul.bf16.gmra.mxu0 %v8050
        %v8405 = vpop.f32.mrf.mxu0
        %v8406 = vadd.f32 %v8387, %v8405
        %v8407 = vpop.f32.mrf.mxu0
        %v8408 = vadd.f32 %v8389, %v8407
        %8409 = vmatmul.bf16.gmra.mxu0 %v8052
        %v8410 = vpop.f32.mrf.mxu0
        %v8411 = vadd.f32 %v8392, %v8410
        %v8412 = vpop.f32.mrf.mxu0
        %v8413 = vadd.f32 %v8394, %v8412
        %8414 = vdwg.mxu0
        %8415 = vmatpush.bf16.msra.mxu0 %v8278
        %8416 = vmatpush.bf16.msra.mxu0 %v8274
        %8417 = vmatpush.bf16.msra.mxu0 %v8270
        %8418 = vmatpush.bf16.msra.mxu0 %v8266
        %8419 = vmatpush.bf16.msra.mxu0 %v8262
        %8420 = vmatpush.bf16.msra.mxu0 %v8258
        %8421 = vmatpush.bf16.msra.mxu0 %v8254
        %8422 = vmatpush.bf16.msra.mxu0 %v8250
        %8423 = vmatmul.bf16.gmra.mxu0 %v8049
        %v8424 = vpop.f32.mrf.mxu0
        %v8425 = vadd.f32 0.0, %v8424
        %v8426 = vpop.f32.mrf.mxu0
        %v8427 = vadd.f32 0.0, %v8426
        %8428 = vmatmul.bf16.gmra.mxu0 %v8051
        %v8429 = vpop.f32.mrf.mxu0
        %v8430 = vadd.f32 0.0, %v8429
        %v8431 = vpop.f32.mrf.mxu0
        %v8432 = vadd.f32 0.0, %v8431
        %8433 = vdwg.mxu0
        %8434 = vmatpush.bf16.msra.mxu0 %v8310
        %8435 = vmatpush.bf16.msra.mxu0 %v8306
        %8436 = vmatpush.bf16.msra.mxu0 %v8302
        %8437 = vmatpush.bf16.msra.mxu0 %v8298
        %8438 = vmatpush.bf16.msra.mxu0 %v8294
        %8439 = vmatpush.bf16.msra.mxu0 %v8290
        %8440 = vmatpush.bf16.msra.mxu0 %v8286
        %8441 = vmatpush.bf16.msra.mxu0 %v8282
        %8442 = vmatmul.bf16.gmra.mxu0 %v8050
        %v8443 = vpop.f32.mrf.mxu0
        %v8444 = vadd.f32 %v8425, %v8443
        %v8445 = vpop.f32.mrf.mxu0
        %v8446 = vadd.f32 %v8427, %v8445
        %8447 = vmatmul.bf16.gmra.mxu0 %v8052
        %v8448 = vpop.f32.mrf.mxu0
        %v8449 = vadd.f32 %v8430, %v8448
        %v8450 = vpop.f32.mrf.mxu0
        %v8451 = vadd.f32 %v8432, %v8450
        %8452 = vdwg.mxu0
        %8453 = vmatpush.bf16.msra.mxu0 %v8279
        %8454 = vmatpush.bf16.msra.mxu0 %v8275
        %8455 = vmatpush.bf16.msra.mxu0 %v8271
        %8456 = vmatpush.bf16.msra.mxu0 %v8267
        %8457 = vmatpush.bf16.msra.mxu0 %v8263
        %8458 = vmatpush.bf16.msra.mxu0 %v8259
        %8459 = vmatpush.bf16.msra.mxu0 %v8255
        %8460 = vmatpush.bf16.msra.mxu0 %v8251
        %8461 = vmatmul.bf16.gmra.mxu0 %v8049
        %v8462 = vpop.f32.mrf.mxu0
        %v8463 = vadd.f32 0.0, %v8462
        %v8464 = vpop.f32.mrf.mxu0
        %v8465 = vadd.f32 0.0, %v8464
        %8466 = vmatmul.bf16.gmra.mxu0 %v8051
        %v8467 = vpop.f32.mrf.mxu0
        %v8468 = vadd.f32 0.0, %v8467
        %v8469 = vpop.f32.mrf.mxu0
        %v8470 = vadd.f32 0.0, %v8469
        %8471 = vdwg.mxu0
        %8472 = vmatpush.bf16.msra.mxu0 %v8311
        %8473 = vmatpush.bf16.msra.mxu0 %v8307
        %8474 = vmatpush.bf16.msra.mxu0 %v8303
        %8475 = vmatpush.bf16.msra.mxu0 %v8299
        %8476 = vmatpush.bf16.msra.mxu0 %v8295
        %8477 = vmatpush.bf16.msra.mxu0 %v8291
        %8478 = vmatpush.bf16.msra.mxu0 %v8287
        %8479 = vmatpush.bf16.msra.mxu0 %v8283
        %8480 = vmatmul.bf16.gmra.mxu0 %v8050
        %v8481 = vpop.f32.mrf.mxu0
        %v8482 = vadd.f32 %v8463, %v8481
        %v8483 = vpop.f32.mrf.mxu0
        %v8484 = vadd.f32 %v8465, %v8483
        %8485 = vmatmul.bf16.gmra.mxu0 %v8052
        %v8486 = vpop.f32.mrf.mxu0
        %v8487 = vadd.f32 %v8468, %v8486
        %v8488 = vpop.f32.mrf.mxu0
        %v8489 = vadd.f32 %v8470, %v8488
        %8490 = vdwg.mxu0
        %8491 = vmatpush.bf16.msra.mxu0 %v8280
        %8492 = vmatpush.bf16.msra.mxu0 %v8276
        %8493 = vmatpush.bf16.msra.mxu0 %v8272
        %8494 = vmatpush.bf16.msra.mxu0 %v8268
        %8495 = vmatpush.bf16.msra.mxu0 %v8264
        %8496 = vmatpush.bf16.msra.mxu0 %v8260
        %8497 = vmatpush.bf16.msra.mxu0 %v8256
        %8498 = vmatpush.bf16.msra.mxu0 %v8252
        %8499 = vmatmul.bf16.gmra.mxu0 %v8049
        %v8500 = vpop.f32.mrf.mxu0
        %v8501 = vadd.f32 0.0, %v8500
        %v8502 = vpop.f32.mrf.mxu0
        %v8503 = vadd.f32 0.0, %v8502
        %8504 = vmatmul.bf16.gmra.mxu0 %v8051
        %v8505 = vpop.f32.mrf.mxu0
        %v8506 = vadd.f32 0.0, %v8505
        %v8507 = vpop.f32.mrf.mxu0
        %v8508 = vadd.f32 0.0, %v8507
        %8509 = vdwg.mxu0
        %8510 = vmatpush.bf16.msra.mxu0 %v8312
        %8511 = vmatpush.bf16.msra.mxu0 %v8308
        %8512 = vmatpush.bf16.msra.mxu0 %v8304
        %8513 = vmatpush.bf16.msra.mxu0 %v8300
        %8514 = vmatpush.bf16.msra.mxu0 %v8296
        %8515 = vmatpush.bf16.msra.mxu0 %v8292
        %8516 = vmatpush.bf16.msra.mxu0 %v8288
        %8517 = vmatpush.bf16.msra.mxu0 %v8284
        %8518 = vmatmul.bf16.gmra.mxu0 %v8050
        %v8519 = vpop.f32.mrf.mxu0
        %v8520 = vadd.f32 %v8501, %v8519
        %v8521 = vpop.f32.mrf.mxu0
        %v8522 = vadd.f32 %v8503, %v8521
        %8523 = vmatmul.bf16.gmra.mxu0 %v8052
        %v8524 = vpop.f32.mrf.mxu0
        %v8525 = vadd.f32 %v8506, %v8524
        %v8526 = vpop.f32.mrf.mxu0
        %v8527 = vadd.f32 %v8508, %v8526
        %8528 = vdwg.mxu0
        %v8533 = vunpack.c.l.b16 %v673
        %v8534 = vunpack.c.h.b16 %v673
        %v8535 = vunpack.c.l.b16 %v674
        %v8536 = vunpack.c.h.b16 %v674
        %v8537 = vunpack.c.l.b16 %v675
        %v8538 = vunpack.c.h.b16 %v675
        %v8539 = vunpack.c.l.b16 %v676
        %v8540 = vunpack.c.h.b16 %v676
        %v8541 = vpack.c.b16 %v8535, %v8533
        %v8542 = vpack.c.b16 %v8536, %v8534
        %v8543 = vpack.c.b16 %v8539, %v8537
        %v8544 = vpack.c.b16 %v8540, %v8538
        %v8613 = vunpack.c.l.b16 %v5821
        %v8614 = vunpack.c.h.b16 %v5821
        %v8615 = vunpack.c.l.b16 %v5822
        %v8616 = vunpack.c.h.b16 %v5822
        %v8617 = vunpack.c.l.b16 %v5823
        %v8618 = vunpack.c.h.b16 %v5823
        %v8619 = vunpack.c.l.b16 %v5824
        %v8620 = vunpack.c.h.b16 %v5824
        %v8621 = vunpack.c.l.b16 %v5825
        %v8622 = vunpack.c.h.b16 %v5825
        %v8623 = vunpack.c.l.b16 %v5826
        %v8624 = vunpack.c.h.b16 %v5826
        %v8625 = vunpack.c.l.b16 %v5827
        %v8626 = vunpack.c.h.b16 %v5827
        %v8627 = vunpack.c.l.b16 %v5828
        %v8628 = vunpack.c.h.b16 %v5828
        %v8629 = vunpack.c.l.b16 %v5829
        %v8630 = vunpack.c.h.b16 %v5829
        %v8631 = vunpack.c.l.b16 %v5830
        %v8632 = vunpack.c.h.b16 %v5830
        %v8633 = vunpack.c.l.b16 %v5831
        %v8634 = vunpack.c.h.b16 %v5831
        %v8635 = vunpack.c.l.b16 %v5832
        %v8636 = vunpack.c.h.b16 %v5832
        %v8637 = vunpack.c.l.b16 %v5833
        %v8638 = vunpack.c.h.b16 %v5833
        %v8639 = vunpack.c.l.b16 %v5834
        %v8640 = vunpack.c.h.b16 %v5834
        %v8641 = vunpack.c.l.b16 %v5835
        %v8642 = vunpack.c.h.b16 %v5835
        %v8643 = vunpack.c.l.b16 %v5836
        %v8644 = vunpack.c.h.b16 %v5836
        %v8645 = vunpack.c.l.b16 %v5837
        %v8646 = vunpack.c.h.b16 %v5837
        %v8647 = vunpack.c.l.b16 %v5838
        %v8648 = vunpack.c.h.b16 %v5838
        %v8649 = vunpack.c.l.b16 %v5839
        %v8650 = vunpack.c.h.b16 %v5839
        %v8651 = vunpack.c.l.b16 %v5840
        %v8652 = vunpack.c.h.b16 %v5840
        %v8653 = vunpack.c.l.b16 %v5841
        %v8654 = vunpack.c.h.b16 %v5841
        %v8655 = vunpack.c.l.b16 %v5842
        %v8656 = vunpack.c.h.b16 %v5842
        %v8657 = vunpack.c.l.b16 %v5843
        %v8658 = vunpack.c.h.b16 %v5843
        %v8659 = vunpack.c.l.b16 %v5844
        %v8660 = vunpack.c.h.b16 %v5844
        %v8661 = vunpack.c.l.b16 %v5845
        %v8662 = vunpack.c.h.b16 %v5845
        %v8663 = vunpack.c.l.b16 %v5846
        %v8664 = vunpack.c.h.b16 %v5846
        %v8665 = vunpack.c.l.b16 %v5847
        %v8666 = vunpack.c.h.b16 %v5847
        %v8667 = vunpack.c.l.b16 %v5848
        %v8668 = vunpack.c.h.b16 %v5848
        %v8669 = vunpack.c.l.b16 %v5849
        %v8670 = vunpack.c.h.b16 %v5849
        %v8671 = vunpack.c.l.b16 %v5850
        %v8672 = vunpack.c.h.b16 %v5850
        %v8673 = vunpack.c.l.b16 %v5851
        %v8674 = vunpack.c.h.b16 %v5851
        %v8675 = vunpack.c.l.b16 %v5852
        %v8676 = vunpack.c.h.b16 %v5852
        %v8677 = vunpack.c.l.b16 %v5853
        %v8678 = vunpack.c.h.b16 %v5853
        %v8679 = vunpack.c.l.b16 %v5854
        %v8680 = vunpack.c.h.b16 %v5854
        %v8681 = vunpack.c.l.b16 %v5855
        %v8682 = vunpack.c.h.b16 %v5855
        %v8683 = vunpack.c.l.b16 %v5856
        %v8684 = vunpack.c.h.b16 %v5856
        %v8685 = vunpack.c.l.b16 %v5857
        %v8686 = vunpack.c.h.b16 %v5857
        %v8687 = vunpack.c.l.b16 %v5858
        %v8688 = vunpack.c.h.b16 %v5858
        %v8689 = vunpack.c.l.b16 %v5859
        %v8690 = vunpack.c.h.b16 %v5859
        %v8691 = vunpack.c.l.b16 %v5860
        %v8692 = vunpack.c.h.b16 %v5860
        %v8693 = vunpack.c.l.b16 %v5861
        %v8694 = vunpack.c.h.b16 %v5861
        %v8695 = vunpack.c.l.b16 %v5862
        %v8696 = vunpack.c.h.b16 %v5862
        %v8697 = vunpack.c.l.b16 %v5863
        %v8698 = vunpack.c.h.b16 %v5863
        %v8699 = vunpack.c.l.b16 %v5864
        %v8700 = vunpack.c.h.b16 %v5864
        %v8701 = vunpack.c.l.b16 %v5865
        %v8702 = vunpack.c.h.b16 %v5865
        %v8703 = vunpack.c.l.b16 %v5866
        %v8704 = vunpack.c.h.b16 %v5866
        %v8705 = vunpack.c.l.b16 %v5867
        %v8706 = vunpack.c.h.b16 %v5867
        %v8707 = vunpack.c.l.b16 %v5868
        %v8708 = vunpack.c.h.b16 %v5868
        %v8709 = vunpack.c.l.b16 %v5869
        %v8710 = vunpack.c.h.b16 %v5869
        %v8711 = vunpack.c.l.b16 %v5870
        %v8712 = vunpack.c.h.b16 %v5870
        %v8713 = vunpack.c.l.b16 %v5871
        %v8714 = vunpack.c.h.b16 %v5871
        %v8715 = vunpack.c.l.b16 %v5872
        %v8716 = vunpack.c.h.b16 %v5872
        %v8717 = vunpack.c.l.b16 %v5873
        %v8718 = vunpack.c.h.b16 %v5873
        %v8719 = vunpack.c.l.b16 %v5874
        %v8720 = vunpack.c.h.b16 %v5874
        %v8721 = vunpack.c.l.b16 %v5875
        %v8722 = vunpack.c.h.b16 %v5875
        %v8723 = vunpack.c.l.b16 %v5876
        %v8724 = vunpack.c.h.b16 %v5876
        %v8725 = vunpack.c.l.b16 %v5877
        %v8726 = vunpack.c.h.b16 %v5877
        %v8727 = vunpack.c.l.b16 %v5878
        %v8728 = vunpack.c.h.b16 %v5878
        %v8729 = vunpack.c.l.b16 %v5879
        %v8730 = vunpack.c.h.b16 %v5879
        %v8731 = vunpack.c.l.b16 %v5880
        %v8732 = vunpack.c.h.b16 %v5880
        %v8733 = vunpack.c.l.b16 %v5881
        %v8734 = vunpack.c.h.b16 %v5881
        %v8735 = vunpack.c.l.b16 %v5882
        %v8736 = vunpack.c.h.b16 %v5882
        %v8737 = vunpack.c.l.b16 %v5883
        %v8738 = vunpack.c.h.b16 %v5883
        %v8739 = vunpack.c.l.b16 %v5884
        %v8740 = vunpack.c.h.b16 %v5884
        %v8741 = vpack.c.b16 %v8617, %v8613
        %v8742 = vpack.c.b16 %v8618, %v8614
        %v8743 = vpack.c.b16 %v8619, %v8615
        %v8744 = vpack.c.b16 %v8620, %v8616
        %v8745 = vpack.c.b16 %v8625, %v8621
        %v8746 = vpack.c.b16 %v8626, %v8622
        %v8747 = vpack.c.b16 %v8627, %v8623
        %v8748 = vpack.c.b16 %v8628, %v8624
        %v8749 = vpack.c.b16 %v8633, %v8629
        %v8750 = vpack.c.b16 %v8634, %v8630
        %v8751 = vpack.c.b16 %v8635, %v8631
        %v8752 = vpack.c.b16 %v8636, %v8632
        %v8753 = vpack.c.b16 %v8641, %v8637
        %v8754 = vpack.c.b16 %v8642, %v8638
        %v8755 = vpack.c.b16 %v8643, %v8639
        %v8756 = vpack.c.b16 %v8644, %v8640
        %v8757 = vpack.c.b16 %v8649, %v8645
        %v8758 = vpack.c.b16 %v8650, %v8646
        %v8759 = vpack.c.b16 %v8651, %v8647
        %v8760 = vpack.c.b16 %v8652, %v8648
        %v8761 = vpack.c.b16 %v8657, %v8653
        %v8762 = vpack.c.b16 %v8658, %v8654
        %v8763 = vpack.c.b16 %v8659, %v8655
        %v8764 = vpack.c.b16 %v8660, %v8656
        %v8765 = vpack.c.b16 %v8665, %v8661
        %v8766 = vpack.c.b16 %v8666, %v8662
        %v8767 = vpack.c.b16 %v8667, %v8663
        %v8768 = vpack.c.b16 %v8668, %v8664
        %v8769 = vpack.c.b16 %v8673, %v8669
        %v8770 = vpack.c.b16 %v8674, %v8670
        %v8771 = vpack.c.b16 %v8675, %v8671
        %v8772 = vpack.c.b16 %v8676, %v8672
        %v8773 = vpack.c.b16 %v8681, %v8677
        %v8774 = vpack.c.b16 %v8682, %v8678
        %v8775 = vpack.c.b16 %v8683, %v8679
        %v8776 = vpack.c.b16 %v8684, %v8680
        %v8777 = vpack.c.b16 %v8689, %v8685
        %v8778 = vpack.c.b16 %v8690, %v8686
        %v8779 = vpack.c.b16 %v8691, %v8687
        %v8780 = vpack.c.b16 %v8692, %v8688
        %v8781 = vpack.c.b16 %v8697, %v8693
        %v8782 = vpack.c.b16 %v8698, %v8694
        %v8783 = vpack.c.b16 %v8699, %v8695
        %v8784 = vpack.c.b16 %v8700, %v8696
        %v8785 = vpack.c.b16 %v8705, %v8701
        %v8786 = vpack.c.b16 %v8706, %v8702
        %v8787 = vpack.c.b16 %v8707, %v8703
        %v8788 = vpack.c.b16 %v8708, %v8704
        %v8789 = vpack.c.b16 %v8713, %v8709
        %v8790 = vpack.c.b16 %v8714, %v8710
        %v8791 = vpack.c.b16 %v8715, %v8711
        %v8792 = vpack.c.b16 %v8716, %v8712
        %v8793 = vpack.c.b16 %v8721, %v8717
        %v8794 = vpack.c.b16 %v8722, %v8718
        %v8795 = vpack.c.b16 %v8723, %v8719
        %v8796 = vpack.c.b16 %v8724, %v8720
        %v8797 = vpack.c.b16 %v8729, %v8725
        %v8798 = vpack.c.b16 %v8730, %v8726
        %v8799 = vpack.c.b16 %v8731, %v8727
        %v8800 = vpack.c.b16 %v8732, %v8728
        %v8801 = vpack.c.b16 %v8737, %v8733
        %v8802 = vpack.c.b16 %v8738, %v8734
        %v8803 = vpack.c.b16 %v8739, %v8735
        %v8804 = vpack.c.b16 %v8740, %v8736
        %8869 = vmatpush.bf16.msra.mxu0 %v8769
        %8870 = vmatpush.bf16.msra.mxu0 %v8765
        %8871 = vmatpush.bf16.msra.mxu0 %v8761
        %8872 = vmatpush.bf16.msra.mxu0 %v8757
        %8873 = vmatpush.bf16.msra.mxu0 %v8753
        %8874 = vmatpush.bf16.msra.mxu0 %v8749
        %8875 = vmatpush.bf16.msra.mxu0 %v8745
        %8876 = vmatpush.bf16.msra.mxu0 %v8741
        %8877 = vmatmul.bf16.gmra.mxu0 %v8541
        %v8878 = vpop.f32.mrf.mxu0
        %v8879 = vadd.f32 0.0, %v8878
        %v8880 = vpop.f32.mrf.mxu0
        %v8881 = vadd.f32 0.0, %v8880
        %8882 = vmatmul.bf16.gmra.mxu0 %v8543
        %v8883 = vpop.f32.mrf.mxu0
        %v8884 = vadd.f32 0.0, %v8883
        %v8885 = vpop.f32.mrf.mxu0
        %v8886 = vadd.f32 0.0, %v8885
        %8887 = vdwg.mxu0
        %8888 = vmatpush.bf16.msra.mxu0 %v8801
        %8889 = vmatpush.bf16.msra.mxu0 %v8797
        %8890 = vmatpush.bf16.msra.mxu0 %v8793
        %8891 = vmatpush.bf16.msra.mxu0 %v8789
        %8892 = vmatpush.bf16.msra.mxu0 %v8785
        %8893 = vmatpush.bf16.msra.mxu0 %v8781
        %8894 = vmatpush.bf16.msra.mxu0 %v8777
        %8895 = vmatpush.bf16.msra.mxu0 %v8773
        %8896 = vmatmul.bf16.gmra.mxu0 %v8542
        %v8897 = vpop.f32.mrf.mxu0
        %v8898 = vadd.f32 %v8879, %v8897
        %v8899 = vpop.f32.mrf.mxu0
        %v8900 = vadd.f32 %v8881, %v8899
        %8901 = vmatmul.bf16.gmra.mxu0 %v8544
        %v8902 = vpop.f32.mrf.mxu0
        %v8903 = vadd.f32 %v8884, %v8902
        %v8904 = vpop.f32.mrf.mxu0
        %v8905 = vadd.f32 %v8886, %v8904
        %8906 = vdwg.mxu0
        %8907 = vmatpush.bf16.msra.mxu0 %v8770
        %8908 = vmatpush.bf16.msra.mxu0 %v8766
        %8909 = vmatpush.bf16.msra.mxu0 %v8762
        %8910 = vmatpush.bf16.msra.mxu0 %v8758
        %8911 = vmatpush.bf16.msra.mxu0 %v8754
        %8912 = vmatpush.bf16.msra.mxu0 %v8750
        %8913 = vmatpush.bf16.msra.mxu0 %v8746
        %8914 = vmatpush.bf16.msra.mxu0 %v8742
        %8915 = vmatmul.bf16.gmra.mxu0 %v8541
        %v8916 = vpop.f32.mrf.mxu0
        %v8917 = vadd.f32 0.0, %v8916
        %v8918 = vpop.f32.mrf.mxu0
        %v8919 = vadd.f32 0.0, %v8918
        %8920 = vmatmul.bf16.gmra.mxu0 %v8543
        %v8921 = vpop.f32.mrf.mxu0
        %v8922 = vadd.f32 0.0, %v8921
        %v8923 = vpop.f32.mrf.mxu0
        %v8924 = vadd.f32 0.0, %v8923
        %8925 = vdwg.mxu0
        %8926 = vmatpush.bf16.msra.mxu0 %v8802
        %8927 = vmatpush.bf16.msra.mxu0 %v8798
        %8928 = vmatpush.bf16.msra.mxu0 %v8794
        %8929 = vmatpush.bf16.msra.mxu0 %v8790
        %8930 = vmatpush.bf16.msra.mxu0 %v8786
        %8931 = vmatpush.bf16.msra.mxu0 %v8782
        %8932 = vmatpush.bf16.msra.mxu0 %v8778
        %8933 = vmatpush.bf16.msra.mxu0 %v8774
        %8934 = vmatmul.bf16.gmra.mxu0 %v8542
        %v8935 = vpop.f32.mrf.mxu0
        %v8936 = vadd.f32 %v8917, %v8935
        %v8937 = vpop.f32.mrf.mxu0
        %v8938 = vadd.f32 %v8919, %v8937
        %8939 = vmatmul.bf16.gmra.mxu0 %v8544
        %v8940 = vpop.f32.mrf.mxu0
        %v8941 = vadd.f32 %v8922, %v8940
        %v8942 = vpop.f32.mrf.mxu0
        %v8943 = vadd.f32 %v8924, %v8942
        %8944 = vdwg.mxu0
        %8945 = vmatpush.bf16.msra.mxu0 %v8771
        %8946 = vmatpush.bf16.msra.mxu0 %v8767
        %8947 = vmatpush.bf16.msra.mxu0 %v8763
        %8948 = vmatpush.bf16.msra.mxu0 %v8759
        %8949 = vmatpush.bf16.msra.mxu0 %v8755
        %8950 = vmatpush.bf16.msra.mxu0 %v8751
        %8951 = vmatpush.bf16.msra.mxu0 %v8747
        %8952 = vmatpush.bf16.msra.mxu0 %v8743
        %8953 = vmatmul.bf16.gmra.mxu0 %v8541
        %v8954 = vpop.f32.mrf.mxu0
        %v8955 = vadd.f32 0.0, %v8954
        %v8956 = vpop.f32.mrf.mxu0
        %v8957 = vadd.f32 0.0, %v8956
        %8958 = vmatmul.bf16.gmra.mxu0 %v8543
        %v8959 = vpop.f32.mrf.mxu0
        %v8960 = vadd.f32 0.0, %v8959
        %v8961 = vpop.f32.mrf.mxu0
        %v8962 = vadd.f32 0.0, %v8961
        %8963 = vdwg.mxu0
        %8964 = vmatpush.bf16.msra.mxu0 %v8803
        %8965 = vmatpush.bf16.msra.mxu0 %v8799
        %8966 = vmatpush.bf16.msra.mxu0 %v8795
        %8967 = vmatpush.bf16.msra.mxu0 %v8791
        %8968 = vmatpush.bf16.msra.mxu0 %v8787
        %8969 = vmatpush.bf16.msra.mxu0 %v8783
        %8970 = vmatpush.bf16.msra.mxu0 %v8779
        %8971 = vmatpush.bf16.msra.mxu0 %v8775
        %8972 = vmatmul.bf16.gmra.mxu0 %v8542
        %v8973 = vpop.f32.mrf.mxu0
        %v8974 = vadd.f32 %v8955, %v8973
        %v8975 = vpop.f32.mrf.mxu0
        %v8976 = vadd.f32 %v8957, %v8975
        %8977 = vmatmul.bf16.gmra.mxu0 %v8544
        %v8978 = vpop.f32.mrf.mxu0
        %v8979 = vadd.f32 %v8960, %v8978
        %v8980 = vpop.f32.mrf.mxu0
        %v8981 = vadd.f32 %v8962, %v8980
        %8982 = vdwg.mxu0
        %8983 = vmatpush.bf16.msra.mxu0 %v8772
        %8984 = vmatpush.bf16.msra.mxu0 %v8768
        %8985 = vmatpush.bf16.msra.mxu0 %v8764
        %8986 = vmatpush.bf16.msra.mxu0 %v8760
        %8987 = vmatpush.bf16.msra.mxu0 %v8756
        %8988 = vmatpush.bf16.msra.mxu0 %v8752
        %8989 = vmatpush.bf16.msra.mxu0 %v8748
        %8990 = vmatpush.bf16.msra.mxu0 %v8744
        %8991 = vmatmul.bf16.gmra.mxu0 %v8541
        %v8992 = vpop.f32.mrf.mxu0
        %v8993 = vadd.f32 0.0, %v8992
        %v8994 = vpop.f32.mrf.mxu0
        %v8995 = vadd.f32 0.0, %v8994
        %8996 = vmatmul.bf16.gmra.mxu0 %v8543
        %v8997 = vpop.f32.mrf.mxu0
        %v8998 = vadd.f32 0.0, %v8997
        %v8999 = vpop.f32.mrf.mxu0
        %v9000 = vadd.f32 0.0, %v8999
        %9001 = vdwg.mxu0
        %9002 = vmatpush.bf16.msra.mxu0 %v8804
        %9003 = vmatpush.bf16.msra.mxu0 %v8800
        %9004 = vmatpush.bf16.msra.mxu0 %v8796
        %9005 = vmatpush.bf16.msra.mxu0 %v8792
        %9006 = vmatpush.bf16.msra.mxu0 %v8788
        %9007 = vmatpush.bf16.msra.mxu0 %v8784
        %9008 = vmatpush.bf16.msra.mxu0 %v8780
        %9009 = vmatpush.bf16.msra.mxu0 %v8776
        %9010 = vmatmul.bf16.gmra.mxu0 %v8542
        %v9011 = vpop.f32.mrf.mxu0
        %v9012 = vadd.f32 %v8993, %v9011
        %v9013 = vpop.f32.mrf.mxu0
        %v9014 = vadd.f32 %v8995, %v9013
        %9015 = vmatmul.bf16.gmra.mxu0 %v8544
        %v9016 = vpop.f32.mrf.mxu0
        %v9017 = vadd.f32 %v8998, %v9016
        %v9018 = vpop.f32.mrf.mxu0
        %v9019 = vadd.f32 %v9000, %v9018
        %9020 = vdwg.mxu0
        %v9021 = vld [vmem:[#allocation4] sm:$0xff]
        %v9022 = vld [vmem:[#allocation4 + $0x8] sm:$0xff]
        %v9023 = vld [vmem:[#allocation4 + $0x10] sm:$0xff]
        %v9024 = vld [vmem:[#allocation4 + $0x18] sm:$0xff]
        %v9025 = vld [vmem:[#allocation4 + $0x20] sm:$0xff]
        %v9026 = vld [vmem:[#allocation4 + $0x28] sm:$0xff]
        %v9027 = vld [vmem:[#allocation4 + $0x30] sm:$0xff]
        %v9028 = vld [vmem:[#allocation4 + $0x38] sm:$0xff]
        %v9029 = vld [vmem:[#allocation4 + $0x40] sm:$0xff]
        %v9030 = vld [vmem:[#allocation4 + $0x48] sm:$0xff]
        %v9031 = vld [vmem:[#allocation4 + $0x50] sm:$0xff]
        %v9032 = vld [vmem:[#allocation4 + $0x58] sm:$0xff]
        %v9033 = vld [vmem:[#allocation4 + $0x60] sm:$0xff]
        %v9034 = vld [vmem:[#allocation4 + $0x68] sm:$0xff]
        %v9035 = vld [vmem:[#allocation4 + $0x70] sm:$0xff]
        %v9036 = vld [vmem:[#allocation4 + $0x78] sm:$0xff]
        %v9037 = vld [vmem:[#allocation4 + $0x80] sm:$0xff]
        %v9038 = vld [vmem:[#allocation4 + $0x88] sm:$0xff]
        %v9039 = vld [vmem:[#allocation4 + $0x90] sm:$0xff]
        %v9040 = vld [vmem:[#allocation4 + $0x98] sm:$0xff]
        %v9041 = vld [vmem:[#allocation4 + $0xa0] sm:$0xff]
        %v9042 = vld [vmem:[#allocation4 + $0xa8] sm:$0xff]
        %v9043 = vld [vmem:[#allocation4 + $0xb0] sm:$0xff]
        %v9044 = vld [vmem:[#allocation4 + $0xb8] sm:$0xff]
        %v9045 = vld [vmem:[#allocation4 + $0xc0] sm:$0xff]
        %v9046 = vld [vmem:[#allocation4 + $0xc8] sm:$0xff]
        %v9047 = vld [vmem:[#allocation4 + $0xd0] sm:$0xff]
        %v9048 = vld [vmem:[#allocation4 + $0xd8] sm:$0xff]
        %v9049 = vld [vmem:[#allocation4 + $0xe0] sm:$0xff]
        %v9050 = vld [vmem:[#allocation4 + $0xe8] sm:$0xff]
        %v9051 = vld [vmem:[#allocation4 + $0xf0] sm:$0xff]
        %v9052 = vld [vmem:[#allocation4 + $0xf8] sm:$0xff]
        %v9053 = vld [vmem:[#allocation4 + $0x100] sm:$0xff]
        %v9054 = vld [vmem:[#allocation4 + $0x108] sm:$0xff]
        %v9055 = vld [vmem:[#allocation4 + $0x110] sm:$0xff]
        %v9056 = vld [vmem:[#allocation4 + $0x118] sm:$0xff]
        %v9057 = vld [vmem:[#allocation4 + $0x120] sm:$0xff]
        %v9058 = vld [vmem:[#allocation4 + $0x128] sm:$0xff]
        %v9059 = vld [vmem:[#allocation4 + $0x130] sm:$0xff]
        %v9060 = vld [vmem:[#allocation4 + $0x138] sm:$0xff]
        %v9061 = vld [vmem:[#allocation4 + $0x140] sm:$0xff]
        %v9062 = vld [vmem:[#allocation4 + $0x148] sm:$0xff]
        %v9063 = vld [vmem:[#allocation4 + $0x150] sm:$0xff]
        %v9064 = vld [vmem:[#allocation4 + $0x158] sm:$0xff]
        %v9065 = vld [vmem:[#allocation4 + $0x160] sm:$0xff]
        %v9066 = vld [vmem:[#allocation4 + $0x168] sm:$0xff]
        %v9067 = vld [vmem:[#allocation4 + $0x170] sm:$0xff]
        %v9068 = vld [vmem:[#allocation4 + $0x178] sm:$0xff]
        %v9069 = vld [vmem:[#allocation4 + $0x180] sm:$0xff]
        %v9070 = vld [vmem:[#allocation4 + $0x188] sm:$0xff]
        %v9071 = vld [vmem:[#allocation4 + $0x190] sm:$0xff]
        %v9072 = vld [vmem:[#allocation4 + $0x198] sm:$0xff]
        %v9073 = vld [vmem:[#allocation4 + $0x1a0] sm:$0xff]
        %v9074 = vld [vmem:[#allocation4 + $0x1a8] sm:$0xff]
        %v9075 = vld [vmem:[#allocation4 + $0x1b0] sm:$0xff]
        %v9076 = vld [vmem:[#allocation4 + $0x1b8] sm:$0xff]
        %v9077 = vld [vmem:[#allocation4 + $0x1c0] sm:$0xff]
        %v9078 = vld [vmem:[#allocation4 + $0x1c8] sm:$0xff]
        %v9079 = vld [vmem:[#allocation4 + $0x1d0] sm:$0xff]
        %v9080 = vld [vmem:[#allocation4 + $0x1d8] sm:$0xff]
        %v9081 = vld [vmem:[#allocation4 + $0x1e0] sm:$0xff]
        %v9082 = vld [vmem:[#allocation4 + $0x1e8] sm:$0xff]
        %v9083 = vld [vmem:[#allocation4 + $0x1f0] sm:$0xff]
        %v9084 = vld [vmem:[#allocation4 + $0x1f8] sm:$0xff]
        %v9089 = vperm.slane %v3282, 0
        %v9090 = vperm.slane %v3282, 1
        %v9091 = vperm.slane %v3282, 2
        %v9092 = vperm.slane %v3282, 3
        %v9093 = vperm.slane %v3284, 0
        %v9094 = vperm.slane %v3284, 1
        %v9095 = vperm.slane %v3284, 2
        %v9096 = vperm.slane %v3284, 3
        %v9097 = vperm.slane %v3286, 0
        %v9098 = vperm.slane %v3286, 1
        %v9099 = vperm.slane %v3286, 2
        %v9100 = vperm.slane %v3286, 3
        %v9101 = vperm.slane %v3288, 0
        %v9102 = vperm.slane %v3288, 1
        %v9103 = vperm.slane %v3288, 2
        %v9104 = vperm.slane %v3288, 3
        %v9121 = vmul.f32 %v9089, %v9021
        %v9122 = vmul.f32 %v9090, %v9022
        %v9123 = vmul.f32 %v9091, %v9023
        %v9124 = vmul.f32 %v9092, %v9024
        %v9125 = vmul.f32 %v9089, %v9025
        %v9126 = vmul.f32 %v9090, %v9026
        %v9127 = vmul.f32 %v9091, %v9027
        %v9128 = vmul.f32 %v9092, %v9028
        %v9129 = vmul.f32 %v9089, %v9029
        %v9130 = vmul.f32 %v9090, %v9030
        %v9131 = vmul.f32 %v9091, %v9031
        %v9132 = vmul.f32 %v9092, %v9032
        %v9133 = vmul.f32 %v9089, %v9033
        %v9134 = vmul.f32 %v9090, %v9034
        %v9135 = vmul.f32 %v9091, %v9035
        %v9136 = vmul.f32 %v9092, %v9036
        %v9137 = vmul.f32 %v9093, %v9037
        %v9138 = vmul.f32 %v9094, %v9038
        %v9139 = vmul.f32 %v9095, %v9039
        %v9140 = vmul.f32 %v9096, %v9040
        %v9141 = vmul.f32 %v9093, %v9041
        %v9142 = vmul.f32 %v9094, %v9042
        %v9143 = vmul.f32 %v9095, %v9043
        %v9144 = vmul.f32 %v9096, %v9044
        %v9145 = vmul.f32 %v9093, %v9045
        %v9146 = vmul.f32 %v9094, %v9046
        %v9147 = vmul.f32 %v9095, %v9047
        %v9148 = vmul.f32 %v9096, %v9048
        %v9149 = vmul.f32 %v9093, %v9049
        %v9150 = vmul.f32 %v9094, %v9050
        %v9151 = vmul.f32 %v9095, %v9051
        %v9152 = vmul.f32 %v9096, %v9052
        %v9153 = vmul.f32 %v9097, %v9053
        %v9154 = vmul.f32 %v9098, %v9054
        %v9155 = vmul.f32 %v9099, %v9055
        %v9156 = vmul.f32 %v9100, %v9056
        %v9157 = vmul.f32 %v9097, %v9057
        %v9158 = vmul.f32 %v9098, %v9058
        %v9159 = vmul.f32 %v9099, %v9059
        %v9160 = vmul.f32 %v9100, %v9060
        %v9161 = vmul.f32 %v9097, %v9061
        %v9162 = vmul.f32 %v9098, %v9062
        %v9163 = vmul.f32 %v9099, %v9063
        %v9164 = vmul.f32 %v9100, %v9064
        %v9165 = vmul.f32 %v9097, %v9065
        %v9166 = vmul.f32 %v9098, %v9066
        %v9167 = vmul.f32 %v9099, %v9067
        %v9168 = vmul.f32 %v9100, %v9068
        %v9169 = vmul.f32 %v9101, %v9069
        %v9170 = vmul.f32 %v9102, %v9070
        %v9171 = vmul.f32 %v9103, %v9071
        %v9172 = vmul.f32 %v9104, %v9072
        %v9173 = vmul.f32 %v9101, %v9073
        %v9174 = vmul.f32 %v9102, %v9074
        %v9175 = vmul.f32 %v9103, %v9075
        %v9176 = vmul.f32 %v9104, %v9076
        %v9177 = vmul.f32 %v9101, %v9077
        %v9178 = vmul.f32 %v9102, %v9078
        %v9179 = vmul.f32 %v9103, %v9079
        %v9180 = vmul.f32 %v9104, %v9080
        %v9181 = vmul.f32 %v9101, %v9081
        %v9182 = vmul.f32 %v9102, %v9082
        %v9183 = vmul.f32 %v9103, %v9083
        %v9184 = vmul.f32 %v9104, %v9084
        %v9185 = vadd.f32 %v9121, %v7422
        %v9186 = vadd.f32 %v9122, %v7460
        %v9187 = vadd.f32 %v9123, %v7498
        %v9188 = vadd.f32 %v9124, %v7536
        %v9189 = vadd.f32 %v9125, %v7424
        %v9190 = vadd.f32 %v9126, %v7462
        %v9191 = vadd.f32 %v9127, %v7500
        %v9192 = vadd.f32 %v9128, %v7538
        %v9193 = vadd.f32 %v9129, %v7427
        %v9194 = vadd.f32 %v9130, %v7465
        %v9195 = vadd.f32 %v9131, %v7503
        %v9196 = vadd.f32 %v9132, %v7541
        %v9197 = vadd.f32 %v9133, %v7429
        %v9198 = vadd.f32 %v9134, %v7467
        %v9199 = vadd.f32 %v9135, %v7505
        %v9200 = vadd.f32 %v9136, %v7543
        %v9201 = vadd.f32 %v9137, %v7914
        %v9202 = vadd.f32 %v9138, %v7952
        %v9203 = vadd.f32 %v9139, %v7990
        %v9204 = vadd.f32 %v9140, %v8028
        %v9205 = vadd.f32 %v9141, %v7916
        %v9206 = vadd.f32 %v9142, %v7954
        %v9207 = vadd.f32 %v9143, %v7992
        %v9208 = vadd.f32 %v9144, %v8030
        %v9209 = vadd.f32 %v9145, %v7919
        %v9210 = vadd.f32 %v9146, %v7957
        %v9211 = vadd.f32 %v9147, %v7995
        %v9212 = vadd.f32 %v9148, %v8033
        %v9213 = vadd.f32 %v9149, %v7921
        %v9214 = vadd.f32 %v9150, %v7959
        %v9215 = vadd.f32 %v9151, %v7997
        %v9216 = vadd.f32 %v9152, %v8035
        %v9217 = vadd.f32 %v9153, %v8406
        %v9218 = vadd.f32 %v9154, %v8444
        %v9219 = vadd.f32 %v9155, %v8482
        %v9220 = vadd.f32 %v9156, %v8520
        %v9221 = vadd.f32 %v9157, %v8408
        %v9222 = vadd.f32 %v9158, %v8446
        %v9223 = vadd.f32 %v9159, %v8484
        %v9224 = vadd.f32 %v9160, %v8522
        %v9225 = vadd.f32 %v9161, %v8411
        %v9226 = vadd.f32 %v9162, %v8449
        %v9227 = vadd.f32 %v9163, %v8487
        %v9228 = vadd.f32 %v9164, %v8525
        %v9229 = vadd.f32 %v9165, %v8413
        %v9230 = vadd.f32 %v9166, %v8451
        %v9231 = vadd.f32 %v9167, %v8489
        %v9232 = vadd.f32 %v9168, %v8527
        %v9233 = vadd.f32 %v9169, %v8898
        %v9234 = vadd.f32 %v9170, %v8936
        %v9235 = vadd.f32 %v9171, %v8974
        %v9236 = vadd.f32 %v9172, %v9012
        %v9237 = vadd.f32 %v9173, %v8900
        %v9238 = vadd.f32 %v9174, %v8938
        %v9239 = vadd.f32 %v9175, %v8976
        %v9240 = vadd.f32 %v9176, %v9014
        %v9241 = vadd.f32 %v9177, %v8903
        %v9242 = vadd.f32 %v9178, %v8941
        %v9243 = vadd.f32 %v9179, %v8979
        %v9244 = vadd.f32 %v9180, %v9017
        %v9245 = vadd.f32 %v9181, %v8905
        %v9246 = vadd.f32 %v9182, %v8943
        %v9247 = vadd.f32 %v9183, %v8981
        %v9248 = vadd.f32 %v9184, %v9019
        %9249 = vst [vmem:[#allocation4] sm:$0xff] %v9185
        %9250 = vst [vmem:[#allocation4 + $0x8] sm:$0xff] %v9186
        %9251 = vst [vmem:[#allocation4 + $0x10] sm:$0xff] %v9187
        %9252 = vst [vmem:[#allocation4 + $0x18] sm:$0xff] %v9188
        %9253 = vst [vmem:[#allocation4 + $0x20] sm:$0xff] %v9189
        %9254 = vst [vmem:[#allocation4 + $0x28] sm:$0xff] %v9190
        %9255 = vst [vmem:[#allocation4 + $0x30] sm:$0xff] %v9191
        %9256 = vst [vmem:[#allocation4 + $0x38] sm:$0xff] %v9192
        %9257 = vst [vmem:[#allocation4 + $0x40] sm:$0xff] %v9193
        %9258 = vst [vmem:[#allocation4 + $0x48] sm:$0xff] %v9194
        %9259 = vst [vmem:[#allocation4 + $0x50] sm:$0xff] %v9195
        %9260 = vst [vmem:[#allocation4 + $0x58] sm:$0xff] %v9196
        %9261 = vst [vmem:[#allocation4 + $0x60] sm:$0xff] %v9197
        %9262 = vst [vmem:[#allocation4 + $0x68] sm:$0xff] %v9198
        %9263 = vst [vmem:[#allocation4 + $0x70] sm:$0xff] %v9199
        %9264 = vst [vmem:[#allocation4 + $0x78] sm:$0xff] %v9200
        %9265 = vst [vmem:[#allocation4 + $0x80] sm:$0xff] %v9201
        %9266 = vst [vmem:[#allocation4 + $0x88] sm:$0xff] %v9202
        %9267 = vst [vmem:[#allocation4 + $0x90] sm:$0xff] %v9203
        %9268 = vst [vmem:[#allocation4 + $0x98] sm:$0xff] %v9204
        %9269 = vst [vmem:[#allocation4 + $0xa0] sm:$0xff] %v9205
        %9270 = vst [vmem:[#allocation4 + $0xa8] sm:$0xff] %v9206
        %9271 = vst [vmem:[#allocation4 + $0xb0] sm:$0xff] %v9207
        %9272 = vst [vmem:[#allocation4 + $0xb8] sm:$0xff] %v9208
        %9273 = vst [vmem:[#allocation4 + $0xc0] sm:$0xff] %v9209
        %9274 = vst [vmem:[#allocation4 + $0xc8] sm:$0xff] %v9210
        %9275 = vst [vmem:[#allocation4 + $0xd0] sm:$0xff] %v9211
        %9276 = vst [vmem:[#allocation4 + $0xd8] sm:$0xff] %v9212
        %9277 = vst [vmem:[#allocation4 + $0xe0] sm:$0xff] %v9213
        %9278 = vst [vmem:[#allocation4 + $0xe8] sm:$0xff] %v9214
        %9279 = vst [vmem:[#allocation4 + $0xf0] sm:$0xff] %v9215
        %9280 = vst [vmem:[#allocation4 + $0xf8] sm:$0xff] %v9216
        %9281 = vst [vmem:[#allocation4 + $0x100] sm:$0xff] %v9217
        %9282 = vst [vmem:[#allocation4 + $0x108] sm:$0xff] %v9218
        %9283 = vst [vmem:[#allocation4 + $0x110] sm:$0xff] %v9219
        %9284 = vst [vmem:[#allocation4 + $0x118] sm:$0xff] %v9220
        %9285 = vst [vmem:[#allocation4 + $0x120] sm:$0xff] %v9221
        %9286 = vst [vmem:[#allocation4 + $0x128] sm:$0xff] %v9222
        %9287 = vst [vmem:[#allocation4 + $0x130] sm:$0xff] %v9223
        %9288 = vst [vmem:[#allocation4 + $0x138] sm:$0xff] %v9224
        %9289 = vst [vmem:[#allocation4 + $0x140] sm:$0xff] %v9225
        %9290 = vst [vmem:[#allocation4 + $0x148] sm:$0xff] %v9226
        %9291 = vst [vmem:[#allocation4 + $0x150] sm:$0xff] %v9227
        %9292 = vst [vmem:[#allocation4 + $0x158] sm:$0xff] %v9228
        %9293 = vst [vmem:[#allocation4 + $0x160] sm:$0xff] %v9229
        %9294 = vst [vmem:[#allocation4 + $0x168] sm:$0xff] %v9230
        %9295 = vst [vmem:[#allocation4 + $0x170] sm:$0xff] %v9231
        %9296 = vst [vmem:[#allocation4 + $0x178] sm:$0xff] %v9232
        %9297 = vst [vmem:[#allocation4 + $0x180] sm:$0xff] %v9233
        %9298 = vst [vmem:[#allocation4 + $0x188] sm:$0xff] %v9234
        %9299 = vst [vmem:[#allocation4 + $0x190] sm:$0xff] %v9235
        %9300 = vst [vmem:[#allocation4 + $0x198] sm:$0xff] %v9236
        %9301 = vst [vmem:[#allocation4 + $0x1a0] sm:$0xff] %v9237
        %9302 = vst [vmem:[#allocation4 + $0x1a8] sm:$0xff] %v9238
        %9303 = vst [vmem:[#allocation4 + $0x1b0] sm:$0xff] %v9239
        %9304 = vst [vmem:[#allocation4 + $0x1b8] sm:$0xff] %v9240
        %9305 = vst [vmem:[#allocation4 + $0x1c0] sm:$0xff] %v9241
        %9306 = vst [vmem:[#allocation4 + $0x1c8] sm:$0xff] %v9242
        %9307 = vst [vmem:[#allocation4 + $0x1d0] sm:$0xff] %v9243
        %9308 = vst [vmem:[#allocation4 + $0x1d8] sm:$0xff] %v9244
        %9309 = vst [vmem:[#allocation4 + $0x1e0] sm:$0xff] %v9245
        %9310 = vst [vmem:[#allocation4 + $0x1e8] sm:$0xff] %v9246
        %9311 = vst [vmem:[#allocation4 + $0x1f0] sm:$0xff] %v9247
        %9312 = vst [vmem:[#allocation4 + $0x1f8] sm:$0xff] %v9248
        %9313 = vst.msk [vmem:[#allocation2] sm:$0xf] %vm7048, %v3273
        %9314 = vst.msk [vmem:[#allocation2 + $0x4] sm:$0xf] %vm7048, %v3274
        %9315 = vst.msk [vmem:[#allocation2 + $0x8] sm:$0xf] %vm7048, %v3275
        %9316 = vst.msk [vmem:[#allocation2 + $0xc] sm:$0xf] %vm7048, %v3276
        %p9317 = scmp.eq.s32.totalorder %s30, 1
        // Predicated region
        $region49: #{tpu_custom_call.1} parent=31 // pred_check
          %p9318 = pneg %p9317
        $region50: #{tpu_custom_call.1} parent=31 // pred_check_branch
          %9320 = sbr.rel (%p9318) target = $region52
        $region51: #{tpu_custom_call.1} parent=31 // pred_region
          %v9321 = vld [vmem:[#allocation4] sm:$0xff]
          %v9322 = vld [vmem:[#allocation4 + $0x8] sm:$0xff]
          %v9323 = vld [vmem:[#allocation4 + $0x10] sm:$0xff]
          %v9324 = vld [vmem:[#allocation4 + $0x18] sm:$0xff]
          %v9325 = vld [vmem:[#allocation4 + $0x20] sm:$0xff]
          %v9326 = vld [vmem:[#allocation4 + $0x28] sm:$0xff]
          %v9327 = vld [vmem:[#allocation4 + $0x30] sm:$0xff]
          %v9328 = vld [vmem:[#allocation4 + $0x38] sm:$0xff]
          %v9329 = vld [vmem:[#allocation4 + $0x40] sm:$0xff]
          %v9330 = vld [vmem:[#allocation4 + $0x48] sm:$0xff]
          %v9331 = vld [vmem:[#allocation4 + $0x50] sm:$0xff]
          %v9332 = vld [vmem:[#allocation4 + $0x58] sm:$0xff]
          %v9333 = vld [vmem:[#allocation4 + $0x60] sm:$0xff]
          %v9334 = vld [vmem:[#allocation4 + $0x68] sm:$0xff]
          %v9335 = vld [vmem:[#allocation4 + $0x70] sm:$0xff]
          %v9336 = vld [vmem:[#allocation4 + $0x78] sm:$0xff]
          %v9337 = vld [vmem:[#allocation4 + $0x80] sm:$0xff]
          %v9338 = vld [vmem:[#allocation4 + $0x88] sm:$0xff]
          %v9339 = vld [vmem:[#allocation4 + $0x90] sm:$0xff]
          %v9340 = vld [vmem:[#allocation4 + $0x98] sm:$0xff]
          %v9341 = vld [vmem:[#allocation4 + $0xa0] sm:$0xff]
          %v9342 = vld [vmem:[#allocation4 + $0xa8] sm:$0xff]
          %v9343 = vld [vmem:[#allocation4 + $0xb0] sm:$0xff]
          %v9344 = vld [vmem:[#allocation4 + $0xb8] sm:$0xff]
          %v9345 = vld [vmem:[#allocation4 + $0xc0] sm:$0xff]
          %v9346 = vld [vmem:[#allocation4 + $0xc8] sm:$0xff]
          %v9347 = vld [vmem:[#allocation4 + $0xd0] sm:$0xff]
          %v9348 = vld [vmem:[#allocation4 + $0xd8] sm:$0xff]
          %v9349 = vld [vmem:[#allocation4 + $0xe0] sm:$0xff]
          %v9350 = vld [vmem:[#allocation4 + $0xe8] sm:$0xff]
          %v9351 = vld [vmem:[#allocation4 + $0xf0] sm:$0xff]
          %v9352 = vld [vmem:[#allocation4 + $0xf8] sm:$0xff]
          %v9353 = vld [vmem:[#allocation4 + $0x100] sm:$0xff]
          %v9354 = vld [vmem:[#allocation4 + $0x108] sm:$0xff]
          %v9355 = vld [vmem:[#allocation4 + $0x110] sm:$0xff]
          %v9356 = vld [vmem:[#allocation4 + $0x118] sm:$0xff]
          %v9357 = vld [vmem:[#allocation4 + $0x120] sm:$0xff]
          %v9358 = vld [vmem:[#allocation4 + $0x128] sm:$0xff]
          %v9359 = vld [vmem:[#allocation4 + $0x130] sm:$0xff]
          %v9360 = vld [vmem:[#allocation4 + $0x138] sm:$0xff]
          %v9361 = vld [vmem:[#allocation4 + $0x140] sm:$0xff]
          %v9362 = vld [vmem:[#allocation4 + $0x148] sm:$0xff]
          %v9363 = vld [vmem:[#allocation4 + $0x150] sm:$0xff]
          %v9364 = vld [vmem:[#allocation4 + $0x158] sm:$0xff]
          %v9365 = vld [vmem:[#allocation4 + $0x160] sm:$0xff]
          %v9366 = vld [vmem:[#allocation4 + $0x168] sm:$0xff]
          %v9367 = vld [vmem:[#allocation4 + $0x170] sm:$0xff]
          %v9368 = vld [vmem:[#allocation4 + $0x178] sm:$0xff]
          %v9369 = vld [vmem:[#allocation4 + $0x180] sm:$0xff]
          %v9370 = vld [vmem:[#allocation4 + $0x188] sm:$0xff]
          %v9371 = vld [vmem:[#allocation4 + $0x190] sm:$0xff]
          %v9372 = vld [vmem:[#allocation4 + $0x198] sm:$0xff]
          %v9373 = vld [vmem:[#allocation4 + $0x1a0] sm:$0xff]
          %v9374 = vld [vmem:[#allocation4 + $0x1a8] sm:$0xff]
          %v9375 = vld [vmem:[#allocation4 + $0x1b0] sm:$0xff]
          %v9376 = vld [vmem:[#allocation4 + $0x1b8] sm:$0xff]
          %v9377 = vld [vmem:[#allocation4 + $0x1c0] sm:$0xff]
          %v9378 = vld [vmem:[#allocation4 + $0x1c8] sm:$0xff]
          %v9379 = vld [vmem:[#allocation4 + $0x1d0] sm:$0xff]
          %v9380 = vld [vmem:[#allocation4 + $0x1d8] sm:$0xff]
          %v9381 = vld [vmem:[#allocation4 + $0x1e0] sm:$0xff]
          %v9382 = vld [vmem:[#allocation4 + $0x1e8] sm:$0xff]
          %v9383 = vld [vmem:[#allocation4 + $0x1f0] sm:$0xff]
          %v9384 = vld [vmem:[#allocation4 + $0x1f8] sm:$0xff]
          %v9385 = vld [vmem:[#allocation3] sm:$0xf]
          %v9386 = vld [vmem:[#allocation3 + $0x4] sm:$0xf]
          %v9387 = vld [vmem:[#allocation3 + $0x8] sm:$0xf]
          %v9388 = vld [vmem:[#allocation3 + $0xc] sm:$0xf]
          %v9389 = vrcp.pop %v9385
          %v9390 = vrcp.pop %v9386
          %v9391 = vrcp.pop %v9387
          %v9392 = vrcp.pop %v9388
          %v9397 = vperm.slane %v9389, 0
          %v9398 = vperm.slane %v9389, 1
          %v9399 = vperm.slane %v9389, 2
          %v9400 = vperm.slane %v9389, 3
          %v9401 = vperm.slane %v9390, 0
          %v9402 = vperm.slane %v9390, 1
          %v9403 = vperm.slane %v9390, 2
          %v9404 = vperm.slane %v9390, 3
          %v9405 = vperm.slane %v9391, 0
          %v9406 = vperm.slane %v9391, 1
          %v9407 = vperm.slane %v9391, 2
          %v9408 = vperm.slane %v9391, 3
          %v9409 = vperm.slane %v9392, 0
          %v9410 = vperm.slane %v9392, 1
          %v9411 = vperm.slane %v9392, 2
          %v9412 = vperm.slane %v9392, 3
          %v9429 = vmul.f32 %v9321, %v9397
          %v9430 = vmul.f32 %v9322, %v9398
          %v9431 = vmul.f32 %v9323, %v9399
          %v9432 = vmul.f32 %v9324, %v9400
          %v9433 = vmul.f32 %v9325, %v9397
          %v9434 = vmul.f32 %v9326, %v9398
          %v9435 = vmul.f32 %v9327, %v9399
          %v9436 = vmul.f32 %v9328, %v9400
          %v9437 = vmul.f32 %v9329, %v9397
          %v9438 = vmul.f32 %v9330, %v9398
          %v9439 = vmul.f32 %v9331, %v9399
          %v9440 = vmul.f32 %v9332, %v9400
          %v9441 = vmul.f32 %v9333, %v9397
          %v9442 = vmul.f32 %v9334, %v9398
          %v9443 = vmul.f32 %v9335, %v9399
          %v9444 = vmul.f32 %v9336, %v9400
          %v9445 = vmul.f32 %v9337, %v9401
          %v9446 = vmul.f32 %v9338, %v9402
          %v9447 = vmul.f32 %v9339, %v9403
          %v9448 = vmul.f32 %v9340, %v9404
          %v9449 = vmul.f32 %v9341, %v9401
          %v9450 = vmul.f32 %v9342, %v9402
          %v9451 = vmul.f32 %v9343, %v9403
          %v9452 = vmul.f32 %v9344, %v9404
          %v9453 = vmul.f32 %v9345, %v9401
          %v9454 = vmul.f32 %v9346, %v9402
          %v9455 = vmul.f32 %v9347, %v9403
          %v9456 = vmul.f32 %v9348, %v9404
          %v9457 = vmul.f32 %v9349, %v9401
          %v9458 = vmul.f32 %v9350, %v9402
          %v9459 = vmul.f32 %v9351, %v9403
          %v9460 = vmul.f32 %v9352, %v9404
          %v9461 = vmul.f32 %v9353, %v9405
          %v9462 = vmul.f32 %v9354, %v9406
          %v9463 = vmul.f32 %v9355, %v9407
          %v9464 = vmul.f32 %v9356, %v9408
          %v9465 = vmul.f32 %v9357, %v9405
          %v9466 = vmul.f32 %v9358, %v9406
          %v9467 = vmul.f32 %v9359, %v9407
          %v9468 = vmul.f32 %v9360, %v9408
          %v9469 = vmul.f32 %v9361, %v9405
          %v9470 = vmul.f32 %v9362, %v9406
          %v9471 = vmul.f32 %v9363, %v9407
          %v9472 = vmul.f32 %v9364, %v9408
          %v9473 = vmul.f32 %v9365, %v9405
          %v9474 = vmul.f32 %v9366, %v9406
          %v9475 = vmul.f32 %v9367, %v9407
          %v9476 = vmul.f32 %v9368, %v9408
          %v9477 = vmul.f32 %v9369, %v9409
          %v9478 = vmul.f32 %v9370, %v9410
          %v9479 = vmul.f32 %v9371, %v9411
          %v9480 = vmul.f32 %v9372, %v9412
          %v9481 = vmul.f32 %v9373, %v9409
          %v9482 = vmul.f32 %v9374, %v9410
          %v9483 = vmul.f32 %v9375, %v9411
          %v9484 = vmul.f32 %v9376, %v9412
          %v9485 = vmul.f32 %v9377, %v9409
          %v9486 = vmul.f32 %v9378, %v9410
          %v9487 = vmul.f32 %v9379, %v9411
          %v9488 = vmul.f32 %v9380, %v9412
          %v9489 = vmul.f32 %v9381, %v9409
          %v9490 = vmul.f32 %v9382, %v9410
          %v9491 = vmul.f32 %v9383, %v9411
          %v9492 = vmul.f32 %v9384, %v9412
          %9493 = vst [vmem:[%s298] sm:$0xff] %v9429
          %9494 = vst [vmem:[%s298 + $0x8] sm:$0xff] %v9430
          %9495 = vst [vmem:[%s298 + $0x10] sm:$0xff] %v9431
          %9496 = vst [vmem:[%s298 + $0x18] sm:$0xff] %v9432
          %9497 = vst [vmem:[%s298 + $0x20] sm:$0xff] %v9433
          %9498 = vst [vmem:[%s298 + $0x28] sm:$0xff] %v9434
          %9499 = vst [vmem:[%s298 + $0x30] sm:$0xff] %v9435
          %9500 = vst [vmem:[%s298 + $0x38] sm:$0xff] %v9436
          %9501 = vst [vmem:[%s298 + $0x40] sm:$0xff] %v9437
          %9502 = vst [vmem:[%s298 + $0x48] sm:$0xff] %v9438
          %9503 = vst [vmem:[%s298 + $0x50] sm:$0xff] %v9439
          %9504 = vst [vmem:[%s298 + $0x58] sm:$0xff] %v9440
          %9505 = vst [vmem:[%s298 + $0x60] sm:$0xff] %v9441
          %9506 = vst [vmem:[%s298 + $0x68] sm:$0xff] %v9442
          %9507 = vst [vmem:[%s298 + $0x70] sm:$0xff] %v9443
          %9508 = vst [vmem:[%s298 + $0x78] sm:$0xff] %v9444
          %9509 = vst [vmem:[%s298 + $0x80] sm:$0xff] %v9445
          %9510 = vst [vmem:[%s298 + $0x88] sm:$0xff] %v9446
          %9511 = vst [vmem:[%s298 + $0x90] sm:$0xff] %v9447
          %9512 = vst [vmem:[%s298 + $0x98] sm:$0xff] %v9448
          %9513 = vst [vmem:[%s298 + $0xa0] sm:$0xff] %v9449
          %9514 = vst [vmem:[%s298 + $0xa8] sm:$0xff] %v9450
          %9515 = vst [vmem:[%s298 + $0xb0] sm:$0xff] %v9451
          %9516 = vst [vmem:[%s298 + $0xb8] sm:$0xff] %v9452
          %9517 = vst [vmem:[%s298 + $0xc0] sm:$0xff] %v9453
          %9518 = vst [vmem:[%s298 + $0xc8] sm:$0xff] %v9454
          %9519 = vst [vmem:[%s298 + $0xd0] sm:$0xff] %v9455
          %9520 = vst [vmem:[%s298 + $0xd8] sm:$0xff] %v9456
          %9521 = vst [vmem:[%s298 + $0xe0] sm:$0xff] %v9457
          %9522 = vst [vmem:[%s298 + $0xe8] sm:$0xff] %v9458
          %9523 = vst [vmem:[%s298 + $0xf0] sm:$0xff] %v9459
          %9524 = vst [vmem:[%s298 + $0xf8] sm:$0xff] %v9460
          %9525 = vst [vmem:[%s298 + $0x100] sm:$0xff] %v9461
          %9526 = vst [vmem:[%s298 + $0x108] sm:$0xff] %v9462
          %9527 = vst [vmem:[%s298 + $0x110] sm:$0xff] %v9463
          %9528 = vst [vmem:[%s298 + $0x118] sm:$0xff] %v9464
          %9529 = vst [vmem:[%s298 + $0x120] sm:$0xff] %v9465
          %9530 = vst [vmem:[%s298 + $0x128] sm:$0xff] %v9466
          %9531 = vst [vmem:[%s298 + $0x130] sm:$0xff] %v9467
          %9532 = vst [vmem:[%s298 + $0x138] sm:$0xff] %v9468
          %9533 = vst [vmem:[%s298 + $0x140] sm:$0xff] %v9469
          %9534 = vst [vmem:[%s298 + $0x148] sm:$0xff] %v9470
          %9535 = vst [vmem:[%s298 + $0x150] sm:$0xff] %v9471
          %9536 = vst [vmem:[%s298 + $0x158] sm:$0xff] %v9472
          %9537 = vst [vmem:[%s298 + $0x160] sm:$0xff] %v9473
          %9538 = vst [vmem:[%s298 + $0x168] sm:$0xff] %v9474
          %9539 = vst [vmem:[%s298 + $0x170] sm:$0xff] %v9475
          %9540 = vst [vmem:[%s298 + $0x178] sm:$0xff] %v9476
          %9541 = vst [vmem:[%s298 + $0x180] sm:$0xff] %v9477
          %9542 = vst [vmem:[%s298 + $0x188] sm:$0xff] %v9478
          %9543 = vst [vmem:[%s298 + $0x190] sm:$0xff] %v9479
          %9544 = vst [vmem:[%s298 + $0x198] sm:$0xff] %v9480
          %9545 = vst [vmem:[%s298 + $0x1a0] sm:$0xff] %v9481
          %9546 = vst [vmem:[%s298 + $0x1a8] sm:$0xff] %v9482
          %9547 = vst [vmem:[%s298 + $0x1b0] sm:$0xff] %v9483
          %9548 = vst [vmem:[%s298 + $0x1b8] sm:$0xff] %v9484
          %9549 = vst [vmem:[%s298 + $0x1c0] sm:$0xff] %v9485
          %9550 = vst [vmem:[%s298 + $0x1c8] sm:$0xff] %v9486
          %9551 = vst [vmem:[%s298 + $0x1d0] sm:$0xff] %v9487
          %9552 = vst [vmem:[%s298 + $0x1d8] sm:$0xff] %v9488
          %9553 = vst [vmem:[%s298 + $0x1e0] sm:$0xff] %v9489
          %9554 = vst [vmem:[%s298 + $0x1e8] sm:$0xff] %v9490
          %9555 = vst [vmem:[%s298 + $0x1f0] sm:$0xff] %v9491
          %9556 = vst [vmem:[%s298 + $0x1f8] sm:$0xff] %v9492
        $region52: #{tpu_custom_call.1} parent=31 // pred_fallthru
          _
        %s9557 = sand.u32 %s132, 1
        %s9558 = scalar_lea.sflag [#allocation8], %s9557
        %s9559 = sand.u32 %s132, 1
        %s9560 = smul.addr %s9559, 512
        %s9561 = scalar_lea.vmem [#allocation12], %s9560
        // Predicated region
        $region53: #{tpu_custom_call.1} parent=31 // pred_check
          %p9562 = pneg %p142
        $region54: #{tpu_custom_call.1} parent=31 // pred_check_branch
          %9564 = sbr.rel (%p9562) target = $region56
        $region55: #{tpu_custom_call.1} parent=31 // pred_region
          %s9565 = smul.u32 4, %s29
          %9567 = vsyncadd %s9558, 0
          %s9568 = smul.addr %s28, 64
          %s9569 = sadd.s32 %s9565, %s9568
          %s9570 = smul.addr %s9569, 8
          %s9571 = scalar_lea.hbm %s3, %s9570
          %s9572 = sshll.u32 %s9561, 4
          %s9573 = int_to_ptr.vmem [resolvable:$true] %s9572
          %s9574 = sshll.u32 %s9571, 4
          %s9575 = int_to_ptr.hbm [resolvable:$true] %s9574
          %9580 = dma.vmem_to_hbm [thread:$0]  %s9573, 8192, %s9575, %s9558, 512, 512, 32
        $region56: #{tpu_custom_call.1} parent=31 // pred_fallthru
          _
      $region32: #{tpu_custom_call.1} parent=5 // pred_fallthru
        _
      %p9581 = scmp.le.s32.totalorder 2, %s18
      // Predicated region
      $region57: #{tpu_custom_call.1} parent=5 // pred_check
        %p9582 = pneg %p9581
      $region58: #{tpu_custom_call.1} parent=5 // pred_check_branch
        %9584 = sbr.rel (%p9582) target = $region60
      $region59: #{tpu_custom_call.1} parent=5 // pred_region
        %s9585 = ssub.s32 %s18, 2
        // Predicated region
        $region61: #{tpu_custom_call.1} parent=59 // pred_check
          %p9586 = pneg %p148
        $region62: #{tpu_custom_call.1} parent=59 // pred_check_branch
          %9588 = sbr.rel (%p9586) target = $region64
        $region63: #{tpu_custom_call.1} parent=59 // pred_region
          %s9589 = sand.u32 %s133, 1
          %s9590 = scalar_lea.sflag [#allocation8], %s9589
          %s9591 = sand.u32 %s133, 1
          %s9592 = smul.addr %s9591, 512
          %s9593 = scalar_lea.vmem [#allocation12], %s9592
          %9595 = dma.done %s9590, 8192
        $region64: #{tpu_custom_call.1} parent=59 // pred_fallthru
          _
      $region60: #{tpu_custom_call.1} parent=5 // pred_fallthru
        _
    $region6: #{tpu_custom_call.1} parent=1 // loop_footer
      %s22 = sadd.s32 1, %s18
    $region7: #{tpu_custom_call.1} parent=1 // loop_footer_branch
      %17 = sbr.rel target = $region3
    $region8: #{tpu_custom_call.1} parent=1 // loop_exit
      _
    %9596 = vsyncpa [#allocation7], 1
    %s9597 = scalar_lea.sflag [#allocation7], 1
    %9598 = vsyncpa %s9597, 1
    %9599 = vsyncpa [#allocation10], 1
    %s9600 = scalar_lea.sflag [#allocation10], 1
    %9601 = vsyncpa %s9600, 1
    %9602 = vsyncpa [#allocation8], 1
    %s9603 = scalar_lea.sflag [#allocation8], 1
    %9604 = vsyncpa %s9603, 1

</llo_original>
